<compile_context>
chip_gen: v7x
topology: tpu7x:2x2x1
jax: 0.10.0
libtpu: 0.0.40
codegen_flags: <defaults>
</compile_context>

<pallas_src>
import numpy as np
import jax
import jax.numpy as jnp
from jax.experimental import pallas as pl
from jax.experimental.pallas import tpu as pltpu


# ------------------------------ Pallas kernel ------------------------------ #

def fused_forward_kernel(x_ref, mean_ref,
                         t1_ref, bc1_ref,
                         t2_ref, bc2_ref,
                         w1h_ref, w1m_ref, b1_ref,
                         w2_ref, b2_ref,
                         w3_ref, b3_ref,
                         wo_ref, bo_ref,
                         q_ref, a1_ref):
    """Whole DRQN forward on VMEM-resident data.

    Layouts (2-D values only; no in-kernel reshapes):
      x_ref  : [16, B, 16*4]  input row r  -> obs[b, i, r, w]     at column w*4+i
      a1_ref : [12, B, 12*16] conv1 row r  -> relu(conv1)[b,o,r,w] at column w*16+o
    Each conv output row h is one GEMM against a width-Toeplitz weight (t1/t2);
    conv2's row result [B,128] is folded straight into linear1 via the per-row
    weight slice w1h_ref[h] ([128,256]), so the NCHW flatten never materializes.
    """
    f32 = jnp.float32
    bf16 = jnp.bfloat16

    # ---- conv1: 4->16, k=5, valid (16x16 -> 12x12), one output row at a time --
    for h in range(12):
        rows = jnp.concatenate([x_ref[h + ky] for ky in range(5)], axis=-1)      # [B, 320]
        y = jnp.dot(rows.astype(bf16), t1_ref[...], preferred_element_type=f32)  # [B, 192]
        a1_ref[h] = jnp.maximum(y + bc1_ref[...], 0.0)

    # ---- conv2 (16->16, 12x12 -> 8x8) fused with linear1 (1024+1 -> 256) ------
    # start the linear1 accumulator with the mean_action column and the bias
    zacc = mean_ref[...] * w1m_ref[...] + b1_ref[...]                            # [B, 256]
    for h in range(8):
        rows = jnp.concatenate([a1_ref[h + ky] for ky in range(5)], axis=-1)     # [B, 960]
        y = jnp.dot(rows.astype(bf16), t2_ref[...], preferred_element_type=f32)  # [B, 128]
        a2 = jnp.maximum(y + bc2_ref[...], 0.0)
        zacc = zacc + jnp.dot(a2.astype(bf16), w1h_ref[h],
                              preferred_element_type=f32)                        # [B, 256]
    z = jnp.maximum(zacc, 0.0)

    # ---- linear2 / linear3 (+ReLU) and output layer ---------------------------
    z = jnp.maximum(jnp.dot(z.astype(bf16), w2_ref[...],
                            preferred_element_type=f32) + b2_ref[...], 0.0)
    z = jnp.maximum(jnp.dot(z.astype(bf16), w3_ref[...],
                            preferred_element_type=f32) + b3_ref[...], 0.0)
    q = jnp.dot(z, wo_ref[...], preferred_element_type=f32) + bo_ref[...]        # [B, 128]
    q_ref[...] = q.astype(q_ref.dtype)


# --------------------------------- wrapper ---------------------------------- #

def model_forward(p, observation, mean_action):
    """observation: [B, 4, 16, 16] (NCHW), mean_action: [B, 1] -> q: [B, 5]."""
    B = observation.shape[0]
    # input rows as [h, B, w*4+i] so each conv-row GEMM reads 5 consecutive rows
    x = observation.astype(jnp.float32)
    x_t = jnp.transpose(x, (2, 0, 3, 1)).reshape(16, B, 16 * 4)
    mean = mean_action.astype(jnp.float32).reshape(B, 1)

    vmem = pl.BlockSpec(memory_space=pltpu.MemorySpace.VMEM)
    q_pad = pl.pallas_call(
        fused_forward_kernel,
        out_shape=jax.ShapeDtypeStruct((B, 128), jnp.float32),   # lane-dense, sliced below
        in_specs=[vmem] * 15,
        out_specs=vmem,
        scratch_shapes=[pltpu.VMEM((12, B, 12 * 16), jnp.float32)],   # conv1 activations
    )(x_t, mean,
      p["t1"], p["bc1"], p["t2"], p["bc2"],
      p["w1h"], p["w1m"], p["b1"],
      p["w2"], p["b2"], p["w3"], p["b3"],
      p["wo"], p["bo"])
    return q_pad[:, :5]


# --------------------- one-time parameter preparation ----------------------- #

def _width_toeplitz(w_oihw, in_w, out_w):
    """Valid, stride-1 torch Conv2d weight as a width-only-Toeplitz matmul weight.
    Returns T [K*in_w*I, out_w*O] such that for one output row h,
        (lhs @ T)[b, w*O + o] == conv(x)[b, o, h, w]
    where lhs[b, (ky*in_w + x)*I + i] == x[b, i, h+ky, x]."""
    w = np.asarray(w_oihw, np.float32)
    O, I, K, _ = w.shape
    t = np.zeros((K, in_w, I, out_w, O), np.float32)
    for ky in range(K):
        for kx in range(K):
            for wp in range(out_w):
                t[ky, wp + kx, :, wp, :] = w[:, :, ky, kx].T   # [I, O]
    return t.reshape(K * in_w * I, out_w * O)


def prepare_params(raw):
    """One-time transform of torch-layout params into kernel-ready form."""
    f32 = np.float32
    bf16 = jnp.bfloat16

    t1 = _width_toeplitz(raw["conv1_w"], 16, 12)                         # [320, 192]
    t2 = _width_toeplitz(raw["conv2_w"], 12, 8)                          # [960, 128]
    bc1 = np.tile(np.asarray(raw["conv1_b"], f32), 12)[None, :]          # [1, 192]
    bc2 = np.tile(np.asarray(raw["conv2_b"], f32), 8)[None, :]           # [1, 128]

    # linear1: permute the 1024 image columns from torch's (o, h, w) flatten
    # order to this kernel's per-row (w, o) order, and split off the
    # mean_action column so the GEMM keeps a lane-aligned K.
    l1 = np.asarray(raw["l1_w"], f32)                                    # [256, 1025]
    w1h = l1[:, :1024].reshape(256, 16, 8, 8)                            # [n, o, h, w]
    w1h = np.transpose(w1h, (2, 3, 1, 0)).reshape(8, 128, 256)           # [h, w*16+o, n]

    # output layer zero-padded to 128 lanes (lane-dense store; wrapper slices :5)
    wo = np.zeros((256, 128), f32)
    wo[:, :5] = np.asarray(raw["out_w"], f32).T
    bo = np.zeros((1, 128), f32)
    bo[0, :5] = np.asarray(raw["out_b"], f32)

    return {
        "t1": jnp.asarray(t1, bf16), "bc1": jnp.asarray(bc1),
        "t2": jnp.asarray(t2, bf16), "bc2": jnp.asarray(bc2),
        "w1h": jnp.asarray(w1h, bf16),
        "w1m": jnp.asarray(l1[:, 1024:1025].T),                          # [1, 256]
        "b1": jnp.asarray(np.asarray(raw["l1_b"], f32)[None, :]),
        "w2": jnp.asarray(np.asarray(raw["l2_w"], f32).T, bf16),
        "b2": jnp.asarray(np.asarray(raw["l2_b"], f32)[None, :]),
        "w3": jnp.asarray(np.asarray(raw["l3_w"], f32).T, bf16),
        "b3": jnp.asarray(np.asarray(raw["l3_b"], f32)[None, :]),
        "wo": jnp.asarray(wo), "bo": jnp.asarray(bo),
    }


# ----------------------- plain-JAX reference (check) ------------------------ #

def reference_forward(raw, observation, mean_action):
    """XLA reference matching the torch forward (float32)."""
    dn = ("NCHW", "OIHW", "NCHW")
    y = jax.lax.conv_general_dilated(observation.astype(jnp.float32),
                                     raw["conv1_w"], (1, 1), "VALID",
                                     dimension_numbers=dn)
    y = jax.nn.relu(y + raw["conv1_b"].reshape(1, -1, 1, 1))
    y = jax.lax.conv_general_dilated(y, raw["conv2_w"], (1, 1), "VALID",
                                     dimension_numbers=dn)
    y = jax.nn.relu(y + raw["conv2_b"].reshape(1, -1, 1, 1))
    z = jnp.concatenate([y.reshape(y.shape[0], -1),
                         mean_action.astype(jnp.float32)], axis=-1)
    z = jax.nn.relu(z @ raw["l1_w"].T + raw["l1_b"])
    z = jax.nn.relu(z @ raw["l2_w"].T + raw["l2_b"])
    z = jax.nn.relu(z @ raw["l3_w"].T + raw["l3_b"])
    return z @ raw["out_w"].T + raw["out_b"]


# --------------------------- deterministic params --------------------------- #

def init_params(key):
    """Torch-default-style uniform(-1/sqrt(fan_in), 1/sqrt(fan_in)) init."""
    ks = jax.random.split(key, 12)

    def u(k, shape, fan_in):
        bound = 1.0 / np.sqrt(fan_in)
        return jax.random.uniform(k, shape, jnp.float32, -bound, bound)

    return {
        "conv1_w": u(ks[0], (16, 4, 5, 5), 4 * 25),     # OIHW
        "conv1_b": u(ks[1], (16,), 4 * 25),
        "conv2_w": u(ks[2], (16, 16, 5, 5), 16 * 25),
        "conv2_b": u(ks[3], (16,), 16 * 25),
        "l1_w":   u(ks[4], (256, 1025), 1025),          # torch [out, in]
        "l1_b":   u(ks[5], (256,), 1025),
        "l2_w":   u(ks[6], (256, 256), 256),
        "l2_b":   u(ks[7], (256,), 256),
        "l3_w":   u(ks[8], (256, 256), 256),
        "l3_b":   u(ks[9], (256,), 256),
        "out_w":  u(ks[10], (5, 256), 256),
        "out_b":  u(ks[11], (5,), 256),
    }


# ----------------------------------- main ----------------------------------- #

if __name__ == "__main__":
    key = jax.random.PRNGKey(0)
    pkey, okey, mkey = jax.random.split(key, 3)

    raw = init_params(pkey)
    params = prepare_params(raw)          # one-time weight prep, outside jit

    B = 2
    observation = jax.random.normal(okey, (B, 4, 16, 16), jnp.float32)  # NCHW
    mean_action = jax.random.uniform(mkey, (B, 1), jnp.float32)

    fwd = jax.jit(model_forward)
    q_values = fwd(params, observation, mean_action)
    jax.block_until_ready(q_values)

    assert q_values.shape == (B, 5)
    assert bool(jnp.all(jnp.isfinite(q_values)))

    # correctness check against a plain-JAX reference (bf16 weights vs f32 ref)
    q_ref = reference_forward(raw, observation, mean_action)
    max_err = float(jnp.max(jnp.abs(q_values - q_ref)))
    assert bool(jnp.allclose(q_values, q_ref, rtol=5e-2, atol=5e-2)), max_err

    print("KERNEL_OK")
</pallas_src>

<mosaic_0001>
module attributes {stable_mosaic.version = 11 : i64} {
  func.func @fused_forward_kernel(%arg0: memref<16x2x64xf32, #tpu.memory_space<vmem>>, %arg1: memref<2x1xf32, #tpu.memory_space<vmem>>, %arg2: memref<320x192xbf16, #tpu.memory_space<vmem>>, %arg3: memref<1x192xf32, #tpu.memory_space<vmem>>, %arg4: memref<960x128xbf16, #tpu.memory_space<vmem>>, %arg5: memref<1x128xf32, #tpu.memory_space<vmem>>, %arg6: memref<8x128x256xbf16, #tpu.memory_space<vmem>>, %arg7: memref<1x256xf32, #tpu.memory_space<vmem>>, %arg8: memref<1x256xf32, #tpu.memory_space<vmem>>, %arg9: memref<256x256xbf16, #tpu.memory_space<vmem>>, %arg10: memref<1x256xf32, #tpu.memory_space<vmem>>, %arg11: memref<256x256xbf16, #tpu.memory_space<vmem>>, %arg12: memref<1x256xf32, #tpu.memory_space<vmem>>, %arg13: memref<256x128xf32, #tpu.memory_space<vmem>>, %arg14: memref<1x128xf32, #tpu.memory_space<vmem>>, %arg15: memref<2x128xf32, #tpu.memory_space<vmem>>, %arg16: memref<12x2x192xf32, #tpu.memory_space<vmem>>) attributes {dimension_semantics = [], scalar_prefetch = 0 : i64, scratch_operands = 1 : i64, tpu.core_type = #tpu.core_type<tc>} {
    %c0 = arith.constant 0 : index
    %c0_0 = arith.constant 0 : index
    %c0_1 = arith.constant 0 : index
    %0 = vector.load %arg0[%c0, %c0_0, %c0_1] : memref<16x2x64xf32, #tpu.memory_space<vmem>>, vector<1x2x64xf32>
    %1 = vector.shape_cast %0 : vector<1x2x64xf32> to vector<2x64xf32>
    %c1 = arith.constant 1 : index
    %c0_2 = arith.constant 0 : index
    %c0_3 = arith.constant 0 : index
    %2 = vector.load %arg0[%c1, %c0_2, %c0_3] : memref<16x2x64xf32, #tpu.memory_space<vmem>>, vector<1x2x64xf32>
    %3 = vector.shape_cast %2 : vector<1x2x64xf32> to vector<2x64xf32>
    %c2 = arith.constant 2 : index
    %c0_4 = arith.constant 0 : index
    %c0_5 = arith.constant 0 : index
    %4 = vector.load %arg0[%c2, %c0_4, %c0_5] : memref<16x2x64xf32, #tpu.memory_space<vmem>>, vector<1x2x64xf32>
    %5 = vector.shape_cast %4 : vector<1x2x64xf32> to vector<2x64xf32>
    %c3 = arith.constant 3 : index
    %c0_6 = arith.constant 0 : index
    %c0_7 = arith.constant 0 : index
    %6 = vector.load %arg0[%c3, %c0_6, %c0_7] : memref<16x2x64xf32, #tpu.memory_space<vmem>>, vector<1x2x64xf32>
    %7 = vector.shape_cast %6 : vector<1x2x64xf32> to vector<2x64xf32>
    %c4 = arith.constant 4 : index
    %c0_8 = arith.constant 0 : index
    %c0_9 = arith.constant 0 : index
    %8 = vector.load %arg0[%c4, %c0_8, %c0_9] : memref<16x2x64xf32, #tpu.memory_space<vmem>>, vector<1x2x64xf32>
    %9 = vector.shape_cast %8 : vector<1x2x64xf32> to vector<2x64xf32>
    %10 = tpu.concatenate %1, %3, %5, %7, %9 in 1 : vector<2x64xf32>, vector<2x64xf32>, vector<2x64xf32>, vector<2x64xf32>, vector<2x64xf32> -> vector<2x320xf32>
    %11 = arith.truncf %10 : vector<2x320xf32> to vector<2x320xbf16>
    %c0_10 = arith.constant 0 : index
    %c0_11 = arith.constant 0 : index
    %12 = vector.load %arg2[%c0_10, %c0_11] : memref<320x192xbf16, #tpu.memory_space<vmem>>, vector<320x192xbf16>
    %cst = arith.constant dense<0.000000e+00> : vector<2x192xf32>
    %13 = tpu.matmul %11, %12, %cst {dimension_numbers = #tpu.dot_dimension_numbers<[1], [0], [0], [1], [0, 0, 1, 1], [], []>} : vector<2x320xbf16>, vector<320x192xbf16>, vector<2x192xf32> -> vector<2x192xf32>
    %c0_12 = arith.constant 0 : index
    %c0_13 = arith.constant 0 : index
    %14 = vector.load %arg3[%c0_12, %c0_13] : memref<1x192xf32, #tpu.memory_space<vmem>>, vector<1x192xf32>
    %15 = vector.broadcast %14 : vector<1x192xf32> to vector<2x192xf32>
    %16 = arith.addf %13, %15 : vector<2x192xf32>
    %cst_14 = arith.constant 0.000000e+00 : f32
    %17 = vector.broadcast %cst_14 : f32 to vector<2x192xf32>
    %18 = arith.maximumf %16, %17 : vector<2x192xf32>
    %c0_15 = arith.constant 0 : index
    %c0_16 = arith.constant 0 : index
    %c0_17 = arith.constant 0 : index
    %19 = vector.load %arg16[%c0_15, %c0_16, %c0_17] : memref<12x2x192xf32, #tpu.memory_space<vmem>>, vector<1x2x192xf32>
    %20 = vector.shape_cast %19 : vector<1x2x192xf32> to vector<2x192xf32>
    %21 = vector.shape_cast %18 : vector<2x192xf32> to vector<1x2x192xf32>
    tpu.vector_store %arg16[%c0_15, %c0_16, %c0_17], %21 {strides = array<i32>} : memref<12x2x192xf32, #tpu.memory_space<vmem>>, vector<1x2x192xf32>,
    %c1_18 = arith.constant 1 : index
    %c0_19 = arith.constant 0 : index
    %c0_20 = arith.constant 0 : index
    %22 = vector.load %arg0[%c1_18, %c0_19, %c0_20] : memref<16x2x64xf32, #tpu.memory_space<vmem>>, vector<1x2x64xf32>
    %23 = vector.shape_cast %22 : vector<1x2x64xf32> to vector<2x64xf32>
    %c2_21 = arith.constant 2 : index
    %c0_22 = arith.constant 0 : index
    %c0_23 = arith.constant 0 : index
    %24 = vector.load %arg0[%c2_21, %c0_22, %c0_23] : memref<16x2x64xf32, #tpu.memory_space<vmem>>, vector<1x2x64xf32>
    %25 = vector.shape_cast %24 : vector<1x2x64xf32> to vector<2x64xf32>
    %c3_24 = arith.constant 3 : index
    %c0_25 = arith.constant 0 : index
    %c0_26 = arith.constant 0 : index
    %26 = vector.load %arg0[%c3_24, %c0_25, %c0_26] : memref<16x2x64xf32, #tpu.memory_space<vmem>>, vector<1x2x64xf32>
    %27 = vector.shape_cast %26 : vector<1x2x64xf32> to vector<2x64xf32>
    %c4_27 = arith.constant 4 : index
    %c0_28 = arith.constant 0 : index
    %c0_29 = arith.constant 0 : index
    %28 = vector.load %arg0[%c4_27, %c0_28, %c0_29] : memref<16x2x64xf32, #tpu.memory_space<vmem>>, vector<1x2x64xf32>
    %29 = vector.shape_cast %28 : vector<1x2x64xf32> to vector<2x64xf32>
    %c5 = arith.constant 5 : index
    %c0_30 = arith.constant 0 : index
    %c0_31 = arith.constant 0 : index
    %30 = vector.load %arg0[%c5, %c0_30, %c0_31] : memref<16x2x64xf32, #tpu.memory_space<vmem>>, vector<1x2x64xf32>
    %31 = vector.shape_cast %30 : vector<1x2x64xf32> to vector<2x64xf32>
    %32 = tpu.concatenate %23, %25, %27, %29, %31 in 1 : vector<2x64xf32>, vector<2x64xf32>, vector<2x64xf32>, vector<2x64xf32>, vector<2x64xf32> -> vector<2x320xf32>
    %33 = arith.truncf %32 : vector<2x320xf32> to vector<2x320xbf16>
    %c0_32 = arith.constant 0 : index
    %c0_33 = arith.constant 0 : index
    %34 = vector.load %arg2[%c0_32, %c0_33] : memref<320x192xbf16, #tpu.memory_space<vmem>>, vector<320x192xbf16>
    %cst_34 = arith.constant dense<0.000000e+00> : vector<2x192xf32>
    %35 = tpu.matmul %33, %34, %cst_34 {dimension_numbers = #tpu.dot_dimension_numbers<[1], [0], [0], [1], [0, 0, 1, 1], [], []>} : vector<2x320xbf16>, vector<320x192xbf16>, vector<2x192xf32> -> vector<2x192xf32>
    %c0_35 = arith.constant 0 : index
    %c0_36 = arith.constant 0 : index
    %36 = vector.load %arg3[%c0_35, %c0_36] : memref<1x192xf32, #tpu.memory_space<vmem>>, vector<1x192xf32>
    %37 = vector.broadcast %36 : vector<1x192xf32> to vector<2x192xf32>
    %38 = arith.addf %35, %37 : vector<2x192xf32>
    %cst_37 = arith.constant 0.000000e+00 : f32
    %39 = vector.broadcast %cst_37 : f32 to vector<2x192xf32>
    %40 = arith.maximumf %38, %39 : vector<2x192xf32>
    %c1_38 = arith.constant 1 : index
    %c0_39 = arith.constant 0 : index
    %c0_40 = arith.constant 0 : index
    %41 = vector.load %arg16[%c1_38, %c0_39, %c0_40] : memref<12x2x192xf32, #tpu.memory_space<vmem>>, vector<1x2x192xf32>
    %42 = vector.shape_cast %41 : vector<1x2x192xf32> to vector<2x192xf32>
    %43 = vector.shape_cast %40 : vector<2x192xf32> to vector<1x2x192xf32>
    tpu.vector_store %arg16[%c1_38, %c0_39, %c0_40], %43 {strides = array<i32>} : memref<12x2x192xf32, #tpu.memory_space<vmem>>, vector<1x2x192xf32>,
    %c2_41 = arith.constant 2 : index
    %c0_42 = arith.constant 0 : index
    %c0_43 = arith.constant 0 : index
    %44 = vector.load %arg0[%c2_41, %c0_42, %c0_43] : memref<16x2x64xf32, #tpu.memory_space<vmem>>, vector<1x2x64xf32>
    %45 = vector.shape_cast %44 : vector<1x2x64xf32> to vector<2x64xf32>
    %c3_44 = arith.constant 3 : index
    %c0_45 = arith.constant 0 : index
    %c0_46 = arith.constant 0 : index
    %46 = vector.load %arg0[%c3_44, %c0_45, %c0_46] : memref<16x2x64xf32, #tpu.memory_space<vmem>>, vector<1x2x64xf32>
    %47 = vector.shape_cast %46 : vector<1x2x64xf32> to vector<2x64xf32>
    %c4_47 = arith.constant 4 : index
    %c0_48 = arith.constant 0 : index
    %c0_49 = arith.constant 0 : index
    %48 = vector.load %arg0[%c4_47, %c0_48, %c0_49] : memref<16x2x64xf32, #tpu.memory_space<vmem>>, vector<1x2x64xf32>
    %49 = vector.shape_cast %48 : vector<1x2x64xf32> to vector<2x64xf32>
    %c5_50 = arith.constant 5 : index
    %c0_51 = arith.constant 0 : index
    %c0_52 = arith.constant 0 : index
    %50 = vector.load %arg0[%c5_50, %c0_51, %c0_52] : memref<16x2x64xf32, #tpu.memory_space<vmem>>, vector<1x2x64xf32>
    %51 = vector.shape_cast %50 : vector<1x2x64xf32> to vector<2x64xf32>
    %c6 = arith.constant 6 : index
    %c0_53 = arith.constant 0 : index
    %c0_54 = arith.constant 0 : index
    %52 = vector.load %arg0[%c6, %c0_53, %c0_54] : memref<16x2x64xf32, #tpu.memory_space<vmem>>, vector<1x2x64xf32>
    %53 = vector.shape_cast %52 : vector<1x2x64xf32> to vector<2x64xf32>
    %54 = tpu.concatenate %45, %47, %49, %51, %53 in 1 : vector<2x64xf32>, vector<2x64xf32>, vector<2x64xf32>, vector<2x64xf32>, vector<2x64xf32> -> vector<2x320xf32>
    %55 = arith.truncf %54 : vector<2x320xf32> to vector<2x320xbf16>
    %c0_55 = arith.constant 0 : index
    %c0_56 = arith.constant 0 : index
    %56 = vector.load %arg2[%c0_55, %c0_56] : memref<320x192xbf16, #tpu.memory_space<vmem>>, vector<320x192xbf16>
    %cst_57 = arith.constant dense<0.000000e+00> : vector<2x192xf32>
    %57 = tpu.matmul %55, %56, %cst_57 {dimension_numbers = #tpu.dot_dimension_numbers<[1], [0], [0], [1], [0, 0, 1, 1], [], []>} : vector<2x320xbf16>, vector<320x192xbf16>, vector<2x192xf32> -> vector<2x192xf32>
    %c0_58 = arith.constant 0 : index
    %c0_59 = arith.constant 0 : index
    %58 = vector.load %arg3[%c0_58, %c0_59] : memref<1x192xf32, #tpu.memory_space<vmem>>, vector<1x192xf32>
    %59 = vector.broadcast %58 : vector<1x192xf32> to vector<2x192xf32>
    %60 = arith.addf %57, %59 : vector<2x192xf32>
    %cst_60 = arith.constant 0.000000e+00 : f32
    %61 = vector.broadcast %cst_60 : f32 to vector<2x192xf32>
    %62 = arith.maximumf %60, %61 : vector<2x192xf32>
    %c2_61 = arith.constant 2 : index
    %c0_62 = arith.constant 0 : index
    %c0_63 = arith.constant 0 : index
    %63 = vector.load %arg16[%c2_61, %c0_62, %c0_63] : memref<12x2x192xf32, #tpu.memory_space<vmem>>, vector<1x2x192xf32>
    %64 = vector.shape_cast %63 : vector<1x2x192xf32> to vector<2x192xf32>
    %65 = vector.shape_cast %62 : vector<2x192xf32> to vector<1x2x192xf32>
    tpu.vector_store %arg16[%c2_61, %c0_62, %c0_63], %65 {strides = array<i32>} : memref<12x2x192xf32, #tpu.memory_space<vmem>>, vector<1x2x192xf32>,
    %c3_64 = arith.constant 3 : index
    %c0_65 = arith.constant 0 : index
    %c0_66 = arith.constant 0 : index
    %66 = vector.load %arg0[%c3_64, %c0_65, %c0_66] : memref<16x2x64xf32, #tpu.memory_space<vmem>>, vector<1x2x64xf32>
    %67 = vector.shape_cast %66 : vector<1x2x64xf32> to vector<2x64xf32>
    %c4_67 = arith.constant 4 : index
    %c0_68 = arith.constant 0 : index
    %c0_69 = arith.constant 0 : index
    %68 = vector.load %arg0[%c4_67, %c0_68, %c0_69] : memref<16x2x64xf32, #tpu.memory_space<vmem>>, vector<1x2x64xf32>
    %69 = vector.shape_cast %68 : vector<1x2x64xf32> to vector<2x64xf32>
    %c5_70 = arith.constant 5 : index
    %c0_71 = arith.constant 0 : index
    %c0_72 = arith.constant 0 : index
    %70 = vector.load %arg0[%c5_70, %c0_71, %c0_72] : memref<16x2x64xf32, #tpu.memory_space<vmem>>, vector<1x2x64xf32>
    %71 = vector.shape_cast %70 : vector<1x2x64xf32> to vector<2x64xf32>
    %c6_73 = arith.constant 6 : index
    %c0_74 = arith.constant 0 : index
    %c0_75 = arith.constant 0 : index
    %72 = vector.load %arg0[%c6_73, %c0_74, %c0_75] : memref<16x2x64xf32, #tpu.memory_space<vmem>>, vector<1x2x64xf32>
    %73 = vector.shape_cast %72 : vector<1x2x64xf32> to vector<2x64xf32>
    %c7 = arith.constant 7 : index
    %c0_76 = arith.constant 0 : index
    %c0_77 = arith.constant 0 : index
    %74 = vector.load %arg0[%c7, %c0_76, %c0_77] : memref<16x2x64xf32, #tpu.memory_space<vmem>>, vector<1x2x64xf32>
    %75 = vector.shape_cast %74 : vector<1x2x64xf32> to vector<2x64xf32>
    %76 = tpu.concatenate %67, %69, %71, %73, %75 in 1 : vector<2x64xf32>, vector<2x64xf32>, vector<2x64xf32>, vector<2x64xf32>, vector<2x64xf32> -> vector<2x320xf32>
    %77 = arith.truncf %76 : vector<2x320xf32> to vector<2x320xbf16>
    %c0_78 = arith.constant 0 : index
    %c0_79 = arith.constant 0 : index
    %78 = vector.load %arg2[%c0_78, %c0_79] : memref<320x192xbf16, #tpu.memory_space<vmem>>, vector<320x192xbf16>
    %cst_80 = arith.constant dense<0.000000e+00> : vector<2x192xf32>
    %79 = tpu.matmul %77, %78, %cst_80 {dimension_numbers = #tpu.dot_dimension_numbers<[1], [0], [0], [1], [0, 0, 1, 1], [], []>} : vector<2x320xbf16>, vector<320x192xbf16>, vector<2x192xf32> -> vector<2x192xf32>
    %c0_81 = arith.constant 0 : index
    %c0_82 = arith.constant 0 : index
    %80 = vector.load %arg3[%c0_81, %c0_82] : memref<1x192xf32, #tpu.memory_space<vmem>>, vector<1x192xf32>
    %81 = vector.broadcast %80 : vector<1x192xf32> to vector<2x192xf32>
    %82 = arith.addf %79, %81 : vector<2x192xf32>
    %cst_83 = arith.constant 0.000000e+00 : f32
    %83 = vector.broadcast %cst_83 : f32 to vector<2x192xf32>
    %84 = arith.maximumf %82, %83 : vector<2x192xf32>
    %c3_84 = arith.constant 3 : index
    %c0_85 = arith.constant 0 : index
    %c0_86 = arith.constant 0 : index
    %85 = vector.load %arg16[%c3_84, %c0_85, %c0_86] : memref<12x2x192xf32, #tpu.memory_space<vmem>>, vector<1x2x192xf32>
    %86 = vector.shape_cast %85 : vector<1x2x192xf32> to vector<2x192xf32>
    %87 = vector.shape_cast %84 : vector<2x192xf32> to vector<1x2x192xf32>
    tpu.vector_store %arg16[%c3_84, %c0_85, %c0_86], %87 {strides = array<i32>} : memref<12x2x192xf32, #tpu.memory_space<vmem>>, vector<1x2x192xf32>,
    %c4_87 = arith.constant 4 : index
    %c0_88 = arith.constant 0 : index
    %c0_89 = arith.constant 0 : index
    %88 = vector.load %arg0[%c4_87, %c0_88, %c0_89] : memref<16x2x64xf32, #tpu.memory_space<vmem>>, vector<1x2x64xf32>
    %89 = vector.shape_cast %88 : vector<1x2x64xf32> to vector<2x64xf32>
    %c5_90 = arith.constant 5 : index
    %c0_91 = arith.constant 0 : index
    %c0_92 = arith.constant 0 : index
    %90 = vector.load %arg0[%c5_90, %c0_91, %c0_92] : memref<16x2x64xf32, #tpu.memory_space<vmem>>, vector<1x2x64xf32>
    %91 = vector.shape_cast %90 : vector<1x2x64xf32> to vector<2x64xf32>
    %c6_93 = arith.constant 6 : index
    %c0_94 = arith.constant 0 : index
    %c0_95 = arith.constant 0 : index
    %92 = vector.load %arg0[%c6_93, %c0_94, %c0_95] : memref<16x2x64xf32, #tpu.memory_space<vmem>>, vector<1x2x64xf32>
    %93 = vector.shape_cast %92 : vector<1x2x64xf32> to vector<2x64xf32>
    %c7_96 = arith.constant 7 : index
    %c0_97 = arith.constant 0 : index
    %c0_98 = arith.constant 0 : index
    %94 = vector.load %arg0[%c7_96, %c0_97, %c0_98] : memref<16x2x64xf32, #tpu.memory_space<vmem>>, vector<1x2x64xf32>
    %95 = vector.shape_cast %94 : vector<1x2x64xf32> to vector<2x64xf32>
    %c8 = arith.constant 8 : index
    %c0_99 = arith.constant 0 : index
    %c0_100 = arith.constant 0 : index
    %96 = vector.load %arg0[%c8, %c0_99, %c0_100] : memref<16x2x64xf32, #tpu.memory_space<vmem>>, vector<1x2x64xf32>
    %97 = vector.shape_cast %96 : vector<1x2x64xf32> to vector<2x64xf32>
    %98 = tpu.concatenate %89, %91, %93, %95, %97 in 1 : vector<2x64xf32>, vector<2x64xf32>, vector<2x64xf32>, vector<2x64xf32>, vector<2x64xf32> -> vector<2x320xf32>
    %99 = arith.truncf %98 : vector<2x320xf32> to vector<2x320xbf16>
    %c0_101 = arith.constant 0 : index
    %c0_102 = arith.constant 0 : index
    %100 = vector.load %arg2[%c0_101, %c0_102] : memref<320x192xbf16, #tpu.memory_space<vmem>>, vector<320x192xbf16>
    %cst_103 = arith.constant dense<0.000000e+00> : vector<2x192xf32>
    %101 = tpu.matmul %99, %100, %cst_103 {dimension_numbers = #tpu.dot_dimension_numbers<[1], [0], [0], [1], [0, 0, 1, 1], [], []>} : vector<2x320xbf16>, vector<320x192xbf16>, vector<2x192xf32> -> vector<2x192xf32>
    %c0_104 = arith.constant 0 : index
    %c0_105 = arith.constant 0 : index
    %102 = vector.load %arg3[%c0_104, %c0_105] : memref<1x192xf32, #tpu.memory_space<vmem>>, vector<1x192xf32>
    %103 = vector.broadcast %102 : vector<1x192xf32> to vector<2x192xf32>
    %104 = arith.addf %101, %103 : vector<2x192xf32>
    %cst_106 = arith.constant 0.000000e+00 : f32
    %105 = vector.broadcast %cst_106 : f32 to vector<2x192xf32>
    %106 = arith.maximumf %104, %105 : vector<2x192xf32>
    %c4_107 = arith.constant 4 : index
    %c0_108 = arith.constant 0 : index
    %c0_109 = arith.constant 0 : index
    %107 = vector.load %arg16[%c4_107, %c0_108, %c0_109] : memref<12x2x192xf32, #tpu.memory_space<vmem>>, vector<1x2x192xf32>
    %108 = vector.shape_cast %107 : vector<1x2x192xf32> to vector<2x192xf32>
    %109 = vector.shape_cast %106 : vector<2x192xf32> to vector<1x2x192xf32>
    tpu.vector_store %arg16[%c4_107, %c0_108, %c0_109], %109 {strides = array<i32>} : memref<12x2x192xf32, #tpu.memory_space<vmem>>, vector<1x2x192xf32>,
    %c5_110 = arith.constant 5 : index
    %c0_111 = arith.constant 0 : index
    %c0_112 = arith.constant 0 : index
    %110 = vector.load %arg0[%c5_110, %c0_111, %c0_112] : memref<16x2x64xf32, #tpu.memory_space<vmem>>, vector<1x2x64xf32>
    %111 = vector.shape_cast %110 : vector<1x2x64xf32> to vector<2x64xf32>
    %c6_113 = arith.constant 6 : index
    %c0_114 = arith.constant 0 : index
    %c0_115 = arith.constant 0 : index
    %112 = vector.load %arg0[%c6_113, %c0_114, %c0_115] : memref<16x2x64xf32, #tpu.memory_space<vmem>>, vector<1x2x64xf32>
    %113 = vector.shape_cast %112 : vector<1x2x64xf32> to vector<2x64xf32>
    %c7_116 = arith.constant 7 : index
    %c0_117 = arith.constant 0 : index
    %c0_118 = arith.constant 0 : index
    %114 = vector.load %arg0[%c7_116, %c0_117, %c0_118] : memref<16x2x64xf32, #tpu.memory_space<vmem>>, vector<1x2x64xf32>
    %115 = vector.shape_cast %114 : vector<1x2x64xf32> to vector<2x64xf32>
    %c8_119 = arith.constant 8 : index
    %c0_120 = arith.constant 0 : index
    %c0_121 = arith.constant 0 : index
    %116 = vector.load %arg0[%c8_119, %c0_120, %c0_121] : memref<16x2x64xf32, #tpu.memory_space<vmem>>, vector<1x2x64xf32>
    %117 = vector.shape_cast %116 : vector<1x2x64xf32> to vector<2x64xf32>
    %c9 = arith.constant 9 : index
    %c0_122 = arith.constant 0 : index
    %c0_123 = arith.constant 0 : index
    %118 = vector.load %arg0[%c9, %c0_122, %c0_123] : memref<16x2x64xf32, #tpu.memory_space<vmem>>, vector<1x2x64xf32>
    %119 = vector.shape_cast %118 : vector<1x2x64xf32> to vector<2x64xf32>
    %120 = tpu.concatenate %111, %113, %115, %117, %119 in 1 : vector<2x64xf32>, vector<2x64xf32>, vector<2x64xf32>, vector<2x64xf32>, vector<2x64xf32> -> vector<2x320xf32>
    %121 = arith.truncf %120 : vector<2x320xf32> to vector<2x320xbf16>
    %c0_124 = arith.constant 0 : index
    %c0_125 = arith.constant 0 : index
    %122 = vector.load %arg2[%c0_124, %c0_125] : memref<320x192xbf16, #tpu.memory_space<vmem>>, vector<320x192xbf16>
    %cst_126 = arith.constant dense<0.000000e+00> : vector<2x192xf32>
    %123 = tpu.matmul %121, %122, %cst_126 {dimension_numbers = #tpu.dot_dimension_numbers<[1], [0], [0], [1], [0, 0, 1, 1], [], []>} : vector<2x320xbf16>, vector<320x192xbf16>, vector<2x192xf32> -> vector<2x192xf32>
    %c0_127 = arith.constant 0 : index
    %c0_128 = arith.constant 0 : index
    %124 = vector.load %arg3[%c0_127, %c0_128] : memref<1x192xf32, #tpu.memory_space<vmem>>, vector<1x192xf32>
    %125 = vector.broadcast %124 : vector<1x192xf32> to vector<2x192xf32>
    %126 = arith.addf %123, %125 : vector<2x192xf32>
    %cst_129 = arith.constant 0.000000e+00 : f32
    %127 = vector.broadcast %cst_129 : f32 to vector<2x192xf32>
    %128 = arith.maximumf %126, %127 : vector<2x192xf32>
    %c5_130 = arith.constant 5 : index
    %c0_131 = arith.constant 0 : index
    %c0_132 = arith.constant 0 : index
    %129 = vector.load %arg16[%c5_130, %c0_131, %c0_132] : memref<12x2x192xf32, #tpu.memory_space<vmem>>, vector<1x2x192xf32>
    %130 = vector.shape_cast %129 : vector<1x2x192xf32> to vector<2x192xf32>
    %131 = vector.shape_cast %128 : vector<2x192xf32> to vector<1x2x192xf32>
    tpu.vector_store %arg16[%c5_130, %c0_131, %c0_132], %131 {strides = array<i32>} : memref<12x2x192xf32, #tpu.memory_space<vmem>>, vector<1x2x192xf32>,
    %c6_133 = arith.constant 6 : index
    %c0_134 = arith.constant 0 : index
    %c0_135 = arith.constant 0 : index
    %132 = vector.load %arg0[%c6_133, %c0_134, %c0_135] : memref<16x2x64xf32, #tpu.memory_space<vmem>>, vector<1x2x64xf32>
    %133 = vector.shape_cast %132 : vector<1x2x64xf32> to vector<2x64xf32>
    %c7_136 = arith.constant 7 : index
    %c0_137 = arith.constant 0 : index
    %c0_138 = arith.constant 0 : index
    %134 = vector.load %arg0[%c7_136, %c0_137, %c0_138] : memref<16x2x64xf32, #tpu.memory_space<vmem>>, vector<1x2x64xf32>
    %135 = vector.shape_cast %134 : vector<1x2x64xf32> to vector<2x64xf32>
    %c8_139 = arith.constant 8 : index
    %c0_140 = arith.constant 0 : index
    %c0_141 = arith.constant 0 : index
    %136 = vector.load %arg0[%c8_139, %c0_140, %c0_141] : memref<16x2x64xf32, #tpu.memory_space<vmem>>, vector<1x2x64xf32>
    %137 = vector.shape_cast %136 : vector<1x2x64xf32> to vector<2x64xf32>
    %c9_142 = arith.constant 9 : index
    %c0_143 = arith.constant 0 : index
    %c0_144 = arith.constant 0 : index
    %138 = vector.load %arg0[%c9_142, %c0_143, %c0_144] : memref<16x2x64xf32, #tpu.memory_space<vmem>>, vector<1x2x64xf32>
    %139 = vector.shape_cast %138 : vector<1x2x64xf32> to vector<2x64xf32>
    %c10 = arith.constant 10 : index
    %c0_145 = arith.constant 0 : index
    %c0_146 = arith.constant 0 : index
    %140 = vector.load %arg0[%c10, %c0_145, %c0_146] : memref<16x2x64xf32, #tpu.memory_space<vmem>>, vector<1x2x64xf32>
    %141 = vector.shape_cast %140 : vector<1x2x64xf32> to vector<2x64xf32>
    %142 = tpu.concatenate %133, %135, %137, %139, %141 in 1 : vector<2x64xf32>, vector<2x64xf32>, vector<2x64xf32>, vector<2x64xf32>, vector<2x64xf32> -> vector<2x320xf32>
    %143 = arith.truncf %142 : vector<2x320xf32> to vector<2x320xbf16>
    %c0_147 = arith.constant 0 : index
    %c0_148 = arith.constant 0 : index
    %144 = vector.load %arg2[%c0_147, %c0_148] : memref<320x192xbf16, #tpu.memory_space<vmem>>, vector<320x192xbf16>
    %cst_149 = arith.constant dense<0.000000e+00> : vector<2x192xf32>
    %145 = tpu.matmul %143, %144, %cst_149 {dimension_numbers = #tpu.dot_dimension_numbers<[1], [0], [0], [1], [0, 0, 1, 1], [], []>} : vector<2x320xbf16>, vector<320x192xbf16>, vector<2x192xf32> -> vector<2x192xf32>
    %c0_150 = arith.constant 0 : index
    %c0_151 = arith.constant 0 : index
    %146 = vector.load %arg3[%c0_150, %c0_151] : memref<1x192xf32, #tpu.memory_space<vmem>>, vector<1x192xf32>
    %147 = vector.broadcast %146 : vector<1x192xf32> to vector<2x192xf32>
    %148 = arith.addf %145, %147 : vector<2x192xf32>
    %cst_152 = arith.constant 0.000000e+00 : f32
    %149 = vector.broadcast %cst_152 : f32 to vector<2x192xf32>
    %150 = arith.maximumf %148, %149 : vector<2x192xf32>
    %c6_153 = arith.constant 6 : index
    %c0_154 = arith.constant 0 : index
    %c0_155 = arith.constant 0 : index
    %151 = vector.load %arg16[%c6_153, %c0_154, %c0_155] : memref<12x2x192xf32, #tpu.memory_space<vmem>>, vector<1x2x192xf32>
    %152 = vector.shape_cast %151 : vector<1x2x192xf32> to vector<2x192xf32>
    %153 = vector.shape_cast %150 : vector<2x192xf32> to vector<1x2x192xf32>
    tpu.vector_store %arg16[%c6_153, %c0_154, %c0_155], %153 {strides = array<i32>} : memref<12x2x192xf32, #tpu.memory_space<vmem>>, vector<1x2x192xf32>,
    %c7_156 = arith.constant 7 : index
    %c0_157 = arith.constant 0 : index
    %c0_158 = arith.constant 0 : index
    %154 = vector.load %arg0[%c7_156, %c0_157, %c0_158] : memref<16x2x64xf32, #tpu.memory_space<vmem>>, vector<1x2x64xf32>
    %155 = vector.shape_cast %154 : vector<1x2x64xf32> to vector<2x64xf32>
    %c8_159 = arith.constant 8 : index
    %c0_160 = arith.constant 0 : index
    %c0_161 = arith.constant 0 : index
    %156 = vector.load %arg0[%c8_159, %c0_160, %c0_161] : memref<16x2x64xf32, #tpu.memory_space<vmem>>, vector<1x2x64xf32>
    %157 = vector.shape_cast %156 : vector<1x2x64xf32> to vector<2x64xf32>
    %c9_162 = arith.constant 9 : index
    %c0_163 = arith.constant 0 : index
    %c0_164 = arith.constant 0 : index
    %158 = vector.load %arg0[%c9_162, %c0_163, %c0_164] : memref<16x2x64xf32, #tpu.memory_space<vmem>>, vector<1x2x64xf32>
    %159 = vector.shape_cast %158 : vector<1x2x64xf32> to vector<2x64xf32>
    %c10_165 = arith.constant 10 : index
    %c0_166 = arith.constant 0 : index
    %c0_167 = arith.constant 0 : index
    %160 = vector.load %arg0[%c10_165, %c0_166, %c0_167] : memref<16x2x64xf32, #tpu.memory_space<vmem>>, vector<1x2x64xf32>
    %161 = vector.shape_cast %160 : vector<1x2x64xf32> to vector<2x64xf32>
    %c11 = arith.constant 11 : index
    %c0_168 = arith.constant 0 : index
    %c0_169 = arith.constant 0 : index
    %162 = vector.load %arg0[%c11, %c0_168, %c0_169] : memref<16x2x64xf32, #tpu.memory_space<vmem>>, vector<1x2x64xf32>
    %163 = vector.shape_cast %162 : vector<1x2x64xf32> to vector<2x64xf32>
    %164 = tpu.concatenate %155, %157, %159, %161, %163 in 1 : vector<2x64xf32>, vector<2x64xf32>, vector<2x64xf32>, vector<2x64xf32>, vector<2x64xf32> -> vector<2x320xf32>
    %165 = arith.truncf %164 : vector<2x320xf32> to vector<2x320xbf16>
    %c0_170 = arith.constant 0 : index
    %c0_171 = arith.constant 0 : index
    %166 = vector.load %arg2[%c0_170, %c0_171] : memref<320x192xbf16, #tpu.memory_space<vmem>>, vector<320x192xbf16>
    %cst_172 = arith.constant dense<0.000000e+00> : vector<2x192xf32>
    %167 = tpu.matmul %165, %166, %cst_172 {dimension_numbers = #tpu.dot_dimension_numbers<[1], [0], [0], [1], [0, 0, 1, 1], [], []>} : vector<2x320xbf16>, vector<320x192xbf16>, vector<2x192xf32> -> vector<2x192xf32>
    %c0_173 = arith.constant 0 : index
    %c0_174 = arith.constant 0 : index
    %168 = vector.load %arg3[%c0_173, %c0_174] : memref<1x192xf32, #tpu.memory_space<vmem>>, vector<1x192xf32>
    %169 = vector.broadcast %168 : vector<1x192xf32> to vector<2x192xf32>
    %170 = arith.addf %167, %169 : vector<2x192xf32>
    %cst_175 = arith.constant 0.000000e+00 : f32
    %171 = vector.broadcast %cst_175 : f32 to vector<2x192xf32>
    %172 = arith.maximumf %170, %171 : vector<2x192xf32>
    %c7_176 = arith.constant 7 : index
    %c0_177 = arith.constant 0 : index
    %c0_178 = arith.constant 0 : index
    %173 = vector.load %arg16[%c7_176, %c0_177, %c0_178] : memref<12x2x192xf32, #tpu.memory_space<vmem>>, vector<1x2x192xf32>
    %174 = vector.shape_cast %173 : vector<1x2x192xf32> to vector<2x192xf32>
    %175 = vector.shape_cast %172 : vector<2x192xf32> to vector<1x2x192xf32>
    tpu.vector_store %arg16[%c7_176, %c0_177, %c0_178], %175 {strides = array<i32>} : memref<12x2x192xf32, #tpu.memory_space<vmem>>, vector<1x2x192xf32>,
    %c8_179 = arith.constant 8 : index
    %c0_180 = arith.constant 0 : index
    %c0_181 = arith.constant 0 : index
    %176 = vector.load %arg0[%c8_179, %c0_180, %c0_181] : memref<16x2x64xf32, #tpu.memory_space<vmem>>, vector<1x2x64xf32>
    %177 = vector.shape_cast %176 : vector<1x2x64xf32> to vector<2x64xf32>
    %c9_182 = arith.constant 9 : index
    %c0_183 = arith.constant 0 : index
    %c0_184 = arith.constant 0 : index
    %178 = vector.load %arg0[%c9_182, %c0_183, %c0_184] : memref<16x2x64xf32, #tpu.memory_space<vmem>>, vector<1x2x64xf32>
    %179 = vector.shape_cast %178 : vector<1x2x64xf32> to vector<2x64xf32>
    %c10_185 = arith.constant 10 : index
    %c0_186 = arith.constant 0 : index
    %c0_187 = arith.constant 0 : index
    %180 = vector.load %arg0[%c10_185, %c0_186, %c0_187] : memref<16x2x64xf32, #tpu.memory_space<vmem>>, vector<1x2x64xf32>
    %181 = vector.shape_cast %180 : vector<1x2x64xf32> to vector<2x64xf32>
    %c11_188 = arith.constant 11 : index
    %c0_189 = arith.constant 0 : index
    %c0_190 = arith.constant 0 : index
    %182 = vector.load %arg0[%c11_188, %c0_189, %c0_190] : memref<16x2x64xf32, #tpu.memory_space<vmem>>, vector<1x2x64xf32>
    %183 = vector.shape_cast %182 : vector<1x2x64xf32> to vector<2x64xf32>
    %c12 = arith.constant 12 : index
    %c0_191 = arith.constant 0 : index
    %c0_192 = arith.constant 0 : index
    %184 = vector.load %arg0[%c12, %c0_191, %c0_192] : memref<16x2x64xf32, #tpu.memory_space<vmem>>, vector<1x2x64xf32>
    %185 = vector.shape_cast %184 : vector<1x2x64xf32> to vector<2x64xf32>
    %186 = tpu.concatenate %177, %179, %181, %183, %185 in 1 : vector<2x64xf32>, vector<2x64xf32>, vector<2x64xf32>, vector<2x64xf32>, vector<2x64xf32> -> vector<2x320xf32>
    %187 = arith.truncf %186 : vector<2x320xf32> to vector<2x320xbf16>
    %c0_193 = arith.constant 0 : index
    %c0_194 = arith.constant 0 : index
    %188 = vector.load %arg2[%c0_193, %c0_194] : memref<320x192xbf16, #tpu.memory_space<vmem>>, vector<320x192xbf16>
    %cst_195 = arith.constant dense<0.000000e+00> : vector<2x192xf32>
    %189 = tpu.matmul %187, %188, %cst_195 {dimension_numbers = #tpu.dot_dimension_numbers<[1], [0], [0], [1], [0, 0, 1, 1], [], []>} : vector<2x320xbf16>, vector<320x192xbf16>, vector<2x192xf32> -> vector<2x192xf32>
    %c0_196 = arith.constant 0 : index
    %c0_197 = arith.constant 0 : index
    %190 = vector.load %arg3[%c0_196, %c0_197] : memref<1x192xf32, #tpu.memory_space<vmem>>, vector<1x192xf32>
    %191 = vector.broadcast %190 : vector<1x192xf32> to vector<2x192xf32>
    %192 = arith.addf %189, %191 : vector<2x192xf32>
    %cst_198 = arith.constant 0.000000e+00 : f32
    %193 = vector.broadcast %cst_198 : f32 to vector<2x192xf32>
    %194 = arith.maximumf %192, %193 : vector<2x192xf32>
    %c8_199 = arith.constant 8 : index
    %c0_200 = arith.constant 0 : index
    %c0_201 = arith.constant 0 : index
    %195 = vector.load %arg16[%c8_199, %c0_200, %c0_201] : memref<12x2x192xf32, #tpu.memory_space<vmem>>, vector<1x2x192xf32>
    %196 = vector.shape_cast %195 : vector<1x2x192xf32> to vector<2x192xf32>
    %197 = vector.shape_cast %194 : vector<2x192xf32> to vector<1x2x192xf32>
    tpu.vector_store %arg16[%c8_199, %c0_200, %c0_201], %197 {strides = array<i32>} : memref<12x2x192xf32, #tpu.memory_space<vmem>>, vector<1x2x192xf32>,
    %c9_202 = arith.constant 9 : index
    %c0_203 = arith.constant 0 : index
    %c0_204 = arith.constant 0 : index
    %198 = vector.load %arg0[%c9_202, %c0_203, %c0_204] : memref<16x2x64xf32, #tpu.memory_space<vmem>>, vector<1x2x64xf32>
    %199 = vector.shape_cast %198 : vector<1x2x64xf32> to vector<2x64xf32>
    %c10_205 = arith.constant 10 : index
    %c0_206 = arith.constant 0 : index
    %c0_207 = arith.constant 0 : index
    %200 = vector.load %arg0[%c10_205, %c0_206, %c0_207] : memref<16x2x64xf32, #tpu.memory_space<vmem>>, vector<1x2x64xf32>
    %201 = vector.shape_cast %200 : vector<1x2x64xf32> to vector<2x64xf32>
    %c11_208 = arith.constant 11 : index
    %c0_209 = arith.constant 0 : index
    %c0_210 = arith.constant 0 : index
    %202 = vector.load %arg0[%c11_208, %c0_209, %c0_210] : memref<16x2x64xf32, #tpu.memory_space<vmem>>, vector<1x2x64xf32>
    %203 = vector.shape_cast %202 : vector<1x2x64xf32> to vector<2x64xf32>
    %c12_211 = arith.constant 12 : index
    %c0_212 = arith.constant 0 : index
    %c0_213 = arith.constant 0 : index
    %204 = vector.load %arg0[%c12_211, %c0_212, %c0_213] : memref<16x2x64xf32, #tpu.memory_space<vmem>>, vector<1x2x64xf32>
    %205 = vector.shape_cast %204 : vector<1x2x64xf32> to vector<2x64xf32>
    %c13 = arith.constant 13 : index
    %c0_214 = arith.constant 0 : index
    %c0_215 = arith.constant 0 : index
    %206 = vector.load %arg0[%c13, %c0_214, %c0_215] : memref<16x2x64xf32, #tpu.memory_space<vmem>>, vector<1x2x64xf32>
    %207 = vector.shape_cast %206 : vector<1x2x64xf32> to vector<2x64xf32>
    %208 = tpu.concatenate %199, %201, %203, %205, %207 in 1 : vector<2x64xf32>, vector<2x64xf32>, vector<2x64xf32>, vector<2x64xf32>, vector<2x64xf32> -> vector<2x320xf32>
    %209 = arith.truncf %208 : vector<2x320xf32> to vector<2x320xbf16>
    %c0_216 = arith.constant 0 : index
    %c0_217 = arith.constant 0 : index
    %210 = vector.load %arg2[%c0_216, %c0_217] : memref<320x192xbf16, #tpu.memory_space<vmem>>, vector<320x192xbf16>
    %cst_218 = arith.constant dense<0.000000e+00> : vector<2x192xf32>
    %211 = tpu.matmul %209, %210, %cst_218 {dimension_numbers = #tpu.dot_dimension_numbers<[1], [0], [0], [1], [0, 0, 1, 1], [], []>} : vector<2x320xbf16>, vector<320x192xbf16>, vector<2x192xf32> -> vector<2x192xf32>
    %c0_219 = arith.constant 0 : index
    %c0_220 = arith.constant 0 : index
    %212 = vector.load %arg3[%c0_219, %c0_220] : memref<1x192xf32, #tpu.memory_space<vmem>>, vector<1x192xf32>
    %213 = vector.broadcast %212 : vector<1x192xf32> to vector<2x192xf32>
    %214 = arith.addf %211, %213 : vector<2x192xf32>
    %cst_221 = arith.constant 0.000000e+00 : f32
    %215 = vector.broadcast %cst_221 : f32 to vector<2x192xf32>
    %216 = arith.maximumf %214, %215 : vector<2x192xf32>
    %c9_222 = arith.constant 9 : index
    %c0_223 = arith.constant 0 : index
    %c0_224 = arith.constant 0 : index
    %217 = vector.load %arg16[%c9_222, %c0_223, %c0_224] : memref<12x2x192xf32, #tpu.memory_space<vmem>>, vector<1x2x192xf32>
    %218 = vector.shape_cast %217 : vector<1x2x192xf32> to vector<2x192xf32>
    %219 = vector.shape_cast %216 : vector<2x192xf32> to vector<1x2x192xf32>
    tpu.vector_store %arg16[%c9_222, %c0_223, %c0_224], %219 {strides = array<i32>} : memref<12x2x192xf32, #tpu.memory_space<vmem>>, vector<1x2x192xf32>,
    %c10_225 = arith.constant 10 : index
    %c0_226 = arith.constant 0 : index
    %c0_227 = arith.constant 0 : index
    %220 = vector.load %arg0[%c10_225, %c0_226, %c0_227] : memref<16x2x64xf32, #tpu.memory_space<vmem>>, vector<1x2x64xf32>
    %221 = vector.shape_cast %220 : vector<1x2x64xf32> to vector<2x64xf32>
    %c11_228 = arith.constant 11 : index
    %c0_229 = arith.constant 0 : index
    %c0_230 = arith.constant 0 : index
    %222 = vector.load %arg0[%c11_228, %c0_229, %c0_230] : memref<16x2x64xf32, #tpu.memory_space<vmem>>, vector<1x2x64xf32>
    %223 = vector.shape_cast %222 : vector<1x2x64xf32> to vector<2x64xf32>
    %c12_231 = arith.constant 12 : index
    %c0_232 = arith.constant 0 : index
    %c0_233 = arith.constant 0 : index
    %224 = vector.load %arg0[%c12_231, %c0_232, %c0_233] : memref<16x2x64xf32, #tpu.memory_space<vmem>>, vector<1x2x64xf32>
    %225 = vector.shape_cast %224 : vector<1x2x64xf32> to vector<2x64xf32>
    %c13_234 = arith.constant 13 : index
    %c0_235 = arith.constant 0 : index
    %c0_236 = arith.constant 0 : index
    %226 = vector.load %arg0[%c13_234, %c0_235, %c0_236] : memref<16x2x64xf32, #tpu.memory_space<vmem>>, vector<1x2x64xf32>
    %227 = vector.shape_cast %226 : vector<1x2x64xf32> to vector<2x64xf32>
    %c14 = arith.constant 14 : index
    %c0_237 = arith.constant 0 : index
    %c0_238 = arith.constant 0 : index
    %228 = vector.load %arg0[%c14, %c0_237, %c0_238] : memref<16x2x64xf32, #tpu.memory_space<vmem>>, vector<1x2x64xf32>
    %229 = vector.shape_cast %228 : vector<1x2x64xf32> to vector<2x64xf32>
    %230 = tpu.concatenate %221, %223, %225, %227, %229 in 1 : vector<2x64xf32>, vector<2x64xf32>, vector<2x64xf32>, vector<2x64xf32>, vector<2x64xf32> -> vector<2x320xf32>
    %231 = arith.truncf %230 : vector<2x320xf32> to vector<2x320xbf16>
    %c0_239 = arith.constant 0 : index
    %c0_240 = arith.constant 0 : index
    %232 = vector.load %arg2[%c0_239, %c0_240] : memref<320x192xbf16, #tpu.memory_space<vmem>>, vector<320x192xbf16>
    %cst_241 = arith.constant dense<0.000000e+00> : vector<2x192xf32>
    %233 = tpu.matmul %231, %232, %cst_241 {dimension_numbers = #tpu.dot_dimension_numbers<[1], [0], [0], [1], [0, 0, 1, 1], [], []>} : vector<2x320xbf16>, vector<320x192xbf16>, vector<2x192xf32> -> vector<2x192xf32>
    %c0_242 = arith.constant 0 : index
    %c0_243 = arith.constant 0 : index
    %234 = vector.load %arg3[%c0_242, %c0_243] : memref<1x192xf32, #tpu.memory_space<vmem>>, vector<1x192xf32>
    %235 = vector.broadcast %234 : vector<1x192xf32> to vector<2x192xf32>
    %236 = arith.addf %233, %235 : vector<2x192xf32>
    %cst_244 = arith.constant 0.000000e+00 : f32
    %237 = vector.broadcast %cst_244 : f32 to vector<2x192xf32>
    %238 = arith.maximumf %236, %237 : vector<2x192xf32>
    %c10_245 = arith.constant 10 : index
    %c0_246 = arith.constant 0 : index
    %c0_247 = arith.constant 0 : index
    %239 = vector.load %arg16[%c10_245, %c0_246, %c0_247] : memref<12x2x192xf32, #tpu.memory_space<vmem>>, vector<1x2x192xf32>
    %240 = vector.shape_cast %239 : vector<1x2x192xf32> to vector<2x192xf32>
    %241 = vector.shape_cast %238 : vector<2x192xf32> to vector<1x2x192xf32>
    tpu.vector_store %arg16[%c10_245, %c0_246, %c0_247], %241 {strides = array<i32>} : memref<12x2x192xf32, #tpu.memory_space<vmem>>, vector<1x2x192xf32>,
    %c11_248 = arith.constant 11 : index
    %c0_249 = arith.constant 0 : index
    %c0_250 = arith.constant 0 : index
    %242 = vector.load %arg0[%c11_248, %c0_249, %c0_250] : memref<16x2x64xf32, #tpu.memory_space<vmem>>, vector<1x2x64xf32>
    %243 = vector.shape_cast %242 : vector<1x2x64xf32> to vector<2x64xf32>
    %c12_251 = arith.constant 12 : index
    %c0_252 = arith.constant 0 : index
    %c0_253 = arith.constant 0 : index
    %244 = vector.load %arg0[%c12_251, %c0_252, %c0_253] : memref<16x2x64xf32, #tpu.memory_space<vmem>>, vector<1x2x64xf32>
    %245 = vector.shape_cast %244 : vector<1x2x64xf32> to vector<2x64xf32>
    %c13_254 = arith.constant 13 : index
    %c0_255 = arith.constant 0 : index
    %c0_256 = arith.constant 0 : index
    %246 = vector.load %arg0[%c13_254, %c0_255, %c0_256] : memref<16x2x64xf32, #tpu.memory_space<vmem>>, vector<1x2x64xf32>
    %247 = vector.shape_cast %246 : vector<1x2x64xf32> to vector<2x64xf32>
    %c14_257 = arith.constant 14 : index
    %c0_258 = arith.constant 0 : index
    %c0_259 = arith.constant 0 : index
    %248 = vector.load %arg0[%c14_257, %c0_258, %c0_259] : memref<16x2x64xf32, #tpu.memory_space<vmem>>, vector<1x2x64xf32>
    %249 = vector.shape_cast %248 : vector<1x2x64xf32> to vector<2x64xf32>
    %c15 = arith.constant 15 : index
    %c0_260 = arith.constant 0 : index
    %c0_261 = arith.constant 0 : index
    %250 = vector.load %arg0[%c15, %c0_260, %c0_261] : memref<16x2x64xf32, #tpu.memory_space<vmem>>, vector<1x2x64xf32>
    %251 = vector.shape_cast %250 : vector<1x2x64xf32> to vector<2x64xf32>
    %252 = tpu.concatenate %243, %245, %247, %249, %251 in 1 : vector<2x64xf32>, vector<2x64xf32>, vector<2x64xf32>, vector<2x64xf32>, vector<2x64xf32> -> vector<2x320xf32>
    %253 = arith.truncf %252 : vector<2x320xf32> to vector<2x320xbf16>
    %c0_262 = arith.constant 0 : index
    %c0_263 = arith.constant 0 : index
    %254 = vector.load %arg2[%c0_262, %c0_263] : memref<320x192xbf16, #tpu.memory_space<vmem>>, vector<320x192xbf16>
    %cst_264 = arith.constant dense<0.000000e+00> : vector<2x192xf32>
    %255 = tpu.matmul %253, %254, %cst_264 {dimension_numbers = #tpu.dot_dimension_numbers<[1], [0], [0], [1], [0, 0, 1, 1], [], []>} : vector<2x320xbf16>, vector<320x192xbf16>, vector<2x192xf32> -> vector<2x192xf32>
    %c0_265 = arith.constant 0 : index
    %c0_266 = arith.constant 0 : index
    %256 = vector.load %arg3[%c0_265, %c0_266] : memref<1x192xf32, #tpu.memory_space<vmem>>, vector<1x192xf32>
    %257 = vector.broadcast %256 : vector<1x192xf32> to vector<2x192xf32>
    %258 = arith.addf %255, %257 : vector<2x192xf32>
    %cst_267 = arith.constant 0.000000e+00 : f32
    %259 = vector.broadcast %cst_267 : f32 to vector<2x192xf32>
    %260 = arith.maximumf %258, %259 : vector<2x192xf32>
    %c11_268 = arith.constant 11 : index
    %c0_269 = arith.constant 0 : index
    %c0_270 = arith.constant 0 : index
    %261 = vector.load %arg16[%c11_268, %c0_269, %c0_270] : memref<12x2x192xf32, #tpu.memory_space<vmem>>, vector<1x2x192xf32>
    %262 = vector.shape_cast %261 : vector<1x2x192xf32> to vector<2x192xf32>
    %263 = vector.shape_cast %260 : vector<2x192xf32> to vector<1x2x192xf32>
    tpu.vector_store %arg16[%c11_268, %c0_269, %c0_270], %263 {strides = array<i32>} : memref<12x2x192xf32, #tpu.memory_space<vmem>>, vector<1x2x192xf32>,
    %c0_271 = arith.constant 0 : index
    %c0_272 = arith.constant 0 : index
    %264 = vector.load %arg1[%c0_271, %c0_272] : memref<2x1xf32, #tpu.memory_space<vmem>>, vector<2x1xf32>
    %c0_273 = arith.constant 0 : index
    %c0_274 = arith.constant 0 : index
    %265 = vector.load %arg7[%c0_273, %c0_274] : memref<1x256xf32, #tpu.memory_space<vmem>>, vector<1x256xf32>
    %266 = vector.broadcast %264 : vector<2x1xf32> to vector<2x256xf32>
    %267 = vector.broadcast %265 : vector<1x256xf32> to vector<2x256xf32>
    %268 = arith.mulf %266, %267 : vector<2x256xf32>
    %c0_275 = arith.constant 0 : index
    %c0_276 = arith.constant 0 : index
    %269 = vector.load %arg8[%c0_275, %c0_276] : memref<1x256xf32, #tpu.memory_space<vmem>>, vector<1x256xf32>
    %270 = vector.broadcast %269 : vector<1x256xf32> to vector<2x256xf32>
    %271 = arith.addf %268, %270 : vector<2x256xf32>
    %c0_277 = arith.constant 0 : index
    %c0_278 = arith.constant 0 : index
    %c0_279 = arith.constant 0 : index
    %272 = vector.load %arg16[%c0_277, %c0_278, %c0_279] : memref<12x2x192xf32, #tpu.memory_space<vmem>>, vector<1x2x192xf32>
    %273 = vector.shape_cast %272 : vector<1x2x192xf32> to vector<2x192xf32>
    %c1_280 = arith.constant 1 : index
    %c0_281 = arith.constant 0 : index
    %c0_282 = arith.constant 0 : index
    %274 = vector.load %arg16[%c1_280, %c0_281, %c0_282] : memref<12x2x192xf32, #tpu.memory_space<vmem>>, vector<1x2x192xf32>
    %275 = vector.shape_cast %274 : vector<1x2x192xf32> to vector<2x192xf32>
    %c2_283 = arith.constant 2 : index
    %c0_284 = arith.constant 0 : index
    %c0_285 = arith.constant 0 : index
    %276 = vector.load %arg16[%c2_283, %c0_284, %c0_285] : memref<12x2x192xf32, #tpu.memory_space<vmem>>, vector<1x2x192xf32>
    %277 = vector.shape_cast %276 : vector<1x2x192xf32> to vector<2x192xf32>
    %c3_286 = arith.constant 3 : index
    %c0_287 = arith.constant 0 : index
    %c0_288 = arith.constant 0 : index
    %278 = vector.load %arg16[%c3_286, %c0_287, %c0_288] : memref<12x2x192xf32, #tpu.memory_space<vmem>>, vector<1x2x192xf32>
    %279 = vector.shape_cast %278 : vector<1x2x192xf32> to vector<2x192xf32>
    %c4_289 = arith.constant 4 : index
    %c0_290 = arith.constant 0 : index
    %c0_291 = arith.constant 0 : index
    %280 = vector.load %arg16[%c4_289, %c0_290, %c0_291] : memref<12x2x192xf32, #tpu.memory_space<vmem>>, vector<1x2x192xf32>
    %281 = vector.shape_cast %280 : vector<1x2x192xf32> to vector<2x192xf32>
    %282 = tpu.concatenate %273, %275, %277, %279, %281 in 1 : vector<2x192xf32>, vector<2x192xf32>, vector<2x192xf32>, vector<2x192xf32>, vector<2x192xf32> -> vector<2x960xf32>
    %283 = arith.truncf %282 : vector<2x960xf32> to vector<2x960xbf16>
    %c0_292 = arith.constant 0 : index
    %c0_293 = arith.constant 0 : index
    %284 = vector.load %arg4[%c0_292, %c0_293] : memref<960x128xbf16, #tpu.memory_space<vmem>>, vector<960x128xbf16>
    %cst_294 = arith.constant dense<0.000000e+00> : vector<2x128xf32>
    %285 = tpu.matmul %283, %284, %cst_294 {dimension_numbers = #tpu.dot_dimension_numbers<[1], [0], [0], [1], [0, 0, 1, 1], [], []>} : vector<2x960xbf16>, vector<960x128xbf16>, vector<2x128xf32> -> vector<2x128xf32>
    %c0_295 = arith.constant 0 : index
    %c0_296 = arith.constant 0 : index
    %286 = vector.load %arg5[%c0_295, %c0_296] : memref<1x128xf32, #tpu.memory_space<vmem>>, vector<1x128xf32>
    %287 = vector.broadcast %286 : vector<1x128xf32> to vector<2x128xf32>
    %288 = arith.addf %285, %287 : vector<2x128xf32>
    %cst_297 = arith.constant 0.000000e+00 : f32
    %289 = vector.broadcast %cst_297 : f32 to vector<2x128xf32>
    %290 = arith.maximumf %288, %289 : vector<2x128xf32>
    %291 = arith.truncf %290 : vector<2x128xf32> to vector<2x128xbf16>
    %c0_298 = arith.constant 0 : index
    %c0_299 = arith.constant 0 : index
    %c0_300 = arith.constant 0 : index
    %292 = vector.load %arg6[%c0_298, %c0_299, %c0_300] : memref<8x128x256xbf16, #tpu.memory_space<vmem>>, vector<1x128x256xbf16>
    %293 = vector.shape_cast %292 : vector<1x128x256xbf16> to vector<128x256xbf16>
    %cst_301 = arith.constant dense<0.000000e+00> : vector<2x256xf32>
    %294 = tpu.matmul %291, %293, %cst_301 {dimension_numbers = #tpu.dot_dimension_numbers<[1], [0], [0], [1], [0, 0, 1, 1], [], []>} : vector<2x128xbf16>, vector<128x256xbf16>, vector<2x256xf32> -> vector<2x256xf32>
    %295 = arith.addf %271, %294 : vector<2x256xf32>
    %c1_302 = arith.constant 1 : index
    %c0_303 = arith.constant 0 : index
    %c0_304 = arith.constant 0 : index
    %296 = vector.load %arg16[%c1_302, %c0_303, %c0_304] : memref<12x2x192xf32, #tpu.memory_space<vmem>>, vector<1x2x192xf32>
    %297 = vector.shape_cast %296 : vector<1x2x192xf32> to vector<2x192xf32>
    %c2_305 = arith.constant 2 : index
    %c0_306 = arith.constant 0 : index
    %c0_307 = arith.constant 0 : index
    %298 = vector.load %arg16[%c2_305, %c0_306, %c0_307] : memref<12x2x192xf32, #tpu.memory_space<vmem>>, vector<1x2x192xf32>
    %299 = vector.shape_cast %298 : vector<1x2x192xf32> to vector<2x192xf32>
    %c3_308 = arith.constant 3 : index
    %c0_309 = arith.constant 0 : index
    %c0_310 = arith.constant 0 : index
    %300 = vector.load %arg16[%c3_308, %c0_309, %c0_310] : memref<12x2x192xf32, #tpu.memory_space<vmem>>, vector<1x2x192xf32>
    %301 = vector.shape_cast %300 : vector<1x2x192xf32> to vector<2x192xf32>
    %c4_311 = arith.constant 4 : index
    %c0_312 = arith.constant 0 : index
    %c0_313 = arith.constant 0 : index
    %302 = vector.load %arg16[%c4_311, %c0_312, %c0_313] : memref<12x2x192xf32, #tpu.memory_space<vmem>>, vector<1x2x192xf32>
    %303 = vector.shape_cast %302 : vector<1x2x192xf32> to vector<2x192xf32>
    %c5_314 = arith.constant 5 : index
    %c0_315 = arith.constant 0 : index
    %c0_316 = arith.constant 0 : index
    %304 = vector.load %arg16[%c5_314, %c0_315, %c0_316] : memref<12x2x192xf32, #tpu.memory_space<vmem>>, vector<1x2x192xf32>
    %305 = vector.shape_cast %304 : vector<1x2x192xf32> to vector<2x192xf32>
    %306 = tpu.concatenate %297, %299, %301, %303, %305 in 1 : vector<2x192xf32>, vector<2x192xf32>, vector<2x192xf32>, vector<2x192xf32>, vector<2x192xf32> -> vector<2x960xf32>
    %307 = arith.truncf %306 : vector<2x960xf32> to vector<2x960xbf16>
    %c0_317 = arith.constant 0 : index
    %c0_318 = arith.constant 0 : index
    %308 = vector.load %arg4[%c0_317, %c0_318] : memref<960x128xbf16, #tpu.memory_space<vmem>>, vector<960x128xbf16>
    %cst_319 = arith.constant dense<0.000000e+00> : vector<2x128xf32>
    %309 = tpu.matmul %307, %308, %cst_319 {dimension_numbers = #tpu.dot_dimension_numbers<[1], [0], [0], [1], [0, 0, 1, 1], [], []>} : vector<2x960xbf16>, vector<960x128xbf16>, vector<2x128xf32> -> vector<2x128xf32>
    %c0_320 = arith.constant 0 : index
    %c0_321 = arith.constant 0 : index
    %310 = vector.load %arg5[%c0_320, %c0_321] : memref<1x128xf32, #tpu.memory_space<vmem>>, vector<1x128xf32>
    %311 = vector.broadcast %310 : vector<1x128xf32> to vector<2x128xf32>
    %312 = arith.addf %309, %311 : vector<2x128xf32>
    %cst_322 = arith.constant 0.000000e+00 : f32
    %313 = vector.broadcast %cst_322 : f32 to vector<2x128xf32>
    %314 = arith.maximumf %312, %313 : vector<2x128xf32>
    %315 = arith.truncf %314 : vector<2x128xf32> to vector<2x128xbf16>
    %c1_323 = arith.constant 1 : index
    %c0_324 = arith.constant 0 : index
    %c0_325 = arith.constant 0 : index
    %316 = vector.load %arg6[%c1_323, %c0_324, %c0_325] : memref<8x128x256xbf16, #tpu.memory_space<vmem>>, vector<1x128x256xbf16>
    %317 = vector.shape_cast %316 : vector<1x128x256xbf16> to vector<128x256xbf16>
    %cst_326 = arith.constant dense<0.000000e+00> : vector<2x256xf32>
    %318 = tpu.matmul %315, %317, %cst_326 {dimension_numbers = #tpu.dot_dimension_numbers<[1], [0], [0], [1], [0, 0, 1, 1], [], []>} : vector<2x128xbf16>, vector<128x256xbf16>, vector<2x256xf32> -> vector<2x256xf32>
    %319 = arith.addf %295, %318 : vector<2x256xf32>
    %c2_327 = arith.constant 2 : index
    %c0_328 = arith.constant 0 : index
    %c0_329 = arith.constant 0 : index
    %320 = vector.load %arg16[%c2_327, %c0_328, %c0_329] : memref<12x2x192xf32, #tpu.memory_space<vmem>>, vector<1x2x192xf32>
    %321 = vector.shape_cast %320 : vector<1x2x192xf32> to vector<2x192xf32>
    %c3_330 = arith.constant 3 : index
    %c0_331 = arith.constant 0 : index
    %c0_332 = arith.constant 0 : index
    %322 = vector.load %arg16[%c3_330, %c0_331, %c0_332] : memref<12x2x192xf32, #tpu.memory_space<vmem>>, vector<1x2x192xf32>
    %323 = vector.shape_cast %322 : vector<1x2x192xf32> to vector<2x192xf32>
    %c4_333 = arith.constant 4 : index
    %c0_334 = arith.constant 0 : index
    %c0_335 = arith.constant 0 : index
    %324 = vector.load %arg16[%c4_333, %c0_334, %c0_335] : memref<12x2x192xf32, #tpu.memory_space<vmem>>, vector<1x2x192xf32>
    %325 = vector.shape_cast %324 : vector<1x2x192xf32> to vector<2x192xf32>
    %c5_336 = arith.constant 5 : index
    %c0_337 = arith.constant 0 : index
    %c0_338 = arith.constant 0 : index
    %326 = vector.load %arg16[%c5_336, %c0_337, %c0_338] : memref<12x2x192xf32, #tpu.memory_space<vmem>>, vector<1x2x192xf32>
    %327 = vector.shape_cast %326 : vector<1x2x192xf32> to vector<2x192xf32>
    %c6_339 = arith.constant 6 : index
    %c0_340 = arith.constant 0 : index
    %c0_341 = arith.constant 0 : index
    %328 = vector.load %arg16[%c6_339, %c0_340, %c0_341] : memref<12x2x192xf32, #tpu.memory_space<vmem>>, vector<1x2x192xf32>
    %329 = vector.shape_cast %328 : vector<1x2x192xf32> to vector<2x192xf32>
    %330 = tpu.concatenate %321, %323, %325, %327, %329 in 1 : vector<2x192xf32>, vector<2x192xf32>, vector<2x192xf32>, vector<2x192xf32>, vector<2x192xf32> -> vector<2x960xf32>
    %331 = arith.truncf %330 : vector<2x960xf32> to vector<2x960xbf16>
    %c0_342 = arith.constant 0 : index
    %c0_343 = arith.constant 0 : index
    %332 = vector.load %arg4[%c0_342, %c0_343] : memref<960x128xbf16, #tpu.memory_space<vmem>>, vector<960x128xbf16>
    %cst_344 = arith.constant dense<0.000000e+00> : vector<2x128xf32>
    %333 = tpu.matmul %331, %332, %cst_344 {dimension_numbers = #tpu.dot_dimension_numbers<[1], [0], [0], [1], [0, 0, 1, 1], [], []>} : vector<2x960xbf16>, vector<960x128xbf16>, vector<2x128xf32> -> vector<2x128xf32>
    %c0_345 = arith.constant 0 : index
    %c0_346 = arith.constant 0 : index
    %334 = vector.load %arg5[%c0_345, %c0_346] : memref<1x128xf32, #tpu.memory_space<vmem>>, vector<1x128xf32>
    %335 = vector.broadcast %334 : vector<1x128xf32> to vector<2x128xf32>
    %336 = arith.addf %333, %335 : vector<2x128xf32>
    %cst_347 = arith.constant 0.000000e+00 : f32
    %337 = vector.broadcast %cst_347 : f32 to vector<2x128xf32>
    %338 = arith.maximumf %336, %337 : vector<2x128xf32>
    %339 = arith.truncf %338 : vector<2x128xf32> to vector<2x128xbf16>
    %c2_348 = arith.constant 2 : index
    %c0_349 = arith.constant 0 : index
    %c0_350 = arith.constant 0 : index
    %340 = vector.load %arg6[%c2_348, %c0_349, %c0_350] : memref<8x128x256xbf16, #tpu.memory_space<vmem>>, vector<1x128x256xbf16>
    %341 = vector.shape_cast %340 : vector<1x128x256xbf16> to vector<128x256xbf16>
    %cst_351 = arith.constant dense<0.000000e+00> : vector<2x256xf32>
    %342 = tpu.matmul %339, %341, %cst_351 {dimension_numbers = #tpu.dot_dimension_numbers<[1], [0], [0], [1], [0, 0, 1, 1], [], []>} : vector<2x128xbf16>, vector<128x256xbf16>, vector<2x256xf32> -> vector<2x256xf32>
    %343 = arith.addf %319, %342 : vector<2x256xf32>
    %c3_352 = arith.constant 3 : index
    %c0_353 = arith.constant 0 : index
    %c0_354 = arith.constant 0 : index
    %344 = vector.load %arg16[%c3_352, %c0_353, %c0_354] : memref<12x2x192xf32, #tpu.memory_space<vmem>>, vector<1x2x192xf32>
    %345 = vector.shape_cast %344 : vector<1x2x192xf32> to vector<2x192xf32>
    %c4_355 = arith.constant 4 : index
    %c0_356 = arith.constant 0 : index
    %c0_357 = arith.constant 0 : index
    %346 = vector.load %arg16[%c4_355, %c0_356, %c0_357] : memref<12x2x192xf32, #tpu.memory_space<vmem>>, vector<1x2x192xf32>
    %347 = vector.shape_cast %346 : vector<1x2x192xf32> to vector<2x192xf32>
    %c5_358 = arith.constant 5 : index
    %c0_359 = arith.constant 0 : index
    %c0_360 = arith.constant 0 : index
    %348 = vector.load %arg16[%c5_358, %c0_359, %c0_360] : memref<12x2x192xf32, #tpu.memory_space<vmem>>, vector<1x2x192xf32>
    %349 = vector.shape_cast %348 : vector<1x2x192xf32> to vector<2x192xf32>
    %c6_361 = arith.constant 6 : index
    %c0_362 = arith.constant 0 : index
    %c0_363 = arith.constant 0 : index
    %350 = vector.load %arg16[%c6_361, %c0_362, %c0_363] : memref<12x2x192xf32, #tpu.memory_space<vmem>>, vector<1x2x192xf32>
    %351 = vector.shape_cast %350 : vector<1x2x192xf32> to vector<2x192xf32>
    %c7_364 = arith.constant 7 : index
    %c0_365 = arith.constant 0 : index
    %c0_366 = arith.constant 0 : index
    %352 = vector.load %arg16[%c7_364, %c0_365, %c0_366] : memref<12x2x192xf32, #tpu.memory_space<vmem>>, vector<1x2x192xf32>
    %353 = vector.shape_cast %352 : vector<1x2x192xf32> to vector<2x192xf32>
    %354 = tpu.concatenate %345, %347, %349, %351, %353 in 1 : vector<2x192xf32>, vector<2x192xf32>, vector<2x192xf32>, vector<2x192xf32>, vector<2x192xf32> -> vector<2x960xf32>
    %355 = arith.truncf %354 : vector<2x960xf32> to vector<2x960xbf16>
    %c0_367 = arith.constant 0 : index
    %c0_368 = arith.constant 0 : index
    %356 = vector.load %arg4[%c0_367, %c0_368] : memref<960x128xbf16, #tpu.memory_space<vmem>>, vector<960x128xbf16>
    %cst_369 = arith.constant dense<0.000000e+00> : vector<2x128xf32>
    %357 = tpu.matmul %355, %356, %cst_369 {dimension_numbers = #tpu.dot_dimension_numbers<[1], [0], [0], [1], [0, 0, 1, 1], [], []>} : vector<2x960xbf16>, vector<960x128xbf16>, vector<2x128xf32> -> vector<2x128xf32>
    %c0_370 = arith.constant 0 : index
    %c0_371 = arith.constant 0 : index
    %358 = vector.load %arg5[%c0_370, %c0_371] : memref<1x128xf32, #tpu.memory_space<vmem>>, vector<1x128xf32>
    %359 = vector.broadcast %358 : vector<1x128xf32> to vector<2x128xf32>
    %360 = arith.addf %357, %359 : vector<2x128xf32>
    %cst_372 = arith.constant 0.000000e+00 : f32
    %361 = vector.broadcast %cst_372 : f32 to vector<2x128xf32>
    %362 = arith.maximumf %360, %361 : vector<2x128xf32>
    %363 = arith.truncf %362 : vector<2x128xf32> to vector<2x128xbf16>
    %c3_373 = arith.constant 3 : index
    %c0_374 = arith.constant 0 : index
    %c0_375 = arith.constant 0 : index
    %364 = vector.load %arg6[%c3_373, %c0_374, %c0_375] : memref<8x128x256xbf16, #tpu.memory_space<vmem>>, vector<1x128x256xbf16>
    %365 = vector.shape_cast %364 : vector<1x128x256xbf16> to vector<128x256xbf16>
    %cst_376 = arith.constant dense<0.000000e+00> : vector<2x256xf32>
    %366 = tpu.matmul %363, %365, %cst_376 {dimension_numbers = #tpu.dot_dimension_numbers<[1], [0], [0], [1], [0, 0, 1, 1], [], []>} : vector<2x128xbf16>, vector<128x256xbf16>, vector<2x256xf32> -> vector<2x256xf32>
    %367 = arith.addf %343, %366 : vector<2x256xf32>
    %c4_377 = arith.constant 4 : index
    %c0_378 = arith.constant 0 : index
    %c0_379 = arith.constant 0 : index
    %368 = vector.load %arg16[%c4_377, %c0_378, %c0_379] : memref<12x2x192xf32, #tpu.memory_space<vmem>>, vector<1x2x192xf32>
    %369 = vector.shape_cast %368 : vector<1x2x192xf32> to vector<2x192xf32>
    %c5_380 = arith.constant 5 : index
    %c0_381 = arith.constant 0 : index
    %c0_382 = arith.constant 0 : index
    %370 = vector.load %arg16[%c5_380, %c0_381, %c0_382] : memref<12x2x192xf32, #tpu.memory_space<vmem>>, vector<1x2x192xf32>
    %371 = vector.shape_cast %370 : vector<1x2x192xf32> to vector<2x192xf32>
    %c6_383 = arith.constant 6 : index
    %c0_384 = arith.constant 0 : index
    %c0_385 = arith.constant 0 : index
    %372 = vector.load %arg16[%c6_383, %c0_384, %c0_385] : memref<12x2x192xf32, #tpu.memory_space<vmem>>, vector<1x2x192xf32>
    %373 = vector.shape_cast %372 : vector<1x2x192xf32> to vector<2x192xf32>
    %c7_386 = arith.constant 7 : index
    %c0_387 = arith.constant 0 : index
    %c0_388 = arith.constant 0 : index
    %374 = vector.load %arg16[%c7_386, %c0_387, %c0_388] : memref<12x2x192xf32, #tpu.memory_space<vmem>>, vector<1x2x192xf32>
    %375 = vector.shape_cast %374 : vector<1x2x192xf32> to vector<2x192xf32>
    %c8_389 = arith.constant 8 : index
    %c0_390 = arith.constant 0 : index
    %c0_391 = arith.constant 0 : index
    %376 = vector.load %arg16[%c8_389, %c0_390, %c0_391] : memref<12x2x192xf32, #tpu.memory_space<vmem>>, vector<1x2x192xf32>
    %377 = vector.shape_cast %376 : vector<1x2x192xf32> to vector<2x192xf32>
    %378 = tpu.concatenate %369, %371, %373, %375, %377 in 1 : vector<2x192xf32>, vector<2x192xf32>, vector<2x192xf32>, vector<2x192xf32>, vector<2x192xf32> -> vector<2x960xf32>
    %379 = arith.truncf %378 : vector<2x960xf32> to vector<2x960xbf16>
    %c0_392 = arith.constant 0 : index
    %c0_393 = arith.constant 0 : index
    %380 = vector.load %arg4[%c0_392, %c0_393] : memref<960x128xbf16, #tpu.memory_space<vmem>>, vector<960x128xbf16>
    %cst_394 = arith.constant dense<0.000000e+00> : vector<2x128xf32>
    %381 = tpu.matmul %379, %380, %cst_394 {dimension_numbers = #tpu.dot_dimension_numbers<[1], [0], [0], [1], [0, 0, 1, 1], [], []>} : vector<2x960xbf16>, vector<960x128xbf16>, vector<2x128xf32> -> vector<2x128xf32>
    %c0_395 = arith.constant 0 : index
    %c0_396 = arith.constant 0 : index
    %382 = vector.load %arg5[%c0_395, %c0_396] : memref<1x128xf32, #tpu.memory_space<vmem>>, vector<1x128xf32>
    %383 = vector.broadcast %382 : vector<1x128xf32> to vector<2x128xf32>
    %384 = arith.addf %381, %383 : vector<2x128xf32>
    %cst_397 = arith.constant 0.000000e+00 : f32
    %385 = vector.broadcast %cst_397 : f32 to vector<2x128xf32>
    %386 = arith.maximumf %384, %385 : vector<2x128xf32>
    %387 = arith.truncf %386 : vector<2x128xf32> to vector<2x128xbf16>
    %c4_398 = arith.constant 4 : index
    %c0_399 = arith.constant 0 : index
    %c0_400 = arith.constant 0 : index
    %388 = vector.load %arg6[%c4_398, %c0_399, %c0_400] : memref<8x128x256xbf16, #tpu.memory_space<vmem>>, vector<1x128x256xbf16>
    %389 = vector.shape_cast %388 : vector<1x128x256xbf16> to vector<128x256xbf16>
    %cst_401 = arith.constant dense<0.000000e+00> : vector<2x256xf32>
    %390 = tpu.matmul %387, %389, %cst_401 {dimension_numbers = #tpu.dot_dimension_numbers<[1], [0], [0], [1], [0, 0, 1, 1], [], []>} : vector<2x128xbf16>, vector<128x256xbf16>, vector<2x256xf32> -> vector<2x256xf32>
    %391 = arith.addf %367, %390 : vector<2x256xf32>
    %c5_402 = arith.constant 5 : index
    %c0_403 = arith.constant 0 : index
    %c0_404 = arith.constant 0 : index
    %392 = vector.load %arg16[%c5_402, %c0_403, %c0_404] : memref<12x2x192xf32, #tpu.memory_space<vmem>>, vector<1x2x192xf32>
    %393 = vector.shape_cast %392 : vector<1x2x192xf32> to vector<2x192xf32>
    %c6_405 = arith.constant 6 : index
    %c0_406 = arith.constant 0 : index
    %c0_407 = arith.constant 0 : index
    %394 = vector.load %arg16[%c6_405, %c0_406, %c0_407] : memref<12x2x192xf32, #tpu.memory_space<vmem>>, vector<1x2x192xf32>
    %395 = vector.shape_cast %394 : vector<1x2x192xf32> to vector<2x192xf32>
    %c7_408 = arith.constant 7 : index
    %c0_409 = arith.constant 0 : index
    %c0_410 = arith.constant 0 : index
    %396 = vector.load %arg16[%c7_408, %c0_409, %c0_410] : memref<12x2x192xf32, #tpu.memory_space<vmem>>, vector<1x2x192xf32>
    %397 = vector.shape_cast %396 : vector<1x2x192xf32> to vector<2x192xf32>
    %c8_411 = arith.constant 8 : index
    %c0_412 = arith.constant 0 : index
    %c0_413 = arith.constant 0 : index
    %398 = vector.load %arg16[%c8_411, %c0_412, %c0_413] : memref<12x2x192xf32, #tpu.memory_space<vmem>>, vector<1x2x192xf32>
    %399 = vector.shape_cast %398 : vector<1x2x192xf32> to vector<2x192xf32>
    %c9_414 = arith.constant 9 : index
    %c0_415 = arith.constant 0 : index
    %c0_416 = arith.constant 0 : index
    %400 = vector.load %arg16[%c9_414, %c0_415, %c0_416] : memref<12x2x192xf32, #tpu.memory_space<vmem>>, vector<1x2x192xf32>
    %401 = vector.shape_cast %400 : vector<1x2x192xf32> to vector<2x192xf32>
    %402 = tpu.concatenate %393, %395, %397, %399, %401 in 1 : vector<2x192xf32>, vector<2x192xf32>, vector<2x192xf32>, vector<2x192xf32>, vector<2x192xf32> -> vector<2x960xf32>
    %403 = arith.truncf %402 : vector<2x960xf32> to vector<2x960xbf16>
    %c0_417 = arith.constant 0 : index
    %c0_418 = arith.constant 0 : index
    %404 = vector.load %arg4[%c0_417, %c0_418] : memref<960x128xbf16, #tpu.memory_space<vmem>>, vector<960x128xbf16>
    %cst_419 = arith.constant dense<0.000000e+00> : vector<2x128xf32>
    %405 = tpu.matmul %403, %404, %cst_419 {dimension_numbers = #tpu.dot_dimension_numbers<[1], [0], [0], [1], [0, 0, 1, 1], [], []>} : vector<2x960xbf16>, vector<960x128xbf16>, vector<2x128xf32> -> vector<2x128xf32>
    %c0_420 = arith.constant 0 : index
    %c0_421 = arith.constant 0 : index
    %406 = vector.load %arg5[%c0_420, %c0_421] : memref<1x128xf32, #tpu.memory_space<vmem>>, vector<1x128xf32>
    %407 = vector.broadcast %406 : vector<1x128xf32> to vector<2x128xf32>
    %408 = arith.addf %405, %407 : vector<2x128xf32>
    %cst_422 = arith.constant 0.000000e+00 : f32
    %409 = vector.broadcast %cst_422 : f32 to vector<2x128xf32>
    %410 = arith.maximumf %408, %409 : vector<2x128xf32>
    %411 = arith.truncf %410 : vector<2x128xf32> to vector<2x128xbf16>
    %c5_423 = arith.constant 5 : index
    %c0_424 = arith.constant 0 : index
    %c0_425 = arith.constant 0 : index
    %412 = vector.load %arg6[%c5_423, %c0_424, %c0_425] : memref<8x128x256xbf16, #tpu.memory_space<vmem>>, vector<1x128x256xbf16>
    %413 = vector.shape_cast %412 : vector<1x128x256xbf16> to vector<128x256xbf16>
    %cst_426 = arith.constant dense<0.000000e+00> : vector<2x256xf32>
    %414 = tpu.matmul %411, %413, %cst_426 {dimension_numbers = #tpu.dot_dimension_numbers<[1], [0], [0], [1], [0, 0, 1, 1], [], []>} : vector<2x128xbf16>, vector<128x256xbf16>, vector<2x256xf32> -> vector<2x256xf32>
    %415 = arith.addf %391, %414 : vector<2x256xf32>
    %c6_427 = arith.constant 6 : index
    %c0_428 = arith.constant 0 : index
    %c0_429 = arith.constant 0 : index
    %416 = vector.load %arg16[%c6_427, %c0_428, %c0_429] : memref<12x2x192xf32, #tpu.memory_space<vmem>>, vector<1x2x192xf32>
    %417 = vector.shape_cast %416 : vector<1x2x192xf32> to vector<2x192xf32>
    %c7_430 = arith.constant 7 : index
    %c0_431 = arith.constant 0 : index
    %c0_432 = arith.constant 0 : index
    %418 = vector.load %arg16[%c7_430, %c0_431, %c0_432] : memref<12x2x192xf32, #tpu.memory_space<vmem>>, vector<1x2x192xf32>
    %419 = vector.shape_cast %418 : vector<1x2x192xf32> to vector<2x192xf32>
    %c8_433 = arith.constant 8 : index
    %c0_434 = arith.constant 0 : index
    %c0_435 = arith.constant 0 : index
    %420 = vector.load %arg16[%c8_433, %c0_434, %c0_435] : memref<12x2x192xf32, #tpu.memory_space<vmem>>, vector<1x2x192xf32>
    %421 = vector.shape_cast %420 : vector<1x2x192xf32> to vector<2x192xf32>
    %c9_436 = arith.constant 9 : index
    %c0_437 = arith.constant 0 : index
    %c0_438 = arith.constant 0 : index
    %422 = vector.load %arg16[%c9_436, %c0_437, %c0_438] : memref<12x2x192xf32, #tpu.memory_space<vmem>>, vector<1x2x192xf32>
    %423 = vector.shape_cast %422 : vector<1x2x192xf32> to vector<2x192xf32>
    %c10_439 = arith.constant 10 : index
    %c0_440 = arith.constant 0 : index
    %c0_441 = arith.constant 0 : index
    %424 = vector.load %arg16[%c10_439, %c0_440, %c0_441] : memref<12x2x192xf32, #tpu.memory_space<vmem>>, vector<1x2x192xf32>
    %425 = vector.shape_cast %424 : vector<1x2x192xf32> to vector<2x192xf32>
    %426 = tpu.concatenate %417, %419, %421, %423, %425 in 1 : vector<2x192xf32>, vector<2x192xf32>, vector<2x192xf32>, vector<2x192xf32>, vector<2x192xf32> -> vector<2x960xf32>
    %427 = arith.truncf %426 : vector<2x960xf32> to vector<2x960xbf16>
    %c0_442 = arith.constant 0 : index
    %c0_443 = arith.constant 0 : index
    %428 = vector.load %arg4[%c0_442, %c0_443] : memref<960x128xbf16, #tpu.memory_space<vmem>>, vector<960x128xbf16>
    %cst_444 = arith.constant dense<0.000000e+00> : vector<2x128xf32>
    %429 = tpu.matmul %427, %428, %cst_444 {dimension_numbers = #tpu.dot_dimension_numbers<[1], [0], [0], [1], [0, 0, 1, 1], [], []>} : vector<2x960xbf16>, vector<960x128xbf16>, vector<2x128xf32> -> vector<2x128xf32>
    %c0_445 = arith.constant 0 : index
    %c0_446 = arith.constant 0 : index
    %430 = vector.load %arg5[%c0_445, %c0_446] : memref<1x128xf32, #tpu.memory_space<vmem>>, vector<1x128xf32>
    %431 = vector.broadcast %430 : vector<1x128xf32> to vector<2x128xf32>
    %432 = arith.addf %429, %431 : vector<2x128xf32>
    %cst_447 = arith.constant 0.000000e+00 : f32
    %433 = vector.broadcast %cst_447 : f32 to vector<2x128xf32>
    %434 = arith.maximumf %432, %433 : vector<2x128xf32>
    %435 = arith.truncf %434 : vector<2x128xf32> to vector<2x128xbf16>
    %c6_448 = arith.constant 6 : index
    %c0_449 = arith.constant 0 : index
    %c0_450 = arith.constant 0 : index
    %436 = vector.load %arg6[%c6_448, %c0_449, %c0_450] : memref<8x128x256xbf16, #tpu.memory_space<vmem>>, vector<1x128x256xbf16>
    %437 = vector.shape_cast %436 : vector<1x128x256xbf16> to vector<128x256xbf16>
    %cst_451 = arith.constant dense<0.000000e+00> : vector<2x256xf32>
    %438 = tpu.matmul %435, %437, %cst_451 {dimension_numbers = #tpu.dot_dimension_numbers<[1], [0], [0], [1], [0, 0, 1, 1], [], []>} : vector<2x128xbf16>, vector<128x256xbf16>, vector<2x256xf32> -> vector<2x256xf32>
    %439 = arith.addf %415, %438 : vector<2x256xf32>
    %c7_452 = arith.constant 7 : index
    %c0_453 = arith.constant 0 : index
    %c0_454 = arith.constant 0 : index
    %440 = vector.load %arg16[%c7_452, %c0_453, %c0_454] : memref<12x2x192xf32, #tpu.memory_space<vmem>>, vector<1x2x192xf32>
    %441 = vector.shape_cast %440 : vector<1x2x192xf32> to vector<2x192xf32>
    %c8_455 = arith.constant 8 : index
    %c0_456 = arith.constant 0 : index
    %c0_457 = arith.constant 0 : index
    %442 = vector.load %arg16[%c8_455, %c0_456, %c0_457] : memref<12x2x192xf32, #tpu.memory_space<vmem>>, vector<1x2x192xf32>
    %443 = vector.shape_cast %442 : vector<1x2x192xf32> to vector<2x192xf32>
    %c9_458 = arith.constant 9 : index
    %c0_459 = arith.constant 0 : index
    %c0_460 = arith.constant 0 : index
    %444 = vector.load %arg16[%c9_458, %c0_459, %c0_460] : memref<12x2x192xf32, #tpu.memory_space<vmem>>, vector<1x2x192xf32>
    %445 = vector.shape_cast %444 : vector<1x2x192xf32> to vector<2x192xf32>
    %c10_461 = arith.constant 10 : index
    %c0_462 = arith.constant 0 : index
    %c0_463 = arith.constant 0 : index
    %446 = vector.load %arg16[%c10_461, %c0_462, %c0_463] : memref<12x2x192xf32, #tpu.memory_space<vmem>>, vector<1x2x192xf32>
    %447 = vector.shape_cast %446 : vector<1x2x192xf32> to vector<2x192xf32>
    %c11_464 = arith.constant 11 : index
    %c0_465 = arith.constant 0 : index
    %c0_466 = arith.constant 0 : index
    %448 = vector.load %arg16[%c11_464, %c0_465, %c0_466] : memref<12x2x192xf32, #tpu.memory_space<vmem>>, vector<1x2x192xf32>
    %449 = vector.shape_cast %448 : vector<1x2x192xf32> to vector<2x192xf32>
    %450 = tpu.concatenate %441, %443, %445, %447, %449 in 1 : vector<2x192xf32>, vector<2x192xf32>, vector<2x192xf32>, vector<2x192xf32>, vector<2x192xf32> -> vector<2x960xf32>
    %451 = arith.truncf %450 : vector<2x960xf32> to vector<2x960xbf16>
    %c0_467 = arith.constant 0 : index
    %c0_468 = arith.constant 0 : index
    %452 = vector.load %arg4[%c0_467, %c0_468] : memref<960x128xbf16, #tpu.memory_space<vmem>>, vector<960x128xbf16>
    %cst_469 = arith.constant dense<0.000000e+00> : vector<2x128xf32>
    %453 = tpu.matmul %451, %452, %cst_469 {dimension_numbers = #tpu.dot_dimension_numbers<[1], [0], [0], [1], [0, 0, 1, 1], [], []>} : vector<2x960xbf16>, vector<960x128xbf16>, vector<2x128xf32> -> vector<2x128xf32>
    %c0_470 = arith.constant 0 : index
    %c0_471 = arith.constant 0 : index
    %454 = vector.load %arg5[%c0_470, %c0_471] : memref<1x128xf32, #tpu.memory_space<vmem>>, vector<1x128xf32>
    %455 = vector.broadcast %454 : vector<1x128xf32> to vector<2x128xf32>
    %456 = arith.addf %453, %455 : vector<2x128xf32>
    %cst_472 = arith.constant 0.000000e+00 : f32
    %457 = vector.broadcast %cst_472 : f32 to vector<2x128xf32>
    %458 = arith.maximumf %456, %457 : vector<2x128xf32>
    %459 = arith.truncf %458 : vector<2x128xf32> to vector<2x128xbf16>
    %c7_473 = arith.constant 7 : index
    %c0_474 = arith.constant 0 : index
    %c0_475 = arith.constant 0 : index
    %460 = vector.load %arg6[%c7_473, %c0_474, %c0_475] : memref<8x128x256xbf16, #tpu.memory_space<vmem>>, vector<1x128x256xbf16>
    %461 = vector.shape_cast %460 : vector<1x128x256xbf16> to vector<128x256xbf16>
    %cst_476 = arith.constant dense<0.000000e+00> : vector<2x256xf32>
    %462 = tpu.matmul %459, %461, %cst_476 {dimension_numbers = #tpu.dot_dimension_numbers<[1], [0], [0], [1], [0, 0, 1, 1], [], []>} : vector<2x128xbf16>, vector<128x256xbf16>, vector<2x256xf32> -> vector<2x256xf32>
    %463 = arith.addf %439, %462 : vector<2x256xf32>
    %cst_477 = arith.constant 0.000000e+00 : f32
    %464 = vector.broadcast %cst_477 : f32 to vector<2x256xf32>
    %465 = arith.maximumf %463, %464 : vector<2x256xf32>
    %466 = arith.truncf %465 : vector<2x256xf32> to vector<2x256xbf16>
    %c0_478 = arith.constant 0 : index
    %c0_479 = arith.constant 0 : index
    %467 = vector.load %arg9[%c0_478, %c0_479] : memref<256x256xbf16, #tpu.memory_space<vmem>>, vector<256x256xbf16>
    %cst_480 = arith.constant dense<0.000000e+00> : vector<2x256xf32>
    %468 = tpu.matmul %466, %467, %cst_480 {dimension_numbers = #tpu.dot_dimension_numbers<[1], [0], [0], [1], [0, 0, 1, 1], [], []>} : vector<2x256xbf16>, vector<256x256xbf16>, vector<2x256xf32> -> vector<2x256xf32>
    %c0_481 = arith.constant 0 : index
    %c0_482 = arith.constant 0 : index
    %469 = vector.load %arg10[%c0_481, %c0_482] : memref<1x256xf32, #tpu.memory_space<vmem>>, vector<1x256xf32>
    %470 = vector.broadcast %469 : vector<1x256xf32> to vector<2x256xf32>
    %471 = arith.addf %468, %470 : vector<2x256xf32>
    %cst_483 = arith.constant 0.000000e+00 : f32
    %472 = vector.broadcast %cst_483 : f32 to vector<2x256xf32>
    %473 = arith.maximumf %471, %472 : vector<2x256xf32>
    %474 = arith.truncf %473 : vector<2x256xf32> to vector<2x256xbf16>
    %c0_484 = arith.constant 0 : index
    %c0_485 = arith.constant 0 : index
    %475 = vector.load %arg11[%c0_484, %c0_485] : memref<256x256xbf16, #tpu.memory_space<vmem>>, vector<256x256xbf16>
    %cst_486 = arith.constant dense<0.000000e+00> : vector<2x256xf32>
    %476 = tpu.matmul %474, %475, %cst_486 {dimension_numbers = #tpu.dot_dimension_numbers<[1], [0], [0], [1], [0, 0, 1, 1], [], []>} : vector<2x256xbf16>, vector<256x256xbf16>, vector<2x256xf32> -> vector<2x256xf32>
    %c0_487 = arith.constant 0 : index
    %c0_488 = arith.constant 0 : index
    %477 = vector.load %arg12[%c0_487, %c0_488] : memref<1x256xf32, #tpu.memory_space<vmem>>, vector<1x256xf32>
    %478 = vector.broadcast %477 : vector<1x256xf32> to vector<2x256xf32>
    %479 = arith.addf %476, %478 : vector<2x256xf32>
    %cst_489 = arith.constant 0.000000e+00 : f32
    %480 = vector.broadcast %cst_489 : f32 to vector<2x256xf32>
    %481 = arith.maximumf %479, %480 : vector<2x256xf32>
    %c0_490 = arith.constant 0 : index
    %c0_491 = arith.constant 0 : index
    %482 = vector.load %arg13[%c0_490, %c0_491] : memref<256x128xf32, #tpu.memory_space<vmem>>, vector<256x128xf32>
    %cst_492 = arith.constant dense<0.000000e+00> : vector<2x128xf32>
    %483 = tpu.matmul %481, %482, %cst_492 {dimension_numbers = #tpu.dot_dimension_numbers<[1], [0], [0], [1], [0, 0, 1, 1], [], []>} : vector<2x256xf32>, vector<256x128xf32>, vector<2x128xf32> -> vector<2x128xf32>
    %c0_493 = arith.constant 0 : index
    %c0_494 = arith.constant 0 : index
    %484 = vector.load %arg14[%c0_493, %c0_494] : memref<1x128xf32, #tpu.memory_space<vmem>>, vector<1x128xf32>
    %485 = vector.broadcast %484 : vector<1x128xf32> to vector<2x128xf32>
    %486 = arith.addf %483, %485 : vector<2x128xf32>
    %c0_495 = arith.constant 0 : index
    %c0_496 = arith.constant 0 : index
    %487 = vector.load %arg15[%c0_495, %c0_496] : memref<2x128xf32, #tpu.memory_space<vmem>>, vector<2x128xf32>
    tpu.vector_store %arg15[%c0_495, %c0_496], %486 {strides = array<i32>} : memref<2x128xf32, #tpu.memory_space<vmem>>, vector<2x128xf32>,
    return
  }
}

</mosaic_0001>

<llo_original>
// kernel: model_forward.1
$region0: #{model_forward.1}
  #allocation0 [shape = 'u32[]', space=smem, size = 0x4, offset = 0x4, fixed_abs, tag = 'smem constant byte address 0x4 - core index']
  #allocation1 [shape = 'u32[144,128]{1,0:T(1,128)}', space=vmem, size = 0x12000, scoped, tag = 'internal scratch']
  #allocation2 [shape = 'f32[12,2,192]{2,1,0:T(2,128)}', space=vmem, size = 0x6000, scoped, tag = 'scratch operand']
  %s0 = inlined_call_operand.vmem [shape: f32[16,2,64], index: 0, kind: input, shape index: {}]
  %s1 = inlined_call_operand.vmem [shape: f32[2,1], index: 1, kind: input, shape index: {}]
  %s2 = inlined_call_operand.vmem [shape: bf16[320,192], index: 2, kind: input, shape index: {}]
  %s3 = inlined_call_operand.vmem [shape: f32[1,192], index: 3, kind: input, shape index: {}]
  %s4 = inlined_call_operand.hbm [shape: bf16[960,128], index: 4, kind: input, shape index: {}]
  %s5 = inlined_call_operand.vmem [shape: f32[1,128], index: 5, kind: input, shape index: {}]
  %s6 = inlined_call_operand.vmem [shape: bf16[8,128,256], index: 6, kind: input, shape index: {}]
  %s7 = inlined_call_operand.vmem [shape: f32[1,256], index: 7, kind: input, shape index: {}]
  %s8 = inlined_call_operand.vmem [shape: f32[1,256], index: 8, kind: input, shape index: {}]
  %s9 = inlined_call_operand.hbm [shape: bf16[256,256], index: 9, kind: input, shape index: {}]
  %s10 = inlined_call_operand.vmem [shape: f32[1,256], index: 10, kind: input, shape index: {}]
  %s11 = inlined_call_operand.hbm [shape: bf16[256,256], index: 11, kind: input, shape index: {}]
  %s12 = inlined_call_operand.vmem [shape: f32[1,256], index: 12, kind: input, shape index: {}]
  %s13 = inlined_call_operand.hbm [shape: f32[256,128], index: 13, kind: input, shape index: {}]
  %s14 = inlined_call_operand.vmem [shape: f32[1,128], index: 14, kind: input, shape index: {}]
  %s15 = inlined_call_operand.hbm [shape: f32[2,128], index: 15, kind: output, shape index: {}]
  %s16 = sld [smem:[#allocation0]]
  $region86: #{model_forward.1} parent=0
    _
  %s18 = ssub.s32 1, %s16
  %s19 = scalar_select 0, %s18, %s16
  $region1: #{model_forward.1} parent=0
    #allocation3 [shape = 'u8[245760]{0}', space=vmem, size = 0x3c000, scoped, tag = 'input window, operand 4, single buffered']
    #allocation4 [shape = 's32[1]{0}', space=sflag, size = 0x4, scoped, tag = 'scoped memory for model_forward.1']
    #allocation5 [shape = 's32[1]{0}', space=sflag, size = 0x4, scoped, tag = 'scoped memory for model_forward.1']
    #allocation6 [shape = 'u8[131072]{0}', space=vmem, size = 0x20000, scoped, tag = 'input window, operand 9, single buffered']
    #allocation7 [shape = 's32[1]{0}', space=sflag, size = 0x4, scoped, tag = 'scoped memory for model_forward.1']
    #allocation8 [shape = 'u8[131072]{0}', space=vmem, size = 0x20000, scoped, tag = 'input window, operand 11, single buffered']
    #allocation9 [shape = 'u8[131072]{0}', space=vmem, size = 0x20000, scoped, tag = 'input window, operand 13, single buffered']
    #allocation10 [shape = 's32[1]{0}', space=sflag, size = 0x4, scoped, tag = 'scoped memory for model_forward.1']
    #allocation11 [shape = 'u8[1024]{0}', space=vmem, size = 0x400, scoped, tag = 'output window, operand 0, single buffered']
    %20 = vsyncpa [#allocation4], 0
    %21 = vsyncpa [#allocation7], 0
    %22 = vsyncpa [#allocation10], 0
    %23 = vsyncpa [#allocation5], 0
    // Predicated region
    $region2: #{model_forward.1} parent=1 // pred_check
      _
    $region3: #{model_forward.1} parent=1 // pred_check_branch
      %25 = sbr.rel (0) target = $region5
    $region4: #{model_forward.1} parent=1 // pred_region
      _
    $region5: #{model_forward.1} parent=1 // pred_fallthru
      _
    // Predicated region
    $region6: #{model_forward.1} parent=1 // pred_check
      _
    $region7: #{model_forward.1} parent=1 // pred_check_branch
      %27 = sbr.rel (0) target = $region9
    $region8: #{model_forward.1} parent=1 // pred_region
      _
    $region9: #{model_forward.1} parent=1 // pred_fallthru
      _
    // Predicated region
    $region10: #{model_forward.1} parent=1 // pred_check
      _
    $region11: #{model_forward.1} parent=1 // pred_check_branch
      %29 = sbr.rel (0) target = $region13
    $region12: #{model_forward.1} parent=1 // pred_region
      _
    $region13: #{model_forward.1} parent=1 // pred_fallthru
      _
    // Predicated region
    $region14: #{model_forward.1} parent=1 // pred_check
      _
    $region15: #{model_forward.1} parent=1 // pred_check_branch
      %31 = sbr.rel (0) target = $region17
    $region16: #{model_forward.1} parent=1 // pred_region
      _
    $region17: #{model_forward.1} parent=1 // pred_fallthru
      _
    // Predicated region
    $region18: #{model_forward.1} parent=1 // pred_check
      _
    $region19: #{model_forward.1} parent=1 // pred_check_branch
      %33 = sbr.rel (0) target = $region21
    $region20: #{model_forward.1} parent=1 // pred_region
      %s35 = ssub.s32 7680, 7680
      %36 = vsyncadd [#allocation4], %s35
      %s37 = sshll.u32 [#allocation3], 4
      %s38 = int_to_ptr.vmem [resolvable:$true] %s37
      %43 = dma.hbm_to_vmem [thread:$0]  %s4, 7680, %s38, [#allocation4], 64, 64, 4
    $region21: #{model_forward.1} parent=1 // pred_fallthru
      _
    // Predicated region
    $region22: #{model_forward.1} parent=1 // pred_check
      _
    $region23: #{model_forward.1} parent=1 // pred_check_branch
      %45 = sbr.rel (0) target = $region25
    $region24: #{model_forward.1} parent=1 // pred_region
      _
    $region25: #{model_forward.1} parent=1 // pred_fallthru
      _
    // Predicated region
    $region26: #{model_forward.1} parent=1 // pred_check
      _
    $region27: #{model_forward.1} parent=1 // pred_check_branch
      %47 = sbr.rel (0) target = $region29
    $region28: #{model_forward.1} parent=1 // pred_region
      _
    $region29: #{model_forward.1} parent=1 // pred_fallthru
      _
    // Predicated region
    $region30: #{model_forward.1} parent=1 // pred_check
      _
    $region31: #{model_forward.1} parent=1 // pred_check_branch
      %49 = sbr.rel (0) target = $region33
    $region32: #{model_forward.1} parent=1 // pred_region
      _
    $region33: #{model_forward.1} parent=1 // pred_fallthru
      _
    // Predicated region
    $region34: #{model_forward.1} parent=1 // pred_check
      _
    $region35: #{model_forward.1} parent=1 // pred_check_branch
      %51 = sbr.rel (0) target = $region37
    $region36: #{model_forward.1} parent=1 // pred_region
      _
    $region37: #{model_forward.1} parent=1 // pred_fallthru
      _
    // Predicated region
    $region38: #{model_forward.1} parent=1 // pred_check
      _
    $region39: #{model_forward.1} parent=1 // pred_check_branch
      %53 = sbr.rel (0) target = $region41
    $region40: #{model_forward.1} parent=1 // pred_region
      %s55 = ssub.s32 4096, 4096
      %56 = vsyncadd [#allocation7], %s55
      %s57 = sshll.u32 [#allocation6], 4
      %s58 = int_to_ptr.vmem [resolvable:$true] %s57
      %63 = dma.hbm_to_vmem [thread:$0]  %s9, 4096, %s58, [#allocation7], 128, 128, 8
    $region41: #{model_forward.1} parent=1 // pred_fallthru
      _
    // Predicated region
    $region42: #{model_forward.1} parent=1 // pred_check
      _
    $region43: #{model_forward.1} parent=1 // pred_check_branch
      %65 = sbr.rel (0) target = $region45
    $region44: #{model_forward.1} parent=1 // pred_region
      _
    $region45: #{model_forward.1} parent=1 // pred_fallthru
      _
    // Predicated region
    $region46: #{model_forward.1} parent=1 // pred_check
      _
    $region47: #{model_forward.1} parent=1 // pred_check_branch
      %67 = sbr.rel (0) target = $region49
    $region48: #{model_forward.1} parent=1 // pred_region
      %s69 = ssub.s32 4096, 4096
      %70 = vsyncadd [#allocation7], %s69
      %s71 = sshll.u32 [#allocation8], 4
      %s72 = int_to_ptr.vmem [resolvable:$true] %s71
      %77 = dma.hbm_to_vmem [thread:$0]  %s11, 4096, %s72, [#allocation7], 128, 128, 8
    $region49: #{model_forward.1} parent=1 // pred_fallthru
      _
    // Predicated region
    $region50: #{model_forward.1} parent=1 // pred_check
      _
    $region51: #{model_forward.1} parent=1 // pred_check_branch
      %79 = sbr.rel (0) target = $region53
    $region52: #{model_forward.1} parent=1 // pred_region
      _
    $region53: #{model_forward.1} parent=1 // pred_fallthru
      _
    // Predicated region
    $region54: #{model_forward.1} parent=1 // pred_check
      _
    $region55: #{model_forward.1} parent=1 // pred_check_branch
      %81 = sbr.rel (0) target = $region57
    $region56: #{model_forward.1} parent=1 // pred_region
      %s83 = ssub.s32 4096, 4096
      %84 = vsyncadd [#allocation10], %s83
      %s85 = sshll.u32 [#allocation9], 4
      %s86 = int_to_ptr.vmem [resolvable:$true] %s85
      %91 = dma.hbm_to_vmem [thread:$0]  %s13, 4096, %s86, [#allocation10], 128, 128, 8
    $region57: #{model_forward.1} parent=1 // pred_fallthru
      _
    // Predicated region
    $region58: #{model_forward.1} parent=1 // pred_check
      _
    $region59: #{model_forward.1} parent=1 // pred_check_branch
      %93 = sbr.rel (0) target = $region61
    $region60: #{model_forward.1} parent=1 // pred_region
      _
    $region61: #{model_forward.1} parent=1 // pred_fallthru
      _
    // Predicated region
    $region62: #{model_forward.1} parent=1 // pred_check
      _
    $region63: #{model_forward.1} parent=1 // pred_check_branch
      %95 = sbr.rel (0) target = $region65
    $region64: #{model_forward.1} parent=1 // pred_region
      %96 = dma.done [#allocation4], 7680
    $region65: #{model_forward.1} parent=1 // pred_fallthru
      _
    // Predicated region
    $region66: #{model_forward.1} parent=1 // pred_check
      _
    $region67: #{model_forward.1} parent=1 // pred_check_branch
      %98 = sbr.rel (0) target = $region69
    $region68: #{model_forward.1} parent=1 // pred_region
      %99 = dma.done [#allocation7], 4096
    $region69: #{model_forward.1} parent=1 // pred_fallthru
      _
    // Predicated region
    $region70: #{model_forward.1} parent=1 // pred_check
      _
    $region71: #{model_forward.1} parent=1 // pred_check_branch
      %101 = sbr.rel (0) target = $region73
    $region72: #{model_forward.1} parent=1 // pred_region
      %102 = dma.done [#allocation7], 4096
    $region73: #{model_forward.1} parent=1 // pred_fallthru
      _
    // Predicated region
    $region74: #{model_forward.1} parent=1 // pred_check
      _
    $region75: #{model_forward.1} parent=1 // pred_check_branch
      %104 = sbr.rel (0) target = $region77
    $region76: #{model_forward.1} parent=1 // pred_region
      %105 = dma.done [#allocation10], 4096
    $region77: #{model_forward.1} parent=1 // pred_fallthru
      _
    %v107 = vld [vmem:[%s0] sm:$0x3]
    %s108 = scalar_lea.vmem %s0, 2
    %v109 = vld [vmem:[%s108] sm:$0x3]
    %s110 = scalar_lea.vmem %s0, 4
    %v111 = vld [vmem:[%s110] sm:$0x3]
    %s112 = scalar_lea.vmem %s0, 6
    %v113 = vld [vmem:[%s112] sm:$0x3]
    %s114 = scalar_lea.vmem %s0, 8
    %v115 = vld [vmem:[%s114] sm:$0x3]
    %117 = vrot.lane.b32.xlu0 %v109, 64
    %v118 = vpop.permute.xlu0 %117
    %121 = vrot.lane.b32.xlu0 %v113, 64
    %v122 = vpop.permute.xlu0 %121
    %vm124 = vcmask 523264
    %v125 = vsel %vm124, %v107, %v118
    %v126 = vsel %vm124, %v111, %v122
    %v127 = vpack.c.bf16 %v125, %v125
    %v128 = vpack.c.bf16 %v126, %v126
    %v129 = vpack.c.bf16 %v115, %v115
    %v130 = vld [vmem:[%s2] sm:$0xff]
    %v131 = vld [vmem:[%s2 + $0x8] sm:$0xff]
    %v132 = vld [vmem:[%s2 + $0x10] sm:$0xff]
    %v133 = vld [vmem:[%s2 + $0x18] sm:$0xff]
    %v134 = vld [vmem:[%s2 + $0x20] sm:$0xff]
    %v135 = vld [vmem:[%s2 + $0x28] sm:$0xff]
    %v136 = vld [vmem:[%s2 + $0x30] sm:$0xff]
    %v137 = vld [vmem:[%s2 + $0x38] sm:$0xff]
    %v138 = vld [vmem:[%s2 + $0x40] sm:$0xff]
    %v139 = vld [vmem:[%s2 + $0x48] sm:$0xff]
    %v140 = vld [vmem:[%s2 + $0x50] sm:$0xff]
    %v141 = vld [vmem:[%s2 + $0x58] sm:$0xff]
    %v142 = vld [vmem:[%s2 + $0x60] sm:$0xff]
    %v143 = vld [vmem:[%s2 + $0x68] sm:$0xff]
    %v144 = vld [vmem:[%s2 + $0x70] sm:$0xff]
    %v145 = vld [vmem:[%s2 + $0x78] sm:$0xff]
    %v146 = vld [vmem:[%s2 + $0x80] sm:$0xff]
    %v147 = vld [vmem:[%s2 + $0x88] sm:$0xff]
    %v148 = vld [vmem:[%s2 + $0x90] sm:$0xff]
    %v149 = vld [vmem:[%s2 + $0x98] sm:$0xff]
    %v150 = vld [vmem:[%s2 + $0xa0] sm:$0xff]
    %v151 = vld [vmem:[%s2 + $0xa8] sm:$0xff]
    %v152 = vld [vmem:[%s2 + $0xb0] sm:$0xff]
    %v153 = vld [vmem:[%s2 + $0xb8] sm:$0xff]
    %v154 = vld [vmem:[%s2 + $0xc0] sm:$0xff]
    %v155 = vld [vmem:[%s2 + $0xc8] sm:$0xff]
    %v156 = vld [vmem:[%s2 + $0xd0] sm:$0xff]
    %v157 = vld [vmem:[%s2 + $0xd8] sm:$0xff]
    %v158 = vld [vmem:[%s2 + $0xe0] sm:$0xff]
    %v159 = vld [vmem:[%s2 + $0xe8] sm:$0xff]
    %v160 = vld [vmem:[%s2 + $0xf0] sm:$0xff]
    %v161 = vld [vmem:[%s2 + $0xf8] sm:$0xff]
    %v162 = vld [vmem:[%s2 + $0x100] sm:$0xff]
    %v163 = vld [vmem:[%s2 + $0x108] sm:$0xff]
    %v164 = vld [vmem:[%s2 + $0x110] sm:$0xff]
    %v165 = vld [vmem:[%s2 + $0x118] sm:$0xff]
    %v166 = vld [vmem:[%s2 + $0x120] sm:$0xff]
    %v167 = vld [vmem:[%s2 + $0x128] sm:$0xff]
    %v168 = vld [vmem:[%s2 + $0x130] sm:$0xff]
    %v169 = vld [vmem:[%s2 + $0x138] sm:$0xff]
    %v170 = vld [vmem:[%s3] sm:$0x3]
    %v172 = vlaneseq
    %v173 = vshrl.u32 %v172, 7
    %v174 = vsub.s32 0, %v173
    %v175 = vrot.slane %v170, %v174
    %v176 = vlaneseq
    %v177 = vshrl.u32 %v176, 7
    %v178 = vsub.s32 1, %v177
    %v179 = vrot.slane %v170, %v178
    %v222 = vunpack.c.l.b16 %v130
    %v223 = vunpack.c.h.b16 %v130
    %v224 = vunpack.c.l.b16 %v131
    %v225 = vunpack.c.h.b16 %v131
    %v226 = vunpack.c.l.b16 %v132
    %v227 = vunpack.c.h.b16 %v132
    %v228 = vunpack.c.l.b16 %v133
    %v229 = vunpack.c.h.b16 %v133
    %v230 = vunpack.c.l.b16 %v134
    %v231 = vunpack.c.h.b16 %v134
    %v232 = vunpack.c.l.b16 %v135
    %v233 = vunpack.c.h.b16 %v135
    %v234 = vunpack.c.l.b16 %v136
    %v235 = vunpack.c.h.b16 %v136
    %v236 = vunpack.c.l.b16 %v137
    %v237 = vunpack.c.h.b16 %v137
    %v238 = vunpack.c.l.b16 %v138
    %v239 = vunpack.c.h.b16 %v138
    %v240 = vunpack.c.l.b16 %v139
    %v241 = vunpack.c.h.b16 %v139
    %v242 = vunpack.c.l.b16 %v140
    %v243 = vunpack.c.h.b16 %v140
    %v244 = vunpack.c.l.b16 %v141
    %v245 = vunpack.c.h.b16 %v141
    %v246 = vunpack.c.l.b16 %v142
    %v247 = vunpack.c.h.b16 %v142
    %v248 = vunpack.c.l.b16 %v143
    %v249 = vunpack.c.h.b16 %v143
    %v250 = vunpack.c.l.b16 %v144
    %v251 = vunpack.c.h.b16 %v144
    %v252 = vunpack.c.l.b16 %v145
    %v253 = vunpack.c.h.b16 %v145
    %v254 = vunpack.c.l.b16 %v146
    %v255 = vunpack.c.h.b16 %v146
    %v256 = vunpack.c.l.b16 %v147
    %v257 = vunpack.c.h.b16 %v147
    %v258 = vunpack.c.l.b16 %v148
    %v259 = vunpack.c.h.b16 %v148
    %v260 = vunpack.c.l.b16 %v149
    %v261 = vunpack.c.h.b16 %v149
    %v262 = vunpack.c.l.b16 %v150
    %v263 = vunpack.c.h.b16 %v150
    %v264 = vunpack.c.l.b16 %v151
    %v265 = vunpack.c.h.b16 %v151
    %v266 = vunpack.c.l.b16 %v152
    %v267 = vunpack.c.h.b16 %v152
    %v268 = vunpack.c.l.b16 %v153
    %v269 = vunpack.c.h.b16 %v153
    %v270 = vunpack.c.l.b16 %v154
    %v271 = vunpack.c.h.b16 %v154
    %v272 = vunpack.c.l.b16 %v155
    %v273 = vunpack.c.h.b16 %v155
    %v274 = vunpack.c.l.b16 %v156
    %v275 = vunpack.c.h.b16 %v156
    %v276 = vunpack.c.l.b16 %v157
    %v277 = vunpack.c.h.b16 %v157
    %v278 = vunpack.c.l.b16 %v158
    %v279 = vunpack.c.h.b16 %v158
    %v280 = vunpack.c.l.b16 %v159
    %v281 = vunpack.c.h.b16 %v159
    %v282 = vunpack.c.l.b16 %v160
    %v283 = vunpack.c.h.b16 %v160
    %v284 = vunpack.c.l.b16 %v161
    %v285 = vunpack.c.h.b16 %v161
    %v286 = vunpack.c.l.b16 %v162
    %v287 = vunpack.c.h.b16 %v162
    %v288 = vunpack.c.l.b16 %v163
    %v289 = vunpack.c.h.b16 %v163
    %v290 = vunpack.c.l.b16 %v164
    %v291 = vunpack.c.h.b16 %v164
    %v292 = vunpack.c.l.b16 %v165
    %v293 = vunpack.c.h.b16 %v165
    %v294 = vunpack.c.l.b16 %v166
    %v295 = vunpack.c.h.b16 %v166
    %v296 = vunpack.c.l.b16 %v167
    %v297 = vunpack.c.h.b16 %v167
    %v298 = vunpack.c.l.b16 %v168
    %v299 = vunpack.c.h.b16 %v168
    %v300 = vunpack.c.l.b16 %v169
    %v301 = vunpack.c.h.b16 %v169
    %v302 = vpack.c.b16 %v224, %v222
    %v303 = vpack.c.b16 %v225, %v223
    %v304 = vpack.c.b16 %v228, %v226
    %v305 = vpack.c.b16 %v229, %v227
    %v306 = vpack.c.b16 %v232, %v230
    %v307 = vpack.c.b16 %v233, %v231
    %v308 = vpack.c.b16 %v236, %v234
    %v309 = vpack.c.b16 %v237, %v235
    %v310 = vpack.c.b16 %v240, %v238
    %v311 = vpack.c.b16 %v241, %v239
    %v312 = vpack.c.b16 %v244, %v242
    %v313 = vpack.c.b16 %v245, %v243
    %v314 = vpack.c.b16 %v248, %v246
    %v315 = vpack.c.b16 %v249, %v247
    %v316 = vpack.c.b16 %v252, %v250
    %v317 = vpack.c.b16 %v253, %v251
    %v318 = vpack.c.b16 %v256, %v254
    %v319 = vpack.c.b16 %v257, %v255
    %v320 = vpack.c.b16 %v260, %v258
    %v321 = vpack.c.b16 %v261, %v259
    %v322 = vpack.c.b16 %v264, %v262
    %v323 = vpack.c.b16 %v265, %v263
    %v324 = vpack.c.b16 %v268, %v266
    %v325 = vpack.c.b16 %v269, %v267
    %v326 = vpack.c.b16 %v272, %v270
    %v327 = vpack.c.b16 %v273, %v271
    %v328 = vpack.c.b16 %v276, %v274
    %v329 = vpack.c.b16 %v277, %v275
    %v330 = vpack.c.b16 %v280, %v278
    %v331 = vpack.c.b16 %v281, %v279
    %v332 = vpack.c.b16 %v284, %v282
    %v333 = vpack.c.b16 %v285, %v283
    %v334 = vpack.c.b16 %v288, %v286
    %v335 = vpack.c.b16 %v289, %v287
    %v336 = vpack.c.b16 %v292, %v290
    %v337 = vpack.c.b16 %v293, %v291
    %v338 = vpack.c.b16 %v296, %v294
    %v339 = vpack.c.b16 %v297, %v295
    %v340 = vpack.c.b16 %v300, %v298
    %v341 = vpack.c.b16 %v301, %v299
    %v383 = vsel %vm124, %v129, 0
    %385 = vmatprep.subr.bf16.mxu0 %v303
    %386 = vmatpush1.bf16.msra.mxu0 %v302
    %387 = vmatprep.subr.bf16.mxu0 %v305
    %388 = vmatpush1.bf16.msra.mxu0 %v304
    %389 = vmatprep.subr.bf16.mxu0 %v307
    %390 = vmatpush1.bf16.msra.mxu0 %v306
    %391 = vmatprep.subr.bf16.mxu0 %v309
    %392 = vmatpush1.bf16.msra.mxu0 %v308
    %393 = vmatprep.subr.bf16.mxu0 %v311
    %394 = vmatpush1.bf16.msra.mxu0 %v310
    %395 = vmatprep.subr.bf16.mxu0 %v313
    %396 = vmatpush1.bf16.msra.mxu0 %v312
    %397 = vmatprep.subr.bf16.mxu0 %v315
    %398 = vmatpush1.bf16.msra.mxu0 %v314
    %399 = vmatprep.subr.bf16.mxu0 %v317
    %400 = vmatpush1.bf16.msra.mxu0 %v316
    %401 = vmatprep.subr.bf16.mxu0 %v319
    %402 = vmatpush1.bf16.msra.mxu0 %v318
    %403 = vmatprep.subr.bf16.mxu0 %v321
    %404 = vmatpush1.bf16.msra.mxu0 %v320
    %405 = vmatprep.subr.bf16.mxu0 %v323
    %406 = vmatpush1.bf16.msra.mxu0 %v322
    %407 = vmatprep.subr.bf16.mxu0 %v325
    %408 = vmatpush1.bf16.msra.mxu0 %v324
    %409 = vmatprep.subr.bf16.mxu0 %v327
    %410 = vmatpush1.bf16.msra.mxu0 %v326
    %411 = vmatprep.subr.bf16.mxu0 %v329
    %412 = vmatpush1.bf16.msra.mxu0 %v328
    %413 = vmatprep.subr.bf16.mxu0 %v331
    %414 = vmatpush1.bf16.msra.mxu0 %v330
    %415 = vmatprep.subr.bf16.mxu0 %v333
    %416 = vmatpush1.bf16.msra.mxu0 %v332
    %417 = vmatprep.mubr.bf16.mxu0 %v128
    %418 = vmatmul.mubr.bf16.gmra.mrb[0].mxu0 %v127
    %v419 = vpop.f32.mrb[0].mxu0
    %v420 = vadd.f32 %v175, %v419
    %v421 = vpop.f32.mrb[0].mxu0
    %v422 = vadd.f32 %v179, %v421
    %v423 = vpop.f32.mrb[0].mxu0
    %v424 = vpop.f32.mrb[0].mxu0
    %425 = vdwg.mxu0
    %426 = vmatprep.subr.bf16.mxu0 %v335
    %427 = vmatpush1.bf16.msra.mxu0 %v334
    %428 = vmatprep.subr.bf16.mxu0 %v337
    %429 = vmatpush1.bf16.msra.mxu0 %v336
    %430 = vmatprep.subr.bf16.mxu0 %v339
    %431 = vmatpush1.bf16.msra.mxu0 %v338
    %432 = vmatprep.subr.bf16.mxu0 %v341
    %433 = vmatpush1.bf16.msra.mxu0 %v340
    %434 = vmatprep.subr.bf16.mxu0 0
    %435 = vmatpush1.bf16.msra.mxu0 0
    %436 = vmatprep.subr.bf16.mxu0 0
    %437 = vmatpush1.bf16.msra.mxu0 0
    %438 = vmatprep.subr.bf16.mxu0 0
    %439 = vmatpush1.bf16.msra.mxu0 0
    %440 = vmatprep.subr.bf16.mxu0 0
    %441 = vmatpush1.bf16.msra.mxu0 0
    %442 = vmatprep.subr.bf16.mxu0 0
    %443 = vmatpush1.bf16.msra.mxu0 0
    %444 = vmatprep.subr.bf16.mxu0 0
    %445 = vmatpush1.bf16.msra.mxu0 0
    %446 = vmatprep.subr.bf16.mxu0 0
    %447 = vmatpush1.bf16.msra.mxu0 0
    %448 = vmatprep.subr.bf16.mxu0 0
    %449 = vmatpush1.bf16.msra.mxu0 0
    %450 = vmatprep.subr.bf16.mxu0 0
    %451 = vmatpush1.bf16.msra.mxu0 0
    %452 = vmatprep.subr.bf16.mxu0 0
    %453 = vmatpush1.bf16.msra.mxu0 0
    %454 = vmatprep.subr.bf16.mxu0 0
    %455 = vmatpush1.bf16.msra.mxu0 0
    %456 = vmatprep.subr.bf16.mxu0 0
    %457 = vmatpush1.bf16.msra.mxu0 0
    %458 = vmatprep.mubr.bf16.mxu0 0
    %459 = vmatmul.mubr.bf16.gmra.mrb[0].mxu0 %v383
    %v460 = vpop.f32.mrb[0].mxu0
    %v461 = vadd.f32 %v420, %v460
    %v462 = vpop.f32.mrb[0].mxu0
    %v463 = vadd.f32 %v422, %v462
    %v464 = vpop.f32.mrb[0].mxu0
    %v465 = vpop.f32.mrb[0].mxu0
    %466 = vdwg.mxu0
    %v467 = vmax.f32 %v461, 0.0
    %v468 = vmax.f32 %v463, 0.0
    %v471 = vcombine.low %v467, %v468
    %v473 = vunpack.c.l.s4 1983009808
    %v474 = vunpack.c.0.s8 %v473
    %v475 = vlaneseq
    %v476 = vshrl.u32 %v475, 7
    %v477 = vsub.s32 %v474, %v476
    %v478 = vrot.slane %v471, %v477
    %vm480 = vcmask 1041408
    %vm481 = vcmask 519170
    %vm482 = vmor %vm481, %vm480
    %483 = vst.msk [vmem:[#allocation2] sm:$0xf] %vm482, %v478
    %v484 = vld [vmem:[%s108] sm:$0x3]
    %v485 = vld [vmem:[%s110] sm:$0x3]
    %v486 = vld [vmem:[%s112] sm:$0x3]
    %v487 = vld [vmem:[%s114] sm:$0x3]
    %s488 = scalar_lea.vmem %s0, 10
    %v489 = vld [vmem:[%s488] sm:$0x3]
    %491 = vrot.lane.b32.xlu0 %v485, 64
    %v492 = vpop.permute.xlu0 %491
    %495 = vrot.lane.b32.xlu0 %v487, 64
    %v496 = vpop.permute.xlu0 %495
    %v498 = vsel %vm124, %v484, %v492
    %v499 = vsel %vm124, %v486, %v496
    %v500 = vpack.c.bf16 %v498, %v498
    %v501 = vpack.c.bf16 %v499, %v499
    %v502 = vpack.c.bf16 %v489, %v489
    %v503 = vld [vmem:[%s2] sm:$0xff]
    %v504 = vld [vmem:[%s2 + $0x8] sm:$0xff]
    %v505 = vld [vmem:[%s2 + $0x10] sm:$0xff]
    %v506 = vld [vmem:[%s2 + $0x18] sm:$0xff]
    %v507 = vld [vmem:[%s2 + $0x20] sm:$0xff]
    %v508 = vld [vmem:[%s2 + $0x28] sm:$0xff]
    %v509 = vld [vmem:[%s2 + $0x30] sm:$0xff]
    %v510 = vld [vmem:[%s2 + $0x38] sm:$0xff]
    %v511 = vld [vmem:[%s2 + $0x40] sm:$0xff]
    %v512 = vld [vmem:[%s2 + $0x48] sm:$0xff]
    %v513 = vld [vmem:[%s2 + $0x50] sm:$0xff]
    %v514 = vld [vmem:[%s2 + $0x58] sm:$0xff]
    %v515 = vld [vmem:[%s2 + $0x60] sm:$0xff]
    %v516 = vld [vmem:[%s2 + $0x68] sm:$0xff]
    %v517 = vld [vmem:[%s2 + $0x70] sm:$0xff]
    %v518 = vld [vmem:[%s2 + $0x78] sm:$0xff]
    %v519 = vld [vmem:[%s2 + $0x80] sm:$0xff]
    %v520 = vld [vmem:[%s2 + $0x88] sm:$0xff]
    %v521 = vld [vmem:[%s2 + $0x90] sm:$0xff]
    %v522 = vld [vmem:[%s2 + $0x98] sm:$0xff]
    %v523 = vld [vmem:[%s2 + $0xa0] sm:$0xff]
    %v524 = vld [vmem:[%s2 + $0xa8] sm:$0xff]
    %v525 = vld [vmem:[%s2 + $0xb0] sm:$0xff]
    %v526 = vld [vmem:[%s2 + $0xb8] sm:$0xff]
    %v527 = vld [vmem:[%s2 + $0xc0] sm:$0xff]
    %v528 = vld [vmem:[%s2 + $0xc8] sm:$0xff]
    %v529 = vld [vmem:[%s2 + $0xd0] sm:$0xff]
    %v530 = vld [vmem:[%s2 + $0xd8] sm:$0xff]
    %v531 = vld [vmem:[%s2 + $0xe0] sm:$0xff]
    %v532 = vld [vmem:[%s2 + $0xe8] sm:$0xff]
    %v533 = vld [vmem:[%s2 + $0xf0] sm:$0xff]
    %v534 = vld [vmem:[%s2 + $0xf8] sm:$0xff]
    %v535 = vld [vmem:[%s2 + $0x100] sm:$0xff]
    %v536 = vld [vmem:[%s2 + $0x108] sm:$0xff]
    %v537 = vld [vmem:[%s2 + $0x110] sm:$0xff]
    %v538 = vld [vmem:[%s2 + $0x118] sm:$0xff]
    %v539 = vld [vmem:[%s2 + $0x120] sm:$0xff]
    %v540 = vld [vmem:[%s2 + $0x128] sm:$0xff]
    %v541 = vld [vmem:[%s2 + $0x130] sm:$0xff]
    %v542 = vld [vmem:[%s2 + $0x138] sm:$0xff]
    %v543 = vld [vmem:[%s3] sm:$0x3]
    %v545 = vlaneseq
    %v546 = vshrl.u32 %v545, 7
    %v547 = vsub.s32 0, %v546
    %v548 = vrot.slane %v543, %v547
    %v549 = vlaneseq
    %v550 = vshrl.u32 %v549, 7
    %v551 = vsub.s32 1, %v550
    %v552 = vrot.slane %v543, %v551
    %v595 = vunpack.c.l.b16 %v503
    %v596 = vunpack.c.h.b16 %v503
    %v597 = vunpack.c.l.b16 %v504
    %v598 = vunpack.c.h.b16 %v504
    %v599 = vunpack.c.l.b16 %v505
    %v600 = vunpack.c.h.b16 %v505
    %v601 = vunpack.c.l.b16 %v506
    %v602 = vunpack.c.h.b16 %v506
    %v603 = vunpack.c.l.b16 %v507
    %v604 = vunpack.c.h.b16 %v507
    %v605 = vunpack.c.l.b16 %v508
    %v606 = vunpack.c.h.b16 %v508
    %v607 = vunpack.c.l.b16 %v509
    %v608 = vunpack.c.h.b16 %v509
    %v609 = vunpack.c.l.b16 %v510
    %v610 = vunpack.c.h.b16 %v510
    %v611 = vunpack.c.l.b16 %v511
    %v612 = vunpack.c.h.b16 %v511
    %v613 = vunpack.c.l.b16 %v512
    %v614 = vunpack.c.h.b16 %v512
    %v615 = vunpack.c.l.b16 %v513
    %v616 = vunpack.c.h.b16 %v513
    %v617 = vunpack.c.l.b16 %v514
    %v618 = vunpack.c.h.b16 %v514
    %v619 = vunpack.c.l.b16 %v515
    %v620 = vunpack.c.h.b16 %v515
    %v621 = vunpack.c.l.b16 %v516
    %v622 = vunpack.c.h.b16 %v516
    %v623 = vunpack.c.l.b16 %v517
    %v624 = vunpack.c.h.b16 %v517
    %v625 = vunpack.c.l.b16 %v518
    %v626 = vunpack.c.h.b16 %v518
    %v627 = vunpack.c.l.b16 %v519
    %v628 = vunpack.c.h.b16 %v519
    %v629 = vunpack.c.l.b16 %v520
    %v630 = vunpack.c.h.b16 %v520
    %v631 = vunpack.c.l.b16 %v521
    %v632 = vunpack.c.h.b16 %v521
    %v633 = vunpack.c.l.b16 %v522
    %v634 = vunpack.c.h.b16 %v522
    %v635 = vunpack.c.l.b16 %v523
    %v636 = vunpack.c.h.b16 %v523
    %v637 = vunpack.c.l.b16 %v524
    %v638 = vunpack.c.h.b16 %v524
    %v639 = vunpack.c.l.b16 %v525
    %v640 = vunpack.c.h.b16 %v525
    %v641 = vunpack.c.l.b16 %v526
    %v642 = vunpack.c.h.b16 %v526
    %v643 = vunpack.c.l.b16 %v527
    %v644 = vunpack.c.h.b16 %v527
    %v645 = vunpack.c.l.b16 %v528
    %v646 = vunpack.c.h.b16 %v528
    %v647 = vunpack.c.l.b16 %v529
    %v648 = vunpack.c.h.b16 %v529
    %v649 = vunpack.c.l.b16 %v530
    %v650 = vunpack.c.h.b16 %v530
    %v651 = vunpack.c.l.b16 %v531
    %v652 = vunpack.c.h.b16 %v531
    %v653 = vunpack.c.l.b16 %v532
    %v654 = vunpack.c.h.b16 %v532
    %v655 = vunpack.c.l.b16 %v533
    %v656 = vunpack.c.h.b16 %v533
    %v657 = vunpack.c.l.b16 %v534
    %v658 = vunpack.c.h.b16 %v534
    %v659 = vunpack.c.l.b16 %v535
    %v660 = vunpack.c.h.b16 %v535
    %v661 = vunpack.c.l.b16 %v536
    %v662 = vunpack.c.h.b16 %v536
    %v663 = vunpack.c.l.b16 %v537
    %v664 = vunpack.c.h.b16 %v537
    %v665 = vunpack.c.l.b16 %v538
    %v666 = vunpack.c.h.b16 %v538
    %v667 = vunpack.c.l.b16 %v539
    %v668 = vunpack.c.h.b16 %v539
    %v669 = vunpack.c.l.b16 %v540
    %v670 = vunpack.c.h.b16 %v540
    %v671 = vunpack.c.l.b16 %v541
    %v672 = vunpack.c.h.b16 %v541
    %v673 = vunpack.c.l.b16 %v542
    %v674 = vunpack.c.h.b16 %v542
    %v675 = vpack.c.b16 %v597, %v595
    %v676 = vpack.c.b16 %v598, %v596
    %v677 = vpack.c.b16 %v601, %v599
    %v678 = vpack.c.b16 %v602, %v600
    %v679 = vpack.c.b16 %v605, %v603
    %v680 = vpack.c.b16 %v606, %v604
    %v681 = vpack.c.b16 %v609, %v607
    %v682 = vpack.c.b16 %v610, %v608
    %v683 = vpack.c.b16 %v613, %v611
    %v684 = vpack.c.b16 %v614, %v612
    %v685 = vpack.c.b16 %v617, %v615
    %v686 = vpack.c.b16 %v618, %v616
    %v687 = vpack.c.b16 %v621, %v619
    %v688 = vpack.c.b16 %v622, %v620
    %v689 = vpack.c.b16 %v625, %v623
    %v690 = vpack.c.b16 %v626, %v624
    %v691 = vpack.c.b16 %v629, %v627
    %v692 = vpack.c.b16 %v630, %v628
    %v693 = vpack.c.b16 %v633, %v631
    %v694 = vpack.c.b16 %v634, %v632
    %v695 = vpack.c.b16 %v637, %v635
    %v696 = vpack.c.b16 %v638, %v636
    %v697 = vpack.c.b16 %v641, %v639
    %v698 = vpack.c.b16 %v642, %v640
    %v699 = vpack.c.b16 %v645, %v643
    %v700 = vpack.c.b16 %v646, %v644
    %v701 = vpack.c.b16 %v649, %v647
    %v702 = vpack.c.b16 %v650, %v648
    %v703 = vpack.c.b16 %v653, %v651
    %v704 = vpack.c.b16 %v654, %v652
    %v705 = vpack.c.b16 %v657, %v655
    %v706 = vpack.c.b16 %v658, %v656
    %v707 = vpack.c.b16 %v661, %v659
    %v708 = vpack.c.b16 %v662, %v660
    %v709 = vpack.c.b16 %v665, %v663
    %v710 = vpack.c.b16 %v666, %v664
    %v711 = vpack.c.b16 %v669, %v667
    %v712 = vpack.c.b16 %v670, %v668
    %v713 = vpack.c.b16 %v673, %v671
    %v714 = vpack.c.b16 %v674, %v672
    %v756 = vsel %vm124, %v502, 0
    %758 = vmatprep.subr.bf16.mxu0 %v676
    %759 = vmatpush1.bf16.msra.mxu0 %v675
    %760 = vmatprep.subr.bf16.mxu0 %v678
    %761 = vmatpush1.bf16.msra.mxu0 %v677
    %762 = vmatprep.subr.bf16.mxu0 %v680
    %763 = vmatpush1.bf16.msra.mxu0 %v679
    %764 = vmatprep.subr.bf16.mxu0 %v682
    %765 = vmatpush1.bf16.msra.mxu0 %v681
    %766 = vmatprep.subr.bf16.mxu0 %v684
    %767 = vmatpush1.bf16.msra.mxu0 %v683
    %768 = vmatprep.subr.bf16.mxu0 %v686
    %769 = vmatpush1.bf16.msra.mxu0 %v685
    %770 = vmatprep.subr.bf16.mxu0 %v688
    %771 = vmatpush1.bf16.msra.mxu0 %v687
    %772 = vmatprep.subr.bf16.mxu0 %v690
    %773 = vmatpush1.bf16.msra.mxu0 %v689
    %774 = vmatprep.subr.bf16.mxu0 %v692
    %775 = vmatpush1.bf16.msra.mxu0 %v691
    %776 = vmatprep.subr.bf16.mxu0 %v694
    %777 = vmatpush1.bf16.msra.mxu0 %v693
    %778 = vmatprep.subr.bf16.mxu0 %v696
    %779 = vmatpush1.bf16.msra.mxu0 %v695
    %780 = vmatprep.subr.bf16.mxu0 %v698
    %781 = vmatpush1.bf16.msra.mxu0 %v697
    %782 = vmatprep.subr.bf16.mxu0 %v700
    %783 = vmatpush1.bf16.msra.mxu0 %v699
    %784 = vmatprep.subr.bf16.mxu0 %v702
    %785 = vmatpush1.bf16.msra.mxu0 %v701
    %786 = vmatprep.subr.bf16.mxu0 %v704
    %787 = vmatpush1.bf16.msra.mxu0 %v703
    %788 = vmatprep.subr.bf16.mxu0 %v706
    %789 = vmatpush1.bf16.msra.mxu0 %v705
    %790 = vmatprep.mubr.bf16.mxu0 %v501
    %791 = vmatmul.mubr.bf16.gmra.mrb[0].mxu0 %v500
    %v792 = vpop.f32.mrb[0].mxu0
    %v793 = vadd.f32 %v548, %v792
    %v794 = vpop.f32.mrb[0].mxu0
    %v795 = vadd.f32 %v552, %v794
    %v796 = vpop.f32.mrb[0].mxu0
    %v797 = vpop.f32.mrb[0].mxu0
    %798 = vdwg.mxu0
    %799 = vmatprep.subr.bf16.mxu0 %v708
    %800 = vmatpush1.bf16.msra.mxu0 %v707
    %801 = vmatprep.subr.bf16.mxu0 %v710
    %802 = vmatpush1.bf16.msra.mxu0 %v709
    %803 = vmatprep.subr.bf16.mxu0 %v712
    %804 = vmatpush1.bf16.msra.mxu0 %v711
    %805 = vmatprep.subr.bf16.mxu0 %v714
    %806 = vmatpush1.bf16.msra.mxu0 %v713
    %807 = vmatprep.subr.bf16.mxu0 0
    %808 = vmatpush1.bf16.msra.mxu0 0
    %809 = vmatprep.subr.bf16.mxu0 0
    %810 = vmatpush1.bf16.msra.mxu0 0
    %811 = vmatprep.subr.bf16.mxu0 0
    %812 = vmatpush1.bf16.msra.mxu0 0
    %813 = vmatprep.subr.bf16.mxu0 0
    %814 = vmatpush1.bf16.msra.mxu0 0
    %815 = vmatprep.subr.bf16.mxu0 0
    %816 = vmatpush1.bf16.msra.mxu0 0
    %817 = vmatprep.subr.bf16.mxu0 0
    %818 = vmatpush1.bf16.msra.mxu0 0
    %819 = vmatprep.subr.bf16.mxu0 0
    %820 = vmatpush1.bf16.msra.mxu0 0
    %821 = vmatprep.subr.bf16.mxu0 0
    %822 = vmatpush1.bf16.msra.mxu0 0
    %823 = vmatprep.subr.bf16.mxu0 0
    %824 = vmatpush1.bf16.msra.mxu0 0
    %825 = vmatprep.subr.bf16.mxu0 0
    %826 = vmatpush1.bf16.msra.mxu0 0
    %827 = vmatprep.subr.bf16.mxu0 0
    %828 = vmatpush1.bf16.msra.mxu0 0
    %829 = vmatprep.subr.bf16.mxu0 0
    %830 = vmatpush1.bf16.msra.mxu0 0
    %831 = vmatprep.mubr.bf16.mxu0 0
    %832 = vmatmul.mubr.bf16.gmra.mrb[0].mxu0 %v756
    %v833 = vpop.f32.mrb[0].mxu0
    %v834 = vadd.f32 %v793, %v833
    %v835 = vpop.f32.mrb[0].mxu0
    %v836 = vadd.f32 %v795, %v835
    %v837 = vpop.f32.mrb[0].mxu0
    %v838 = vpop.f32.mrb[0].mxu0
    %839 = vdwg.mxu0
    %v840 = vmax.f32 %v834, 0.0
    %v841 = vmax.f32 %v836, 0.0
    %v844 = vcombine.low %v840, %v841
    %v846 = vunpack.c.l.s4 1983009808
    %v847 = vunpack.c.0.s8 %v846
    %v848 = vlaneseq
    %v849 = vshrl.u32 %v848, 7
    %v850 = vsub.s32 %v847, %v849
    %v851 = vrot.slane %v844, %v850
    %s853 = scalar_lea.vmem [#allocation2], 4
    %854 = vst.msk [vmem:[%s853] sm:$0xf] %vm482, %v851
    %v855 = vld [vmem:[%s110] sm:$0x3]
    %v856 = vld [vmem:[%s112] sm:$0x3]
    %v857 = vld [vmem:[%s114] sm:$0x3]
    %v858 = vld [vmem:[%s488] sm:$0x3]
    %s859 = scalar_lea.vmem %s0, 12
    %v860 = vld [vmem:[%s859] sm:$0x3]
    %862 = vrot.lane.b32.xlu0 %v856, 64
    %v863 = vpop.permute.xlu0 %862
    %866 = vrot.lane.b32.xlu0 %v858, 64
    %v867 = vpop.permute.xlu0 %866
    %v869 = vsel %vm124, %v855, %v863
    %v870 = vsel %vm124, %v857, %v867
    %v871 = vpack.c.bf16 %v869, %v869
    %v872 = vpack.c.bf16 %v870, %v870
    %v873 = vpack.c.bf16 %v860, %v860
    %v874 = vld [vmem:[%s2] sm:$0xff]
    %v875 = vld [vmem:[%s2 + $0x8] sm:$0xff]
    %v876 = vld [vmem:[%s2 + $0x10] sm:$0xff]
    %v877 = vld [vmem:[%s2 + $0x18] sm:$0xff]
    %v878 = vld [vmem:[%s2 + $0x20] sm:$0xff]
    %v879 = vld [vmem:[%s2 + $0x28] sm:$0xff]
    %v880 = vld [vmem:[%s2 + $0x30] sm:$0xff]
    %v881 = vld [vmem:[%s2 + $0x38] sm:$0xff]
    %v882 = vld [vmem:[%s2 + $0x40] sm:$0xff]
    %v883 = vld [vmem:[%s2 + $0x48] sm:$0xff]
    %v884 = vld [vmem:[%s2 + $0x50] sm:$0xff]
    %v885 = vld [vmem:[%s2 + $0x58] sm:$0xff]
    %v886 = vld [vmem:[%s2 + $0x60] sm:$0xff]
    %v887 = vld [vmem:[%s2 + $0x68] sm:$0xff]
    %v888 = vld [vmem:[%s2 + $0x70] sm:$0xff]
    %v889 = vld [vmem:[%s2 + $0x78] sm:$0xff]
    %v890 = vld [vmem:[%s2 + $0x80] sm:$0xff]
    %v891 = vld [vmem:[%s2 + $0x88] sm:$0xff]
    %v892 = vld [vmem:[%s2 + $0x90] sm:$0xff]
    %v893 = vld [vmem:[%s2 + $0x98] sm:$0xff]
    %v894 = vld [vmem:[%s2 + $0xa0] sm:$0xff]
    %v895 = vld [vmem:[%s2 + $0xa8] sm:$0xff]
    %v896 = vld [vmem:[%s2 + $0xb0] sm:$0xff]
    %v897 = vld [vmem:[%s2 + $0xb8] sm:$0xff]
    %v898 = vld [vmem:[%s2 + $0xc0] sm:$0xff]
    %v899 = vld [vmem:[%s2 + $0xc8] sm:$0xff]
    %v900 = vld [vmem:[%s2 + $0xd0] sm:$0xff]
    %v901 = vld [vmem:[%s2 + $0xd8] sm:$0xff]
    %v902 = vld [vmem:[%s2 + $0xe0] sm:$0xff]
    %v903 = vld [vmem:[%s2 + $0xe8] sm:$0xff]
    %v904 = vld [vmem:[%s2 + $0xf0] sm:$0xff]
    %v905 = vld [vmem:[%s2 + $0xf8] sm:$0xff]
    %v906 = vld [vmem:[%s2 + $0x100] sm:$0xff]
    %v907 = vld [vmem:[%s2 + $0x108] sm:$0xff]
    %v908 = vld [vmem:[%s2 + $0x110] sm:$0xff]
    %v909 = vld [vmem:[%s2 + $0x118] sm:$0xff]
    %v910 = vld [vmem:[%s2 + $0x120] sm:$0xff]
    %v911 = vld [vmem:[%s2 + $0x128] sm:$0xff]
    %v912 = vld [vmem:[%s2 + $0x130] sm:$0xff]
    %v913 = vld [vmem:[%s2 + $0x138] sm:$0xff]
    %v914 = vld [vmem:[%s3] sm:$0x3]
    %v916 = vlaneseq
    %v917 = vshrl.u32 %v916, 7
    %v918 = vsub.s32 0, %v917
    %v919 = vrot.slane %v914, %v918
    %v920 = vlaneseq
    %v921 = vshrl.u32 %v920, 7
    %v922 = vsub.s32 1, %v921
    %v923 = vrot.slane %v914, %v922
    %v966 = vunpack.c.l.b16 %v874
    %v967 = vunpack.c.h.b16 %v874
    %v968 = vunpack.c.l.b16 %v875
    %v969 = vunpack.c.h.b16 %v875
    %v970 = vunpack.c.l.b16 %v876
    %v971 = vunpack.c.h.b16 %v876
    %v972 = vunpack.c.l.b16 %v877
    %v973 = vunpack.c.h.b16 %v877
    %v974 = vunpack.c.l.b16 %v878
    %v975 = vunpack.c.h.b16 %v878
    %v976 = vunpack.c.l.b16 %v879
    %v977 = vunpack.c.h.b16 %v879
    %v978 = vunpack.c.l.b16 %v880
    %v979 = vunpack.c.h.b16 %v880
    %v980 = vunpack.c.l.b16 %v881
    %v981 = vunpack.c.h.b16 %v881
    %v982 = vunpack.c.l.b16 %v882
    %v983 = vunpack.c.h.b16 %v882
    %v984 = vunpack.c.l.b16 %v883
    %v985 = vunpack.c.h.b16 %v883
    %v986 = vunpack.c.l.b16 %v884
    %v987 = vunpack.c.h.b16 %v884
    %v988 = vunpack.c.l.b16 %v885
    %v989 = vunpack.c.h.b16 %v885
    %v990 = vunpack.c.l.b16 %v886
    %v991 = vunpack.c.h.b16 %v886
    %v992 = vunpack.c.l.b16 %v887
    %v993 = vunpack.c.h.b16 %v887
    %v994 = vunpack.c.l.b16 %v888
    %v995 = vunpack.c.h.b16 %v888
    %v996 = vunpack.c.l.b16 %v889
    %v997 = vunpack.c.h.b16 %v889
    %v998 = vunpack.c.l.b16 %v890
    %v999 = vunpack.c.h.b16 %v890
    %v1000 = vunpack.c.l.b16 %v891
    %v1001 = vunpack.c.h.b16 %v891
    %v1002 = vunpack.c.l.b16 %v892
    %v1003 = vunpack.c.h.b16 %v892
    %v1004 = vunpack.c.l.b16 %v893
    %v1005 = vunpack.c.h.b16 %v893
    %v1006 = vunpack.c.l.b16 %v894
    %v1007 = vunpack.c.h.b16 %v894
    %v1008 = vunpack.c.l.b16 %v895
    %v1009 = vunpack.c.h.b16 %v895
    %v1010 = vunpack.c.l.b16 %v896
    %v1011 = vunpack.c.h.b16 %v896
    %v1012 = vunpack.c.l.b16 %v897
    %v1013 = vunpack.c.h.b16 %v897
    %v1014 = vunpack.c.l.b16 %v898
    %v1015 = vunpack.c.h.b16 %v898
    %v1016 = vunpack.c.l.b16 %v899
    %v1017 = vunpack.c.h.b16 %v899
    %v1018 = vunpack.c.l.b16 %v900
    %v1019 = vunpack.c.h.b16 %v900
    %v1020 = vunpack.c.l.b16 %v901
    %v1021 = vunpack.c.h.b16 %v901
    %v1022 = vunpack.c.l.b16 %v902
    %v1023 = vunpack.c.h.b16 %v902
    %v1024 = vunpack.c.l.b16 %v903
    %v1025 = vunpack.c.h.b16 %v903
    %v1026 = vunpack.c.l.b16 %v904
    %v1027 = vunpack.c.h.b16 %v904
    %v1028 = vunpack.c.l.b16 %v905
    %v1029 = vunpack.c.h.b16 %v905
    %v1030 = vunpack.c.l.b16 %v906
    %v1031 = vunpack.c.h.b16 %v906
    %v1032 = vunpack.c.l.b16 %v907
    %v1033 = vunpack.c.h.b16 %v907
    %v1034 = vunpack.c.l.b16 %v908
    %v1035 = vunpack.c.h.b16 %v908
    %v1036 = vunpack.c.l.b16 %v909
    %v1037 = vunpack.c.h.b16 %v909
    %v1038 = vunpack.c.l.b16 %v910
    %v1039 = vunpack.c.h.b16 %v910
    %v1040 = vunpack.c.l.b16 %v911
    %v1041 = vunpack.c.h.b16 %v911
    %v1042 = vunpack.c.l.b16 %v912
    %v1043 = vunpack.c.h.b16 %v912
    %v1044 = vunpack.c.l.b16 %v913
    %v1045 = vunpack.c.h.b16 %v913
    %v1046 = vpack.c.b16 %v968, %v966
    %v1047 = vpack.c.b16 %v969, %v967
    %v1048 = vpack.c.b16 %v972, %v970
    %v1049 = vpack.c.b16 %v973, %v971
    %v1050 = vpack.c.b16 %v976, %v974
    %v1051 = vpack.c.b16 %v977, %v975
    %v1052 = vpack.c.b16 %v980, %v978
    %v1053 = vpack.c.b16 %v981, %v979
    %v1054 = vpack.c.b16 %v984, %v982
    %v1055 = vpack.c.b16 %v985, %v983
    %v1056 = vpack.c.b16 %v988, %v986
    %v1057 = vpack.c.b16 %v989, %v987
    %v1058 = vpack.c.b16 %v992, %v990
    %v1059 = vpack.c.b16 %v993, %v991
    %v1060 = vpack.c.b16 %v996, %v994
    %v1061 = vpack.c.b16 %v997, %v995
    %v1062 = vpack.c.b16 %v1000, %v998
    %v1063 = vpack.c.b16 %v1001, %v999
    %v1064 = vpack.c.b16 %v1004, %v1002
    %v1065 = vpack.c.b16 %v1005, %v1003
    %v1066 = vpack.c.b16 %v1008, %v1006
    %v1067 = vpack.c.b16 %v1009, %v1007
    %v1068 = vpack.c.b16 %v1012, %v1010
    %v1069 = vpack.c.b16 %v1013, %v1011
    %v1070 = vpack.c.b16 %v1016, %v1014
    %v1071 = vpack.c.b16 %v1017, %v1015
    %v1072 = vpack.c.b16 %v1020, %v1018
    %v1073 = vpack.c.b16 %v1021, %v1019
    %v1074 = vpack.c.b16 %v1024, %v1022
    %v1075 = vpack.c.b16 %v1025, %v1023
    %v1076 = vpack.c.b16 %v1028, %v1026
    %v1077 = vpack.c.b16 %v1029, %v1027
    %v1078 = vpack.c.b16 %v1032, %v1030
    %v1079 = vpack.c.b16 %v1033, %v1031
    %v1080 = vpack.c.b16 %v1036, %v1034
    %v1081 = vpack.c.b16 %v1037, %v1035
    %v1082 = vpack.c.b16 %v1040, %v1038
    %v1083 = vpack.c.b16 %v1041, %v1039
    %v1084 = vpack.c.b16 %v1044, %v1042
    %v1085 = vpack.c.b16 %v1045, %v1043
    %v1127 = vsel %vm124, %v873, 0
    %1129 = vmatprep.subr.bf16.mxu0 %v1047
    %1130 = vmatpush1.bf16.msra.mxu0 %v1046
    %1131 = vmatprep.subr.bf16.mxu0 %v1049
    %1132 = vmatpush1.bf16.msra.mxu0 %v1048
    %1133 = vmatprep.subr.bf16.mxu0 %v1051
    %1134 = vmatpush1.bf16.msra.mxu0 %v1050
    %1135 = vmatprep.subr.bf16.mxu0 %v1053
    %1136 = vmatpush1.bf16.msra.mxu0 %v1052
    %1137 = vmatprep.subr.bf16.mxu0 %v1055
    %1138 = vmatpush1.bf16.msra.mxu0 %v1054
    %1139 = vmatprep.subr.bf16.mxu0 %v1057
    %1140 = vmatpush1.bf16.msra.mxu0 %v1056
    %1141 = vmatprep.subr.bf16.mxu0 %v1059
    %1142 = vmatpush1.bf16.msra.mxu0 %v1058
    %1143 = vmatprep.subr.bf16.mxu0 %v1061
    %1144 = vmatpush1.bf16.msra.mxu0 %v1060
    %1145 = vmatprep.subr.bf16.mxu0 %v1063
    %1146 = vmatpush1.bf16.msra.mxu0 %v1062
    %1147 = vmatprep.subr.bf16.mxu0 %v1065
    %1148 = vmatpush1.bf16.msra.mxu0 %v1064
    %1149 = vmatprep.subr.bf16.mxu0 %v1067
    %1150 = vmatpush1.bf16.msra.mxu0 %v1066
    %1151 = vmatprep.subr.bf16.mxu0 %v1069
    %1152 = vmatpush1.bf16.msra.mxu0 %v1068
    %1153 = vmatprep.subr.bf16.mxu0 %v1071
    %1154 = vmatpush1.bf16.msra.mxu0 %v1070
    %1155 = vmatprep.subr.bf16.mxu0 %v1073
    %1156 = vmatpush1.bf16.msra.mxu0 %v1072
    %1157 = vmatprep.subr.bf16.mxu0 %v1075
    %1158 = vmatpush1.bf16.msra.mxu0 %v1074
    %1159 = vmatprep.subr.bf16.mxu0 %v1077
    %1160 = vmatpush1.bf16.msra.mxu0 %v1076
    %1161 = vmatprep.mubr.bf16.mxu0 %v872
    %1162 = vmatmul.mubr.bf16.gmra.mrb[0].mxu0 %v871
    %v1163 = vpop.f32.mrb[0].mxu0
    %v1164 = vadd.f32 %v919, %v1163
    %v1165 = vpop.f32.mrb[0].mxu0
    %v1166 = vadd.f32 %v923, %v1165
    %v1167 = vpop.f32.mrb[0].mxu0
    %v1168 = vpop.f32.mrb[0].mxu0
    %1169 = vdwg.mxu0
    %1170 = vmatprep.subr.bf16.mxu0 %v1079
    %1171 = vmatpush1.bf16.msra.mxu0 %v1078
    %1172 = vmatprep.subr.bf16.mxu0 %v1081
    %1173 = vmatpush1.bf16.msra.mxu0 %v1080
    %1174 = vmatprep.subr.bf16.mxu0 %v1083
    %1175 = vmatpush1.bf16.msra.mxu0 %v1082
    %1176 = vmatprep.subr.bf16.mxu0 %v1085
    %1177 = vmatpush1.bf16.msra.mxu0 %v1084
    %1178 = vmatprep.subr.bf16.mxu0 0
    %1179 = vmatpush1.bf16.msra.mxu0 0
    %1180 = vmatprep.subr.bf16.mxu0 0
    %1181 = vmatpush1.bf16.msra.mxu0 0
    %1182 = vmatprep.subr.bf16.mxu0 0
    %1183 = vmatpush1.bf16.msra.mxu0 0
    %1184 = vmatprep.subr.bf16.mxu0 0
    %1185 = vmatpush1.bf16.msra.mxu0 0
    %1186 = vmatprep.subr.bf16.mxu0 0
    %1187 = vmatpush1.bf16.msra.mxu0 0
    %1188 = vmatprep.subr.bf16.mxu0 0
    %1189 = vmatpush1.bf16.msra.mxu0 0
    %1190 = vmatprep.subr.bf16.mxu0 0
    %1191 = vmatpush1.bf16.msra.mxu0 0
    %1192 = vmatprep.subr.bf16.mxu0 0
    %1193 = vmatpush1.bf16.msra.mxu0 0
    %1194 = vmatprep.subr.bf16.mxu0 0
    %1195 = vmatpush1.bf16.msra.mxu0 0
    %1196 = vmatprep.subr.bf16.mxu0 0
    %1197 = vmatpush1.bf16.msra.mxu0 0
    %1198 = vmatprep.subr.bf16.mxu0 0
    %1199 = vmatpush1.bf16.msra.mxu0 0
    %1200 = vmatprep.subr.bf16.mxu0 0
    %1201 = vmatpush1.bf16.msra.mxu0 0
    %1202 = vmatprep.mubr.bf16.mxu0 0
    %1203 = vmatmul.mubr.bf16.gmra.mrb[0].mxu0 %v1127
    %v1204 = vpop.f32.mrb[0].mxu0
    %v1205 = vadd.f32 %v1164, %v1204
    %v1206 = vpop.f32.mrb[0].mxu0
    %v1207 = vadd.f32 %v1166, %v1206
    %v1208 = vpop.f32.mrb[0].mxu0
    %v1209 = vpop.f32.mrb[0].mxu0
    %1210 = vdwg.mxu0
    %v1211 = vmax.f32 %v1205, 0.0
    %v1212 = vmax.f32 %v1207, 0.0
    %v1215 = vcombine.low %v1211, %v1212
    %v1217 = vunpack.c.l.s4 1983009808
    %v1218 = vunpack.c.0.s8 %v1217
    %v1219 = vlaneseq
    %v1220 = vshrl.u32 %v1219, 7
    %v1221 = vsub.s32 %v1218, %v1220
    %v1222 = vrot.slane %v1215, %v1221
    %s1224 = scalar_lea.vmem [#allocation2], 8
    %1225 = vst.msk [vmem:[%s1224] sm:$0xf] %vm482, %v1222
    %v1226 = vld [vmem:[%s112] sm:$0x3]
    %v1227 = vld [vmem:[%s114] sm:$0x3]
    %v1228 = vld [vmem:[%s488] sm:$0x3]
    %v1229 = vld [vmem:[%s859] sm:$0x3]
    %s1230 = scalar_lea.vmem %s0, 14
    %v1231 = vld [vmem:[%s1230] sm:$0x3]
    %1233 = vrot.lane.b32.xlu0 %v1227, 64
    %v1234 = vpop.permute.xlu0 %1233
    %1237 = vrot.lane.b32.xlu0 %v1229, 64
    %v1238 = vpop.permute.xlu0 %1237
    %v1240 = vsel %vm124, %v1226, %v1234
    %v1241 = vsel %vm124, %v1228, %v1238
    %v1242 = vpack.c.bf16 %v1240, %v1240
    %v1243 = vpack.c.bf16 %v1241, %v1241
    %v1244 = vpack.c.bf16 %v1231, %v1231
    %v1245 = vld [vmem:[%s2] sm:$0xff]
    %v1246 = vld [vmem:[%s2 + $0x8] sm:$0xff]
    %v1247 = vld [vmem:[%s2 + $0x10] sm:$0xff]
    %v1248 = vld [vmem:[%s2 + $0x18] sm:$0xff]
    %v1249 = vld [vmem:[%s2 + $0x20] sm:$0xff]
    %v1250 = vld [vmem:[%s2 + $0x28] sm:$0xff]
    %v1251 = vld [vmem:[%s2 + $0x30] sm:$0xff]
    %v1252 = vld [vmem:[%s2 + $0x38] sm:$0xff]
    %v1253 = vld [vmem:[%s2 + $0x40] sm:$0xff]
    %v1254 = vld [vmem:[%s2 + $0x48] sm:$0xff]
    %v1255 = vld [vmem:[%s2 + $0x50] sm:$0xff]
    %v1256 = vld [vmem:[%s2 + $0x58] sm:$0xff]
    %v1257 = vld [vmem:[%s2 + $0x60] sm:$0xff]
    %v1258 = vld [vmem:[%s2 + $0x68] sm:$0xff]
    %v1259 = vld [vmem:[%s2 + $0x70] sm:$0xff]
    %v1260 = vld [vmem:[%s2 + $0x78] sm:$0xff]
    %v1261 = vld [vmem:[%s2 + $0x80] sm:$0xff]
    %v1262 = vld [vmem:[%s2 + $0x88] sm:$0xff]
    %v1263 = vld [vmem:[%s2 + $0x90] sm:$0xff]
    %v1264 = vld [vmem:[%s2 + $0x98] sm:$0xff]
    %v1265 = vld [vmem:[%s2 + $0xa0] sm:$0xff]
    %v1266 = vld [vmem:[%s2 + $0xa8] sm:$0xff]
    %v1267 = vld [vmem:[%s2 + $0xb0] sm:$0xff]
    %v1268 = vld [vmem:[%s2 + $0xb8] sm:$0xff]
    %v1269 = vld [vmem:[%s2 + $0xc0] sm:$0xff]
    %v1270 = vld [vmem:[%s2 + $0xc8] sm:$0xff]
    %v1271 = vld [vmem:[%s2 + $0xd0] sm:$0xff]
    %v1272 = vld [vmem:[%s2 + $0xd8] sm:$0xff]
    %v1273 = vld [vmem:[%s2 + $0xe0] sm:$0xff]
    %v1274 = vld [vmem:[%s2 + $0xe8] sm:$0xff]
    %v1275 = vld [vmem:[%s2 + $0xf0] sm:$0xff]
    %v1276 = vld [vmem:[%s2 + $0xf8] sm:$0xff]
    %v1277 = vld [vmem:[%s2 + $0x100] sm:$0xff]
    %v1278 = vld [vmem:[%s2 + $0x108] sm:$0xff]
    %v1279 = vld [vmem:[%s2 + $0x110] sm:$0xff]
    %v1280 = vld [vmem:[%s2 + $0x118] sm:$0xff]
    %v1281 = vld [vmem:[%s2 + $0x120] sm:$0xff]
    %v1282 = vld [vmem:[%s2 + $0x128] sm:$0xff]
    %v1283 = vld [vmem:[%s2 + $0x130] sm:$0xff]
    %v1284 = vld [vmem:[%s2 + $0x138] sm:$0xff]
    %v1285 = vld [vmem:[%s3] sm:$0x3]
    %v1287 = vlaneseq
    %v1288 = vshrl.u32 %v1287, 7
    %v1289 = vsub.s32 0, %v1288
    %v1290 = vrot.slane %v1285, %v1289
    %v1291 = vlaneseq
    %v1292 = vshrl.u32 %v1291, 7
    %v1293 = vsub.s32 1, %v1292
    %v1294 = vrot.slane %v1285, %v1293
    %v1337 = vunpack.c.l.b16 %v1245
    %v1338 = vunpack.c.h.b16 %v1245
    %v1339 = vunpack.c.l.b16 %v1246
    %v1340 = vunpack.c.h.b16 %v1246
    %v1341 = vunpack.c.l.b16 %v1247
    %v1342 = vunpack.c.h.b16 %v1247
    %v1343 = vunpack.c.l.b16 %v1248
    %v1344 = vunpack.c.h.b16 %v1248
    %v1345 = vunpack.c.l.b16 %v1249
    %v1346 = vunpack.c.h.b16 %v1249
    %v1347 = vunpack.c.l.b16 %v1250
    %v1348 = vunpack.c.h.b16 %v1250
    %v1349 = vunpack.c.l.b16 %v1251
    %v1350 = vunpack.c.h.b16 %v1251
    %v1351 = vunpack.c.l.b16 %v1252
    %v1352 = vunpack.c.h.b16 %v1252
    %v1353 = vunpack.c.l.b16 %v1253
    %v1354 = vunpack.c.h.b16 %v1253
    %v1355 = vunpack.c.l.b16 %v1254
    %v1356 = vunpack.c.h.b16 %v1254
    %v1357 = vunpack.c.l.b16 %v1255
    %v1358 = vunpack.c.h.b16 %v1255
    %v1359 = vunpack.c.l.b16 %v1256
    %v1360 = vunpack.c.h.b16 %v1256
    %v1361 = vunpack.c.l.b16 %v1257
    %v1362 = vunpack.c.h.b16 %v1257
    %v1363 = vunpack.c.l.b16 %v1258
    %v1364 = vunpack.c.h.b16 %v1258
    %v1365 = vunpack.c.l.b16 %v1259
    %v1366 = vunpack.c.h.b16 %v1259
    %v1367 = vunpack.c.l.b16 %v1260
    %v1368 = vunpack.c.h.b16 %v1260
    %v1369 = vunpack.c.l.b16 %v1261
    %v1370 = vunpack.c.h.b16 %v1261
    %v1371 = vunpack.c.l.b16 %v1262
    %v1372 = vunpack.c.h.b16 %v1262
    %v1373 = vunpack.c.l.b16 %v1263
    %v1374 = vunpack.c.h.b16 %v1263
    %v1375 = vunpack.c.l.b16 %v1264
    %v1376 = vunpack.c.h.b16 %v1264
    %v1377 = vunpack.c.l.b16 %v1265
    %v1378 = vunpack.c.h.b16 %v1265
    %v1379 = vunpack.c.l.b16 %v1266
    %v1380 = vunpack.c.h.b16 %v1266
    %v1381 = vunpack.c.l.b16 %v1267
    %v1382 = vunpack.c.h.b16 %v1267
    %v1383 = vunpack.c.l.b16 %v1268
    %v1384 = vunpack.c.h.b16 %v1268
    %v1385 = vunpack.c.l.b16 %v1269
    %v1386 = vunpack.c.h.b16 %v1269
    %v1387 = vunpack.c.l.b16 %v1270
    %v1388 = vunpack.c.h.b16 %v1270
    %v1389 = vunpack.c.l.b16 %v1271
    %v1390 = vunpack.c.h.b16 %v1271
    %v1391 = vunpack.c.l.b16 %v1272
    %v1392 = vunpack.c.h.b16 %v1272
    %v1393 = vunpack.c.l.b16 %v1273
    %v1394 = vunpack.c.h.b16 %v1273
    %v1395 = vunpack.c.l.b16 %v1274
    %v1396 = vunpack.c.h.b16 %v1274
    %v1397 = vunpack.c.l.b16 %v1275
    %v1398 = vunpack.c.h.b16 %v1275
    %v1399 = vunpack.c.l.b16 %v1276
    %v1400 = vunpack.c.h.b16 %v1276
    %v1401 = vunpack.c.l.b16 %v1277
    %v1402 = vunpack.c.h.b16 %v1277
    %v1403 = vunpack.c.l.b16 %v1278
    %v1404 = vunpack.c.h.b16 %v1278
    %v1405 = vunpack.c.l.b16 %v1279
    %v1406 = vunpack.c.h.b16 %v1279
    %v1407 = vunpack.c.l.b16 %v1280
    %v1408 = vunpack.c.h.b16 %v1280
    %v1409 = vunpack.c.l.b16 %v1281
    %v1410 = vunpack.c.h.b16 %v1281
    %v1411 = vunpack.c.l.b16 %v1282
    %v1412 = vunpack.c.h.b16 %v1282
    %v1413 = vunpack.c.l.b16 %v1283
    %v1414 = vunpack.c.h.b16 %v1283
    %v1415 = vunpack.c.l.b16 %v1284
    %v1416 = vunpack.c.h.b16 %v1284
    %v1417 = vpack.c.b16 %v1339, %v1337
    %v1418 = vpack.c.b16 %v1340, %v1338
    %v1419 = vpack.c.b16 %v1343, %v1341
    %v1420 = vpack.c.b16 %v1344, %v1342
    %v1421 = vpack.c.b16 %v1347, %v1345
    %v1422 = vpack.c.b16 %v1348, %v1346
    %v1423 = vpack.c.b16 %v1351, %v1349
    %v1424 = vpack.c.b16 %v1352, %v1350
    %v1425 = vpack.c.b16 %v1355, %v1353
    %v1426 = vpack.c.b16 %v1356, %v1354
    %v1427 = vpack.c.b16 %v1359, %v1357
    %v1428 = vpack.c.b16 %v1360, %v1358
    %v1429 = vpack.c.b16 %v1363, %v1361
    %v1430 = vpack.c.b16 %v1364, %v1362
    %v1431 = vpack.c.b16 %v1367, %v1365
    %v1432 = vpack.c.b16 %v1368, %v1366
    %v1433 = vpack.c.b16 %v1371, %v1369
    %v1434 = vpack.c.b16 %v1372, %v1370
    %v1435 = vpack.c.b16 %v1375, %v1373
    %v1436 = vpack.c.b16 %v1376, %v1374
    %v1437 = vpack.c.b16 %v1379, %v1377
    %v1438 = vpack.c.b16 %v1380, %v1378
    %v1439 = vpack.c.b16 %v1383, %v1381
    %v1440 = vpack.c.b16 %v1384, %v1382
    %v1441 = vpack.c.b16 %v1387, %v1385
    %v1442 = vpack.c.b16 %v1388, %v1386
    %v1443 = vpack.c.b16 %v1391, %v1389
    %v1444 = vpack.c.b16 %v1392, %v1390
    %v1445 = vpack.c.b16 %v1395, %v1393
    %v1446 = vpack.c.b16 %v1396, %v1394
    %v1447 = vpack.c.b16 %v1399, %v1397
    %v1448 = vpack.c.b16 %v1400, %v1398
    %v1449 = vpack.c.b16 %v1403, %v1401
    %v1450 = vpack.c.b16 %v1404, %v1402
    %v1451 = vpack.c.b16 %v1407, %v1405
    %v1452 = vpack.c.b16 %v1408, %v1406
    %v1453 = vpack.c.b16 %v1411, %v1409
    %v1454 = vpack.c.b16 %v1412, %v1410
    %v1455 = vpack.c.b16 %v1415, %v1413
    %v1456 = vpack.c.b16 %v1416, %v1414
    %v1498 = vsel %vm124, %v1244, 0
    %1500 = vmatprep.subr.bf16.mxu0 %v1418
    %1501 = vmatpush1.bf16.msra.mxu0 %v1417
    %1502 = vmatprep.subr.bf16.mxu0 %v1420
    %1503 = vmatpush1.bf16.msra.mxu0 %v1419
    %1504 = vmatprep.subr.bf16.mxu0 %v1422
    %1505 = vmatpush1.bf16.msra.mxu0 %v1421
    %1506 = vmatprep.subr.bf16.mxu0 %v1424
    %1507 = vmatpush1.bf16.msra.mxu0 %v1423
    %1508 = vmatprep.subr.bf16.mxu0 %v1426
    %1509 = vmatpush1.bf16.msra.mxu0 %v1425
    %1510 = vmatprep.subr.bf16.mxu0 %v1428
    %1511 = vmatpush1.bf16.msra.mxu0 %v1427
    %1512 = vmatprep.subr.bf16.mxu0 %v1430
    %1513 = vmatpush1.bf16.msra.mxu0 %v1429
    %1514 = vmatprep.subr.bf16.mxu0 %v1432
    %1515 = vmatpush1.bf16.msra.mxu0 %v1431
    %1516 = vmatprep.subr.bf16.mxu0 %v1434
    %1517 = vmatpush1.bf16.msra.mxu0 %v1433
    %1518 = vmatprep.subr.bf16.mxu0 %v1436
    %1519 = vmatpush1.bf16.msra.mxu0 %v1435
    %1520 = vmatprep.subr.bf16.mxu0 %v1438
    %1521 = vmatpush1.bf16.msra.mxu0 %v1437
    %1522 = vmatprep.subr.bf16.mxu0 %v1440
    %1523 = vmatpush1.bf16.msra.mxu0 %v1439
    %1524 = vmatprep.subr.bf16.mxu0 %v1442
    %1525 = vmatpush1.bf16.msra.mxu0 %v1441
    %1526 = vmatprep.subr.bf16.mxu0 %v1444
    %1527 = vmatpush1.bf16.msra.mxu0 %v1443
    %1528 = vmatprep.subr.bf16.mxu0 %v1446
    %1529 = vmatpush1.bf16.msra.mxu0 %v1445
    %1530 = vmatprep.subr.bf16.mxu0 %v1448
    %1531 = vmatpush1.bf16.msra.mxu0 %v1447
    %1532 = vmatprep.mubr.bf16.mxu0 %v1243
    %1533 = vmatmul.mubr.bf16.gmra.mrb[0].mxu0 %v1242
    %v1534 = vpop.f32.mrb[0].mxu0
    %v1535 = vadd.f32 %v1290, %v1534
    %v1536 = vpop.f32.mrb[0].mxu0
    %v1537 = vadd.f32 %v1294, %v1536
    %v1538 = vpop.f32.mrb[0].mxu0
    %v1539 = vpop.f32.mrb[0].mxu0
    %1540 = vdwg.mxu0
    %1541 = vmatprep.subr.bf16.mxu0 %v1450
    %1542 = vmatpush1.bf16.msra.mxu0 %v1449
    %1543 = vmatprep.subr.bf16.mxu0 %v1452
    %1544 = vmatpush1.bf16.msra.mxu0 %v1451
    %1545 = vmatprep.subr.bf16.mxu0 %v1454
    %1546 = vmatpush1.bf16.msra.mxu0 %v1453
    %1547 = vmatprep.subr.bf16.mxu0 %v1456
    %1548 = vmatpush1.bf16.msra.mxu0 %v1455
    %1549 = vmatprep.subr.bf16.mxu0 0
    %1550 = vmatpush1.bf16.msra.mxu0 0
    %1551 = vmatprep.subr.bf16.mxu0 0
    %1552 = vmatpush1.bf16.msra.mxu0 0
    %1553 = vmatprep.subr.bf16.mxu0 0
    %1554 = vmatpush1.bf16.msra.mxu0 0
    %1555 = vmatprep.subr.bf16.mxu0 0
    %1556 = vmatpush1.bf16.msra.mxu0 0
    %1557 = vmatprep.subr.bf16.mxu0 0
    %1558 = vmatpush1.bf16.msra.mxu0 0
    %1559 = vmatprep.subr.bf16.mxu0 0
    %1560 = vmatpush1.bf16.msra.mxu0 0
    %1561 = vmatprep.subr.bf16.mxu0 0
    %1562 = vmatpush1.bf16.msra.mxu0 0
    %1563 = vmatprep.subr.bf16.mxu0 0
    %1564 = vmatpush1.bf16.msra.mxu0 0
    %1565 = vmatprep.subr.bf16.mxu0 0
    %1566 = vmatpush1.bf16.msra.mxu0 0
    %1567 = vmatprep.subr.bf16.mxu0 0
    %1568 = vmatpush1.bf16.msra.mxu0 0
    %1569 = vmatprep.subr.bf16.mxu0 0
    %1570 = vmatpush1.bf16.msra.mxu0 0
    %1571 = vmatprep.subr.bf16.mxu0 0
    %1572 = vmatpush1.bf16.msra.mxu0 0
    %1573 = vmatprep.mubr.bf16.mxu0 0
    %1574 = vmatmul.mubr.bf16.gmra.mrb[0].mxu0 %v1498
    %v1575 = vpop.f32.mrb[0].mxu0
    %v1576 = vadd.f32 %v1535, %v1575
    %v1577 = vpop.f32.mrb[0].mxu0
    %v1578 = vadd.f32 %v1537, %v1577
    %v1579 = vpop.f32.mrb[0].mxu0
    %v1580 = vpop.f32.mrb[0].mxu0
    %1581 = vdwg.mxu0
    %v1582 = vmax.f32 %v1576, 0.0
    %v1583 = vmax.f32 %v1578, 0.0
    %v1586 = vcombine.low %v1582, %v1583
    %v1588 = vunpack.c.l.s4 1983009808
    %v1589 = vunpack.c.0.s8 %v1588
    %v1590 = vlaneseq
    %v1591 = vshrl.u32 %v1590, 7
    %v1592 = vsub.s32 %v1589, %v1591
    %v1593 = vrot.slane %v1586, %v1592
    %s1595 = scalar_lea.vmem [#allocation2], 12
    %1596 = vst.msk [vmem:[%s1595] sm:$0xf] %vm482, %v1593
    %v1597 = vld [vmem:[%s114] sm:$0x3]
    %v1598 = vld [vmem:[%s488] sm:$0x3]
    %v1599 = vld [vmem:[%s859] sm:$0x3]
    %v1600 = vld [vmem:[%s1230] sm:$0x3]
    %s1601 = scalar_lea.vmem %s0, 16
    %v1602 = vld [vmem:[%s1601] sm:$0x3]
    %1604 = vrot.lane.b32.xlu0 %v1598, 64
    %v1605 = vpop.permute.xlu0 %1604
    %1608 = vrot.lane.b32.xlu0 %v1600, 64
    %v1609 = vpop.permute.xlu0 %1608
    %v1611 = vsel %vm124, %v1597, %v1605
    %v1612 = vsel %vm124, %v1599, %v1609
    %v1613 = vpack.c.bf16 %v1611, %v1611
    %v1614 = vpack.c.bf16 %v1612, %v1612
    %v1615 = vpack.c.bf16 %v1602, %v1602
    %v1616 = vld [vmem:[%s2] sm:$0xff]
    %v1617 = vld [vmem:[%s2 + $0x8] sm:$0xff]
    %v1618 = vld [vmem:[%s2 + $0x10] sm:$0xff]
    %v1619 = vld [vmem:[%s2 + $0x18] sm:$0xff]
    %v1620 = vld [vmem:[%s2 + $0x20] sm:$0xff]
    %v1621 = vld [vmem:[%s2 + $0x28] sm:$0xff]
    %v1622 = vld [vmem:[%s2 + $0x30] sm:$0xff]
    %v1623 = vld [vmem:[%s2 + $0x38] sm:$0xff]
    %v1624 = vld [vmem:[%s2 + $0x40] sm:$0xff]
    %v1625 = vld [vmem:[%s2 + $0x48] sm:$0xff]
    %v1626 = vld [vmem:[%s2 + $0x50] sm:$0xff]
    %v1627 = vld [vmem:[%s2 + $0x58] sm:$0xff]
    %v1628 = vld [vmem:[%s2 + $0x60] sm:$0xff]
    %v1629 = vld [vmem:[%s2 + $0x68] sm:$0xff]
    %v1630 = vld [vmem:[%s2 + $0x70] sm:$0xff]
    %v1631 = vld [vmem:[%s2 + $0x78] sm:$0xff]
    %v1632 = vld [vmem:[%s2 + $0x80] sm:$0xff]
    %v1633 = vld [vmem:[%s2 + $0x88] sm:$0xff]
    %v1634 = vld [vmem:[%s2 + $0x90] sm:$0xff]
    %v1635 = vld [vmem:[%s2 + $0x98] sm:$0xff]
    %v1636 = vld [vmem:[%s2 + $0xa0] sm:$0xff]
    %v1637 = vld [vmem:[%s2 + $0xa8] sm:$0xff]
    %v1638 = vld [vmem:[%s2 + $0xb0] sm:$0xff]
    %v1639 = vld [vmem:[%s2 + $0xb8] sm:$0xff]
    %v1640 = vld [vmem:[%s2 + $0xc0] sm:$0xff]
    %v1641 = vld [vmem:[%s2 + $0xc8] sm:$0xff]
    %v1642 = vld [vmem:[%s2 + $0xd0] sm:$0xff]
    %v1643 = vld [vmem:[%s2 + $0xd8] sm:$0xff]
    %v1644 = vld [vmem:[%s2 + $0xe0] sm:$0xff]
    %v1645 = vld [vmem:[%s2 + $0xe8] sm:$0xff]
    %v1646 = vld [vmem:[%s2 + $0xf0] sm:$0xff]
    %v1647 = vld [vmem:[%s2 + $0xf8] sm:$0xff]
    %v1648 = vld [vmem:[%s2 + $0x100] sm:$0xff]
    %v1649 = vld [vmem:[%s2 + $0x108] sm:$0xff]
    %v1650 = vld [vmem:[%s2 + $0x110] sm:$0xff]
    %v1651 = vld [vmem:[%s2 + $0x118] sm:$0xff]
    %v1652 = vld [vmem:[%s2 + $0x120] sm:$0xff]
    %v1653 = vld [vmem:[%s2 + $0x128] sm:$0xff]
    %v1654 = vld [vmem:[%s2 + $0x130] sm:$0xff]
    %v1655 = vld [vmem:[%s2 + $0x138] sm:$0xff]
    %v1656 = vld [vmem:[%s3] sm:$0x3]
    %v1658 = vlaneseq
    %v1659 = vshrl.u32 %v1658, 7
    %v1660 = vsub.s32 0, %v1659
    %v1661 = vrot.slane %v1656, %v1660
    %v1662 = vlaneseq
    %v1663 = vshrl.u32 %v1662, 7
    %v1664 = vsub.s32 1, %v1663
    %v1665 = vrot.slane %v1656, %v1664
    %v1708 = vunpack.c.l.b16 %v1616
    %v1709 = vunpack.c.h.b16 %v1616
    %v1710 = vunpack.c.l.b16 %v1617
    %v1711 = vunpack.c.h.b16 %v1617
    %v1712 = vunpack.c.l.b16 %v1618
    %v1713 = vunpack.c.h.b16 %v1618
    %v1714 = vunpack.c.l.b16 %v1619
    %v1715 = vunpack.c.h.b16 %v1619
    %v1716 = vunpack.c.l.b16 %v1620
    %v1717 = vunpack.c.h.b16 %v1620
    %v1718 = vunpack.c.l.b16 %v1621
    %v1719 = vunpack.c.h.b16 %v1621
    %v1720 = vunpack.c.l.b16 %v1622
    %v1721 = vunpack.c.h.b16 %v1622
    %v1722 = vunpack.c.l.b16 %v1623
    %v1723 = vunpack.c.h.b16 %v1623
    %v1724 = vunpack.c.l.b16 %v1624
    %v1725 = vunpack.c.h.b16 %v1624
    %v1726 = vunpack.c.l.b16 %v1625
    %v1727 = vunpack.c.h.b16 %v1625
    %v1728 = vunpack.c.l.b16 %v1626
    %v1729 = vunpack.c.h.b16 %v1626
    %v1730 = vunpack.c.l.b16 %v1627
    %v1731 = vunpack.c.h.b16 %v1627
    %v1732 = vunpack.c.l.b16 %v1628
    %v1733 = vunpack.c.h.b16 %v1628
    %v1734 = vunpack.c.l.b16 %v1629
    %v1735 = vunpack.c.h.b16 %v1629
    %v1736 = vunpack.c.l.b16 %v1630
    %v1737 = vunpack.c.h.b16 %v1630
    %v1738 = vunpack.c.l.b16 %v1631
    %v1739 = vunpack.c.h.b16 %v1631
    %v1740 = vunpack.c.l.b16 %v1632
    %v1741 = vunpack.c.h.b16 %v1632
    %v1742 = vunpack.c.l.b16 %v1633
    %v1743 = vunpack.c.h.b16 %v1633
    %v1744 = vunpack.c.l.b16 %v1634
    %v1745 = vunpack.c.h.b16 %v1634
    %v1746 = vunpack.c.l.b16 %v1635
    %v1747 = vunpack.c.h.b16 %v1635
    %v1748 = vunpack.c.l.b16 %v1636
    %v1749 = vunpack.c.h.b16 %v1636
    %v1750 = vunpack.c.l.b16 %v1637
    %v1751 = vunpack.c.h.b16 %v1637
    %v1752 = vunpack.c.l.b16 %v1638
    %v1753 = vunpack.c.h.b16 %v1638
    %v1754 = vunpack.c.l.b16 %v1639
    %v1755 = vunpack.c.h.b16 %v1639
    %v1756 = vunpack.c.l.b16 %v1640
    %v1757 = vunpack.c.h.b16 %v1640
    %v1758 = vunpack.c.l.b16 %v1641
    %v1759 = vunpack.c.h.b16 %v1641
    %v1760 = vunpack.c.l.b16 %v1642
    %v1761 = vunpack.c.h.b16 %v1642
    %v1762 = vunpack.c.l.b16 %v1643
    %v1763 = vunpack.c.h.b16 %v1643
    %v1764 = vunpack.c.l.b16 %v1644
    %v1765 = vunpack.c.h.b16 %v1644
    %v1766 = vunpack.c.l.b16 %v1645
    %v1767 = vunpack.c.h.b16 %v1645
    %v1768 = vunpack.c.l.b16 %v1646
    %v1769 = vunpack.c.h.b16 %v1646
    %v1770 = vunpack.c.l.b16 %v1647
    %v1771 = vunpack.c.h.b16 %v1647
    %v1772 = vunpack.c.l.b16 %v1648
    %v1773 = vunpack.c.h.b16 %v1648
    %v1774 = vunpack.c.l.b16 %v1649
    %v1775 = vunpack.c.h.b16 %v1649
    %v1776 = vunpack.c.l.b16 %v1650
    %v1777 = vunpack.c.h.b16 %v1650
    %v1778 = vunpack.c.l.b16 %v1651
    %v1779 = vunpack.c.h.b16 %v1651
    %v1780 = vunpack.c.l.b16 %v1652
    %v1781 = vunpack.c.h.b16 %v1652
    %v1782 = vunpack.c.l.b16 %v1653
    %v1783 = vunpack.c.h.b16 %v1653
    %v1784 = vunpack.c.l.b16 %v1654
    %v1785 = vunpack.c.h.b16 %v1654
    %v1786 = vunpack.c.l.b16 %v1655
    %v1787 = vunpack.c.h.b16 %v1655
    %v1788 = vpack.c.b16 %v1710, %v1708
    %v1789 = vpack.c.b16 %v1711, %v1709
    %v1790 = vpack.c.b16 %v1714, %v1712
    %v1791 = vpack.c.b16 %v1715, %v1713
    %v1792 = vpack.c.b16 %v1718, %v1716
    %v1793 = vpack.c.b16 %v1719, %v1717
    %v1794 = vpack.c.b16 %v1722, %v1720
    %v1795 = vpack.c.b16 %v1723, %v1721
    %v1796 = vpack.c.b16 %v1726, %v1724
    %v1797 = vpack.c.b16 %v1727, %v1725
    %v1798 = vpack.c.b16 %v1730, %v1728
    %v1799 = vpack.c.b16 %v1731, %v1729
    %v1800 = vpack.c.b16 %v1734, %v1732
    %v1801 = vpack.c.b16 %v1735, %v1733
    %v1802 = vpack.c.b16 %v1738, %v1736
    %v1803 = vpack.c.b16 %v1739, %v1737
    %v1804 = vpack.c.b16 %v1742, %v1740
    %v1805 = vpack.c.b16 %v1743, %v1741
    %v1806 = vpack.c.b16 %v1746, %v1744
    %v1807 = vpack.c.b16 %v1747, %v1745
    %v1808 = vpack.c.b16 %v1750, %v1748
    %v1809 = vpack.c.b16 %v1751, %v1749
    %v1810 = vpack.c.b16 %v1754, %v1752
    %v1811 = vpack.c.b16 %v1755, %v1753
    %v1812 = vpack.c.b16 %v1758, %v1756
    %v1813 = vpack.c.b16 %v1759, %v1757
    %v1814 = vpack.c.b16 %v1762, %v1760
    %v1815 = vpack.c.b16 %v1763, %v1761
    %v1816 = vpack.c.b16 %v1766, %v1764
    %v1817 = vpack.c.b16 %v1767, %v1765
    %v1818 = vpack.c.b16 %v1770, %v1768
    %v1819 = vpack.c.b16 %v1771, %v1769
    %v1820 = vpack.c.b16 %v1774, %v1772
    %v1821 = vpack.c.b16 %v1775, %v1773
    %v1822 = vpack.c.b16 %v1778, %v1776
    %v1823 = vpack.c.b16 %v1779, %v1777
    %v1824 = vpack.c.b16 %v1782, %v1780
    %v1825 = vpack.c.b16 %v1783, %v1781
    %v1826 = vpack.c.b16 %v1786, %v1784
    %v1827 = vpack.c.b16 %v1787, %v1785
    %v1869 = vsel %vm124, %v1615, 0
    %1871 = vmatprep.subr.bf16.mxu0 %v1789
    %1872 = vmatpush1.bf16.msra.mxu0 %v1788
    %1873 = vmatprep.subr.bf16.mxu0 %v1791
    %1874 = vmatpush1.bf16.msra.mxu0 %v1790
    %1875 = vmatprep.subr.bf16.mxu0 %v1793
    %1876 = vmatpush1.bf16.msra.mxu0 %v1792
    %1877 = vmatprep.subr.bf16.mxu0 %v1795
    %1878 = vmatpush1.bf16.msra.mxu0 %v1794
    %1879 = vmatprep.subr.bf16.mxu0 %v1797
    %1880 = vmatpush1.bf16.msra.mxu0 %v1796
    %1881 = vmatprep.subr.bf16.mxu0 %v1799
    %1882 = vmatpush1.bf16.msra.mxu0 %v1798
    %1883 = vmatprep.subr.bf16.mxu0 %v1801
    %1884 = vmatpush1.bf16.msra.mxu0 %v1800
    %1885 = vmatprep.subr.bf16.mxu0 %v1803
    %1886 = vmatpush1.bf16.msra.mxu0 %v1802
    %1887 = vmatprep.subr.bf16.mxu0 %v1805
    %1888 = vmatpush1.bf16.msra.mxu0 %v1804
    %1889 = vmatprep.subr.bf16.mxu0 %v1807
    %1890 = vmatpush1.bf16.msra.mxu0 %v1806
    %1891 = vmatprep.subr.bf16.mxu0 %v1809
    %1892 = vmatpush1.bf16.msra.mxu0 %v1808
    %1893 = vmatprep.subr.bf16.mxu0 %v1811
    %1894 = vmatpush1.bf16.msra.mxu0 %v1810
    %1895 = vmatprep.subr.bf16.mxu0 %v1813
    %1896 = vmatpush1.bf16.msra.mxu0 %v1812
    %1897 = vmatprep.subr.bf16.mxu0 %v1815
    %1898 = vmatpush1.bf16.msra.mxu0 %v1814
    %1899 = vmatprep.subr.bf16.mxu0 %v1817
    %1900 = vmatpush1.bf16.msra.mxu0 %v1816
    %1901 = vmatprep.subr.bf16.mxu0 %v1819
    %1902 = vmatpush1.bf16.msra.mxu0 %v1818
    %1903 = vmatprep.mubr.bf16.mxu0 %v1614
    %1904 = vmatmul.mubr.bf16.gmra.mrb[0].mxu0 %v1613
    %v1905 = vpop.f32.mrb[0].mxu0
    %v1906 = vadd.f32 %v1661, %v1905
    %v1907 = vpop.f32.mrb[0].mxu0
    %v1908 = vadd.f32 %v1665, %v1907
    %v1909 = vpop.f32.mrb[0].mxu0
    %v1910 = vpop.f32.mrb[0].mxu0
    %1911 = vdwg.mxu0
    %1912 = vmatprep.subr.bf16.mxu0 %v1821
    %1913 = vmatpush1.bf16.msra.mxu0 %v1820
    %1914 = vmatprep.subr.bf16.mxu0 %v1823
    %1915 = vmatpush1.bf16.msra.mxu0 %v1822
    %1916 = vmatprep.subr.bf16.mxu0 %v1825
    %1917 = vmatpush1.bf16.msra.mxu0 %v1824
    %1918 = vmatprep.subr.bf16.mxu0 %v1827
    %1919 = vmatpush1.bf16.msra.mxu0 %v1826
    %1920 = vmatprep.subr.bf16.mxu0 0
    %1921 = vmatpush1.bf16.msra.mxu0 0
    %1922 = vmatprep.subr.bf16.mxu0 0
    %1923 = vmatpush1.bf16.msra.mxu0 0
    %1924 = vmatprep.subr.bf16.mxu0 0
    %1925 = vmatpush1.bf16.msra.mxu0 0
    %1926 = vmatprep.subr.bf16.mxu0 0
    %1927 = vmatpush1.bf16.msra.mxu0 0
    %1928 = vmatprep.subr.bf16.mxu0 0
    %1929 = vmatpush1.bf16.msra.mxu0 0
    %1930 = vmatprep.subr.bf16.mxu0 0
    %1931 = vmatpush1.bf16.msra.mxu0 0
    %1932 = vmatprep.subr.bf16.mxu0 0
    %1933 = vmatpush1.bf16.msra.mxu0 0
    %1934 = vmatprep.subr.bf16.mxu0 0
    %1935 = vmatpush1.bf16.msra.mxu0 0
    %1936 = vmatprep.subr.bf16.mxu0 0
    %1937 = vmatpush1.bf16.msra.mxu0 0
    %1938 = vmatprep.subr.bf16.mxu0 0
    %1939 = vmatpush1.bf16.msra.mxu0 0
    %1940 = vmatprep.subr.bf16.mxu0 0
    %1941 = vmatpush1.bf16.msra.mxu0 0
    %1942 = vmatprep.subr.bf16.mxu0 0
    %1943 = vmatpush1.bf16.msra.mxu0 0
    %1944 = vmatprep.mubr.bf16.mxu0 0
    %1945 = vmatmul.mubr.bf16.gmra.mrb[0].mxu0 %v1869
    %v1946 = vpop.f32.mrb[0].mxu0
    %v1947 = vadd.f32 %v1906, %v1946
    %v1948 = vpop.f32.mrb[0].mxu0
    %v1949 = vadd.f32 %v1908, %v1948
    %v1950 = vpop.f32.mrb[0].mxu0
    %v1951 = vpop.f32.mrb[0].mxu0
    %1952 = vdwg.mxu0
    %v1953 = vmax.f32 %v1947, 0.0
    %v1954 = vmax.f32 %v1949, 0.0
    %v1957 = vcombine.low %v1953, %v1954
    %v1959 = vunpack.c.l.s4 1983009808
    %v1960 = vunpack.c.0.s8 %v1959
    %v1961 = vlaneseq
    %v1962 = vshrl.u32 %v1961, 7
    %v1963 = vsub.s32 %v1960, %v1962
    %v1964 = vrot.slane %v1957, %v1963
    %s1966 = scalar_lea.vmem [#allocation2], 16
    %1967 = vst.msk [vmem:[%s1966] sm:$0xf] %vm482, %v1964
    %v1968 = vld [vmem:[%s488] sm:$0x3]
    %v1969 = vld [vmem:[%s859] sm:$0x3]
    %v1970 = vld [vmem:[%s1230] sm:$0x3]
    %v1971 = vld [vmem:[%s1601] sm:$0x3]
    %s1972 = scalar_lea.vmem %s0, 18
    %v1973 = vld [vmem:[%s1972] sm:$0x3]
    %1975 = vrot.lane.b32.xlu0 %v1969, 64
    %v1976 = vpop.permute.xlu0 %1975
    %1979 = vrot.lane.b32.xlu0 %v1971, 64
    %v1980 = vpop.permute.xlu0 %1979
    %v1982 = vsel %vm124, %v1968, %v1976
    %v1983 = vsel %vm124, %v1970, %v1980
    %v1984 = vpack.c.bf16 %v1982, %v1982
    %v1985 = vpack.c.bf16 %v1983, %v1983
    %v1986 = vpack.c.bf16 %v1973, %v1973
    %v1987 = vld [vmem:[%s2] sm:$0xff]
    %v1988 = vld [vmem:[%s2 + $0x8] sm:$0xff]
    %v1989 = vld [vmem:[%s2 + $0x10] sm:$0xff]
    %v1990 = vld [vmem:[%s2 + $0x18] sm:$0xff]
    %v1991 = vld [vmem:[%s2 + $0x20] sm:$0xff]
    %v1992 = vld [vmem:[%s2 + $0x28] sm:$0xff]
    %v1993 = vld [vmem:[%s2 + $0x30] sm:$0xff]
    %v1994 = vld [vmem:[%s2 + $0x38] sm:$0xff]
    %v1995 = vld [vmem:[%s2 + $0x40] sm:$0xff]
    %v1996 = vld [vmem:[%s2 + $0x48] sm:$0xff]
    %v1997 = vld [vmem:[%s2 + $0x50] sm:$0xff]
    %v1998 = vld [vmem:[%s2 + $0x58] sm:$0xff]
    %v1999 = vld [vmem:[%s2 + $0x60] sm:$0xff]
    %v2000 = vld [vmem:[%s2 + $0x68] sm:$0xff]
    %v2001 = vld [vmem:[%s2 + $0x70] sm:$0xff]
    %v2002 = vld [vmem:[%s2 + $0x78] sm:$0xff]
    %v2003 = vld [vmem:[%s2 + $0x80] sm:$0xff]
    %v2004 = vld [vmem:[%s2 + $0x88] sm:$0xff]
    %v2005 = vld [vmem:[%s2 + $0x90] sm:$0xff]
    %v2006 = vld [vmem:[%s2 + $0x98] sm:$0xff]
    %v2007 = vld [vmem:[%s2 + $0xa0] sm:$0xff]
    %v2008 = vld [vmem:[%s2 + $0xa8] sm:$0xff]
    %v2009 = vld [vmem:[%s2 + $0xb0] sm:$0xff]
    %v2010 = vld [vmem:[%s2 + $0xb8] sm:$0xff]
    %v2011 = vld [vmem:[%s2 + $0xc0] sm:$0xff]
    %v2012 = vld [vmem:[%s2 + $0xc8] sm:$0xff]
    %v2013 = vld [vmem:[%s2 + $0xd0] sm:$0xff]
    %v2014 = vld [vmem:[%s2 + $0xd8] sm:$0xff]
    %v2015 = vld [vmem:[%s2 + $0xe0] sm:$0xff]
    %v2016 = vld [vmem:[%s2 + $0xe8] sm:$0xff]
    %v2017 = vld [vmem:[%s2 + $0xf0] sm:$0xff]
    %v2018 = vld [vmem:[%s2 + $0xf8] sm:$0xff]
    %v2019 = vld [vmem:[%s2 + $0x100] sm:$0xff]
    %v2020 = vld [vmem:[%s2 + $0x108] sm:$0xff]
    %v2021 = vld [vmem:[%s2 + $0x110] sm:$0xff]
    %v2022 = vld [vmem:[%s2 + $0x118] sm:$0xff]
    %v2023 = vld [vmem:[%s2 + $0x120] sm:$0xff]
    %v2024 = vld [vmem:[%s2 + $0x128] sm:$0xff]
    %v2025 = vld [vmem:[%s2 + $0x130] sm:$0xff]
    %v2026 = vld [vmem:[%s2 + $0x138] sm:$0xff]
    %v2027 = vld [vmem:[%s3] sm:$0x3]
    %v2029 = vlaneseq
    %v2030 = vshrl.u32 %v2029, 7
    %v2031 = vsub.s32 0, %v2030
    %v2032 = vrot.slane %v2027, %v2031
    %v2033 = vlaneseq
    %v2034 = vshrl.u32 %v2033, 7
    %v2035 = vsub.s32 1, %v2034
    %v2036 = vrot.slane %v2027, %v2035
    %v2079 = vunpack.c.l.b16 %v1987
    %v2080 = vunpack.c.h.b16 %v1987
    %v2081 = vunpack.c.l.b16 %v1988
    %v2082 = vunpack.c.h.b16 %v1988
    %v2083 = vunpack.c.l.b16 %v1989
    %v2084 = vunpack.c.h.b16 %v1989
    %v2085 = vunpack.c.l.b16 %v1990
    %v2086 = vunpack.c.h.b16 %v1990
    %v2087 = vunpack.c.l.b16 %v1991
    %v2088 = vunpack.c.h.b16 %v1991
    %v2089 = vunpack.c.l.b16 %v1992
    %v2090 = vunpack.c.h.b16 %v1992
    %v2091 = vunpack.c.l.b16 %v1993
    %v2092 = vunpack.c.h.b16 %v1993
    %v2093 = vunpack.c.l.b16 %v1994
    %v2094 = vunpack.c.h.b16 %v1994
    %v2095 = vunpack.c.l.b16 %v1995
    %v2096 = vunpack.c.h.b16 %v1995
    %v2097 = vunpack.c.l.b16 %v1996
    %v2098 = vunpack.c.h.b16 %v1996
    %v2099 = vunpack.c.l.b16 %v1997
    %v2100 = vunpack.c.h.b16 %v1997
    %v2101 = vunpack.c.l.b16 %v1998
    %v2102 = vunpack.c.h.b16 %v1998
    %v2103 = vunpack.c.l.b16 %v1999
    %v2104 = vunpack.c.h.b16 %v1999
    %v2105 = vunpack.c.l.b16 %v2000
    %v2106 = vunpack.c.h.b16 %v2000
    %v2107 = vunpack.c.l.b16 %v2001
    %v2108 = vunpack.c.h.b16 %v2001
    %v2109 = vunpack.c.l.b16 %v2002
    %v2110 = vunpack.c.h.b16 %v2002
    %v2111 = vunpack.c.l.b16 %v2003
    %v2112 = vunpack.c.h.b16 %v2003
    %v2113 = vunpack.c.l.b16 %v2004
    %v2114 = vunpack.c.h.b16 %v2004
    %v2115 = vunpack.c.l.b16 %v2005
    %v2116 = vunpack.c.h.b16 %v2005
    %v2117 = vunpack.c.l.b16 %v2006
    %v2118 = vunpack.c.h.b16 %v2006
    %v2119 = vunpack.c.l.b16 %v2007
    %v2120 = vunpack.c.h.b16 %v2007
    %v2121 = vunpack.c.l.b16 %v2008
    %v2122 = vunpack.c.h.b16 %v2008
    %v2123 = vunpack.c.l.b16 %v2009
    %v2124 = vunpack.c.h.b16 %v2009
    %v2125 = vunpack.c.l.b16 %v2010
    %v2126 = vunpack.c.h.b16 %v2010
    %v2127 = vunpack.c.l.b16 %v2011
    %v2128 = vunpack.c.h.b16 %v2011
    %v2129 = vunpack.c.l.b16 %v2012
    %v2130 = vunpack.c.h.b16 %v2012
    %v2131 = vunpack.c.l.b16 %v2013
    %v2132 = vunpack.c.h.b16 %v2013
    %v2133 = vunpack.c.l.b16 %v2014
    %v2134 = vunpack.c.h.b16 %v2014
    %v2135 = vunpack.c.l.b16 %v2015
    %v2136 = vunpack.c.h.b16 %v2015
    %v2137 = vunpack.c.l.b16 %v2016
    %v2138 = vunpack.c.h.b16 %v2016
    %v2139 = vunpack.c.l.b16 %v2017
    %v2140 = vunpack.c.h.b16 %v2017
    %v2141 = vunpack.c.l.b16 %v2018
    %v2142 = vunpack.c.h.b16 %v2018
    %v2143 = vunpack.c.l.b16 %v2019
    %v2144 = vunpack.c.h.b16 %v2019
    %v2145 = vunpack.c.l.b16 %v2020
    %v2146 = vunpack.c.h.b16 %v2020
    %v2147 = vunpack.c.l.b16 %v2021
    %v2148 = vunpack.c.h.b16 %v2021
    %v2149 = vunpack.c.l.b16 %v2022
    %v2150 = vunpack.c.h.b16 %v2022
    %v2151 = vunpack.c.l.b16 %v2023
    %v2152 = vunpack.c.h.b16 %v2023
    %v2153 = vunpack.c.l.b16 %v2024
    %v2154 = vunpack.c.h.b16 %v2024
    %v2155 = vunpack.c.l.b16 %v2025
    %v2156 = vunpack.c.h.b16 %v2025
    %v2157 = vunpack.c.l.b16 %v2026
    %v2158 = vunpack.c.h.b16 %v2026
    %v2159 = vpack.c.b16 %v2081, %v2079
    %v2160 = vpack.c.b16 %v2082, %v2080
    %v2161 = vpack.c.b16 %v2085, %v2083
    %v2162 = vpack.c.b16 %v2086, %v2084
    %v2163 = vpack.c.b16 %v2089, %v2087
    %v2164 = vpack.c.b16 %v2090, %v2088
    %v2165 = vpack.c.b16 %v2093, %v2091
    %v2166 = vpack.c.b16 %v2094, %v2092
    %v2167 = vpack.c.b16 %v2097, %v2095
    %v2168 = vpack.c.b16 %v2098, %v2096
    %v2169 = vpack.c.b16 %v2101, %v2099
    %v2170 = vpack.c.b16 %v2102, %v2100
    %v2171 = vpack.c.b16 %v2105, %v2103
    %v2172 = vpack.c.b16 %v2106, %v2104
    %v2173 = vpack.c.b16 %v2109, %v2107
    %v2174 = vpack.c.b16 %v2110, %v2108
    %v2175 = vpack.c.b16 %v2113, %v2111
    %v2176 = vpack.c.b16 %v2114, %v2112
    %v2177 = vpack.c.b16 %v2117, %v2115
    %v2178 = vpack.c.b16 %v2118, %v2116
    %v2179 = vpack.c.b16 %v2121, %v2119
    %v2180 = vpack.c.b16 %v2122, %v2120
    %v2181 = vpack.c.b16 %v2125, %v2123
    %v2182 = vpack.c.b16 %v2126, %v2124
    %v2183 = vpack.c.b16 %v2129, %v2127
    %v2184 = vpack.c.b16 %v2130, %v2128
    %v2185 = vpack.c.b16 %v2133, %v2131
    %v2186 = vpack.c.b16 %v2134, %v2132
    %v2187 = vpack.c.b16 %v2137, %v2135
    %v2188 = vpack.c.b16 %v2138, %v2136
    %v2189 = vpack.c.b16 %v2141, %v2139
    %v2190 = vpack.c.b16 %v2142, %v2140
    %v2191 = vpack.c.b16 %v2145, %v2143
    %v2192 = vpack.c.b16 %v2146, %v2144
    %v2193 = vpack.c.b16 %v2149, %v2147
    %v2194 = vpack.c.b16 %v2150, %v2148
    %v2195 = vpack.c.b16 %v2153, %v2151
    %v2196 = vpack.c.b16 %v2154, %v2152
    %v2197 = vpack.c.b16 %v2157, %v2155
    %v2198 = vpack.c.b16 %v2158, %v2156
    %v2240 = vsel %vm124, %v1986, 0
    %2242 = vmatprep.subr.bf16.mxu0 %v2160
    %2243 = vmatpush1.bf16.msra.mxu0 %v2159
    %2244 = vmatprep.subr.bf16.mxu0 %v2162
    %2245 = vmatpush1.bf16.msra.mxu0 %v2161
    %2246 = vmatprep.subr.bf16.mxu0 %v2164
    %2247 = vmatpush1.bf16.msra.mxu0 %v2163
    %2248 = vmatprep.subr.bf16.mxu0 %v2166
    %2249 = vmatpush1.bf16.msra.mxu0 %v2165
    %2250 = vmatprep.subr.bf16.mxu0 %v2168
    %2251 = vmatpush1.bf16.msra.mxu0 %v2167
    %2252 = vmatprep.subr.bf16.mxu0 %v2170
    %2253 = vmatpush1.bf16.msra.mxu0 %v2169
    %2254 = vmatprep.subr.bf16.mxu0 %v2172
    %2255 = vmatpush1.bf16.msra.mxu0 %v2171
    %2256 = vmatprep.subr.bf16.mxu0 %v2174
    %2257 = vmatpush1.bf16.msra.mxu0 %v2173
    %2258 = vmatprep.subr.bf16.mxu0 %v2176
    %2259 = vmatpush1.bf16.msra.mxu0 %v2175
    %2260 = vmatprep.subr.bf16.mxu0 %v2178
    %2261 = vmatpush1.bf16.msra.mxu0 %v2177
    %2262 = vmatprep.subr.bf16.mxu0 %v2180
    %2263 = vmatpush1.bf16.msra.mxu0 %v2179
    %2264 = vmatprep.subr.bf16.mxu0 %v2182
    %2265 = vmatpush1.bf16.msra.mxu0 %v2181
    %2266 = vmatprep.subr.bf16.mxu0 %v2184
    %2267 = vmatpush1.bf16.msra.mxu0 %v2183
    %2268 = vmatprep.subr.bf16.mxu0 %v2186
    %2269 = vmatpush1.bf16.msra.mxu0 %v2185
    %2270 = vmatprep.subr.bf16.mxu0 %v2188
    %2271 = vmatpush1.bf16.msra.mxu0 %v2187
    %2272 = vmatprep.subr.bf16.mxu0 %v2190
    %2273 = vmatpush1.bf16.msra.mxu0 %v2189
    %2274 = vmatprep.mubr.bf16.mxu0 %v1985
    %2275 = vmatmul.mubr.bf16.gmra.mrb[0].mxu0 %v1984
    %v2276 = vpop.f32.mrb[0].mxu0
    %v2277 = vadd.f32 %v2032, %v2276
    %v2278 = vpop.f32.mrb[0].mxu0
    %v2279 = vadd.f32 %v2036, %v2278
    %v2280 = vpop.f32.mrb[0].mxu0
    %v2281 = vpop.f32.mrb[0].mxu0
    %2282 = vdwg.mxu0
    %2283 = vmatprep.subr.bf16.mxu0 %v2192
    %2284 = vmatpush1.bf16.msra.mxu0 %v2191
    %2285 = vmatprep.subr.bf16.mxu0 %v2194
    %2286 = vmatpush1.bf16.msra.mxu0 %v2193
    %2287 = vmatprep.subr.bf16.mxu0 %v2196
    %2288 = vmatpush1.bf16.msra.mxu0 %v2195
    %2289 = vmatprep.subr.bf16.mxu0 %v2198
    %2290 = vmatpush1.bf16.msra.mxu0 %v2197
    %2291 = vmatprep.subr.bf16.mxu0 0
    %2292 = vmatpush1.bf16.msra.mxu0 0
    %2293 = vmatprep.subr.bf16.mxu0 0
    %2294 = vmatpush1.bf16.msra.mxu0 0
    %2295 = vmatprep.subr.bf16.mxu0 0
    %2296 = vmatpush1.bf16.msra.mxu0 0
    %2297 = vmatprep.subr.bf16.mxu0 0
    %2298 = vmatpush1.bf16.msra.mxu0 0
    %2299 = vmatprep.subr.bf16.mxu0 0
    %2300 = vmatpush1.bf16.msra.mxu0 0
    %2301 = vmatprep.subr.bf16.mxu0 0
    %2302 = vmatpush1.bf16.msra.mxu0 0
    %2303 = vmatprep.subr.bf16.mxu0 0
    %2304 = vmatpush1.bf16.msra.mxu0 0
    %2305 = vmatprep.subr.bf16.mxu0 0
    %2306 = vmatpush1.bf16.msra.mxu0 0
    %2307 = vmatprep.subr.bf16.mxu0 0
    %2308 = vmatpush1.bf16.msra.mxu0 0
    %2309 = vmatprep.subr.bf16.mxu0 0
    %2310 = vmatpush1.bf16.msra.mxu0 0
    %2311 = vmatprep.subr.bf16.mxu0 0
    %2312 = vmatpush1.bf16.msra.mxu0 0
    %2313 = vmatprep.subr.bf16.mxu0 0
    %2314 = vmatpush1.bf16.msra.mxu0 0
    %2315 = vmatprep.mubr.bf16.mxu0 0
    %2316 = vmatmul.mubr.bf16.gmra.mrb[0].mxu0 %v2240
    %v2317 = vpop.f32.mrb[0].mxu0
    %v2318 = vadd.f32 %v2277, %v2317
    %v2319 = vpop.f32.mrb[0].mxu0
    %v2320 = vadd.f32 %v2279, %v2319
    %v2321 = vpop.f32.mrb[0].mxu0
    %v2322 = vpop.f32.mrb[0].mxu0
    %2323 = vdwg.mxu0
    %v2324 = vmax.f32 %v2318, 0.0
    %v2325 = vmax.f32 %v2320, 0.0
    %v2328 = vcombine.low %v2324, %v2325
    %v2330 = vunpack.c.l.s4 1983009808
    %v2331 = vunpack.c.0.s8 %v2330
    %v2332 = vlaneseq
    %v2333 = vshrl.u32 %v2332, 7
    %v2334 = vsub.s32 %v2331, %v2333
    %v2335 = vrot.slane %v2328, %v2334
    %s2337 = scalar_lea.vmem [#allocation2], 20
    %2338 = vst.msk [vmem:[%s2337] sm:$0xf] %vm482, %v2335
    %v2339 = vld [vmem:[%s859] sm:$0x3]
    %v2340 = vld [vmem:[%s1230] sm:$0x3]
    %v2341 = vld [vmem:[%s1601] sm:$0x3]
    %v2342 = vld [vmem:[%s1972] sm:$0x3]
    %s2343 = scalar_lea.vmem %s0, 20
    %v2344 = vld [vmem:[%s2343] sm:$0x3]
    %2346 = vrot.lane.b32.xlu0 %v2340, 64
    %v2347 = vpop.permute.xlu0 %2346
    %2350 = vrot.lane.b32.xlu0 %v2342, 64
    %v2351 = vpop.permute.xlu0 %2350
    %v2353 = vsel %vm124, %v2339, %v2347
    %v2354 = vsel %vm124, %v2341, %v2351
    %v2355 = vpack.c.bf16 %v2353, %v2353
    %v2356 = vpack.c.bf16 %v2354, %v2354
    %v2357 = vpack.c.bf16 %v2344, %v2344
    %v2358 = vld [vmem:[%s2] sm:$0xff]
    %v2359 = vld [vmem:[%s2 + $0x8] sm:$0xff]
    %v2360 = vld [vmem:[%s2 + $0x10] sm:$0xff]
    %v2361 = vld [vmem:[%s2 + $0x18] sm:$0xff]
    %v2362 = vld [vmem:[%s2 + $0x20] sm:$0xff]
    %v2363 = vld [vmem:[%s2 + $0x28] sm:$0xff]
    %v2364 = vld [vmem:[%s2 + $0x30] sm:$0xff]
    %v2365 = vld [vmem:[%s2 + $0x38] sm:$0xff]
    %v2366 = vld [vmem:[%s2 + $0x40] sm:$0xff]
    %v2367 = vld [vmem:[%s2 + $0x48] sm:$0xff]
    %v2368 = vld [vmem:[%s2 + $0x50] sm:$0xff]
    %v2369 = vld [vmem:[%s2 + $0x58] sm:$0xff]
    %v2370 = vld [vmem:[%s2 + $0x60] sm:$0xff]
    %v2371 = vld [vmem:[%s2 + $0x68] sm:$0xff]
    %v2372 = vld [vmem:[%s2 + $0x70] sm:$0xff]
    %v2373 = vld [vmem:[%s2 + $0x78] sm:$0xff]
    %v2374 = vld [vmem:[%s2 + $0x80] sm:$0xff]
    %v2375 = vld [vmem:[%s2 + $0x88] sm:$0xff]
    %v2376 = vld [vmem:[%s2 + $0x90] sm:$0xff]
    %v2377 = vld [vmem:[%s2 + $0x98] sm:$0xff]
    %v2378 = vld [vmem:[%s2 + $0xa0] sm:$0xff]
    %v2379 = vld [vmem:[%s2 + $0xa8] sm:$0xff]
    %v2380 = vld [vmem:[%s2 + $0xb0] sm:$0xff]
    %v2381 = vld [vmem:[%s2 + $0xb8] sm:$0xff]
    %v2382 = vld [vmem:[%s2 + $0xc0] sm:$0xff]
    %v2383 = vld [vmem:[%s2 + $0xc8] sm:$0xff]
    %v2384 = vld [vmem:[%s2 + $0xd0] sm:$0xff]
    %v2385 = vld [vmem:[%s2 + $0xd8] sm:$0xff]
    %v2386 = vld [vmem:[%s2 + $0xe0] sm:$0xff]
    %v2387 = vld [vmem:[%s2 + $0xe8] sm:$0xff]
    %v2388 = vld [vmem:[%s2 + $0xf0] sm:$0xff]
    %v2389 = vld [vmem:[%s2 + $0xf8] sm:$0xff]
    %v2390 = vld [vmem:[%s2 + $0x100] sm:$0xff]
    %v2391 = vld [vmem:[%s2 + $0x108] sm:$0xff]
    %v2392 = vld [vmem:[%s2 + $0x110] sm:$0xff]
    %v2393 = vld [vmem:[%s2 + $0x118] sm:$0xff]
    %v2394 = vld [vmem:[%s2 + $0x120] sm:$0xff]
    %v2395 = vld [vmem:[%s2 + $0x128] sm:$0xff]
    %v2396 = vld [vmem:[%s2 + $0x130] sm:$0xff]
    %v2397 = vld [vmem:[%s2 + $0x138] sm:$0xff]
    %v2398 = vld [vmem:[%s3] sm:$0x3]
    %v2400 = vlaneseq
    %v2401 = vshrl.u32 %v2400, 7
    %v2402 = vsub.s32 0, %v2401
    %v2403 = vrot.slane %v2398, %v2402
    %v2404 = vlaneseq
    %v2405 = vshrl.u32 %v2404, 7
    %v2406 = vsub.s32 1, %v2405
    %v2407 = vrot.slane %v2398, %v2406
    %v2450 = vunpack.c.l.b16 %v2358
    %v2451 = vunpack.c.h.b16 %v2358
    %v2452 = vunpack.c.l.b16 %v2359
    %v2453 = vunpack.c.h.b16 %v2359
    %v2454 = vunpack.c.l.b16 %v2360
    %v2455 = vunpack.c.h.b16 %v2360
    %v2456 = vunpack.c.l.b16 %v2361
    %v2457 = vunpack.c.h.b16 %v2361
    %v2458 = vunpack.c.l.b16 %v2362
    %v2459 = vunpack.c.h.b16 %v2362
    %v2460 = vunpack.c.l.b16 %v2363
    %v2461 = vunpack.c.h.b16 %v2363
    %v2462 = vunpack.c.l.b16 %v2364
    %v2463 = vunpack.c.h.b16 %v2364
    %v2464 = vunpack.c.l.b16 %v2365
    %v2465 = vunpack.c.h.b16 %v2365
    %v2466 = vunpack.c.l.b16 %v2366
    %v2467 = vunpack.c.h.b16 %v2366
    %v2468 = vunpack.c.l.b16 %v2367
    %v2469 = vunpack.c.h.b16 %v2367
    %v2470 = vunpack.c.l.b16 %v2368
    %v2471 = vunpack.c.h.b16 %v2368
    %v2472 = vunpack.c.l.b16 %v2369
    %v2473 = vunpack.c.h.b16 %v2369
    %v2474 = vunpack.c.l.b16 %v2370
    %v2475 = vunpack.c.h.b16 %v2370
    %v2476 = vunpack.c.l.b16 %v2371
    %v2477 = vunpack.c.h.b16 %v2371
    %v2478 = vunpack.c.l.b16 %v2372
    %v2479 = vunpack.c.h.b16 %v2372
    %v2480 = vunpack.c.l.b16 %v2373
    %v2481 = vunpack.c.h.b16 %v2373
    %v2482 = vunpack.c.l.b16 %v2374
    %v2483 = vunpack.c.h.b16 %v2374
    %v2484 = vunpack.c.l.b16 %v2375
    %v2485 = vunpack.c.h.b16 %v2375
    %v2486 = vunpack.c.l.b16 %v2376
    %v2487 = vunpack.c.h.b16 %v2376
    %v2488 = vunpack.c.l.b16 %v2377
    %v2489 = vunpack.c.h.b16 %v2377
    %v2490 = vunpack.c.l.b16 %v2378
    %v2491 = vunpack.c.h.b16 %v2378
    %v2492 = vunpack.c.l.b16 %v2379
    %v2493 = vunpack.c.h.b16 %v2379
    %v2494 = vunpack.c.l.b16 %v2380
    %v2495 = vunpack.c.h.b16 %v2380
    %v2496 = vunpack.c.l.b16 %v2381
    %v2497 = vunpack.c.h.b16 %v2381
    %v2498 = vunpack.c.l.b16 %v2382
    %v2499 = vunpack.c.h.b16 %v2382
    %v2500 = vunpack.c.l.b16 %v2383
    %v2501 = vunpack.c.h.b16 %v2383
    %v2502 = vunpack.c.l.b16 %v2384
    %v2503 = vunpack.c.h.b16 %v2384
    %v2504 = vunpack.c.l.b16 %v2385
    %v2505 = vunpack.c.h.b16 %v2385
    %v2506 = vunpack.c.l.b16 %v2386
    %v2507 = vunpack.c.h.b16 %v2386
    %v2508 = vunpack.c.l.b16 %v2387
    %v2509 = vunpack.c.h.b16 %v2387
    %v2510 = vunpack.c.l.b16 %v2388
    %v2511 = vunpack.c.h.b16 %v2388
    %v2512 = vunpack.c.l.b16 %v2389
    %v2513 = vunpack.c.h.b16 %v2389
    %v2514 = vunpack.c.l.b16 %v2390
    %v2515 = vunpack.c.h.b16 %v2390
    %v2516 = vunpack.c.l.b16 %v2391
    %v2517 = vunpack.c.h.b16 %v2391
    %v2518 = vunpack.c.l.b16 %v2392
    %v2519 = vunpack.c.h.b16 %v2392
    %v2520 = vunpack.c.l.b16 %v2393
    %v2521 = vunpack.c.h.b16 %v2393
    %v2522 = vunpack.c.l.b16 %v2394
    %v2523 = vunpack.c.h.b16 %v2394
    %v2524 = vunpack.c.l.b16 %v2395
    %v2525 = vunpack.c.h.b16 %v2395
    %v2526 = vunpack.c.l.b16 %v2396
    %v2527 = vunpack.c.h.b16 %v2396
    %v2528 = vunpack.c.l.b16 %v2397
    %v2529 = vunpack.c.h.b16 %v2397
    %v2530 = vpack.c.b16 %v2452, %v2450
    %v2531 = vpack.c.b16 %v2453, %v2451
    %v2532 = vpack.c.b16 %v2456, %v2454
    %v2533 = vpack.c.b16 %v2457, %v2455
    %v2534 = vpack.c.b16 %v2460, %v2458
    %v2535 = vpack.c.b16 %v2461, %v2459
    %v2536 = vpack.c.b16 %v2464, %v2462
    %v2537 = vpack.c.b16 %v2465, %v2463
    %v2538 = vpack.c.b16 %v2468, %v2466
    %v2539 = vpack.c.b16 %v2469, %v2467
    %v2540 = vpack.c.b16 %v2472, %v2470
    %v2541 = vpack.c.b16 %v2473, %v2471
    %v2542 = vpack.c.b16 %v2476, %v2474
    %v2543 = vpack.c.b16 %v2477, %v2475
    %v2544 = vpack.c.b16 %v2480, %v2478
    %v2545 = vpack.c.b16 %v2481, %v2479
    %v2546 = vpack.c.b16 %v2484, %v2482
    %v2547 = vpack.c.b16 %v2485, %v2483
    %v2548 = vpack.c.b16 %v2488, %v2486
    %v2549 = vpack.c.b16 %v2489, %v2487
    %v2550 = vpack.c.b16 %v2492, %v2490
    %v2551 = vpack.c.b16 %v2493, %v2491
    %v2552 = vpack.c.b16 %v2496, %v2494
    %v2553 = vpack.c.b16 %v2497, %v2495
    %v2554 = vpack.c.b16 %v2500, %v2498
    %v2555 = vpack.c.b16 %v2501, %v2499
    %v2556 = vpack.c.b16 %v2504, %v2502
    %v2557 = vpack.c.b16 %v2505, %v2503
    %v2558 = vpack.c.b16 %v2508, %v2506
    %v2559 = vpack.c.b16 %v2509, %v2507
    %v2560 = vpack.c.b16 %v2512, %v2510
    %v2561 = vpack.c.b16 %v2513, %v2511
    %v2562 = vpack.c.b16 %v2516, %v2514
    %v2563 = vpack.c.b16 %v2517, %v2515
    %v2564 = vpack.c.b16 %v2520, %v2518
    %v2565 = vpack.c.b16 %v2521, %v2519
    %v2566 = vpack.c.b16 %v2524, %v2522
    %v2567 = vpack.c.b16 %v2525, %v2523
    %v2568 = vpack.c.b16 %v2528, %v2526
    %v2569 = vpack.c.b16 %v2529, %v2527
    %v2611 = vsel %vm124, %v2357, 0
    %2613 = vmatprep.subr.bf16.mxu0 %v2531
    %2614 = vmatpush1.bf16.msra.mxu0 %v2530
    %2615 = vmatprep.subr.bf16.mxu0 %v2533
    %2616 = vmatpush1.bf16.msra.mxu0 %v2532
    %2617 = vmatprep.subr.bf16.mxu0 %v2535
    %2618 = vmatpush1.bf16.msra.mxu0 %v2534
    %2619 = vmatprep.subr.bf16.mxu0 %v2537
    %2620 = vmatpush1.bf16.msra.mxu0 %v2536
    %2621 = vmatprep.subr.bf16.mxu0 %v2539
    %2622 = vmatpush1.bf16.msra.mxu0 %v2538
    %2623 = vmatprep.subr.bf16.mxu0 %v2541
    %2624 = vmatpush1.bf16.msra.mxu0 %v2540
    %2625 = vmatprep.subr.bf16.mxu0 %v2543
    %2626 = vmatpush1.bf16.msra.mxu0 %v2542
    %2627 = vmatprep.subr.bf16.mxu0 %v2545
    %2628 = vmatpush1.bf16.msra.mxu0 %v2544
    %2629 = vmatprep.subr.bf16.mxu0 %v2547
    %2630 = vmatpush1.bf16.msra.mxu0 %v2546
    %2631 = vmatprep.subr.bf16.mxu0 %v2549
    %2632 = vmatpush1.bf16.msra.mxu0 %v2548
    %2633 = vmatprep.subr.bf16.mxu0 %v2551
    %2634 = vmatpush1.bf16.msra.mxu0 %v2550
    %2635 = vmatprep.subr.bf16.mxu0 %v2553
    %2636 = vmatpush1.bf16.msra.mxu0 %v2552
    %2637 = vmatprep.subr.bf16.mxu0 %v2555
    %2638 = vmatpush1.bf16.msra.mxu0 %v2554
    %2639 = vmatprep.subr.bf16.mxu0 %v2557
    %2640 = vmatpush1.bf16.msra.mxu0 %v2556
    %2641 = vmatprep.subr.bf16.mxu0 %v2559
    %2642 = vmatpush1.bf16.msra.mxu0 %v2558
    %2643 = vmatprep.subr.bf16.mxu0 %v2561
    %2644 = vmatpush1.bf16.msra.mxu0 %v2560
    %2645 = vmatprep.mubr.bf16.mxu0 %v2356
    %2646 = vmatmul.mubr.bf16.gmra.mrb[0].mxu0 %v2355
    %v2647 = vpop.f32.mrb[0].mxu0
    %v2648 = vadd.f32 %v2403, %v2647
    %v2649 = vpop.f32.mrb[0].mxu0
    %v2650 = vadd.f32 %v2407, %v2649
    %v2651 = vpop.f32.mrb[0].mxu0
    %v2652 = vpop.f32.mrb[0].mxu0
    %2653 = vdwg.mxu0
    %2654 = vmatprep.subr.bf16.mxu0 %v2563
    %2655 = vmatpush1.bf16.msra.mxu0 %v2562
    %2656 = vmatprep.subr.bf16.mxu0 %v2565
    %2657 = vmatpush1.bf16.msra.mxu0 %v2564
    %2658 = vmatprep.subr.bf16.mxu0 %v2567
    %2659 = vmatpush1.bf16.msra.mxu0 %v2566
    %2660 = vmatprep.subr.bf16.mxu0 %v2569
    %2661 = vmatpush1.bf16.msra.mxu0 %v2568
    %2662 = vmatprep.subr.bf16.mxu0 0
    %2663 = vmatpush1.bf16.msra.mxu0 0
    %2664 = vmatprep.subr.bf16.mxu0 0
    %2665 = vmatpush1.bf16.msra.mxu0 0
    %2666 = vmatprep.subr.bf16.mxu0 0
    %2667 = vmatpush1.bf16.msra.mxu0 0
    %2668 = vmatprep.subr.bf16.mxu0 0
    %2669 = vmatpush1.bf16.msra.mxu0 0
    %2670 = vmatprep.subr.bf16.mxu0 0
    %2671 = vmatpush1.bf16.msra.mxu0 0
    %2672 = vmatprep.subr.bf16.mxu0 0
    %2673 = vmatpush1.bf16.msra.mxu0 0
    %2674 = vmatprep.subr.bf16.mxu0 0
    %2675 = vmatpush1.bf16.msra.mxu0 0
    %2676 = vmatprep.subr.bf16.mxu0 0
    %2677 = vmatpush1.bf16.msra.mxu0 0
    %2678 = vmatprep.subr.bf16.mxu0 0
    %2679 = vmatpush1.bf16.msra.mxu0 0
    %2680 = vmatprep.subr.bf16.mxu0 0
    %2681 = vmatpush1.bf16.msra.mxu0 0
    %2682 = vmatprep.subr.bf16.mxu0 0
    %2683 = vmatpush1.bf16.msra.mxu0 0
    %2684 = vmatprep.subr.bf16.mxu0 0
    %2685 = vmatpush1.bf16.msra.mxu0 0
    %2686 = vmatprep.mubr.bf16.mxu0 0
    %2687 = vmatmul.mubr.bf16.gmra.mrb[0].mxu0 %v2611
    %v2688 = vpop.f32.mrb[0].mxu0
    %v2689 = vadd.f32 %v2648, %v2688
    %v2690 = vpop.f32.mrb[0].mxu0
    %v2691 = vadd.f32 %v2650, %v2690
    %v2692 = vpop.f32.mrb[0].mxu0
    %v2693 = vpop.f32.mrb[0].mxu0
    %2694 = vdwg.mxu0
    %v2695 = vmax.f32 %v2689, 0.0
    %v2696 = vmax.f32 %v2691, 0.0
    %v2699 = vcombine.low %v2695, %v2696
    %v2701 = vunpack.c.l.s4 1983009808
    %v2702 = vunpack.c.0.s8 %v2701
    %v2703 = vlaneseq
    %v2704 = vshrl.u32 %v2703, 7
    %v2705 = vsub.s32 %v2702, %v2704
    %v2706 = vrot.slane %v2699, %v2705
    %s2708 = scalar_lea.vmem [#allocation2], 24
    %2709 = vst.msk [vmem:[%s2708] sm:$0xf] %vm482, %v2706
    %v2710 = vld [vmem:[%s1230] sm:$0x3]
    %v2711 = vld [vmem:[%s1601] sm:$0x3]
    %v2712 = vld [vmem:[%s1972] sm:$0x3]
    %v2713 = vld [vmem:[%s2343] sm:$0x3]
    %s2714 = scalar_lea.vmem %s0, 22
    %v2715 = vld [vmem:[%s2714] sm:$0x3]
    %2717 = vrot.lane.b32.xlu0 %v2711, 64
    %v2718 = vpop.permute.xlu0 %2717
    %2721 = vrot.lane.b32.xlu0 %v2713, 64
    %v2722 = vpop.permute.xlu0 %2721
    %v2724 = vsel %vm124, %v2710, %v2718
    %v2725 = vsel %vm124, %v2712, %v2722
    %v2726 = vpack.c.bf16 %v2724, %v2724
    %v2727 = vpack.c.bf16 %v2725, %v2725
    %v2728 = vpack.c.bf16 %v2715, %v2715
    %v2729 = vld [vmem:[%s2] sm:$0xff]
    %v2730 = vld [vmem:[%s2 + $0x8] sm:$0xff]
    %v2731 = vld [vmem:[%s2 + $0x10] sm:$0xff]
    %v2732 = vld [vmem:[%s2 + $0x18] sm:$0xff]
    %v2733 = vld [vmem:[%s2 + $0x20] sm:$0xff]
    %v2734 = vld [vmem:[%s2 + $0x28] sm:$0xff]
    %v2735 = vld [vmem:[%s2 + $0x30] sm:$0xff]
    %v2736 = vld [vmem:[%s2 + $0x38] sm:$0xff]
    %v2737 = vld [vmem:[%s2 + $0x40] sm:$0xff]
    %v2738 = vld [vmem:[%s2 + $0x48] sm:$0xff]
    %v2739 = vld [vmem:[%s2 + $0x50] sm:$0xff]
    %v2740 = vld [vmem:[%s2 + $0x58] sm:$0xff]
    %v2741 = vld [vmem:[%s2 + $0x60] sm:$0xff]
    %v2742 = vld [vmem:[%s2 + $0x68] sm:$0xff]
    %v2743 = vld [vmem:[%s2 + $0x70] sm:$0xff]
    %v2744 = vld [vmem:[%s2 + $0x78] sm:$0xff]
    %v2745 = vld [vmem:[%s2 + $0x80] sm:$0xff]
    %v2746 = vld [vmem:[%s2 + $0x88] sm:$0xff]
    %v2747 = vld [vmem:[%s2 + $0x90] sm:$0xff]
    %v2748 = vld [vmem:[%s2 + $0x98] sm:$0xff]
    %v2749 = vld [vmem:[%s2 + $0xa0] sm:$0xff]
    %v2750 = vld [vmem:[%s2 + $0xa8] sm:$0xff]
    %v2751 = vld [vmem:[%s2 + $0xb0] sm:$0xff]
    %v2752 = vld [vmem:[%s2 + $0xb8] sm:$0xff]
    %v2753 = vld [vmem:[%s2 + $0xc0] sm:$0xff]
    %v2754 = vld [vmem:[%s2 + $0xc8] sm:$0xff]
    %v2755 = vld [vmem:[%s2 + $0xd0] sm:$0xff]
    %v2756 = vld [vmem:[%s2 + $0xd8] sm:$0xff]
    %v2757 = vld [vmem:[%s2 + $0xe0] sm:$0xff]
    %v2758 = vld [vmem:[%s2 + $0xe8] sm:$0xff]
    %v2759 = vld [vmem:[%s2 + $0xf0] sm:$0xff]
    %v2760 = vld [vmem:[%s2 + $0xf8] sm:$0xff]
    %v2761 = vld [vmem:[%s2 + $0x100] sm:$0xff]
    %v2762 = vld [vmem:[%s2 + $0x108] sm:$0xff]
    %v2763 = vld [vmem:[%s2 + $0x110] sm:$0xff]
    %v2764 = vld [vmem:[%s2 + $0x118] sm:$0xff]
    %v2765 = vld [vmem:[%s2 + $0x120] sm:$0xff]
    %v2766 = vld [vmem:[%s2 + $0x128] sm:$0xff]
    %v2767 = vld [vmem:[%s2 + $0x130] sm:$0xff]
    %v2768 = vld [vmem:[%s2 + $0x138] sm:$0xff]
    %v2769 = vld [vmem:[%s3] sm:$0x3]
    %v2771 = vlaneseq
    %v2772 = vshrl.u32 %v2771, 7
    %v2773 = vsub.s32 0, %v2772
    %v2774 = vrot.slane %v2769, %v2773
    %v2775 = vlaneseq
    %v2776 = vshrl.u32 %v2775, 7
    %v2777 = vsub.s32 1, %v2776
    %v2778 = vrot.slane %v2769, %v2777
    %v2821 = vunpack.c.l.b16 %v2729
    %v2822 = vunpack.c.h.b16 %v2729
    %v2823 = vunpack.c.l.b16 %v2730
    %v2824 = vunpack.c.h.b16 %v2730
    %v2825 = vunpack.c.l.b16 %v2731
    %v2826 = vunpack.c.h.b16 %v2731
    %v2827 = vunpack.c.l.b16 %v2732
    %v2828 = vunpack.c.h.b16 %v2732
    %v2829 = vunpack.c.l.b16 %v2733
    %v2830 = vunpack.c.h.b16 %v2733
    %v2831 = vunpack.c.l.b16 %v2734
    %v2832 = vunpack.c.h.b16 %v2734
    %v2833 = vunpack.c.l.b16 %v2735
    %v2834 = vunpack.c.h.b16 %v2735
    %v2835 = vunpack.c.l.b16 %v2736
    %v2836 = vunpack.c.h.b16 %v2736
    %v2837 = vunpack.c.l.b16 %v2737
    %v2838 = vunpack.c.h.b16 %v2737
    %v2839 = vunpack.c.l.b16 %v2738
    %v2840 = vunpack.c.h.b16 %v2738
    %v2841 = vunpack.c.l.b16 %v2739
    %v2842 = vunpack.c.h.b16 %v2739
    %v2843 = vunpack.c.l.b16 %v2740
    %v2844 = vunpack.c.h.b16 %v2740
    %v2845 = vunpack.c.l.b16 %v2741
    %v2846 = vunpack.c.h.b16 %v2741
    %v2847 = vunpack.c.l.b16 %v2742
    %v2848 = vunpack.c.h.b16 %v2742
    %v2849 = vunpack.c.l.b16 %v2743
    %v2850 = vunpack.c.h.b16 %v2743
    %v2851 = vunpack.c.l.b16 %v2744
    %v2852 = vunpack.c.h.b16 %v2744
    %v2853 = vunpack.c.l.b16 %v2745
    %v2854 = vunpack.c.h.b16 %v2745
    %v2855 = vunpack.c.l.b16 %v2746
    %v2856 = vunpack.c.h.b16 %v2746
    %v2857 = vunpack.c.l.b16 %v2747
    %v2858 = vunpack.c.h.b16 %v2747
    %v2859 = vunpack.c.l.b16 %v2748
    %v2860 = vunpack.c.h.b16 %v2748
    %v2861 = vunpack.c.l.b16 %v2749
    %v2862 = vunpack.c.h.b16 %v2749
    %v2863 = vunpack.c.l.b16 %v2750
    %v2864 = vunpack.c.h.b16 %v2750
    %v2865 = vunpack.c.l.b16 %v2751
    %v2866 = vunpack.c.h.b16 %v2751
    %v2867 = vunpack.c.l.b16 %v2752
    %v2868 = vunpack.c.h.b16 %v2752
    %v2869 = vunpack.c.l.b16 %v2753
    %v2870 = vunpack.c.h.b16 %v2753
    %v2871 = vunpack.c.l.b16 %v2754
    %v2872 = vunpack.c.h.b16 %v2754
    %v2873 = vunpack.c.l.b16 %v2755
    %v2874 = vunpack.c.h.b16 %v2755
    %v2875 = vunpack.c.l.b16 %v2756
    %v2876 = vunpack.c.h.b16 %v2756
    %v2877 = vunpack.c.l.b16 %v2757
    %v2878 = vunpack.c.h.b16 %v2757
    %v2879 = vunpack.c.l.b16 %v2758
    %v2880 = vunpack.c.h.b16 %v2758
    %v2881 = vunpack.c.l.b16 %v2759
    %v2882 = vunpack.c.h.b16 %v2759
    %v2883 = vunpack.c.l.b16 %v2760
    %v2884 = vunpack.c.h.b16 %v2760
    %v2885 = vunpack.c.l.b16 %v2761
    %v2886 = vunpack.c.h.b16 %v2761
    %v2887 = vunpack.c.l.b16 %v2762
    %v2888 = vunpack.c.h.b16 %v2762
    %v2889 = vunpack.c.l.b16 %v2763
    %v2890 = vunpack.c.h.b16 %v2763
    %v2891 = vunpack.c.l.b16 %v2764
    %v2892 = vunpack.c.h.b16 %v2764
    %v2893 = vunpack.c.l.b16 %v2765
    %v2894 = vunpack.c.h.b16 %v2765
    %v2895 = vunpack.c.l.b16 %v2766
    %v2896 = vunpack.c.h.b16 %v2766
    %v2897 = vunpack.c.l.b16 %v2767
    %v2898 = vunpack.c.h.b16 %v2767
    %v2899 = vunpack.c.l.b16 %v2768
    %v2900 = vunpack.c.h.b16 %v2768
    %v2901 = vpack.c.b16 %v2823, %v2821
    %v2902 = vpack.c.b16 %v2824, %v2822
    %v2903 = vpack.c.b16 %v2827, %v2825
    %v2904 = vpack.c.b16 %v2828, %v2826
    %v2905 = vpack.c.b16 %v2831, %v2829
    %v2906 = vpack.c.b16 %v2832, %v2830
    %v2907 = vpack.c.b16 %v2835, %v2833
    %v2908 = vpack.c.b16 %v2836, %v2834
    %v2909 = vpack.c.b16 %v2839, %v2837
    %v2910 = vpack.c.b16 %v2840, %v2838
    %v2911 = vpack.c.b16 %v2843, %v2841
    %v2912 = vpack.c.b16 %v2844, %v2842
    %v2913 = vpack.c.b16 %v2847, %v2845
    %v2914 = vpack.c.b16 %v2848, %v2846
    %v2915 = vpack.c.b16 %v2851, %v2849
    %v2916 = vpack.c.b16 %v2852, %v2850
    %v2917 = vpack.c.b16 %v2855, %v2853
    %v2918 = vpack.c.b16 %v2856, %v2854
    %v2919 = vpack.c.b16 %v2859, %v2857
    %v2920 = vpack.c.b16 %v2860, %v2858
    %v2921 = vpack.c.b16 %v2863, %v2861
    %v2922 = vpack.c.b16 %v2864, %v2862
    %v2923 = vpack.c.b16 %v2867, %v2865
    %v2924 = vpack.c.b16 %v2868, %v2866
    %v2925 = vpack.c.b16 %v2871, %v2869
    %v2926 = vpack.c.b16 %v2872, %v2870
    %v2927 = vpack.c.b16 %v2875, %v2873
    %v2928 = vpack.c.b16 %v2876, %v2874
    %v2929 = vpack.c.b16 %v2879, %v2877
    %v2930 = vpack.c.b16 %v2880, %v2878
    %v2931 = vpack.c.b16 %v2883, %v2881
    %v2932 = vpack.c.b16 %v2884, %v2882
    %v2933 = vpack.c.b16 %v2887, %v2885
    %v2934 = vpack.c.b16 %v2888, %v2886
    %v2935 = vpack.c.b16 %v2891, %v2889
    %v2936 = vpack.c.b16 %v2892, %v2890
    %v2937 = vpack.c.b16 %v2895, %v2893
    %v2938 = vpack.c.b16 %v2896, %v2894
    %v2939 = vpack.c.b16 %v2899, %v2897
    %v2940 = vpack.c.b16 %v2900, %v2898
    %v2982 = vsel %vm124, %v2728, 0
    %2984 = vmatprep.subr.bf16.mxu0 %v2902
    %2985 = vmatpush1.bf16.msra.mxu0 %v2901
    %2986 = vmatprep.subr.bf16.mxu0 %v2904
    %2987 = vmatpush1.bf16.msra.mxu0 %v2903
    %2988 = vmatprep.subr.bf16.mxu0 %v2906
    %2989 = vmatpush1.bf16.msra.mxu0 %v2905
    %2990 = vmatprep.subr.bf16.mxu0 %v2908
    %2991 = vmatpush1.bf16.msra.mxu0 %v2907
    %2992 = vmatprep.subr.bf16.mxu0 %v2910
    %2993 = vmatpush1.bf16.msra.mxu0 %v2909
    %2994 = vmatprep.subr.bf16.mxu0 %v2912
    %2995 = vmatpush1.bf16.msra.mxu0 %v2911
    %2996 = vmatprep.subr.bf16.mxu0 %v2914
    %2997 = vmatpush1.bf16.msra.mxu0 %v2913
    %2998 = vmatprep.subr.bf16.mxu0 %v2916
    %2999 = vmatpush1.bf16.msra.mxu0 %v2915
    %3000 = vmatprep.subr.bf16.mxu0 %v2918
    %3001 = vmatpush1.bf16.msra.mxu0 %v2917
    %3002 = vmatprep.subr.bf16.mxu0 %v2920
    %3003 = vmatpush1.bf16.msra.mxu0 %v2919
    %3004 = vmatprep.subr.bf16.mxu0 %v2922
    %3005 = vmatpush1.bf16.msra.mxu0 %v2921
    %3006 = vmatprep.subr.bf16.mxu0 %v2924
    %3007 = vmatpush1.bf16.msra.mxu0 %v2923
    %3008 = vmatprep.subr.bf16.mxu0 %v2926
    %3009 = vmatpush1.bf16.msra.mxu0 %v2925
    %3010 = vmatprep.subr.bf16.mxu0 %v2928
    %3011 = vmatpush1.bf16.msra.mxu0 %v2927
    %3012 = vmatprep.subr.bf16.mxu0 %v2930
    %3013 = vmatpush1.bf16.msra.mxu0 %v2929
    %3014 = vmatprep.subr.bf16.mxu0 %v2932
    %3015 = vmatpush1.bf16.msra.mxu0 %v2931
    %3016 = vmatprep.mubr.bf16.mxu0 %v2727
    %3017 = vmatmul.mubr.bf16.gmra.mrb[0].mxu0 %v2726
    %v3018 = vpop.f32.mrb[0].mxu0
    %v3019 = vadd.f32 %v2774, %v3018
    %v3020 = vpop.f32.mrb[0].mxu0
    %v3021 = vadd.f32 %v2778, %v3020
    %v3022 = vpop.f32.mrb[0].mxu0
    %v3023 = vpop.f32.mrb[0].mxu0
    %3024 = vdwg.mxu0
    %3025 = vmatprep.subr.bf16.mxu0 %v2934
    %3026 = vmatpush1.bf16.msra.mxu0 %v2933
    %3027 = vmatprep.subr.bf16.mxu0 %v2936
    %3028 = vmatpush1.bf16.msra.mxu0 %v2935
    %3029 = vmatprep.subr.bf16.mxu0 %v2938
    %3030 = vmatpush1.bf16.msra.mxu0 %v2937
    %3031 = vmatprep.subr.bf16.mxu0 %v2940
    %3032 = vmatpush1.bf16.msra.mxu0 %v2939
    %3033 = vmatprep.subr.bf16.mxu0 0
    %3034 = vmatpush1.bf16.msra.mxu0 0
    %3035 = vmatprep.subr.bf16.mxu0 0
    %3036 = vmatpush1.bf16.msra.mxu0 0
    %3037 = vmatprep.subr.bf16.mxu0 0
    %3038 = vmatpush1.bf16.msra.mxu0 0
    %3039 = vmatprep.subr.bf16.mxu0 0
    %3040 = vmatpush1.bf16.msra.mxu0 0
    %3041 = vmatprep.subr.bf16.mxu0 0
    %3042 = vmatpush1.bf16.msra.mxu0 0
    %3043 = vmatprep.subr.bf16.mxu0 0
    %3044 = vmatpush1.bf16.msra.mxu0 0
    %3045 = vmatprep.subr.bf16.mxu0 0
    %3046 = vmatpush1.bf16.msra.mxu0 0
    %3047 = vmatprep.subr.bf16.mxu0 0
    %3048 = vmatpush1.bf16.msra.mxu0 0
    %3049 = vmatprep.subr.bf16.mxu0 0
    %3050 = vmatpush1.bf16.msra.mxu0 0
    %3051 = vmatprep.subr.bf16.mxu0 0
    %3052 = vmatpush1.bf16.msra.mxu0 0
    %3053 = vmatprep.subr.bf16.mxu0 0
    %3054 = vmatpush1.bf16.msra.mxu0 0
    %3055 = vmatprep.subr.bf16.mxu0 0
    %3056 = vmatpush1.bf16.msra.mxu0 0
    %3057 = vmatprep.mubr.bf16.mxu0 0
    %3058 = vmatmul.mubr.bf16.gmra.mrb[0].mxu0 %v2982
    %v3059 = vpop.f32.mrb[0].mxu0
    %v3060 = vadd.f32 %v3019, %v3059
    %v3061 = vpop.f32.mrb[0].mxu0
    %v3062 = vadd.f32 %v3021, %v3061
    %v3063 = vpop.f32.mrb[0].mxu0
    %v3064 = vpop.f32.mrb[0].mxu0
    %3065 = vdwg.mxu0
    %v3066 = vmax.f32 %v3060, 0.0
    %v3067 = vmax.f32 %v3062, 0.0
    %v3070 = vcombine.low %v3066, %v3067
    %v3072 = vunpack.c.l.s4 1983009808
    %v3073 = vunpack.c.0.s8 %v3072
    %v3074 = vlaneseq
    %v3075 = vshrl.u32 %v3074, 7
    %v3076 = vsub.s32 %v3073, %v3075
    %v3077 = vrot.slane %v3070, %v3076
    %s3079 = scalar_lea.vmem [#allocation2], 28
    %3080 = vst.msk [vmem:[%s3079] sm:$0xf] %vm482, %v3077
    %v3081 = vld [vmem:[%s1601] sm:$0x3]
    %v3082 = vld [vmem:[%s1972] sm:$0x3]
    %v3083 = vld [vmem:[%s2343] sm:$0x3]
    %v3084 = vld [vmem:[%s2714] sm:$0x3]
    %s3085 = scalar_lea.vmem %s0, 24
    %v3086 = vld [vmem:[%s3085] sm:$0x3]
    %3088 = vrot.lane.b32.xlu0 %v3082, 64
    %v3089 = vpop.permute.xlu0 %3088
    %3092 = vrot.lane.b32.xlu0 %v3084, 64
    %v3093 = vpop.permute.xlu0 %3092
    %v3095 = vsel %vm124, %v3081, %v3089
    %v3096 = vsel %vm124, %v3083, %v3093
    %v3097 = vpack.c.bf16 %v3095, %v3095
    %v3098 = vpack.c.bf16 %v3096, %v3096
    %v3099 = vpack.c.bf16 %v3086, %v3086
    %v3100 = vld [vmem:[%s2] sm:$0xff]
    %v3101 = vld [vmem:[%s2 + $0x8] sm:$0xff]
    %v3102 = vld [vmem:[%s2 + $0x10] sm:$0xff]
    %v3103 = vld [vmem:[%s2 + $0x18] sm:$0xff]
    %v3104 = vld [vmem:[%s2 + $0x20] sm:$0xff]
    %v3105 = vld [vmem:[%s2 + $0x28] sm:$0xff]
    %v3106 = vld [vmem:[%s2 + $0x30] sm:$0xff]
    %v3107 = vld [vmem:[%s2 + $0x38] sm:$0xff]
    %v3108 = vld [vmem:[%s2 + $0x40] sm:$0xff]
    %v3109 = vld [vmem:[%s2 + $0x48] sm:$0xff]
    %v3110 = vld [vmem:[%s2 + $0x50] sm:$0xff]
    %v3111 = vld [vmem:[%s2 + $0x58] sm:$0xff]
    %v3112 = vld [vmem:[%s2 + $0x60] sm:$0xff]
    %v3113 = vld [vmem:[%s2 + $0x68] sm:$0xff]
    %v3114 = vld [vmem:[%s2 + $0x70] sm:$0xff]
    %v3115 = vld [vmem:[%s2 + $0x78] sm:$0xff]
    %v3116 = vld [vmem:[%s2 + $0x80] sm:$0xff]
    %v3117 = vld [vmem:[%s2 + $0x88] sm:$0xff]
    %v3118 = vld [vmem:[%s2 + $0x90] sm:$0xff]
    %v3119 = vld [vmem:[%s2 + $0x98] sm:$0xff]
    %v3120 = vld [vmem:[%s2 + $0xa0] sm:$0xff]
    %v3121 = vld [vmem:[%s2 + $0xa8] sm:$0xff]
    %v3122 = vld [vmem:[%s2 + $0xb0] sm:$0xff]
    %v3123 = vld [vmem:[%s2 + $0xb8] sm:$0xff]
    %v3124 = vld [vmem:[%s2 + $0xc0] sm:$0xff]
    %v3125 = vld [vmem:[%s2 + $0xc8] sm:$0xff]
    %v3126 = vld [vmem:[%s2 + $0xd0] sm:$0xff]
    %v3127 = vld [vmem:[%s2 + $0xd8] sm:$0xff]
    %v3128 = vld [vmem:[%s2 + $0xe0] sm:$0xff]
    %v3129 = vld [vmem:[%s2 + $0xe8] sm:$0xff]
    %v3130 = vld [vmem:[%s2 + $0xf0] sm:$0xff]
    %v3131 = vld [vmem:[%s2 + $0xf8] sm:$0xff]
    %v3132 = vld [vmem:[%s2 + $0x100] sm:$0xff]
    %v3133 = vld [vmem:[%s2 + $0x108] sm:$0xff]
    %v3134 = vld [vmem:[%s2 + $0x110] sm:$0xff]
    %v3135 = vld [vmem:[%s2 + $0x118] sm:$0xff]
    %v3136 = vld [vmem:[%s2 + $0x120] sm:$0xff]
    %v3137 = vld [vmem:[%s2 + $0x128] sm:$0xff]
    %v3138 = vld [vmem:[%s2 + $0x130] sm:$0xff]
    %v3139 = vld [vmem:[%s2 + $0x138] sm:$0xff]
    %v3140 = vld [vmem:[%s3] sm:$0x3]
    %v3142 = vlaneseq
    %v3143 = vshrl.u32 %v3142, 7
    %v3144 = vsub.s32 0, %v3143
    %v3145 = vrot.slane %v3140, %v3144
    %v3146 = vlaneseq
    %v3147 = vshrl.u32 %v3146, 7
    %v3148 = vsub.s32 1, %v3147
    %v3149 = vrot.slane %v3140, %v3148
    %v3192 = vunpack.c.l.b16 %v3100
    %v3193 = vunpack.c.h.b16 %v3100
    %v3194 = vunpack.c.l.b16 %v3101
    %v3195 = vunpack.c.h.b16 %v3101
    %v3196 = vunpack.c.l.b16 %v3102
    %v3197 = vunpack.c.h.b16 %v3102
    %v3198 = vunpack.c.l.b16 %v3103
    %v3199 = vunpack.c.h.b16 %v3103
    %v3200 = vunpack.c.l.b16 %v3104
    %v3201 = vunpack.c.h.b16 %v3104
    %v3202 = vunpack.c.l.b16 %v3105
    %v3203 = vunpack.c.h.b16 %v3105
    %v3204 = vunpack.c.l.b16 %v3106
    %v3205 = vunpack.c.h.b16 %v3106
    %v3206 = vunpack.c.l.b16 %v3107
    %v3207 = vunpack.c.h.b16 %v3107
    %v3208 = vunpack.c.l.b16 %v3108
    %v3209 = vunpack.c.h.b16 %v3108
    %v3210 = vunpack.c.l.b16 %v3109
    %v3211 = vunpack.c.h.b16 %v3109
    %v3212 = vunpack.c.l.b16 %v3110
    %v3213 = vunpack.c.h.b16 %v3110
    %v3214 = vunpack.c.l.b16 %v3111
    %v3215 = vunpack.c.h.b16 %v3111
    %v3216 = vunpack.c.l.b16 %v3112
    %v3217 = vunpack.c.h.b16 %v3112
    %v3218 = vunpack.c.l.b16 %v3113
    %v3219 = vunpack.c.h.b16 %v3113
    %v3220 = vunpack.c.l.b16 %v3114
    %v3221 = vunpack.c.h.b16 %v3114
    %v3222 = vunpack.c.l.b16 %v3115
    %v3223 = vunpack.c.h.b16 %v3115
    %v3224 = vunpack.c.l.b16 %v3116
    %v3225 = vunpack.c.h.b16 %v3116
    %v3226 = vunpack.c.l.b16 %v3117
    %v3227 = vunpack.c.h.b16 %v3117
    %v3228 = vunpack.c.l.b16 %v3118
    %v3229 = vunpack.c.h.b16 %v3118
    %v3230 = vunpack.c.l.b16 %v3119
    %v3231 = vunpack.c.h.b16 %v3119
    %v3232 = vunpack.c.l.b16 %v3120
    %v3233 = vunpack.c.h.b16 %v3120
    %v3234 = vunpack.c.l.b16 %v3121
    %v3235 = vunpack.c.h.b16 %v3121
    %v3236 = vunpack.c.l.b16 %v3122
    %v3237 = vunpack.c.h.b16 %v3122
    %v3238 = vunpack.c.l.b16 %v3123
    %v3239 = vunpack.c.h.b16 %v3123
    %v3240 = vunpack.c.l.b16 %v3124
    %v3241 = vunpack.c.h.b16 %v3124
    %v3242 = vunpack.c.l.b16 %v3125
    %v3243 = vunpack.c.h.b16 %v3125
    %v3244 = vunpack.c.l.b16 %v3126
    %v3245 = vunpack.c.h.b16 %v3126
    %v3246 = vunpack.c.l.b16 %v3127
    %v3247 = vunpack.c.h.b16 %v3127
    %v3248 = vunpack.c.l.b16 %v3128
    %v3249 = vunpack.c.h.b16 %v3128
    %v3250 = vunpack.c.l.b16 %v3129
    %v3251 = vunpack.c.h.b16 %v3129
    %v3252 = vunpack.c.l.b16 %v3130
    %v3253 = vunpack.c.h.b16 %v3130
    %v3254 = vunpack.c.l.b16 %v3131
    %v3255 = vunpack.c.h.b16 %v3131
    %v3256 = vunpack.c.l.b16 %v3132
    %v3257 = vunpack.c.h.b16 %v3132
    %v3258 = vunpack.c.l.b16 %v3133
    %v3259 = vunpack.c.h.b16 %v3133
    %v3260 = vunpack.c.l.b16 %v3134
    %v3261 = vunpack.c.h.b16 %v3134
    %v3262 = vunpack.c.l.b16 %v3135
    %v3263 = vunpack.c.h.b16 %v3135
    %v3264 = vunpack.c.l.b16 %v3136
    %v3265 = vunpack.c.h.b16 %v3136
    %v3266 = vunpack.c.l.b16 %v3137
    %v3267 = vunpack.c.h.b16 %v3137
    %v3268 = vunpack.c.l.b16 %v3138
    %v3269 = vunpack.c.h.b16 %v3138
    %v3270 = vunpack.c.l.b16 %v3139
    %v3271 = vunpack.c.h.b16 %v3139
    %v3272 = vpack.c.b16 %v3194, %v3192
    %v3273 = vpack.c.b16 %v3195, %v3193
    %v3274 = vpack.c.b16 %v3198, %v3196
    %v3275 = vpack.c.b16 %v3199, %v3197
    %v3276 = vpack.c.b16 %v3202, %v3200
    %v3277 = vpack.c.b16 %v3203, %v3201
    %v3278 = vpack.c.b16 %v3206, %v3204
    %v3279 = vpack.c.b16 %v3207, %v3205
    %v3280 = vpack.c.b16 %v3210, %v3208
    %v3281 = vpack.c.b16 %v3211, %v3209
    %v3282 = vpack.c.b16 %v3214, %v3212
    %v3283 = vpack.c.b16 %v3215, %v3213
    %v3284 = vpack.c.b16 %v3218, %v3216
    %v3285 = vpack.c.b16 %v3219, %v3217
    %v3286 = vpack.c.b16 %v3222, %v3220
    %v3287 = vpack.c.b16 %v3223, %v3221
    %v3288 = vpack.c.b16 %v3226, %v3224
    %v3289 = vpack.c.b16 %v3227, %v3225
    %v3290 = vpack.c.b16 %v3230, %v3228
    %v3291 = vpack.c.b16 %v3231, %v3229
    %v3292 = vpack.c.b16 %v3234, %v3232
    %v3293 = vpack.c.b16 %v3235, %v3233
    %v3294 = vpack.c.b16 %v3238, %v3236
    %v3295 = vpack.c.b16 %v3239, %v3237
    %v3296 = vpack.c.b16 %v3242, %v3240
    %v3297 = vpack.c.b16 %v3243, %v3241
    %v3298 = vpack.c.b16 %v3246, %v3244
    %v3299 = vpack.c.b16 %v3247, %v3245
    %v3300 = vpack.c.b16 %v3250, %v3248
    %v3301 = vpack.c.b16 %v3251, %v3249
    %v3302 = vpack.c.b16 %v3254, %v3252
    %v3303 = vpack.c.b16 %v3255, %v3253
    %v3304 = vpack.c.b16 %v3258, %v3256
    %v3305 = vpack.c.b16 %v3259, %v3257
    %v3306 = vpack.c.b16 %v3262, %v3260
    %v3307 = vpack.c.b16 %v3263, %v3261
    %v3308 = vpack.c.b16 %v3266, %v3264
    %v3309 = vpack.c.b16 %v3267, %v3265
    %v3310 = vpack.c.b16 %v3270, %v3268
    %v3311 = vpack.c.b16 %v3271, %v3269
    %v3353 = vsel %vm124, %v3099, 0
    %3355 = vmatprep.subr.bf16.mxu0 %v3273
    %3356 = vmatpush1.bf16.msra.mxu0 %v3272
    %3357 = vmatprep.subr.bf16.mxu0 %v3275
    %3358 = vmatpush1.bf16.msra.mxu0 %v3274
    %3359 = vmatprep.subr.bf16.mxu0 %v3277
    %3360 = vmatpush1.bf16.msra.mxu0 %v3276
    %3361 = vmatprep.subr.bf16.mxu0 %v3279
    %3362 = vmatpush1.bf16.msra.mxu0 %v3278
    %3363 = vmatprep.subr.bf16.mxu0 %v3281
    %3364 = vmatpush1.bf16.msra.mxu0 %v3280
    %3365 = vmatprep.subr.bf16.mxu0 %v3283
    %3366 = vmatpush1.bf16.msra.mxu0 %v3282
    %3367 = vmatprep.subr.bf16.mxu0 %v3285
    %3368 = vmatpush1.bf16.msra.mxu0 %v3284
    %3369 = vmatprep.subr.bf16.mxu0 %v3287
    %3370 = vmatpush1.bf16.msra.mxu0 %v3286
    %3371 = vmatprep.subr.bf16.mxu0 %v3289
    %3372 = vmatpush1.bf16.msra.mxu0 %v3288
    %3373 = vmatprep.subr.bf16.mxu0 %v3291
    %3374 = vmatpush1.bf16.msra.mxu0 %v3290
    %3375 = vmatprep.subr.bf16.mxu0 %v3293
    %3376 = vmatpush1.bf16.msra.mxu0 %v3292
    %3377 = vmatprep.subr.bf16.mxu0 %v3295
    %3378 = vmatpush1.bf16.msra.mxu0 %v3294
    %3379 = vmatprep.subr.bf16.mxu0 %v3297
    %3380 = vmatpush1.bf16.msra.mxu0 %v3296
    %3381 = vmatprep.subr.bf16.mxu0 %v3299
    %3382 = vmatpush1.bf16.msra.mxu0 %v3298
    %3383 = vmatprep.subr.bf16.mxu0 %v3301
    %3384 = vmatpush1.bf16.msra.mxu0 %v3300
    %3385 = vmatprep.subr.bf16.mxu0 %v3303
    %3386 = vmatpush1.bf16.msra.mxu0 %v3302
    %3387 = vmatprep.mubr.bf16.mxu0 %v3098
    %3388 = vmatmul.mubr.bf16.gmra.mrb[0].mxu0 %v3097
    %v3389 = vpop.f32.mrb[0].mxu0
    %v3390 = vadd.f32 %v3145, %v3389
    %v3391 = vpop.f32.mrb[0].mxu0
    %v3392 = vadd.f32 %v3149, %v3391
    %v3393 = vpop.f32.mrb[0].mxu0
    %v3394 = vpop.f32.mrb[0].mxu0
    %3395 = vdwg.mxu0
    %3396 = vmatprep.subr.bf16.mxu0 %v3305
    %3397 = vmatpush1.bf16.msra.mxu0 %v3304
    %3398 = vmatprep.subr.bf16.mxu0 %v3307
    %3399 = vmatpush1.bf16.msra.mxu0 %v3306
    %3400 = vmatprep.subr.bf16.mxu0 %v3309
    %3401 = vmatpush1.bf16.msra.mxu0 %v3308
    %3402 = vmatprep.subr.bf16.mxu0 %v3311
    %3403 = vmatpush1.bf16.msra.mxu0 %v3310
    %3404 = vmatprep.subr.bf16.mxu0 0
    %3405 = vmatpush1.bf16.msra.mxu0 0
    %3406 = vmatprep.subr.bf16.mxu0 0
    %3407 = vmatpush1.bf16.msra.mxu0 0
    %3408 = vmatprep.subr.bf16.mxu0 0
    %3409 = vmatpush1.bf16.msra.mxu0 0
    %3410 = vmatprep.subr.bf16.mxu0 0
    %3411 = vmatpush1.bf16.msra.mxu0 0
    %3412 = vmatprep.subr.bf16.mxu0 0
    %3413 = vmatpush1.bf16.msra.mxu0 0
    %3414 = vmatprep.subr.bf16.mxu0 0
    %3415 = vmatpush1.bf16.msra.mxu0 0
    %3416 = vmatprep.subr.bf16.mxu0 0
    %3417 = vmatpush1.bf16.msra.mxu0 0
    %3418 = vmatprep.subr.bf16.mxu0 0
    %3419 = vmatpush1.bf16.msra.mxu0 0
    %3420 = vmatprep.subr.bf16.mxu0 0
    %3421 = vmatpush1.bf16.msra.mxu0 0
    %3422 = vmatprep.subr.bf16.mxu0 0
    %3423 = vmatpush1.bf16.msra.mxu0 0
    %3424 = vmatprep.subr.bf16.mxu0 0
    %3425 = vmatpush1.bf16.msra.mxu0 0
    %3426 = vmatprep.subr.bf16.mxu0 0
    %3427 = vmatpush1.bf16.msra.mxu0 0
    %3428 = vmatprep.mubr.bf16.mxu0 0
    %3429 = vmatmul.mubr.bf16.gmra.mrb[0].mxu0 %v3353
    %v3430 = vpop.f32.mrb[0].mxu0
    %v3431 = vadd.f32 %v3390, %v3430
    %v3432 = vpop.f32.mrb[0].mxu0
    %v3433 = vadd.f32 %v3392, %v3432
    %v3434 = vpop.f32.mrb[0].mxu0
    %v3435 = vpop.f32.mrb[0].mxu0
    %3436 = vdwg.mxu0
    %v3437 = vmax.f32 %v3431, 0.0
    %v3438 = vmax.f32 %v3433, 0.0
    %v3441 = vcombine.low %v3437, %v3438
    %v3443 = vunpack.c.l.s4 1983009808
    %v3444 = vunpack.c.0.s8 %v3443
    %v3445 = vlaneseq
    %v3446 = vshrl.u32 %v3445, 7
    %v3447 = vsub.s32 %v3444, %v3446
    %v3448 = vrot.slane %v3441, %v3447
    %s3450 = scalar_lea.vmem [#allocation2], 32
    %3451 = vst.msk [vmem:[%s3450] sm:$0xf] %vm482, %v3448
    %v3452 = vld [vmem:[%s1972] sm:$0x3]
    %v3453 = vld [vmem:[%s2343] sm:$0x3]
    %v3454 = vld [vmem:[%s2714] sm:$0x3]
    %v3455 = vld [vmem:[%s3085] sm:$0x3]
    %s3456 = scalar_lea.vmem %s0, 26
    %v3457 = vld [vmem:[%s3456] sm:$0x3]
    %3459 = vrot.lane.b32.xlu0 %v3453, 64
    %v3460 = vpop.permute.xlu0 %3459
    %3463 = vrot.lane.b32.xlu0 %v3455, 64
    %v3464 = vpop.permute.xlu0 %3463
    %v3466 = vsel %vm124, %v3452, %v3460
    %v3467 = vsel %vm124, %v3454, %v3464
    %v3468 = vpack.c.bf16 %v3466, %v3466
    %v3469 = vpack.c.bf16 %v3467, %v3467
    %v3470 = vpack.c.bf16 %v3457, %v3457
    %v3471 = vld [vmem:[%s2] sm:$0xff]
    %v3472 = vld [vmem:[%s2 + $0x8] sm:$0xff]
    %v3473 = vld [vmem:[%s2 + $0x10] sm:$0xff]
    %v3474 = vld [vmem:[%s2 + $0x18] sm:$0xff]
    %v3475 = vld [vmem:[%s2 + $0x20] sm:$0xff]
    %v3476 = vld [vmem:[%s2 + $0x28] sm:$0xff]
    %v3477 = vld [vmem:[%s2 + $0x30] sm:$0xff]
    %v3478 = vld [vmem:[%s2 + $0x38] sm:$0xff]
    %v3479 = vld [vmem:[%s2 + $0x40] sm:$0xff]
    %v3480 = vld [vmem:[%s2 + $0x48] sm:$0xff]
    %v3481 = vld [vmem:[%s2 + $0x50] sm:$0xff]
    %v3482 = vld [vmem:[%s2 + $0x58] sm:$0xff]
    %v3483 = vld [vmem:[%s2 + $0x60] sm:$0xff]
    %v3484 = vld [vmem:[%s2 + $0x68] sm:$0xff]
    %v3485 = vld [vmem:[%s2 + $0x70] sm:$0xff]
    %v3486 = vld [vmem:[%s2 + $0x78] sm:$0xff]
    %v3487 = vld [vmem:[%s2 + $0x80] sm:$0xff]
    %v3488 = vld [vmem:[%s2 + $0x88] sm:$0xff]
    %v3489 = vld [vmem:[%s2 + $0x90] sm:$0xff]
    %v3490 = vld [vmem:[%s2 + $0x98] sm:$0xff]
    %v3491 = vld [vmem:[%s2 + $0xa0] sm:$0xff]
    %v3492 = vld [vmem:[%s2 + $0xa8] sm:$0xff]
    %v3493 = vld [vmem:[%s2 + $0xb0] sm:$0xff]
    %v3494 = vld [vmem:[%s2 + $0xb8] sm:$0xff]
    %v3495 = vld [vmem:[%s2 + $0xc0] sm:$0xff]
    %v3496 = vld [vmem:[%s2 + $0xc8] sm:$0xff]
    %v3497 = vld [vmem:[%s2 + $0xd0] sm:$0xff]
    %v3498 = vld [vmem:[%s2 + $0xd8] sm:$0xff]
    %v3499 = vld [vmem:[%s2 + $0xe0] sm:$0xff]
    %v3500 = vld [vmem:[%s2 + $0xe8] sm:$0xff]
    %v3501 = vld [vmem:[%s2 + $0xf0] sm:$0xff]
    %v3502 = vld [vmem:[%s2 + $0xf8] sm:$0xff]
    %v3503 = vld [vmem:[%s2 + $0x100] sm:$0xff]
    %v3504 = vld [vmem:[%s2 + $0x108] sm:$0xff]
    %v3505 = vld [vmem:[%s2 + $0x110] sm:$0xff]
    %v3506 = vld [vmem:[%s2 + $0x118] sm:$0xff]
    %v3507 = vld [vmem:[%s2 + $0x120] sm:$0xff]
    %v3508 = vld [vmem:[%s2 + $0x128] sm:$0xff]
    %v3509 = vld [vmem:[%s2 + $0x130] sm:$0xff]
    %v3510 = vld [vmem:[%s2 + $0x138] sm:$0xff]
    %v3511 = vld [vmem:[%s3] sm:$0x3]
    %v3513 = vlaneseq
    %v3514 = vshrl.u32 %v3513, 7
    %v3515 = vsub.s32 0, %v3514
    %v3516 = vrot.slane %v3511, %v3515
    %v3517 = vlaneseq
    %v3518 = vshrl.u32 %v3517, 7
    %v3519 = vsub.s32 1, %v3518
    %v3520 = vrot.slane %v3511, %v3519
    %v3563 = vunpack.c.l.b16 %v3471
    %v3564 = vunpack.c.h.b16 %v3471
    %v3565 = vunpack.c.l.b16 %v3472
    %v3566 = vunpack.c.h.b16 %v3472
    %v3567 = vunpack.c.l.b16 %v3473
    %v3568 = vunpack.c.h.b16 %v3473
    %v3569 = vunpack.c.l.b16 %v3474
    %v3570 = vunpack.c.h.b16 %v3474
    %v3571 = vunpack.c.l.b16 %v3475
    %v3572 = vunpack.c.h.b16 %v3475
    %v3573 = vunpack.c.l.b16 %v3476
    %v3574 = vunpack.c.h.b16 %v3476
    %v3575 = vunpack.c.l.b16 %v3477
    %v3576 = vunpack.c.h.b16 %v3477
    %v3577 = vunpack.c.l.b16 %v3478
    %v3578 = vunpack.c.h.b16 %v3478
    %v3579 = vunpack.c.l.b16 %v3479
    %v3580 = vunpack.c.h.b16 %v3479
    %v3581 = vunpack.c.l.b16 %v3480
    %v3582 = vunpack.c.h.b16 %v3480
    %v3583 = vunpack.c.l.b16 %v3481
    %v3584 = vunpack.c.h.b16 %v3481
    %v3585 = vunpack.c.l.b16 %v3482
    %v3586 = vunpack.c.h.b16 %v3482
    %v3587 = vunpack.c.l.b16 %v3483
    %v3588 = vunpack.c.h.b16 %v3483
    %v3589 = vunpack.c.l.b16 %v3484
    %v3590 = vunpack.c.h.b16 %v3484
    %v3591 = vunpack.c.l.b16 %v3485
    %v3592 = vunpack.c.h.b16 %v3485
    %v3593 = vunpack.c.l.b16 %v3486
    %v3594 = vunpack.c.h.b16 %v3486
    %v3595 = vunpack.c.l.b16 %v3487
    %v3596 = vunpack.c.h.b16 %v3487
    %v3597 = vunpack.c.l.b16 %v3488
    %v3598 = vunpack.c.h.b16 %v3488
    %v3599 = vunpack.c.l.b16 %v3489
    %v3600 = vunpack.c.h.b16 %v3489
    %v3601 = vunpack.c.l.b16 %v3490
    %v3602 = vunpack.c.h.b16 %v3490
    %v3603 = vunpack.c.l.b16 %v3491
    %v3604 = vunpack.c.h.b16 %v3491
    %v3605 = vunpack.c.l.b16 %v3492
    %v3606 = vunpack.c.h.b16 %v3492
    %v3607 = vunpack.c.l.b16 %v3493
    %v3608 = vunpack.c.h.b16 %v3493
    %v3609 = vunpack.c.l.b16 %v3494
    %v3610 = vunpack.c.h.b16 %v3494
    %v3611 = vunpack.c.l.b16 %v3495
    %v3612 = vunpack.c.h.b16 %v3495
    %v3613 = vunpack.c.l.b16 %v3496
    %v3614 = vunpack.c.h.b16 %v3496
    %v3615 = vunpack.c.l.b16 %v3497
    %v3616 = vunpack.c.h.b16 %v3497
    %v3617 = vunpack.c.l.b16 %v3498
    %v3618 = vunpack.c.h.b16 %v3498
    %v3619 = vunpack.c.l.b16 %v3499
    %v3620 = vunpack.c.h.b16 %v3499
    %v3621 = vunpack.c.l.b16 %v3500
    %v3622 = vunpack.c.h.b16 %v3500
    %v3623 = vunpack.c.l.b16 %v3501
    %v3624 = vunpack.c.h.b16 %v3501
    %v3625 = vunpack.c.l.b16 %v3502
    %v3626 = vunpack.c.h.b16 %v3502
    %v3627 = vunpack.c.l.b16 %v3503
    %v3628 = vunpack.c.h.b16 %v3503
    %v3629 = vunpack.c.l.b16 %v3504
    %v3630 = vunpack.c.h.b16 %v3504
    %v3631 = vunpack.c.l.b16 %v3505
    %v3632 = vunpack.c.h.b16 %v3505
    %v3633 = vunpack.c.l.b16 %v3506
    %v3634 = vunpack.c.h.b16 %v3506
    %v3635 = vunpack.c.l.b16 %v3507
    %v3636 = vunpack.c.h.b16 %v3507
    %v3637 = vunpack.c.l.b16 %v3508
    %v3638 = vunpack.c.h.b16 %v3508
    %v3639 = vunpack.c.l.b16 %v3509
    %v3640 = vunpack.c.h.b16 %v3509
    %v3641 = vunpack.c.l.b16 %v3510
    %v3642 = vunpack.c.h.b16 %v3510
    %v3643 = vpack.c.b16 %v3565, %v3563
    %v3644 = vpack.c.b16 %v3566, %v3564
    %v3645 = vpack.c.b16 %v3569, %v3567
    %v3646 = vpack.c.b16 %v3570, %v3568
    %v3647 = vpack.c.b16 %v3573, %v3571
    %v3648 = vpack.c.b16 %v3574, %v3572
    %v3649 = vpack.c.b16 %v3577, %v3575
    %v3650 = vpack.c.b16 %v3578, %v3576
    %v3651 = vpack.c.b16 %v3581, %v3579
    %v3652 = vpack.c.b16 %v3582, %v3580
    %v3653 = vpack.c.b16 %v3585, %v3583
    %v3654 = vpack.c.b16 %v3586, %v3584
    %v3655 = vpack.c.b16 %v3589, %v3587
    %v3656 = vpack.c.b16 %v3590, %v3588
    %v3657 = vpack.c.b16 %v3593, %v3591
    %v3658 = vpack.c.b16 %v3594, %v3592
    %v3659 = vpack.c.b16 %v3597, %v3595
    %v3660 = vpack.c.b16 %v3598, %v3596
    %v3661 = vpack.c.b16 %v3601, %v3599
    %v3662 = vpack.c.b16 %v3602, %v3600
    %v3663 = vpack.c.b16 %v3605, %v3603
    %v3664 = vpack.c.b16 %v3606, %v3604
    %v3665 = vpack.c.b16 %v3609, %v3607
    %v3666 = vpack.c.b16 %v3610, %v3608
    %v3667 = vpack.c.b16 %v3613, %v3611
    %v3668 = vpack.c.b16 %v3614, %v3612
    %v3669 = vpack.c.b16 %v3617, %v3615
    %v3670 = vpack.c.b16 %v3618, %v3616
    %v3671 = vpack.c.b16 %v3621, %v3619
    %v3672 = vpack.c.b16 %v3622, %v3620
    %v3673 = vpack.c.b16 %v3625, %v3623
    %v3674 = vpack.c.b16 %v3626, %v3624
    %v3675 = vpack.c.b16 %v3629, %v3627
    %v3676 = vpack.c.b16 %v3630, %v3628
    %v3677 = vpack.c.b16 %v3633, %v3631
    %v3678 = vpack.c.b16 %v3634, %v3632
    %v3679 = vpack.c.b16 %v3637, %v3635
    %v3680 = vpack.c.b16 %v3638, %v3636
    %v3681 = vpack.c.b16 %v3641, %v3639
    %v3682 = vpack.c.b16 %v3642, %v3640
    %v3724 = vsel %vm124, %v3470, 0
    %3726 = vmatprep.subr.bf16.mxu0 %v3644
    %3727 = vmatpush1.bf16.msra.mxu0 %v3643
    %3728 = vmatprep.subr.bf16.mxu0 %v3646
    %3729 = vmatpush1.bf16.msra.mxu0 %v3645
    %3730 = vmatprep.subr.bf16.mxu0 %v3648
    %3731 = vmatpush1.bf16.msra.mxu0 %v3647
    %3732 = vmatprep.subr.bf16.mxu0 %v3650
    %3733 = vmatpush1.bf16.msra.mxu0 %v3649
    %3734 = vmatprep.subr.bf16.mxu0 %v3652
    %3735 = vmatpush1.bf16.msra.mxu0 %v3651
    %3736 = vmatprep.subr.bf16.mxu0 %v3654
    %3737 = vmatpush1.bf16.msra.mxu0 %v3653
    %3738 = vmatprep.subr.bf16.mxu0 %v3656
    %3739 = vmatpush1.bf16.msra.mxu0 %v3655
    %3740 = vmatprep.subr.bf16.mxu0 %v3658
    %3741 = vmatpush1.bf16.msra.mxu0 %v3657
    %3742 = vmatprep.subr.bf16.mxu0 %v3660
    %3743 = vmatpush1.bf16.msra.mxu0 %v3659
    %3744 = vmatprep.subr.bf16.mxu0 %v3662
    %3745 = vmatpush1.bf16.msra.mxu0 %v3661
    %3746 = vmatprep.subr.bf16.mxu0 %v3664
    %3747 = vmatpush1.bf16.msra.mxu0 %v3663
    %3748 = vmatprep.subr.bf16.mxu0 %v3666
    %3749 = vmatpush1.bf16.msra.mxu0 %v3665
    %3750 = vmatprep.subr.bf16.mxu0 %v3668
    %3751 = vmatpush1.bf16.msra.mxu0 %v3667
    %3752 = vmatprep.subr.bf16.mxu0 %v3670
    %3753 = vmatpush1.bf16.msra.mxu0 %v3669
    %3754 = vmatprep.subr.bf16.mxu0 %v3672
    %3755 = vmatpush1.bf16.msra.mxu0 %v3671
    %3756 = vmatprep.subr.bf16.mxu0 %v3674
    %3757 = vmatpush1.bf16.msra.mxu0 %v3673
    %3758 = vmatprep.mubr.bf16.mxu0 %v3469
    %3759 = vmatmul.mubr.bf16.gmra.mrb[0].mxu0 %v3468
    %v3760 = vpop.f32.mrb[0].mxu0
    %v3761 = vadd.f32 %v3516, %v3760
    %v3762 = vpop.f32.mrb[0].mxu0
    %v3763 = vadd.f32 %v3520, %v3762
    %v3764 = vpop.f32.mrb[0].mxu0
    %v3765 = vpop.f32.mrb[0].mxu0
    %3766 = vdwg.mxu0
    %3767 = vmatprep.subr.bf16.mxu0 %v3676
    %3768 = vmatpush1.bf16.msra.mxu0 %v3675
    %3769 = vmatprep.subr.bf16.mxu0 %v3678
    %3770 = vmatpush1.bf16.msra.mxu0 %v3677
    %3771 = vmatprep.subr.bf16.mxu0 %v3680
    %3772 = vmatpush1.bf16.msra.mxu0 %v3679
    %3773 = vmatprep.subr.bf16.mxu0 %v3682
    %3774 = vmatpush1.bf16.msra.mxu0 %v3681
    %3775 = vmatprep.subr.bf16.mxu0 0
    %3776 = vmatpush1.bf16.msra.mxu0 0
    %3777 = vmatprep.subr.bf16.mxu0 0
    %3778 = vmatpush1.bf16.msra.mxu0 0
    %3779 = vmatprep.subr.bf16.mxu0 0
    %3780 = vmatpush1.bf16.msra.mxu0 0
    %3781 = vmatprep.subr.bf16.mxu0 0
    %3782 = vmatpush1.bf16.msra.mxu0 0
    %3783 = vmatprep.subr.bf16.mxu0 0
    %3784 = vmatpush1.bf16.msra.mxu0 0
    %3785 = vmatprep.subr.bf16.mxu0 0
    %3786 = vmatpush1.bf16.msra.mxu0 0
    %3787 = vmatprep.subr.bf16.mxu0 0
    %3788 = vmatpush1.bf16.msra.mxu0 0
    %3789 = vmatprep.subr.bf16.mxu0 0
    %3790 = vmatpush1.bf16.msra.mxu0 0
    %3791 = vmatprep.subr.bf16.mxu0 0
    %3792 = vmatpush1.bf16.msra.mxu0 0
    %3793 = vmatprep.subr.bf16.mxu0 0
    %3794 = vmatpush1.bf16.msra.mxu0 0
    %3795 = vmatprep.subr.bf16.mxu0 0
    %3796 = vmatpush1.bf16.msra.mxu0 0
    %3797 = vmatprep.subr.bf16.mxu0 0
    %3798 = vmatpush1.bf16.msra.mxu0 0
    %3799 = vmatprep.mubr.bf16.mxu0 0
    %3800 = vmatmul.mubr.bf16.gmra.mrb[0].mxu0 %v3724
    %v3801 = vpop.f32.mrb[0].mxu0
    %v3802 = vadd.f32 %v3761, %v3801
    %v3803 = vpop.f32.mrb[0].mxu0
    %v3804 = vadd.f32 %v3763, %v3803
    %v3805 = vpop.f32.mrb[0].mxu0
    %v3806 = vpop.f32.mrb[0].mxu0
    %3807 = vdwg.mxu0
    %v3808 = vmax.f32 %v3802, 0.0
    %v3809 = vmax.f32 %v3804, 0.0
    %v3812 = vcombine.low %v3808, %v3809
    %v3814 = vunpack.c.l.s4 1983009808
    %v3815 = vunpack.c.0.s8 %v3814
    %v3816 = vlaneseq
    %v3817 = vshrl.u32 %v3816, 7
    %v3818 = vsub.s32 %v3815, %v3817
    %v3819 = vrot.slane %v3812, %v3818
    %s3821 = scalar_lea.vmem [#allocation2], 36
    %3822 = vst.msk [vmem:[%s3821] sm:$0xf] %vm482, %v3819
    %v3823 = vld [vmem:[%s2343] sm:$0x3]
    %v3824 = vld [vmem:[%s2714] sm:$0x3]
    %v3825 = vld [vmem:[%s3085] sm:$0x3]
    %v3826 = vld [vmem:[%s3456] sm:$0x3]
    %s3827 = scalar_lea.vmem %s0, 28
    %v3828 = vld [vmem:[%s3827] sm:$0x3]
    %3830 = vrot.lane.b32.xlu0 %v3824, 64
    %v3831 = vpop.permute.xlu0 %3830
    %3834 = vrot.lane.b32.xlu0 %v3826, 64
    %v3835 = vpop.permute.xlu0 %3834
    %v3837 = vsel %vm124, %v3823, %v3831
    %v3838 = vsel %vm124, %v3825, %v3835
    %v3839 = vpack.c.bf16 %v3837, %v3837
    %v3840 = vpack.c.bf16 %v3838, %v3838
    %v3841 = vpack.c.bf16 %v3828, %v3828
    %v3842 = vld [vmem:[%s2] sm:$0xff]
    %v3843 = vld [vmem:[%s2 + $0x8] sm:$0xff]
    %v3844 = vld [vmem:[%s2 + $0x10] sm:$0xff]
    %v3845 = vld [vmem:[%s2 + $0x18] sm:$0xff]
    %v3846 = vld [vmem:[%s2 + $0x20] sm:$0xff]
    %v3847 = vld [vmem:[%s2 + $0x28] sm:$0xff]
    %v3848 = vld [vmem:[%s2 + $0x30] sm:$0xff]
    %v3849 = vld [vmem:[%s2 + $0x38] sm:$0xff]
    %v3850 = vld [vmem:[%s2 + $0x40] sm:$0xff]
    %v3851 = vld [vmem:[%s2 + $0x48] sm:$0xff]
    %v3852 = vld [vmem:[%s2 + $0x50] sm:$0xff]
    %v3853 = vld [vmem:[%s2 + $0x58] sm:$0xff]
    %v3854 = vld [vmem:[%s2 + $0x60] sm:$0xff]
    %v3855 = vld [vmem:[%s2 + $0x68] sm:$0xff]
    %v3856 = vld [vmem:[%s2 + $0x70] sm:$0xff]
    %v3857 = vld [vmem:[%s2 + $0x78] sm:$0xff]
    %v3858 = vld [vmem:[%s2 + $0x80] sm:$0xff]
    %v3859 = vld [vmem:[%s2 + $0x88] sm:$0xff]
    %v3860 = vld [vmem:[%s2 + $0x90] sm:$0xff]
    %v3861 = vld [vmem:[%s2 + $0x98] sm:$0xff]
    %v3862 = vld [vmem:[%s2 + $0xa0] sm:$0xff]
    %v3863 = vld [vmem:[%s2 + $0xa8] sm:$0xff]
    %v3864 = vld [vmem:[%s2 + $0xb0] sm:$0xff]
    %v3865 = vld [vmem:[%s2 + $0xb8] sm:$0xff]
    %v3866 = vld [vmem:[%s2 + $0xc0] sm:$0xff]
    %v3867 = vld [vmem:[%s2 + $0xc8] sm:$0xff]
    %v3868 = vld [vmem:[%s2 + $0xd0] sm:$0xff]
    %v3869 = vld [vmem:[%s2 + $0xd8] sm:$0xff]
    %v3870 = vld [vmem:[%s2 + $0xe0] sm:$0xff]
    %v3871 = vld [vmem:[%s2 + $0xe8] sm:$0xff]
    %v3872 = vld [vmem:[%s2 + $0xf0] sm:$0xff]
    %v3873 = vld [vmem:[%s2 + $0xf8] sm:$0xff]
    %v3874 = vld [vmem:[%s2 + $0x100] sm:$0xff]
    %v3875 = vld [vmem:[%s2 + $0x108] sm:$0xff]
    %v3876 = vld [vmem:[%s2 + $0x110] sm:$0xff]
    %v3877 = vld [vmem:[%s2 + $0x118] sm:$0xff]
    %v3878 = vld [vmem:[%s2 + $0x120] sm:$0xff]
    %v3879 = vld [vmem:[%s2 + $0x128] sm:$0xff]
    %v3880 = vld [vmem:[%s2 + $0x130] sm:$0xff]
    %v3881 = vld [vmem:[%s2 + $0x138] sm:$0xff]
    %v3882 = vld [vmem:[%s3] sm:$0x3]
    %v3884 = vlaneseq
    %v3885 = vshrl.u32 %v3884, 7
    %v3886 = vsub.s32 0, %v3885
    %v3887 = vrot.slane %v3882, %v3886
    %v3888 = vlaneseq
    %v3889 = vshrl.u32 %v3888, 7
    %v3890 = vsub.s32 1, %v3889
    %v3891 = vrot.slane %v3882, %v3890
    %v3934 = vunpack.c.l.b16 %v3842
    %v3935 = vunpack.c.h.b16 %v3842
    %v3936 = vunpack.c.l.b16 %v3843
    %v3937 = vunpack.c.h.b16 %v3843
    %v3938 = vunpack.c.l.b16 %v3844
    %v3939 = vunpack.c.h.b16 %v3844
    %v3940 = vunpack.c.l.b16 %v3845
    %v3941 = vunpack.c.h.b16 %v3845
    %v3942 = vunpack.c.l.b16 %v3846
    %v3943 = vunpack.c.h.b16 %v3846
    %v3944 = vunpack.c.l.b16 %v3847
    %v3945 = vunpack.c.h.b16 %v3847
    %v3946 = vunpack.c.l.b16 %v3848
    %v3947 = vunpack.c.h.b16 %v3848
    %v3948 = vunpack.c.l.b16 %v3849
    %v3949 = vunpack.c.h.b16 %v3849
    %v3950 = vunpack.c.l.b16 %v3850
    %v3951 = vunpack.c.h.b16 %v3850
    %v3952 = vunpack.c.l.b16 %v3851
    %v3953 = vunpack.c.h.b16 %v3851
    %v3954 = vunpack.c.l.b16 %v3852
    %v3955 = vunpack.c.h.b16 %v3852
    %v3956 = vunpack.c.l.b16 %v3853
    %v3957 = vunpack.c.h.b16 %v3853
    %v3958 = vunpack.c.l.b16 %v3854
    %v3959 = vunpack.c.h.b16 %v3854
    %v3960 = vunpack.c.l.b16 %v3855
    %v3961 = vunpack.c.h.b16 %v3855
    %v3962 = vunpack.c.l.b16 %v3856
    %v3963 = vunpack.c.h.b16 %v3856
    %v3964 = vunpack.c.l.b16 %v3857
    %v3965 = vunpack.c.h.b16 %v3857
    %v3966 = vunpack.c.l.b16 %v3858
    %v3967 = vunpack.c.h.b16 %v3858
    %v3968 = vunpack.c.l.b16 %v3859
    %v3969 = vunpack.c.h.b16 %v3859
    %v3970 = vunpack.c.l.b16 %v3860
    %v3971 = vunpack.c.h.b16 %v3860
    %v3972 = vunpack.c.l.b16 %v3861
    %v3973 = vunpack.c.h.b16 %v3861
    %v3974 = vunpack.c.l.b16 %v3862
    %v3975 = vunpack.c.h.b16 %v3862
    %v3976 = vunpack.c.l.b16 %v3863
    %v3977 = vunpack.c.h.b16 %v3863
    %v3978 = vunpack.c.l.b16 %v3864
    %v3979 = vunpack.c.h.b16 %v3864
    %v3980 = vunpack.c.l.b16 %v3865
    %v3981 = vunpack.c.h.b16 %v3865
    %v3982 = vunpack.c.l.b16 %v3866
    %v3983 = vunpack.c.h.b16 %v3866
    %v3984 = vunpack.c.l.b16 %v3867
    %v3985 = vunpack.c.h.b16 %v3867
    %v3986 = vunpack.c.l.b16 %v3868
    %v3987 = vunpack.c.h.b16 %v3868
    %v3988 = vunpack.c.l.b16 %v3869
    %v3989 = vunpack.c.h.b16 %v3869
    %v3990 = vunpack.c.l.b16 %v3870
    %v3991 = vunpack.c.h.b16 %v3870
    %v3992 = vunpack.c.l.b16 %v3871
    %v3993 = vunpack.c.h.b16 %v3871
    %v3994 = vunpack.c.l.b16 %v3872
    %v3995 = vunpack.c.h.b16 %v3872
    %v3996 = vunpack.c.l.b16 %v3873
    %v3997 = vunpack.c.h.b16 %v3873
    %v3998 = vunpack.c.l.b16 %v3874
    %v3999 = vunpack.c.h.b16 %v3874
    %v4000 = vunpack.c.l.b16 %v3875
    %v4001 = vunpack.c.h.b16 %v3875
    %v4002 = vunpack.c.l.b16 %v3876
    %v4003 = vunpack.c.h.b16 %v3876
    %v4004 = vunpack.c.l.b16 %v3877
    %v4005 = vunpack.c.h.b16 %v3877
    %v4006 = vunpack.c.l.b16 %v3878
    %v4007 = vunpack.c.h.b16 %v3878
    %v4008 = vunpack.c.l.b16 %v3879
    %v4009 = vunpack.c.h.b16 %v3879
    %v4010 = vunpack.c.l.b16 %v3880
    %v4011 = vunpack.c.h.b16 %v3880
    %v4012 = vunpack.c.l.b16 %v3881
    %v4013 = vunpack.c.h.b16 %v3881
    %v4014 = vpack.c.b16 %v3936, %v3934
    %v4015 = vpack.c.b16 %v3937, %v3935
    %v4016 = vpack.c.b16 %v3940, %v3938
    %v4017 = vpack.c.b16 %v3941, %v3939
    %v4018 = vpack.c.b16 %v3944, %v3942
    %v4019 = vpack.c.b16 %v3945, %v3943
    %v4020 = vpack.c.b16 %v3948, %v3946
    %v4021 = vpack.c.b16 %v3949, %v3947
    %v4022 = vpack.c.b16 %v3952, %v3950
    %v4023 = vpack.c.b16 %v3953, %v3951
    %v4024 = vpack.c.b16 %v3956, %v3954
    %v4025 = vpack.c.b16 %v3957, %v3955
    %v4026 = vpack.c.b16 %v3960, %v3958
    %v4027 = vpack.c.b16 %v3961, %v3959
    %v4028 = vpack.c.b16 %v3964, %v3962
    %v4029 = vpack.c.b16 %v3965, %v3963
    %v4030 = vpack.c.b16 %v3968, %v3966
    %v4031 = vpack.c.b16 %v3969, %v3967
    %v4032 = vpack.c.b16 %v3972, %v3970
    %v4033 = vpack.c.b16 %v3973, %v3971
    %v4034 = vpack.c.b16 %v3976, %v3974
    %v4035 = vpack.c.b16 %v3977, %v3975
    %v4036 = vpack.c.b16 %v3980, %v3978
    %v4037 = vpack.c.b16 %v3981, %v3979
    %v4038 = vpack.c.b16 %v3984, %v3982
    %v4039 = vpack.c.b16 %v3985, %v3983
    %v4040 = vpack.c.b16 %v3988, %v3986
    %v4041 = vpack.c.b16 %v3989, %v3987
    %v4042 = vpack.c.b16 %v3992, %v3990
    %v4043 = vpack.c.b16 %v3993, %v3991
    %v4044 = vpack.c.b16 %v3996, %v3994
    %v4045 = vpack.c.b16 %v3997, %v3995
    %v4046 = vpack.c.b16 %v4000, %v3998
    %v4047 = vpack.c.b16 %v4001, %v3999
    %v4048 = vpack.c.b16 %v4004, %v4002
    %v4049 = vpack.c.b16 %v4005, %v4003
    %v4050 = vpack.c.b16 %v4008, %v4006
    %v4051 = vpack.c.b16 %v4009, %v4007
    %v4052 = vpack.c.b16 %v4012, %v4010
    %v4053 = vpack.c.b16 %v4013, %v4011
    %v4095 = vsel %vm124, %v3841, 0
    %4097 = vmatprep.subr.bf16.mxu0 %v4015
    %4098 = vmatpush1.bf16.msra.mxu0 %v4014
    %4099 = vmatprep.subr.bf16.mxu0 %v4017
    %4100 = vmatpush1.bf16.msra.mxu0 %v4016
    %4101 = vmatprep.subr.bf16.mxu0 %v4019
    %4102 = vmatpush1.bf16.msra.mxu0 %v4018
    %4103 = vmatprep.subr.bf16.mxu0 %v4021
    %4104 = vmatpush1.bf16.msra.mxu0 %v4020
    %4105 = vmatprep.subr.bf16.mxu0 %v4023
    %4106 = vmatpush1.bf16.msra.mxu0 %v4022
    %4107 = vmatprep.subr.bf16.mxu0 %v4025
    %4108 = vmatpush1.bf16.msra.mxu0 %v4024
    %4109 = vmatprep.subr.bf16.mxu0 %v4027
    %4110 = vmatpush1.bf16.msra.mxu0 %v4026
    %4111 = vmatprep.subr.bf16.mxu0 %v4029
    %4112 = vmatpush1.bf16.msra.mxu0 %v4028
    %4113 = vmatprep.subr.bf16.mxu0 %v4031
    %4114 = vmatpush1.bf16.msra.mxu0 %v4030
    %4115 = vmatprep.subr.bf16.mxu0 %v4033
    %4116 = vmatpush1.bf16.msra.mxu0 %v4032
    %4117 = vmatprep.subr.bf16.mxu0 %v4035
    %4118 = vmatpush1.bf16.msra.mxu0 %v4034
    %4119 = vmatprep.subr.bf16.mxu0 %v4037
    %4120 = vmatpush1.bf16.msra.mxu0 %v4036
    %4121 = vmatprep.subr.bf16.mxu0 %v4039
    %4122 = vmatpush1.bf16.msra.mxu0 %v4038
    %4123 = vmatprep.subr.bf16.mxu0 %v4041
    %4124 = vmatpush1.bf16.msra.mxu0 %v4040
    %4125 = vmatprep.subr.bf16.mxu0 %v4043
    %4126 = vmatpush1.bf16.msra.mxu0 %v4042
    %4127 = vmatprep.subr.bf16.mxu0 %v4045
    %4128 = vmatpush1.bf16.msra.mxu0 %v4044
    %4129 = vmatprep.mubr.bf16.mxu0 %v3840
    %4130 = vmatmul.mubr.bf16.gmra.mrb[0].mxu0 %v3839
    %v4131 = vpop.f32.mrb[0].mxu0
    %v4132 = vadd.f32 %v3887, %v4131
    %v4133 = vpop.f32.mrb[0].mxu0
    %v4134 = vadd.f32 %v3891, %v4133
    %v4135 = vpop.f32.mrb[0].mxu0
    %v4136 = vpop.f32.mrb[0].mxu0
    %4137 = vdwg.mxu0
    %4138 = vmatprep.subr.bf16.mxu0 %v4047
    %4139 = vmatpush1.bf16.msra.mxu0 %v4046
    %4140 = vmatprep.subr.bf16.mxu0 %v4049
    %4141 = vmatpush1.bf16.msra.mxu0 %v4048
    %4142 = vmatprep.subr.bf16.mxu0 %v4051
    %4143 = vmatpush1.bf16.msra.mxu0 %v4050
    %4144 = vmatprep.subr.bf16.mxu0 %v4053
    %4145 = vmatpush1.bf16.msra.mxu0 %v4052
    %4146 = vmatprep.subr.bf16.mxu0 0
    %4147 = vmatpush1.bf16.msra.mxu0 0
    %4148 = vmatprep.subr.bf16.mxu0 0
    %4149 = vmatpush1.bf16.msra.mxu0 0
    %4150 = vmatprep.subr.bf16.mxu0 0
    %4151 = vmatpush1.bf16.msra.mxu0 0
    %4152 = vmatprep.subr.bf16.mxu0 0
    %4153 = vmatpush1.bf16.msra.mxu0 0
    %4154 = vmatprep.subr.bf16.mxu0 0
    %4155 = vmatpush1.bf16.msra.mxu0 0
    %4156 = vmatprep.subr.bf16.mxu0 0
    %4157 = vmatpush1.bf16.msra.mxu0 0
    %4158 = vmatprep.subr.bf16.mxu0 0
    %4159 = vmatpush1.bf16.msra.mxu0 0
    %4160 = vmatprep.subr.bf16.mxu0 0
    %4161 = vmatpush1.bf16.msra.mxu0 0
    %4162 = vmatprep.subr.bf16.mxu0 0
    %4163 = vmatpush1.bf16.msra.mxu0 0
    %4164 = vmatprep.subr.bf16.mxu0 0
    %4165 = vmatpush1.bf16.msra.mxu0 0
    %4166 = vmatprep.subr.bf16.mxu0 0
    %4167 = vmatpush1.bf16.msra.mxu0 0
    %4168 = vmatprep.subr.bf16.mxu0 0
    %4169 = vmatpush1.bf16.msra.mxu0 0
    %4170 = vmatprep.mubr.bf16.mxu0 0
    %4171 = vmatmul.mubr.bf16.gmra.mrb[0].mxu0 %v4095
    %v4172 = vpop.f32.mrb[0].mxu0
    %v4173 = vadd.f32 %v4132, %v4172
    %v4174 = vpop.f32.mrb[0].mxu0
    %v4175 = vadd.f32 %v4134, %v4174
    %v4176 = vpop.f32.mrb[0].mxu0
    %v4177 = vpop.f32.mrb[0].mxu0
    %4178 = vdwg.mxu0
    %v4179 = vmax.f32 %v4173, 0.0
    %v4180 = vmax.f32 %v4175, 0.0
    %v4183 = vcombine.low %v4179, %v4180
    %v4185 = vunpack.c.l.s4 1983009808
    %v4186 = vunpack.c.0.s8 %v4185
    %v4187 = vlaneseq
    %v4188 = vshrl.u32 %v4187, 7
    %v4189 = vsub.s32 %v4186, %v4188
    %v4190 = vrot.slane %v4183, %v4189
    %s4192 = scalar_lea.vmem [#allocation2], 40
    %4193 = vst.msk [vmem:[%s4192] sm:$0xf] %vm482, %v4190
    %v4194 = vld [vmem:[%s2714] sm:$0x3]
    %v4195 = vld [vmem:[%s3085] sm:$0x3]
    %v4196 = vld [vmem:[%s3456] sm:$0x3]
    %v4197 = vld [vmem:[%s3827] sm:$0x3]
    %s4198 = scalar_lea.vmem %s0, 30
    %v4199 = vld [vmem:[%s4198] sm:$0x3]
    %4201 = vrot.lane.b32.xlu0 %v4195, 64
    %v4202 = vpop.permute.xlu0 %4201
    %4205 = vrot.lane.b32.xlu0 %v4197, 64
    %v4206 = vpop.permute.xlu0 %4205
    %v4208 = vsel %vm124, %v4194, %v4202
    %v4209 = vsel %vm124, %v4196, %v4206
    %v4210 = vpack.c.bf16 %v4208, %v4208
    %v4211 = vpack.c.bf16 %v4209, %v4209
    %v4212 = vpack.c.bf16 %v4199, %v4199
    %v4213 = vld [vmem:[%s2] sm:$0xff]
    %v4214 = vld [vmem:[%s2 + $0x8] sm:$0xff]
    %v4215 = vld [vmem:[%s2 + $0x10] sm:$0xff]
    %v4216 = vld [vmem:[%s2 + $0x18] sm:$0xff]
    %v4217 = vld [vmem:[%s2 + $0x20] sm:$0xff]
    %v4218 = vld [vmem:[%s2 + $0x28] sm:$0xff]
    %v4219 = vld [vmem:[%s2 + $0x30] sm:$0xff]
    %v4220 = vld [vmem:[%s2 + $0x38] sm:$0xff]
    %v4221 = vld [vmem:[%s2 + $0x40] sm:$0xff]
    %v4222 = vld [vmem:[%s2 + $0x48] sm:$0xff]
    %v4223 = vld [vmem:[%s2 + $0x50] sm:$0xff]
    %v4224 = vld [vmem:[%s2 + $0x58] sm:$0xff]
    %v4225 = vld [vmem:[%s2 + $0x60] sm:$0xff]
    %v4226 = vld [vmem:[%s2 + $0x68] sm:$0xff]
    %v4227 = vld [vmem:[%s2 + $0x70] sm:$0xff]
    %v4228 = vld [vmem:[%s2 + $0x78] sm:$0xff]
    %v4229 = vld [vmem:[%s2 + $0x80] sm:$0xff]
    %v4230 = vld [vmem:[%s2 + $0x88] sm:$0xff]
    %v4231 = vld [vmem:[%s2 + $0x90] sm:$0xff]
    %v4232 = vld [vmem:[%s2 + $0x98] sm:$0xff]
    %v4233 = vld [vmem:[%s2 + $0xa0] sm:$0xff]
    %v4234 = vld [vmem:[%s2 + $0xa8] sm:$0xff]
    %v4235 = vld [vmem:[%s2 + $0xb0] sm:$0xff]
    %v4236 = vld [vmem:[%s2 + $0xb8] sm:$0xff]
    %v4237 = vld [vmem:[%s2 + $0xc0] sm:$0xff]
    %v4238 = vld [vmem:[%s2 + $0xc8] sm:$0xff]
    %v4239 = vld [vmem:[%s2 + $0xd0] sm:$0xff]
    %v4240 = vld [vmem:[%s2 + $0xd8] sm:$0xff]
    %v4241 = vld [vmem:[%s2 + $0xe0] sm:$0xff]
    %v4242 = vld [vmem:[%s2 + $0xe8] sm:$0xff]
    %v4243 = vld [vmem:[%s2 + $0xf0] sm:$0xff]
    %v4244 = vld [vmem:[%s2 + $0xf8] sm:$0xff]
    %v4245 = vld [vmem:[%s2 + $0x100] sm:$0xff]
    %v4246 = vld [vmem:[%s2 + $0x108] sm:$0xff]
    %v4247 = vld [vmem:[%s2 + $0x110] sm:$0xff]
    %v4248 = vld [vmem:[%s2 + $0x118] sm:$0xff]
    %v4249 = vld [vmem:[%s2 + $0x120] sm:$0xff]
    %v4250 = vld [vmem:[%s2 + $0x128] sm:$0xff]
    %v4251 = vld [vmem:[%s2 + $0x130] sm:$0xff]
    %v4252 = vld [vmem:[%s2 + $0x138] sm:$0xff]
    %v4253 = vld [vmem:[%s3] sm:$0x3]
    %v4255 = vlaneseq
    %v4256 = vshrl.u32 %v4255, 7
    %v4257 = vsub.s32 0, %v4256
    %v4258 = vrot.slane %v4253, %v4257
    %v4259 = vlaneseq
    %v4260 = vshrl.u32 %v4259, 7
    %v4261 = vsub.s32 1, %v4260
    %v4262 = vrot.slane %v4253, %v4261
    %v4305 = vunpack.c.l.b16 %v4213
    %v4306 = vunpack.c.h.b16 %v4213
    %v4307 = vunpack.c.l.b16 %v4214
    %v4308 = vunpack.c.h.b16 %v4214
    %v4309 = vunpack.c.l.b16 %v4215
    %v4310 = vunpack.c.h.b16 %v4215
    %v4311 = vunpack.c.l.b16 %v4216
    %v4312 = vunpack.c.h.b16 %v4216
    %v4313 = vunpack.c.l.b16 %v4217
    %v4314 = vunpack.c.h.b16 %v4217
    %v4315 = vunpack.c.l.b16 %v4218
    %v4316 = vunpack.c.h.b16 %v4218
    %v4317 = vunpack.c.l.b16 %v4219
    %v4318 = vunpack.c.h.b16 %v4219
    %v4319 = vunpack.c.l.b16 %v4220
    %v4320 = vunpack.c.h.b16 %v4220
    %v4321 = vunpack.c.l.b16 %v4221
    %v4322 = vunpack.c.h.b16 %v4221
    %v4323 = vunpack.c.l.b16 %v4222
    %v4324 = vunpack.c.h.b16 %v4222
    %v4325 = vunpack.c.l.b16 %v4223
    %v4326 = vunpack.c.h.b16 %v4223
    %v4327 = vunpack.c.l.b16 %v4224
    %v4328 = vunpack.c.h.b16 %v4224
    %v4329 = vunpack.c.l.b16 %v4225
    %v4330 = vunpack.c.h.b16 %v4225
    %v4331 = vunpack.c.l.b16 %v4226
    %v4332 = vunpack.c.h.b16 %v4226
    %v4333 = vunpack.c.l.b16 %v4227
    %v4334 = vunpack.c.h.b16 %v4227
    %v4335 = vunpack.c.l.b16 %v4228
    %v4336 = vunpack.c.h.b16 %v4228
    %v4337 = vunpack.c.l.b16 %v4229
    %v4338 = vunpack.c.h.b16 %v4229
    %v4339 = vunpack.c.l.b16 %v4230
    %v4340 = vunpack.c.h.b16 %v4230
    %v4341 = vunpack.c.l.b16 %v4231
    %v4342 = vunpack.c.h.b16 %v4231
    %v4343 = vunpack.c.l.b16 %v4232
    %v4344 = vunpack.c.h.b16 %v4232
    %v4345 = vunpack.c.l.b16 %v4233
    %v4346 = vunpack.c.h.b16 %v4233
    %v4347 = vunpack.c.l.b16 %v4234
    %v4348 = vunpack.c.h.b16 %v4234
    %v4349 = vunpack.c.l.b16 %v4235
    %v4350 = vunpack.c.h.b16 %v4235
    %v4351 = vunpack.c.l.b16 %v4236
    %v4352 = vunpack.c.h.b16 %v4236
    %v4353 = vunpack.c.l.b16 %v4237
    %v4354 = vunpack.c.h.b16 %v4237
    %v4355 = vunpack.c.l.b16 %v4238
    %v4356 = vunpack.c.h.b16 %v4238
    %v4357 = vunpack.c.l.b16 %v4239
    %v4358 = vunpack.c.h.b16 %v4239
    %v4359 = vunpack.c.l.b16 %v4240
    %v4360 = vunpack.c.h.b16 %v4240
    %v4361 = vunpack.c.l.b16 %v4241
    %v4362 = vunpack.c.h.b16 %v4241
    %v4363 = vunpack.c.l.b16 %v4242
    %v4364 = vunpack.c.h.b16 %v4242
    %v4365 = vunpack.c.l.b16 %v4243
    %v4366 = vunpack.c.h.b16 %v4243
    %v4367 = vunpack.c.l.b16 %v4244
    %v4368 = vunpack.c.h.b16 %v4244
    %v4369 = vunpack.c.l.b16 %v4245
    %v4370 = vunpack.c.h.b16 %v4245
    %v4371 = vunpack.c.l.b16 %v4246
    %v4372 = vunpack.c.h.b16 %v4246
    %v4373 = vunpack.c.l.b16 %v4247
    %v4374 = vunpack.c.h.b16 %v4247
    %v4375 = vunpack.c.l.b16 %v4248
    %v4376 = vunpack.c.h.b16 %v4248
    %v4377 = vunpack.c.l.b16 %v4249
    %v4378 = vunpack.c.h.b16 %v4249
    %v4379 = vunpack.c.l.b16 %v4250
    %v4380 = vunpack.c.h.b16 %v4250
    %v4381 = vunpack.c.l.b16 %v4251
    %v4382 = vunpack.c.h.b16 %v4251
    %v4383 = vunpack.c.l.b16 %v4252
    %v4384 = vunpack.c.h.b16 %v4252
    %v4385 = vpack.c.b16 %v4307, %v4305
    %v4386 = vpack.c.b16 %v4308, %v4306
    %v4387 = vpack.c.b16 %v4311, %v4309
    %v4388 = vpack.c.b16 %v4312, %v4310
    %v4389 = vpack.c.b16 %v4315, %v4313
    %v4390 = vpack.c.b16 %v4316, %v4314
    %v4391 = vpack.c.b16 %v4319, %v4317
    %v4392 = vpack.c.b16 %v4320, %v4318
    %v4393 = vpack.c.b16 %v4323, %v4321
    %v4394 = vpack.c.b16 %v4324, %v4322
    %v4395 = vpack.c.b16 %v4327, %v4325
    %v4396 = vpack.c.b16 %v4328, %v4326
    %v4397 = vpack.c.b16 %v4331, %v4329
    %v4398 = vpack.c.b16 %v4332, %v4330
    %v4399 = vpack.c.b16 %v4335, %v4333
    %v4400 = vpack.c.b16 %v4336, %v4334
    %v4401 = vpack.c.b16 %v4339, %v4337
    %v4402 = vpack.c.b16 %v4340, %v4338
    %v4403 = vpack.c.b16 %v4343, %v4341
    %v4404 = vpack.c.b16 %v4344, %v4342
    %v4405 = vpack.c.b16 %v4347, %v4345
    %v4406 = vpack.c.b16 %v4348, %v4346
    %v4407 = vpack.c.b16 %v4351, %v4349
    %v4408 = vpack.c.b16 %v4352, %v4350
    %v4409 = vpack.c.b16 %v4355, %v4353
    %v4410 = vpack.c.b16 %v4356, %v4354
    %v4411 = vpack.c.b16 %v4359, %v4357
    %v4412 = vpack.c.b16 %v4360, %v4358
    %v4413 = vpack.c.b16 %v4363, %v4361
    %v4414 = vpack.c.b16 %v4364, %v4362
    %v4415 = vpack.c.b16 %v4367, %v4365
    %v4416 = vpack.c.b16 %v4368, %v4366
    %v4417 = vpack.c.b16 %v4371, %v4369
    %v4418 = vpack.c.b16 %v4372, %v4370
    %v4419 = vpack.c.b16 %v4375, %v4373
    %v4420 = vpack.c.b16 %v4376, %v4374
    %v4421 = vpack.c.b16 %v4379, %v4377
    %v4422 = vpack.c.b16 %v4380, %v4378
    %v4423 = vpack.c.b16 %v4383, %v4381
    %v4424 = vpack.c.b16 %v4384, %v4382
    %v4466 = vsel %vm124, %v4212, 0
    %4468 = vmatprep.subr.bf16.mxu0 %v4386
    %4469 = vmatpush1.bf16.msra.mxu0 %v4385
    %4470 = vmatprep.subr.bf16.mxu0 %v4388
    %4471 = vmatpush1.bf16.msra.mxu0 %v4387
    %4472 = vmatprep.subr.bf16.mxu0 %v4390
    %4473 = vmatpush1.bf16.msra.mxu0 %v4389
    %4474 = vmatprep.subr.bf16.mxu0 %v4392
    %4475 = vmatpush1.bf16.msra.mxu0 %v4391
    %4476 = vmatprep.subr.bf16.mxu0 %v4394
    %4477 = vmatpush1.bf16.msra.mxu0 %v4393
    %4478 = vmatprep.subr.bf16.mxu0 %v4396
    %4479 = vmatpush1.bf16.msra.mxu0 %v4395
    %4480 = vmatprep.subr.bf16.mxu0 %v4398
    %4481 = vmatpush1.bf16.msra.mxu0 %v4397
    %4482 = vmatprep.subr.bf16.mxu0 %v4400
    %4483 = vmatpush1.bf16.msra.mxu0 %v4399
    %4484 = vmatprep.subr.bf16.mxu0 %v4402
    %4485 = vmatpush1.bf16.msra.mxu0 %v4401
    %4486 = vmatprep.subr.bf16.mxu0 %v4404
    %4487 = vmatpush1.bf16.msra.mxu0 %v4403
    %4488 = vmatprep.subr.bf16.mxu0 %v4406
    %4489 = vmatpush1.bf16.msra.mxu0 %v4405
    %4490 = vmatprep.subr.bf16.mxu0 %v4408
    %4491 = vmatpush1.bf16.msra.mxu0 %v4407
    %4492 = vmatprep.subr.bf16.mxu0 %v4410
    %4493 = vmatpush1.bf16.msra.mxu0 %v4409
    %4494 = vmatprep.subr.bf16.mxu0 %v4412
    %4495 = vmatpush1.bf16.msra.mxu0 %v4411
    %4496 = vmatprep.subr.bf16.mxu0 %v4414
    %4497 = vmatpush1.bf16.msra.mxu0 %v4413
    %4498 = vmatprep.subr.bf16.mxu0 %v4416
    %4499 = vmatpush1.bf16.msra.mxu0 %v4415
    %4500 = vmatprep.mubr.bf16.mxu0 %v4211
    %4501 = vmatmul.mubr.bf16.gmra.mrb[0].mxu0 %v4210
    %v4502 = vpop.f32.mrb[0].mxu0
    %v4503 = vadd.f32 %v4258, %v4502
    %v4504 = vpop.f32.mrb[0].mxu0
    %v4505 = vadd.f32 %v4262, %v4504
    %v4506 = vpop.f32.mrb[0].mxu0
    %v4507 = vpop.f32.mrb[0].mxu0
    %4508 = vdwg.mxu0
    %4509 = vmatprep.subr.bf16.mxu0 %v4418
    %4510 = vmatpush1.bf16.msra.mxu0 %v4417
    %4511 = vmatprep.subr.bf16.mxu0 %v4420
    %4512 = vmatpush1.bf16.msra.mxu0 %v4419
    %4513 = vmatprep.subr.bf16.mxu0 %v4422
    %4514 = vmatpush1.bf16.msra.mxu0 %v4421
    %4515 = vmatprep.subr.bf16.mxu0 %v4424
    %4516 = vmatpush1.bf16.msra.mxu0 %v4423
    %4517 = vmatprep.subr.bf16.mxu0 0
    %4518 = vmatpush1.bf16.msra.mxu0 0
    %4519 = vmatprep.subr.bf16.mxu0 0
    %4520 = vmatpush1.bf16.msra.mxu0 0
    %4521 = vmatprep.subr.bf16.mxu0 0
    %4522 = vmatpush1.bf16.msra.mxu0 0
    %4523 = vmatprep.subr.bf16.mxu0 0
    %4524 = vmatpush1.bf16.msra.mxu0 0
    %4525 = vmatprep.subr.bf16.mxu0 0
    %4526 = vmatpush1.bf16.msra.mxu0 0
    %4527 = vmatprep.subr.bf16.mxu0 0
    %4528 = vmatpush1.bf16.msra.mxu0 0
    %4529 = vmatprep.subr.bf16.mxu0 0
    %4530 = vmatpush1.bf16.msra.mxu0 0
    %4531 = vmatprep.subr.bf16.mxu0 0
    %4532 = vmatpush1.bf16.msra.mxu0 0
    %4533 = vmatprep.subr.bf16.mxu0 0
    %4534 = vmatpush1.bf16.msra.mxu0 0
    %4535 = vmatprep.subr.bf16.mxu0 0
    %4536 = vmatpush1.bf16.msra.mxu0 0
    %4537 = vmatprep.subr.bf16.mxu0 0
    %4538 = vmatpush1.bf16.msra.mxu0 0
    %4539 = vmatprep.subr.bf16.mxu0 0
    %4540 = vmatpush1.bf16.msra.mxu0 0
    %4541 = vmatprep.mubr.bf16.mxu0 0
    %4542 = vmatmul.mubr.bf16.gmra.mrb[0].mxu0 %v4466
    %v4543 = vpop.f32.mrb[0].mxu0
    %v4544 = vadd.f32 %v4503, %v4543
    %v4545 = vpop.f32.mrb[0].mxu0
    %v4546 = vadd.f32 %v4505, %v4545
    %v4547 = vpop.f32.mrb[0].mxu0
    %v4548 = vpop.f32.mrb[0].mxu0
    %4549 = vdwg.mxu0
    %v4550 = vmax.f32 %v4544, 0.0
    %v4551 = vmax.f32 %v4546, 0.0
    %v4554 = vcombine.low %v4550, %v4551
    %v4556 = vunpack.c.l.s4 1983009808
    %v4557 = vunpack.c.0.s8 %v4556
    %v4558 = vlaneseq
    %v4559 = vshrl.u32 %v4558, 7
    %v4560 = vsub.s32 %v4557, %v4559
    %v4561 = vrot.slane %v4554, %v4560
    %s4563 = scalar_lea.vmem [#allocation2], 44
    %4564 = vst.msk [vmem:[%s4563] sm:$0xf] %vm482, %v4561
    %v4565 = vld [vmem:[%s1] sm:$0x3]
    %v4566 = vld [vmem:[%s7] sm:$0x3]
    %4568 = vset.pattern.permute.xlu0 0
    %4569 = vperm.xlu0 %4568, %v4565
    %v4570 = vpop.permute.xlu0 %4569
    %v4573 = vlaneseq
    %v4574 = vshrl.u32 %v4573, 7
    %v4575 = vsub.s32 0, %v4574
    %v4576 = vrot.slane %v4566, %v4575
    %v4577 = vlaneseq
    %v4578 = vshrl.u32 %v4577, 7
    %v4579 = vsub.s32 1, %v4578
    %v4580 = vrot.slane %v4566, %v4579
    %v4583 = vmul.f32 %v4570, %v4576
    %v4584 = vmul.f32 %v4570, %v4580
    %v4585 = vld [vmem:[%s8] sm:$0x3]
    %v4587 = vlaneseq
    %v4588 = vshrl.u32 %v4587, 7
    %v4589 = vsub.s32 0, %v4588
    %v4590 = vrot.slane %v4585, %v4589
    %v4591 = vlaneseq
    %v4592 = vshrl.u32 %v4591, 7
    %v4593 = vsub.s32 1, %v4592
    %v4594 = vrot.slane %v4585, %v4593
    %v4597 = vadd.f32 %v4583, %v4590
    %v4598 = vadd.f32 %v4584, %v4594
    %v4599 = vld [vmem:[#allocation2] sm:$0xf]
    %v4600 = vld [vmem:[%s853] sm:$0xf]
    %v4601 = vld [vmem:[%s1224] sm:$0xf]
    %v4602 = vld [vmem:[%s1595] sm:$0xf]
    %v4603 = vld [vmem:[%s1966] sm:$0xf]
    %v4606 = vunpack.c.l.s4 1983009808
    %v4607 = vunpack.c.0.s8 %v4606
    %v4608 = vlaneseq
    %v4609 = vshrl.u32 %v4608, 7
    %v4610 = vsub.s32 %v4607, %v4609
    %v4611 = vrot.slane %v4599, %v4610
    %v4612 = vcombine.high %v4611, %v4611
    %v4617 = vunpack.c.l.s4 1983009808
    %v4618 = vunpack.c.0.s8 %v4617
    %v4619 = vlaneseq
    %v4620 = vshrl.u32 %v4619, 7
    %v4621 = vsub.s32 %v4618, %v4620
    %v4622 = vrot.slane %v4600, %v4621
    %v4623 = vcombine.high %v4622, %v4622
    %4624 = vrot.lane.b32.xlu0 %v4622, 64
    %v4625 = vpop.permute.xlu0 %4624
    %4626 = vrot.lane.b32.xlu0 %v4623, 64
    %v4627 = vpop.permute.xlu0 %4626
    %v4628 = vsel %vm124, %v4625, %v4627
    %v4633 = vunpack.c.l.s4 1983009808
    %v4634 = vunpack.c.0.s8 %v4633
    %v4635 = vlaneseq
    %v4636 = vshrl.u32 %v4635, 7
    %v4637 = vsub.s32 %v4634, %v4636
    %v4638 = vrot.slane %v4601, %v4637
    %v4639 = vcombine.high %v4638, %v4638
    %v4644 = vunpack.c.l.s4 1983009808
    %v4645 = vunpack.c.0.s8 %v4644
    %v4646 = vlaneseq
    %v4647 = vshrl.u32 %v4646, 7
    %v4648 = vsub.s32 %v4645, %v4647
    %v4649 = vrot.slane %v4602, %v4648
    %v4650 = vcombine.high %v4649, %v4649
    %4651 = vrot.lane.b32.xlu0 %v4649, 64
    %v4652 = vpop.permute.xlu0 %4651
    %4653 = vrot.lane.b32.xlu0 %v4650, 64
    %v4654 = vpop.permute.xlu0 %4653
    %v4655 = vsel %vm124, %v4652, %v4654
    %v4660 = vunpack.c.l.s4 1983009808
    %v4661 = vunpack.c.0.s8 %v4660
    %v4662 = vlaneseq
    %v4663 = vshrl.u32 %v4662, 7
    %v4664 = vsub.s32 %v4661, %v4663
    %v4665 = vrot.slane %v4603, %v4664
    %v4666 = vcombine.high %v4665, %v4665
    %v4669 = vsel %vm124, %v4612, %v4625
    %v4670 = vsel %vm124, %v4639, %v4652
    %v4671 = vpack.c.bf16 %v4611, %v4611
    %v4672 = vpack.c.bf16 %v4669, %v4669
    %v4673 = vpack.c.bf16 %v4628, %v4628
    %v4674 = vpack.c.bf16 %v4638, %v4638
    %v4675 = vpack.c.bf16 %v4670, %v4670
    %v4676 = vpack.c.bf16 %v4655, %v4655
    %v4677 = vpack.c.bf16 %v4665, %v4665
    %v4678 = vpack.c.bf16 %v4666, %v4666
    %v4679 = vld [vmem:[#allocation3] sm:$0xf]
    %v4680 = vld [vmem:[#allocation3 + $0x4] sm:$0xf]
    %v4681 = vld [vmem:[#allocation3 + $0x8] sm:$0xf]
    %v4682 = vld [vmem:[#allocation3 + $0xc] sm:$0xf]
    %v4683 = vld [vmem:[#allocation3 + $0x10] sm:$0xf]
    %v4684 = vld [vmem:[#allocation3 + $0x14] sm:$0xf]
    %v4685 = vld [vmem:[#allocation3 + $0x18] sm:$0xf]
    %v4686 = vld [vmem:[#allocation3 + $0x1c] sm:$0xf]
    %v4687 = vld [vmem:[#allocation3 + $0x20] sm:$0xf]
    %v4688 = vld [vmem:[#allocation3 + $0x24] sm:$0xf]
    %v4689 = vld [vmem:[#allocation3 + $0x28] sm:$0xf]
    %v4690 = vld [vmem:[#allocation3 + $0x2c] sm:$0xf]
    %v4691 = vld [vmem:[#allocation3 + $0x30] sm:$0xf]
    %v4692 = vld [vmem:[#allocation3 + $0x34] sm:$0xf]
    %v4693 = vld [vmem:[#allocation3 + $0x38] sm:$0xf]
    %v4694 = vld [vmem:[#allocation3 + $0x3c] sm:$0xf]
    %v4695 = vld [vmem:[#allocation3 + $0x40] sm:$0xf]
    %v4696 = vld [vmem:[#allocation3 + $0x44] sm:$0xf]
    %v4697 = vld [vmem:[#allocation3 + $0x48] sm:$0xf]
    %v4698 = vld [vmem:[#allocation3 + $0x4c] sm:$0xf]
    %v4699 = vld [vmem:[#allocation3 + $0x50] sm:$0xf]
    %v4700 = vld [vmem:[#allocation3 + $0x54] sm:$0xf]
    %v4701 = vld [vmem:[#allocation3 + $0x58] sm:$0xf]
    %v4702 = vld [vmem:[#allocation3 + $0x5c] sm:$0xf]
    %v4703 = vld [vmem:[#allocation3 + $0x60] sm:$0xf]
    %v4704 = vld [vmem:[#allocation3 + $0x64] sm:$0xf]
    %v4705 = vld [vmem:[#allocation3 + $0x68] sm:$0xf]
    %v4706 = vld [vmem:[#allocation3 + $0x6c] sm:$0xf]
    %v4707 = vld [vmem:[#allocation3 + $0x70] sm:$0xf]
    %v4708 = vld [vmem:[#allocation3 + $0x74] sm:$0xf]
    %v4709 = vld [vmem:[#allocation3 + $0x78] sm:$0xf]
    %v4710 = vld [vmem:[#allocation3 + $0x7c] sm:$0xf]
    %v4711 = vld [vmem:[#allocation3 + $0x80] sm:$0xf]
    %v4712 = vld [vmem:[#allocation3 + $0x84] sm:$0xf]
    %v4713 = vld [vmem:[#allocation3 + $0x88] sm:$0xf]
    %v4714 = vld [vmem:[#allocation3 + $0x8c] sm:$0xf]
    %v4715 = vld [vmem:[#allocation3 + $0x90] sm:$0xf]
    %v4716 = vld [vmem:[#allocation3 + $0x94] sm:$0xf]
    %v4717 = vld [vmem:[#allocation3 + $0x98] sm:$0xf]
    %v4718 = vld [vmem:[#allocation3 + $0x9c] sm:$0xf]
    %v4719 = vld [vmem:[#allocation3 + $0xa0] sm:$0xf]
    %v4720 = vld [vmem:[#allocation3 + $0xa4] sm:$0xf]
    %v4721 = vld [vmem:[#allocation3 + $0xa8] sm:$0xf]
    %v4722 = vld [vmem:[#allocation3 + $0xac] sm:$0xf]
    %v4723 = vld [vmem:[#allocation3 + $0xb0] sm:$0xf]
    %v4724 = vld [vmem:[#allocation3 + $0xb4] sm:$0xf]
    %v4725 = vld [vmem:[#allocation3 + $0xb8] sm:$0xf]
    %v4726 = vld [vmem:[#allocation3 + $0xbc] sm:$0xf]
    %v4727 = vld [vmem:[#allocation3 + $0xc0] sm:$0xf]
    %v4728 = vld [vmem:[#allocation3 + $0xc4] sm:$0xf]
    %v4729 = vld [vmem:[#allocation3 + $0xc8] sm:$0xf]
    %v4730 = vld [vmem:[#allocation3 + $0xcc] sm:$0xf]
    %v4731 = vld [vmem:[#allocation3 + $0xd0] sm:$0xf]
    %v4732 = vld [vmem:[#allocation3 + $0xd4] sm:$0xf]
    %v4733 = vld [vmem:[#allocation3 + $0xd8] sm:$0xf]
    %v4734 = vld [vmem:[#allocation3 + $0xdc] sm:$0xf]
    %v4735 = vld [vmem:[#allocation3 + $0xe0] sm:$0xf]
    %v4736 = vld [vmem:[#allocation3 + $0xe4] sm:$0xf]
    %v4737 = vld [vmem:[#allocation3 + $0xe8] sm:$0xf]
    %v4738 = vld [vmem:[#allocation3 + $0xec] sm:$0xf]
    %v4739 = vld [vmem:[#allocation3 + $0xf0] sm:$0xf]
    %v4740 = vld [vmem:[#allocation3 + $0xf4] sm:$0xf]
    %v4741 = vld [vmem:[#allocation3 + $0xf8] sm:$0xf]
    %v4742 = vld [vmem:[#allocation3 + $0xfc] sm:$0xf]
    %v4743 = vld [vmem:[#allocation3 + $0x100] sm:$0xf]
    %v4744 = vld [vmem:[#allocation3 + $0x104] sm:$0xf]
    %v4745 = vld [vmem:[#allocation3 + $0x108] sm:$0xf]
    %v4746 = vld [vmem:[#allocation3 + $0x10c] sm:$0xf]
    %v4747 = vld [vmem:[#allocation3 + $0x110] sm:$0xf]
    %v4748 = vld [vmem:[#allocation3 + $0x114] sm:$0xf]
    %v4749 = vld [vmem:[#allocation3 + $0x118] sm:$0xf]
    %v4750 = vld [vmem:[#allocation3 + $0x11c] sm:$0xf]
    %v4751 = vld [vmem:[#allocation3 + $0x120] sm:$0xf]
    %v4752 = vld [vmem:[#allocation3 + $0x124] sm:$0xf]
    %v4753 = vld [vmem:[#allocation3 + $0x128] sm:$0xf]
    %v4754 = vld [vmem:[#allocation3 + $0x12c] sm:$0xf]
    %v4755 = vld [vmem:[#allocation3 + $0x130] sm:$0xf]
    %v4756 = vld [vmem:[#allocation3 + $0x134] sm:$0xf]
    %v4757 = vld [vmem:[#allocation3 + $0x138] sm:$0xf]
    %v4758 = vld [vmem:[#allocation3 + $0x13c] sm:$0xf]
    %v4759 = vld [vmem:[#allocation3 + $0x140] sm:$0xf]
    %v4760 = vld [vmem:[#allocation3 + $0x144] sm:$0xf]
    %v4761 = vld [vmem:[#allocation3 + $0x148] sm:$0xf]
    %v4762 = vld [vmem:[#allocation3 + $0x14c] sm:$0xf]
    %v4763 = vld [vmem:[#allocation3 + $0x150] sm:$0xf]
    %v4764 = vld [vmem:[#allocation3 + $0x154] sm:$0xf]
    %v4765 = vld [vmem:[#allocation3 + $0x158] sm:$0xf]
    %v4766 = vld [vmem:[#allocation3 + $0x15c] sm:$0xf]
    %v4767 = vld [vmem:[#allocation3 + $0x160] sm:$0xf]
    %v4768 = vld [vmem:[#allocation3 + $0x164] sm:$0xf]
    %v4769 = vld [vmem:[#allocation3 + $0x168] sm:$0xf]
    %v4770 = vld [vmem:[#allocation3 + $0x16c] sm:$0xf]
    %v4771 = vld [vmem:[#allocation3 + $0x170] sm:$0xf]
    %v4772 = vld [vmem:[#allocation3 + $0x174] sm:$0xf]
    %v4773 = vld [vmem:[#allocation3 + $0x178] sm:$0xf]
    %v4774 = vld [vmem:[#allocation3 + $0x17c] sm:$0xf]
    %v4775 = vld [vmem:[#allocation3 + $0x180] sm:$0xf]
    %v4776 = vld [vmem:[#allocation3 + $0x184] sm:$0xf]
    %v4777 = vld [vmem:[#allocation3 + $0x188] sm:$0xf]
    %v4778 = vld [vmem:[#allocation3 + $0x18c] sm:$0xf]
    %v4779 = vld [vmem:[#allocation3 + $0x190] sm:$0xf]
    %v4780 = vld [vmem:[#allocation3 + $0x194] sm:$0xf]
    %v4781 = vld [vmem:[#allocation3 + $0x198] sm:$0xf]
    %v4782 = vld [vmem:[#allocation3 + $0x19c] sm:$0xf]
    %v4783 = vld [vmem:[#allocation3 + $0x1a0] sm:$0xf]
    %v4784 = vld [vmem:[#allocation3 + $0x1a4] sm:$0xf]
    %v4785 = vld [vmem:[#allocation3 + $0x1a8] sm:$0xf]
    %v4786 = vld [vmem:[#allocation3 + $0x1ac] sm:$0xf]
    %v4787 = vld [vmem:[#allocation3 + $0x1b0] sm:$0xf]
    %v4788 = vld [vmem:[#allocation3 + $0x1b4] sm:$0xf]
    %v4789 = vld [vmem:[#allocation3 + $0x1b8] sm:$0xf]
    %v4790 = vld [vmem:[#allocation3 + $0x1bc] sm:$0xf]
    %v4791 = vld [vmem:[#allocation3 + $0x1c0] sm:$0xf]
    %v4792 = vld [vmem:[#allocation3 + $0x1c4] sm:$0xf]
    %v4793 = vld [vmem:[#allocation3 + $0x1c8] sm:$0xf]
    %v4794 = vld [vmem:[#allocation3 + $0x1cc] sm:$0xf]
    %v4795 = vld [vmem:[#allocation3 + $0x1d0] sm:$0xf]
    %v4796 = vld [vmem:[#allocation3 + $0x1d4] sm:$0xf]
    %v4797 = vld [vmem:[#allocation3 + $0x1d8] sm:$0xf]
    %v4798 = vld [vmem:[#allocation3 + $0x1dc] sm:$0xf]
    %v4799 = vld [vmem:[%s5] sm:$0x1]
    %v4801 = vlaneseq
    %v4802 = vshrl.u32 %v4801, 7
    %v4803 = vsub.s32 0, %v4802
    %v4804 = vrot.slane %v4799, %v4803
    %v4926 = vunpack.c.l.b16 %v4679
    %v4927 = vunpack.c.l.b16 %v4680
    %v4928 = vunpack.c.l.b16 %v4681
    %v4929 = vunpack.c.l.b16 %v4682
    %v4930 = vunpack.c.l.b16 %v4683
    %v4931 = vunpack.c.l.b16 %v4684
    %v4932 = vunpack.c.l.b16 %v4685
    %v4933 = vunpack.c.l.b16 %v4686
    %v4934 = vunpack.c.l.b16 %v4687
    %v4935 = vunpack.c.l.b16 %v4688
    %v4936 = vunpack.c.l.b16 %v4689
    %v4937 = vunpack.c.l.b16 %v4690
    %v4938 = vunpack.c.l.b16 %v4691
    %v4939 = vunpack.c.l.b16 %v4692
    %v4940 = vunpack.c.l.b16 %v4693
    %v4941 = vunpack.c.l.b16 %v4694
    %v4942 = vunpack.c.l.b16 %v4695
    %v4943 = vunpack.c.l.b16 %v4696
    %v4944 = vunpack.c.l.b16 %v4697
    %v4945 = vunpack.c.l.b16 %v4698
    %v4946 = vunpack.c.l.b16 %v4699
    %v4947 = vunpack.c.l.b16 %v4700
    %v4948 = vunpack.c.l.b16 %v4701
    %v4949 = vunpack.c.l.b16 %v4702
    %v4950 = vunpack.c.l.b16 %v4703
    %v4951 = vunpack.c.l.b16 %v4704
    %v4952 = vunpack.c.l.b16 %v4705
    %v4953 = vunpack.c.l.b16 %v4706
    %v4954 = vunpack.c.l.b16 %v4707
    %v4955 = vunpack.c.l.b16 %v4708
    %v4956 = vunpack.c.l.b16 %v4709
    %v4957 = vunpack.c.l.b16 %v4710
    %v4958 = vunpack.c.l.b16 %v4711
    %v4959 = vunpack.c.l.b16 %v4712
    %v4960 = vunpack.c.l.b16 %v4713
    %v4961 = vunpack.c.l.b16 %v4714
    %v4962 = vunpack.c.l.b16 %v4715
    %v4963 = vunpack.c.l.b16 %v4716
    %v4964 = vunpack.c.l.b16 %v4717
    %v4965 = vunpack.c.l.b16 %v4718
    %v4966 = vunpack.c.l.b16 %v4719
    %v4967 = vunpack.c.l.b16 %v4720
    %v4968 = vunpack.c.l.b16 %v4721
    %v4969 = vunpack.c.l.b16 %v4722
    %v4970 = vunpack.c.l.b16 %v4723
    %v4971 = vunpack.c.l.b16 %v4724
    %v4972 = vunpack.c.l.b16 %v4725
    %v4973 = vunpack.c.l.b16 %v4726
    %v4974 = vunpack.c.l.b16 %v4727
    %v4975 = vunpack.c.l.b16 %v4728
    %v4976 = vunpack.c.l.b16 %v4729
    %v4977 = vunpack.c.l.b16 %v4730
    %v4978 = vunpack.c.l.b16 %v4731
    %v4979 = vunpack.c.l.b16 %v4732
    %v4980 = vunpack.c.l.b16 %v4733
    %v4981 = vunpack.c.l.b16 %v4734
    %v4982 = vunpack.c.l.b16 %v4735
    %v4983 = vunpack.c.l.b16 %v4736
    %v4984 = vunpack.c.l.b16 %v4737
    %v4985 = vunpack.c.l.b16 %v4738
    %v4986 = vunpack.c.l.b16 %v4739
    %v4987 = vunpack.c.l.b16 %v4740
    %v4988 = vunpack.c.l.b16 %v4741
    %v4989 = vunpack.c.l.b16 %v4742
    %v4990 = vunpack.c.l.b16 %v4743
    %v4991 = vunpack.c.l.b16 %v4744
    %v4992 = vunpack.c.l.b16 %v4745
    %v4993 = vunpack.c.l.b16 %v4746
    %v4994 = vunpack.c.l.b16 %v4747
    %v4995 = vunpack.c.l.b16 %v4748
    %v4996 = vunpack.c.l.b16 %v4749
    %v4997 = vunpack.c.l.b16 %v4750
    %v4998 = vunpack.c.l.b16 %v4751
    %v4999 = vunpack.c.l.b16 %v4752
    %v5000 = vunpack.c.l.b16 %v4753
    %v5001 = vunpack.c.l.b16 %v4754
    %v5002 = vunpack.c.l.b16 %v4755
    %v5003 = vunpack.c.l.b16 %v4756
    %v5004 = vunpack.c.l.b16 %v4757
    %v5005 = vunpack.c.l.b16 %v4758
    %v5006 = vunpack.c.l.b16 %v4759
    %v5007 = vunpack.c.l.b16 %v4760
    %v5008 = vunpack.c.l.b16 %v4761
    %v5009 = vunpack.c.l.b16 %v4762
    %v5010 = vunpack.c.l.b16 %v4763
    %v5011 = vunpack.c.l.b16 %v4764
    %v5012 = vunpack.c.l.b16 %v4765
    %v5013 = vunpack.c.l.b16 %v4766
    %v5014 = vunpack.c.l.b16 %v4767
    %v5015 = vunpack.c.l.b16 %v4768
    %v5016 = vunpack.c.l.b16 %v4769
    %v5017 = vunpack.c.l.b16 %v4770
    %v5018 = vunpack.c.l.b16 %v4771
    %v5019 = vunpack.c.l.b16 %v4772
    %v5020 = vunpack.c.l.b16 %v4773
    %v5021 = vunpack.c.l.b16 %v4774
    %v5022 = vunpack.c.l.b16 %v4775
    %v5023 = vunpack.c.l.b16 %v4776
    %v5024 = vunpack.c.l.b16 %v4777
    %v5025 = vunpack.c.l.b16 %v4778
    %v5026 = vunpack.c.l.b16 %v4779
    %v5027 = vunpack.c.l.b16 %v4780
    %v5028 = vunpack.c.l.b16 %v4781
    %v5029 = vunpack.c.l.b16 %v4782
    %v5030 = vunpack.c.l.b16 %v4783
    %v5031 = vunpack.c.l.b16 %v4784
    %v5032 = vunpack.c.l.b16 %v4785
    %v5033 = vunpack.c.l.b16 %v4786
    %v5034 = vunpack.c.l.b16 %v4787
    %v5035 = vunpack.c.l.b16 %v4788
    %v5036 = vunpack.c.l.b16 %v4789
    %v5037 = vunpack.c.l.b16 %v4790
    %v5038 = vunpack.c.l.b16 %v4791
    %v5039 = vunpack.c.l.b16 %v4792
    %v5040 = vunpack.c.l.b16 %v4793
    %v5041 = vunpack.c.l.b16 %v4794
    %v5042 = vunpack.c.l.b16 %v4795
    %v5043 = vunpack.c.l.b16 %v4796
    %v5044 = vunpack.c.l.b16 %v4797
    %v5045 = vunpack.c.l.b16 %v4798
    %v5046 = vpack.c.b16 %v4927, %v4926
    %v5047 = vpack.c.b16 %v4929, %v4928
    %v5048 = vpack.c.b16 %v4931, %v4930
    %v5049 = vpack.c.b16 %v4933, %v4932
    %v5050 = vpack.c.b16 %v4935, %v4934
    %v5051 = vpack.c.b16 %v4937, %v4936
    %v5052 = vpack.c.b16 %v4939, %v4938
    %v5053 = vpack.c.b16 %v4941, %v4940
    %v5054 = vpack.c.b16 %v4943, %v4942
    %v5055 = vpack.c.b16 %v4945, %v4944
    %v5056 = vpack.c.b16 %v4947, %v4946
    %v5057 = vpack.c.b16 %v4949, %v4948
    %v5058 = vpack.c.b16 %v4951, %v4950
    %v5059 = vpack.c.b16 %v4953, %v4952
    %v5060 = vpack.c.b16 %v4955, %v4954
    %v5061 = vpack.c.b16 %v4957, %v4956
    %v5062 = vpack.c.b16 %v4959, %v4958
    %v5063 = vpack.c.b16 %v4961, %v4960
    %v5064 = vpack.c.b16 %v4963, %v4962
    %v5065 = vpack.c.b16 %v4965, %v4964
    %v5066 = vpack.c.b16 %v4967, %v4966
    %v5067 = vpack.c.b16 %v4969, %v4968
    %v5068 = vpack.c.b16 %v4971, %v4970
    %v5069 = vpack.c.b16 %v4973, %v4972
    %v5070 = vpack.c.b16 %v4975, %v4974
    %v5071 = vpack.c.b16 %v4977, %v4976
    %v5072 = vpack.c.b16 %v4979, %v4978
    %v5073 = vpack.c.b16 %v4981, %v4980
    %v5074 = vpack.c.b16 %v4983, %v4982
    %v5075 = vpack.c.b16 %v4985, %v4984
    %v5076 = vpack.c.b16 %v4987, %v4986
    %v5077 = vpack.c.b16 %v4989, %v4988
    %v5078 = vpack.c.b16 %v4991, %v4990
    %v5079 = vpack.c.b16 %v4993, %v4992
    %v5080 = vpack.c.b16 %v4995, %v4994
    %v5081 = vpack.c.b16 %v4997, %v4996
    %v5082 = vpack.c.b16 %v4999, %v4998
    %v5083 = vpack.c.b16 %v5001, %v5000
    %v5084 = vpack.c.b16 %v5003, %v5002
    %v5085 = vpack.c.b16 %v5005, %v5004
    %v5086 = vpack.c.b16 %v5007, %v5006
    %v5087 = vpack.c.b16 %v5009, %v5008
    %v5088 = vpack.c.b16 %v5011, %v5010
    %v5089 = vpack.c.b16 %v5013, %v5012
    %v5090 = vpack.c.b16 %v5015, %v5014
    %v5091 = vpack.c.b16 %v5017, %v5016
    %v5092 = vpack.c.b16 %v5019, %v5018
    %v5093 = vpack.c.b16 %v5021, %v5020
    %v5094 = vpack.c.b16 %v5023, %v5022
    %v5095 = vpack.c.b16 %v5025, %v5024
    %v5096 = vpack.c.b16 %v5027, %v5026
    %v5097 = vpack.c.b16 %v5029, %v5028
    %v5098 = vpack.c.b16 %v5031, %v5030
    %v5099 = vpack.c.b16 %v5033, %v5032
    %v5100 = vpack.c.b16 %v5035, %v5034
    %v5101 = vpack.c.b16 %v5037, %v5036
    %v5102 = vpack.c.b16 %v5039, %v5038
    %v5103 = vpack.c.b16 %v5041, %v5040
    %v5104 = vpack.c.b16 %v5043, %v5042
    %v5105 = vpack.c.b16 %v5045, %v5044
    %v5167 = vsel %vm124, %v4678, 0
    %5169 = vmatprep.subr.bf16.mxu0 0
    %5170 = vmatpush1.bf16.msra.mxu0 %v5046
    %5171 = vmatprep.subr.bf16.mxu0 0
    %5172 = vmatpush1.bf16.msra.mxu0 %v5047
    %5173 = vmatprep.subr.bf16.mxu0 0
    %5174 = vmatpush1.bf16.msra.mxu0 %v5048
    %5175 = vmatprep.subr.bf16.mxu0 0
    %5176 = vmatpush1.bf16.msra.mxu0 %v5049
    %5177 = vmatprep.subr.bf16.mxu0 0
    %5178 = vmatpush1.bf16.msra.mxu0 %v5050
    %5179 = vmatprep.subr.bf16.mxu0 0
    %5180 = vmatpush1.bf16.msra.mxu0 %v5051
    %5181 = vmatprep.subr.bf16.mxu0 0
    %5182 = vmatpush1.bf16.msra.mxu0 %v5052
    %5183 = vmatprep.subr.bf16.mxu0 0
    %5184 = vmatpush1.bf16.msra.mxu0 %v5053
    %5185 = vmatprep.subr.bf16.mxu0 0
    %5186 = vmatpush1.bf16.msra.mxu0 %v5054
    %5187 = vmatprep.subr.bf16.mxu0 0
    %5188 = vmatpush1.bf16.msra.mxu0 %v5055
    %5189 = vmatprep.subr.bf16.mxu0 0
    %5190 = vmatpush1.bf16.msra.mxu0 %v5056
    %5191 = vmatprep.subr.bf16.mxu0 0
    %5192 = vmatpush1.bf16.msra.mxu0 %v5057
    %5193 = vmatprep.subr.bf16.mxu0 0
    %5194 = vmatpush1.bf16.msra.mxu0 %v5058
    %5195 = vmatprep.subr.bf16.mxu0 0
    %5196 = vmatpush1.bf16.msra.mxu0 %v5059
    %5197 = vmatprep.subr.bf16.mxu0 0
    %5198 = vmatpush1.bf16.msra.mxu0 %v5060
    %5199 = vmatprep.subr.bf16.mxu0 0
    %5200 = vmatpush1.bf16.msra.mxu0 %v5061
    %5201 = vmatprep.mubr.bf16.mxu0 %v4672
    %5202 = vmatmul.mubr.bf16.gmra.mrb[0].mxu0 %v4671
    %v5203 = vpop.f32.mrb[0].mxu0
    %v5204 = vadd.f32 %v4804, %v5203
    %v5205 = vpop.f32.mrb[0].mxu0
    %v5206 = vpop.f32.mrb[0].mxu0
    %v5207 = vpop.f32.mrb[0].mxu0
    %5208 = vdwg.mxu0
    %5209 = vmatprep.subr.bf16.mxu0 0
    %5210 = vmatpush1.bf16.msra.mxu0 %v5062
    %5211 = vmatprep.subr.bf16.mxu0 0
    %5212 = vmatpush1.bf16.msra.mxu0 %v5063
    %5213 = vmatprep.subr.bf16.mxu0 0
    %5214 = vmatpush1.bf16.msra.mxu0 %v5064
    %5215 = vmatprep.subr.bf16.mxu0 0
    %5216 = vmatpush1.bf16.msra.mxu0 %v5065
    %5217 = vmatprep.subr.bf16.mxu0 0
    %5218 = vmatpush1.bf16.msra.mxu0 %v5066
    %5219 = vmatprep.subr.bf16.mxu0 0
    %5220 = vmatpush1.bf16.msra.mxu0 %v5067
    %5221 = vmatprep.subr.bf16.mxu0 0
    %5222 = vmatpush1.bf16.msra.mxu0 %v5068
    %5223 = vmatprep.subr.bf16.mxu0 0
    %5224 = vmatpush1.bf16.msra.mxu0 %v5069
    %5225 = vmatprep.subr.bf16.mxu0 0
    %5226 = vmatpush1.bf16.msra.mxu0 %v5070
    %5227 = vmatprep.subr.bf16.mxu0 0
    %5228 = vmatpush1.bf16.msra.mxu0 %v5071
    %5229 = vmatprep.subr.bf16.mxu0 0
    %5230 = vmatpush1.bf16.msra.mxu0 %v5072
    %5231 = vmatprep.subr.bf16.mxu0 0
    %5232 = vmatpush1.bf16.msra.mxu0 %v5073
    %5233 = vmatprep.subr.bf16.mxu0 0
    %5234 = vmatpush1.bf16.msra.mxu0 %v5074
    %5235 = vmatprep.subr.bf16.mxu0 0
    %5236 = vmatpush1.bf16.msra.mxu0 %v5075
    %5237 = vmatprep.subr.bf16.mxu0 0
    %5238 = vmatpush1.bf16.msra.mxu0 %v5076
    %5239 = vmatprep.subr.bf16.mxu0 0
    %5240 = vmatpush1.bf16.msra.mxu0 %v5077
    %5241 = vmatprep.mubr.bf16.mxu0 %v4674
    %5242 = vmatmul.mubr.bf16.gmra.mrb[0].mxu0 %v4673
    %v5243 = vpop.f32.mrb[0].mxu0
    %v5244 = vadd.f32 %v5204, %v5243
    %v5245 = vpop.f32.mrb[0].mxu0
    %v5246 = vpop.f32.mrb[0].mxu0
    %v5247 = vpop.f32.mrb[0].mxu0
    %5248 = vdwg.mxu0
    %5249 = vmatprep.subr.bf16.mxu0 0
    %5250 = vmatpush1.bf16.msra.mxu0 %v5078
    %5251 = vmatprep.subr.bf16.mxu0 0
    %5252 = vmatpush1.bf16.msra.mxu0 %v5079
    %5253 = vmatprep.subr.bf16.mxu0 0
    %5254 = vmatpush1.bf16.msra.mxu0 %v5080
    %5255 = vmatprep.subr.bf16.mxu0 0
    %5256 = vmatpush1.bf16.msra.mxu0 %v5081
    %5257 = vmatprep.subr.bf16.mxu0 0
    %5258 = vmatpush1.bf16.msra.mxu0 %v5082
    %5259 = vmatprep.subr.bf16.mxu0 0
    %5260 = vmatpush1.bf16.msra.mxu0 %v5083
    %5261 = vmatprep.subr.bf16.mxu0 0
    %5262 = vmatpush1.bf16.msra.mxu0 %v5084
    %5263 = vmatprep.subr.bf16.mxu0 0
    %5264 = vmatpush1.bf16.msra.mxu0 %v5085
    %5265 = vmatprep.subr.bf16.mxu0 0
    %5266 = vmatpush1.bf16.msra.mxu0 %v5086
    %5267 = vmatprep.subr.bf16.mxu0 0
    %5268 = vmatpush1.bf16.msra.mxu0 %v5087
    %5269 = vmatprep.subr.bf16.mxu0 0
    %5270 = vmatpush1.bf16.msra.mxu0 %v5088
    %5271 = vmatprep.subr.bf16.mxu0 0
    %5272 = vmatpush1.bf16.msra.mxu0 %v5089
    %5273 = vmatprep.subr.bf16.mxu0 0
    %5274 = vmatpush1.bf16.msra.mxu0 %v5090
    %5275 = vmatprep.subr.bf16.mxu0 0
    %5276 = vmatpush1.bf16.msra.mxu0 %v5091
    %5277 = vmatprep.subr.bf16.mxu0 0
    %5278 = vmatpush1.bf16.msra.mxu0 %v5092
    %5279 = vmatprep.subr.bf16.mxu0 0
    %5280 = vmatpush1.bf16.msra.mxu0 %v5093
    %5281 = vmatprep.mubr.bf16.mxu0 %v4676
    %5282 = vmatmul.mubr.bf16.gmra.mrb[0].mxu0 %v4675
    %v5283 = vpop.f32.mrb[0].mxu0
    %v5284 = vadd.f32 %v5244, %v5283
    %v5285 = vpop.f32.mrb[0].mxu0
    %v5286 = vpop.f32.mrb[0].mxu0
    %v5287 = vpop.f32.mrb[0].mxu0
    %5288 = vdwg.mxu0
    %5289 = vmatprep.subr.bf16.mxu0 0
    %5290 = vmatpush1.bf16.msra.mxu0 %v5094
    %5291 = vmatprep.subr.bf16.mxu0 0
    %5292 = vmatpush1.bf16.msra.mxu0 %v5095
    %5293 = vmatprep.subr.bf16.mxu0 0
    %5294 = vmatpush1.bf16.msra.mxu0 %v5096
    %5295 = vmatprep.subr.bf16.mxu0 0
    %5296 = vmatpush1.bf16.msra.mxu0 %v5097
    %5297 = vmatprep.subr.bf16.mxu0 0
    %5298 = vmatpush1.bf16.msra.mxu0 %v5098
    %5299 = vmatprep.subr.bf16.mxu0 0
    %5300 = vmatpush1.bf16.msra.mxu0 %v5099
    %5301 = vmatprep.subr.bf16.mxu0 0
    %5302 = vmatpush1.bf16.msra.mxu0 %v5100
    %5303 = vmatprep.subr.bf16.mxu0 0
    %5304 = vmatpush1.bf16.msra.mxu0 %v5101
    %5305 = vmatprep.subr.bf16.mxu0 0
    %5306 = vmatpush1.bf16.msra.mxu0 %v5102
    %5307 = vmatprep.subr.bf16.mxu0 0
    %5308 = vmatpush1.bf16.msra.mxu0 %v5103
    %5309 = vmatprep.subr.bf16.mxu0 0
    %5310 = vmatpush1.bf16.msra.mxu0 %v5104
    %5311 = vmatprep.subr.bf16.mxu0 0
    %5312 = vmatpush1.bf16.msra.mxu0 %v5105
    %5313 = vmatprep.subr.bf16.mxu0 0
    %5314 = vmatpush1.bf16.msra.mxu0 0
    %5315 = vmatprep.subr.bf16.mxu0 0
    %5316 = vmatpush1.bf16.msra.mxu0 0
    %5317 = vmatprep.subr.bf16.mxu0 0
    %5318 = vmatpush1.bf16.msra.mxu0 0
    %5319 = vmatprep.subr.bf16.mxu0 0
    %5320 = vmatpush1.bf16.msra.mxu0 0
    %5321 = vmatprep.mubr.bf16.mxu0 %v5167
    %5322 = vmatmul.mubr.bf16.gmra.mrb[0].mxu0 %v4677
    %v5323 = vpop.f32.mrb[0].mxu0
    %v5324 = vadd.f32 %v5284, %v5323
    %v5325 = vpop.f32.mrb[0].mxu0
    %v5326 = vpop.f32.mrb[0].mxu0
    %v5327 = vpop.f32.mrb[0].mxu0
    %5328 = vdwg.mxu0
    %v5329 = vmax.f32 %v5324, 0.0
    %v5330 = vpack.c.bf16 %v5329, %v5329
    %v5331 = vld [vmem:[%s6] sm:$0xff]
    %v5332 = vld [vmem:[%s6 + $0x8] sm:$0xff]
    %v5333 = vld [vmem:[%s6 + $0x10] sm:$0xff]
    %v5334 = vld [vmem:[%s6 + $0x18] sm:$0xff]
    %v5335 = vld [vmem:[%s6 + $0x20] sm:$0xff]
    %v5336 = vld [vmem:[%s6 + $0x28] sm:$0xff]
    %v5337 = vld [vmem:[%s6 + $0x30] sm:$0xff]
    %v5338 = vld [vmem:[%s6 + $0x38] sm:$0xff]
    %v5339 = vld [vmem:[%s6 + $0x40] sm:$0xff]
    %v5340 = vld [vmem:[%s6 + $0x48] sm:$0xff]
    %v5341 = vld [vmem:[%s6 + $0x50] sm:$0xff]
    %v5342 = vld [vmem:[%s6 + $0x58] sm:$0xff]
    %v5343 = vld [vmem:[%s6 + $0x60] sm:$0xff]
    %v5344 = vld [vmem:[%s6 + $0x68] sm:$0xff]
    %v5345 = vld [vmem:[%s6 + $0x70] sm:$0xff]
    %v5346 = vld [vmem:[%s6 + $0x78] sm:$0xff]
    %v5363 = vunpack.c.l.b16 %v5331
    %v5364 = vunpack.c.h.b16 %v5331
    %v5365 = vunpack.c.l.b16 %v5332
    %v5366 = vunpack.c.h.b16 %v5332
    %v5367 = vunpack.c.l.b16 %v5333
    %v5368 = vunpack.c.h.b16 %v5333
    %v5369 = vunpack.c.l.b16 %v5334
    %v5370 = vunpack.c.h.b16 %v5334
    %v5371 = vunpack.c.l.b16 %v5335
    %v5372 = vunpack.c.h.b16 %v5335
    %v5373 = vunpack.c.l.b16 %v5336
    %v5374 = vunpack.c.h.b16 %v5336
    %v5375 = vunpack.c.l.b16 %v5337
    %v5376 = vunpack.c.h.b16 %v5337
    %v5377 = vunpack.c.l.b16 %v5338
    %v5378 = vunpack.c.h.b16 %v5338
    %v5379 = vunpack.c.l.b16 %v5339
    %v5380 = vunpack.c.h.b16 %v5339
    %v5381 = vunpack.c.l.b16 %v5340
    %v5382 = vunpack.c.h.b16 %v5340
    %v5383 = vunpack.c.l.b16 %v5341
    %v5384 = vunpack.c.h.b16 %v5341
    %v5385 = vunpack.c.l.b16 %v5342
    %v5386 = vunpack.c.h.b16 %v5342
    %v5387 = vunpack.c.l.b16 %v5343
    %v5388 = vunpack.c.h.b16 %v5343
    %v5389 = vunpack.c.l.b16 %v5344
    %v5390 = vunpack.c.h.b16 %v5344
    %v5391 = vunpack.c.l.b16 %v5345
    %v5392 = vunpack.c.h.b16 %v5345
    %v5393 = vunpack.c.l.b16 %v5346
    %v5394 = vunpack.c.h.b16 %v5346
    %v5395 = vpack.c.b16 %v5365, %v5363
    %v5396 = vpack.c.b16 %v5366, %v5364
    %v5397 = vpack.c.b16 %v5369, %v5367
    %v5398 = vpack.c.b16 %v5370, %v5368
    %v5399 = vpack.c.b16 %v5373, %v5371
    %v5400 = vpack.c.b16 %v5374, %v5372
    %v5401 = vpack.c.b16 %v5377, %v5375
    %v5402 = vpack.c.b16 %v5378, %v5376
    %v5403 = vpack.c.b16 %v5381, %v5379
    %v5404 = vpack.c.b16 %v5382, %v5380
    %v5405 = vpack.c.b16 %v5385, %v5383
    %v5406 = vpack.c.b16 %v5386, %v5384
    %v5407 = vpack.c.b16 %v5389, %v5387
    %v5408 = vpack.c.b16 %v5390, %v5388
    %v5409 = vpack.c.b16 %v5393, %v5391
    %v5410 = vpack.c.b16 %v5394, %v5392
    %5427 = vmatprep.subr.bf16.mxu0 %v5396
    %5428 = vmatpush1.bf16.msra.mxu0 %v5395
    %5429 = vmatprep.subr.bf16.mxu0 %v5398
    %5430 = vmatpush1.bf16.msra.mxu0 %v5397
    %5431 = vmatprep.subr.bf16.mxu0 %v5400
    %5432 = vmatpush1.bf16.msra.mxu0 %v5399
    %5433 = vmatprep.subr.bf16.mxu0 %v5402
    %5434 = vmatpush1.bf16.msra.mxu0 %v5401
    %5435 = vmatprep.subr.bf16.mxu0 %v5404
    %5436 = vmatpush1.bf16.msra.mxu0 %v5403
    %5437 = vmatprep.subr.bf16.mxu0 %v5406
    %5438 = vmatpush1.bf16.msra.mxu0 %v5405
    %5439 = vmatprep.subr.bf16.mxu0 %v5408
    %5440 = vmatpush1.bf16.msra.mxu0 %v5407
    %5441 = vmatprep.subr.bf16.mxu0 %v5410
    %5442 = vmatpush1.bf16.msra.mxu0 %v5409
    %5443 = vmatprep.subr.bf16.mxu0 0
    %5444 = vmatpush1.bf16.msra.mxu0 0
    %5445 = vmatprep.subr.bf16.mxu0 0
    %5446 = vmatpush1.bf16.msra.mxu0 0
    %5447 = vmatprep.subr.bf16.mxu0 0
    %5448 = vmatpush1.bf16.msra.mxu0 0
    %5449 = vmatprep.subr.bf16.mxu0 0
    %5450 = vmatpush1.bf16.msra.mxu0 0
    %5451 = vmatprep.subr.bf16.mxu0 0
    %5452 = vmatpush1.bf16.msra.mxu0 0
    %5453 = vmatprep.subr.bf16.mxu0 0
    %5454 = vmatpush1.bf16.msra.mxu0 0
    %5455 = vmatprep.subr.bf16.mxu0 0
    %5456 = vmatpush1.bf16.msra.mxu0 0
    %5457 = vmatprep.subr.bf16.mxu0 0
    %5458 = vmatpush1.bf16.msra.mxu0 0
    %5459 = vmatprep.mubr.bf16.mxu0 0
    %5460 = vmatmul.mubr.bf16.gmra.mrb[0].mxu0 %v5330
    %v5461 = vpop.f32.mrb[0].mxu0
    %v5462 = vadd.f32 0.0, %v5461
    %v5463 = vpop.f32.mrb[0].mxu0
    %v5464 = vadd.f32 0.0, %v5463
    %v5465 = vpop.f32.mrb[0].mxu0
    %v5466 = vpop.f32.mrb[0].mxu0
    %5467 = vdwg.mxu0
    %v5468 = vadd.f32 %v4597, %v5462
    %v5469 = vadd.f32 %v4598, %v5464
    %v5470 = vld [vmem:[%s2337] sm:$0xf]
    %5473 = vrot.lane.b32.xlu0 %v4638, 64
    %v5474 = vpop.permute.xlu0 %5473
    %5475 = vrot.lane.b32.xlu0 %v4639, 64
    %v5476 = vpop.permute.xlu0 %5475
    %v5477 = vsel %vm124, %v5474, %v5476
    %5482 = vrot.lane.b32.xlu0 %v4665, 64
    %v5483 = vpop.permute.xlu0 %5482
    %5484 = vrot.lane.b32.xlu0 %v4666, 64
    %v5485 = vpop.permute.xlu0 %5484
    %v5486 = vsel %vm124, %v5483, %v5485
    %v5491 = vunpack.c.l.s4 1983009808
    %v5492 = vunpack.c.0.s8 %v5491
    %v5493 = vlaneseq
    %v5494 = vshrl.u32 %v5493, 7
    %v5495 = vsub.s32 %v5492, %v5494
    %v5496 = vrot.slane %v5470, %v5495
    %v5497 = vcombine.high %v5496, %v5496
    %v5500 = vsel %vm124, %v4623, %v5474
    %v5501 = vsel %vm124, %v4650, %v5483
    %v5502 = vpack.c.bf16 %v4622, %v4622
    %v5503 = vpack.c.bf16 %v5500, %v5500
    %v5504 = vpack.c.bf16 %v5477, %v5477
    %v5505 = vpack.c.bf16 %v4649, %v4649
    %v5506 = vpack.c.bf16 %v5501, %v5501
    %v5507 = vpack.c.bf16 %v5486, %v5486
    %v5508 = vpack.c.bf16 %v5496, %v5496
    %v5509 = vpack.c.bf16 %v5497, %v5497
    %v5511 = vsel %vm124, %v5509, 0
    %5513 = vmatprep.subr.bf16.mxu0 0
    %5514 = vmatpush1.bf16.msra.mxu0 %v5046
    %5515 = vmatprep.subr.bf16.mxu0 0
    %5516 = vmatpush1.bf16.msra.mxu0 %v5047
    %5517 = vmatprep.subr.bf16.mxu0 0
    %5518 = vmatpush1.bf16.msra.mxu0 %v5048
    %5519 = vmatprep.subr.bf16.mxu0 0
    %5520 = vmatpush1.bf16.msra.mxu0 %v5049
    %5521 = vmatprep.subr.bf16.mxu0 0
    %5522 = vmatpush1.bf16.msra.mxu0 %v5050
    %5523 = vmatprep.subr.bf16.mxu0 0
    %5524 = vmatpush1.bf16.msra.mxu0 %v5051
    %5525 = vmatprep.subr.bf16.mxu0 0
    %5526 = vmatpush1.bf16.msra.mxu0 %v5052
    %5527 = vmatprep.subr.bf16.mxu0 0
    %5528 = vmatpush1.bf16.msra.mxu0 %v5053
    %5529 = vmatprep.subr.bf16.mxu0 0
    %5530 = vmatpush1.bf16.msra.mxu0 %v5054
    %5531 = vmatprep.subr.bf16.mxu0 0
    %5532 = vmatpush1.bf16.msra.mxu0 %v5055
    %5533 = vmatprep.subr.bf16.mxu0 0
    %5534 = vmatpush1.bf16.msra.mxu0 %v5056
    %5535 = vmatprep.subr.bf16.mxu0 0
    %5536 = vmatpush1.bf16.msra.mxu0 %v5057
    %5537 = vmatprep.subr.bf16.mxu0 0
    %5538 = vmatpush1.bf16.msra.mxu0 %v5058
    %5539 = vmatprep.subr.bf16.mxu0 0
    %5540 = vmatpush1.bf16.msra.mxu0 %v5059
    %5541 = vmatprep.subr.bf16.mxu0 0
    %5542 = vmatpush1.bf16.msra.mxu0 %v5060
    %5543 = vmatprep.subr.bf16.mxu0 0
    %5544 = vmatpush1.bf16.msra.mxu0 %v5061
    %5545 = vmatprep.mubr.bf16.mxu0 %v5503
    %5546 = vmatmul.mubr.bf16.gmra.mrb[0].mxu0 %v5502
    %v5547 = vpop.f32.mrb[0].mxu0
    %v5548 = vadd.f32 %v4804, %v5547
    %v5549 = vpop.f32.mrb[0].mxu0
    %v5550 = vpop.f32.mrb[0].mxu0
    %v5551 = vpop.f32.mrb[0].mxu0
    %5552 = vdwg.mxu0
    %5553 = vmatprep.subr.bf16.mxu0 0
    %5554 = vmatpush1.bf16.msra.mxu0 %v5062
    %5555 = vmatprep.subr.bf16.mxu0 0
    %5556 = vmatpush1.bf16.msra.mxu0 %v5063
    %5557 = vmatprep.subr.bf16.mxu0 0
    %5558 = vmatpush1.bf16.msra.mxu0 %v5064
    %5559 = vmatprep.subr.bf16.mxu0 0
    %5560 = vmatpush1.bf16.msra.mxu0 %v5065
    %5561 = vmatprep.subr.bf16.mxu0 0
    %5562 = vmatpush1.bf16.msra.mxu0 %v5066
    %5563 = vmatprep.subr.bf16.mxu0 0
    %5564 = vmatpush1.bf16.msra.mxu0 %v5067
    %5565 = vmatprep.subr.bf16.mxu0 0
    %5566 = vmatpush1.bf16.msra.mxu0 %v5068
    %5567 = vmatprep.subr.bf16.mxu0 0
    %5568 = vmatpush1.bf16.msra.mxu0 %v5069
    %5569 = vmatprep.subr.bf16.mxu0 0
    %5570 = vmatpush1.bf16.msra.mxu0 %v5070
    %5571 = vmatprep.subr.bf16.mxu0 0
    %5572 = vmatpush1.bf16.msra.mxu0 %v5071
    %5573 = vmatprep.subr.bf16.mxu0 0
    %5574 = vmatpush1.bf16.msra.mxu0 %v5072
    %5575 = vmatprep.subr.bf16.mxu0 0
    %5576 = vmatpush1.bf16.msra.mxu0 %v5073
    %5577 = vmatprep.subr.bf16.mxu0 0
    %5578 = vmatpush1.bf16.msra.mxu0 %v5074
    %5579 = vmatprep.subr.bf16.mxu0 0
    %5580 = vmatpush1.bf16.msra.mxu0 %v5075
    %5581 = vmatprep.subr.bf16.mxu0 0
    %5582 = vmatpush1.bf16.msra.mxu0 %v5076
    %5583 = vmatprep.subr.bf16.mxu0 0
    %5584 = vmatpush1.bf16.msra.mxu0 %v5077
    %5585 = vmatprep.mubr.bf16.mxu0 %v5505
    %5586 = vmatmul.mubr.bf16.gmra.mrb[0].mxu0 %v5504
    %v5587 = vpop.f32.mrb[0].mxu0
    %v5588 = vadd.f32 %v5548, %v5587
    %v5589 = vpop.f32.mrb[0].mxu0
    %v5590 = vpop.f32.mrb[0].mxu0
    %v5591 = vpop.f32.mrb[0].mxu0
    %5592 = vdwg.mxu0
    %5593 = vmatprep.subr.bf16.mxu0 0
    %5594 = vmatpush1.bf16.msra.mxu0 %v5078
    %5595 = vmatprep.subr.bf16.mxu0 0
    %5596 = vmatpush1.bf16.msra.mxu0 %v5079
    %5597 = vmatprep.subr.bf16.mxu0 0
    %5598 = vmatpush1.bf16.msra.mxu0 %v5080
    %5599 = vmatprep.subr.bf16.mxu0 0
    %5600 = vmatpush1.bf16.msra.mxu0 %v5081
    %5601 = vmatprep.subr.bf16.mxu0 0
    %5602 = vmatpush1.bf16.msra.mxu0 %v5082
    %5603 = vmatprep.subr.bf16.mxu0 0
    %5604 = vmatpush1.bf16.msra.mxu0 %v5083
    %5605 = vmatprep.subr.bf16.mxu0 0
    %5606 = vmatpush1.bf16.msra.mxu0 %v5084
    %5607 = vmatprep.subr.bf16.mxu0 0
    %5608 = vmatpush1.bf16.msra.mxu0 %v5085
    %5609 = vmatprep.subr.bf16.mxu0 0
    %5610 = vmatpush1.bf16.msra.mxu0 %v5086
    %5611 = vmatprep.subr.bf16.mxu0 0
    %5612 = vmatpush1.bf16.msra.mxu0 %v5087
    %5613 = vmatprep.subr.bf16.mxu0 0
    %5614 = vmatpush1.bf16.msra.mxu0 %v5088
    %5615 = vmatprep.subr.bf16.mxu0 0
    %5616 = vmatpush1.bf16.msra.mxu0 %v5089
    %5617 = vmatprep.subr.bf16.mxu0 0
    %5618 = vmatpush1.bf16.msra.mxu0 %v5090
    %5619 = vmatprep.subr.bf16.mxu0 0
    %5620 = vmatpush1.bf16.msra.mxu0 %v5091
    %5621 = vmatprep.subr.bf16.mxu0 0
    %5622 = vmatpush1.bf16.msra.mxu0 %v5092
    %5623 = vmatprep.subr.bf16.mxu0 0
    %5624 = vmatpush1.bf16.msra.mxu0 %v5093
    %5625 = vmatprep.mubr.bf16.mxu0 %v5507
    %5626 = vmatmul.mubr.bf16.gmra.mrb[0].mxu0 %v5506
    %v5627 = vpop.f32.mrb[0].mxu0
    %v5628 = vadd.f32 %v5588, %v5627
    %v5629 = vpop.f32.mrb[0].mxu0
    %v5630 = vpop.f32.mrb[0].mxu0
    %v5631 = vpop.f32.mrb[0].mxu0
    %5632 = vdwg.mxu0
    %5633 = vmatprep.subr.bf16.mxu0 0
    %5634 = vmatpush1.bf16.msra.mxu0 %v5094
    %5635 = vmatprep.subr.bf16.mxu0 0
    %5636 = vmatpush1.bf16.msra.mxu0 %v5095
    %5637 = vmatprep.subr.bf16.mxu0 0
    %5638 = vmatpush1.bf16.msra.mxu0 %v5096
    %5639 = vmatprep.subr.bf16.mxu0 0
    %5640 = vmatpush1.bf16.msra.mxu0 %v5097
    %5641 = vmatprep.subr.bf16.mxu0 0
    %5642 = vmatpush1.bf16.msra.mxu0 %v5098
    %5643 = vmatprep.subr.bf16.mxu0 0
    %5644 = vmatpush1.bf16.msra.mxu0 %v5099
    %5645 = vmatprep.subr.bf16.mxu0 0
    %5646 = vmatpush1.bf16.msra.mxu0 %v5100
    %5647 = vmatprep.subr.bf16.mxu0 0
    %5648 = vmatpush1.bf16.msra.mxu0 %v5101
    %5649 = vmatprep.subr.bf16.mxu0 0
    %5650 = vmatpush1.bf16.msra.mxu0 %v5102
    %5651 = vmatprep.subr.bf16.mxu0 0
    %5652 = vmatpush1.bf16.msra.mxu0 %v5103
    %5653 = vmatprep.subr.bf16.mxu0 0
    %5654 = vmatpush1.bf16.msra.mxu0 %v5104
    %5655 = vmatprep.subr.bf16.mxu0 0
    %5656 = vmatpush1.bf16.msra.mxu0 %v5105
    %5657 = vmatprep.subr.bf16.mxu0 0
    %5658 = vmatpush1.bf16.msra.mxu0 0
    %5659 = vmatprep.subr.bf16.mxu0 0
    %5660 = vmatpush1.bf16.msra.mxu0 0
    %5661 = vmatprep.subr.bf16.mxu0 0
    %5662 = vmatpush1.bf16.msra.mxu0 0
    %5663 = vmatprep.subr.bf16.mxu0 0
    %5664 = vmatpush1.bf16.msra.mxu0 0
    %5665 = vmatprep.mubr.bf16.mxu0 %v5511
    %5666 = vmatmul.mubr.bf16.gmra.mrb[0].mxu0 %v5508
    %v5667 = vpop.f32.mrb[0].mxu0
    %v5668 = vadd.f32 %v5628, %v5667
    %v5669 = vpop.f32.mrb[0].mxu0
    %v5670 = vpop.f32.mrb[0].mxu0
    %v5671 = vpop.f32.mrb[0].mxu0
    %5672 = vdwg.mxu0
    %v5673 = vmax.f32 %v5668, 0.0
    %v5674 = vpack.c.bf16 %v5673, %v5673
    %s5675 = scalar_lea.vmem %s6, 128
    %v5676 = vld [vmem:[%s5675] sm:$0xff]
    %v5677 = vld [vmem:[%s5675 + $0x8] sm:$0xff]
    %v5678 = vld [vmem:[%s5675 + $0x10] sm:$0xff]
    %v5679 = vld [vmem:[%s5675 + $0x18] sm:$0xff]
    %v5680 = vld [vmem:[%s5675 + $0x20] sm:$0xff]
    %v5681 = vld [vmem:[%s5675 + $0x28] sm:$0xff]
    %v5682 = vld [vmem:[%s5675 + $0x30] sm:$0xff]
    %v5683 = vld [vmem:[%s5675 + $0x38] sm:$0xff]
    %v5684 = vld [vmem:[%s5675 + $0x40] sm:$0xff]
    %v5685 = vld [vmem:[%s5675 + $0x48] sm:$0xff]
    %v5686 = vld [vmem:[%s5675 + $0x50] sm:$0xff]
    %v5687 = vld [vmem:[%s5675 + $0x58] sm:$0xff]
    %v5688 = vld [vmem:[%s5675 + $0x60] sm:$0xff]
    %v5689 = vld [vmem:[%s5675 + $0x68] sm:$0xff]
    %v5690 = vld [vmem:[%s5675 + $0x70] sm:$0xff]
    %v5691 = vld [vmem:[%s5675 + $0x78] sm:$0xff]
    %v5708 = vunpack.c.l.b16 %v5676
    %v5709 = vunpack.c.h.b16 %v5676
    %v5710 = vunpack.c.l.b16 %v5677
    %v5711 = vunpack.c.h.b16 %v5677
    %v5712 = vunpack.c.l.b16 %v5678
    %v5713 = vunpack.c.h.b16 %v5678
    %v5714 = vunpack.c.l.b16 %v5679
    %v5715 = vunpack.c.h.b16 %v5679
    %v5716 = vunpack.c.l.b16 %v5680
    %v5717 = vunpack.c.h.b16 %v5680
    %v5718 = vunpack.c.l.b16 %v5681
    %v5719 = vunpack.c.h.b16 %v5681
    %v5720 = vunpack.c.l.b16 %v5682
    %v5721 = vunpack.c.h.b16 %v5682
    %v5722 = vunpack.c.l.b16 %v5683
    %v5723 = vunpack.c.h.b16 %v5683
    %v5724 = vunpack.c.l.b16 %v5684
    %v5725 = vunpack.c.h.b16 %v5684
    %v5726 = vunpack.c.l.b16 %v5685
    %v5727 = vunpack.c.h.b16 %v5685
    %v5728 = vunpack.c.l.b16 %v5686
    %v5729 = vunpack.c.h.b16 %v5686
    %v5730 = vunpack.c.l.b16 %v5687
    %v5731 = vunpack.c.h.b16 %v5687
    %v5732 = vunpack.c.l.b16 %v5688
    %v5733 = vunpack.c.h.b16 %v5688
    %v5734 = vunpack.c.l.b16 %v5689
    %v5735 = vunpack.c.h.b16 %v5689
    %v5736 = vunpack.c.l.b16 %v5690
    %v5737 = vunpack.c.h.b16 %v5690
    %v5738 = vunpack.c.l.b16 %v5691
    %v5739 = vunpack.c.h.b16 %v5691
    %v5740 = vpack.c.b16 %v5710, %v5708
    %v5741 = vpack.c.b16 %v5711, %v5709
    %v5742 = vpack.c.b16 %v5714, %v5712
    %v5743 = vpack.c.b16 %v5715, %v5713
    %v5744 = vpack.c.b16 %v5718, %v5716
    %v5745 = vpack.c.b16 %v5719, %v5717
    %v5746 = vpack.c.b16 %v5722, %v5720
    %v5747 = vpack.c.b16 %v5723, %v5721
    %v5748 = vpack.c.b16 %v5726, %v5724
    %v5749 = vpack.c.b16 %v5727, %v5725
    %v5750 = vpack.c.b16 %v5730, %v5728
    %v5751 = vpack.c.b16 %v5731, %v5729
    %v5752 = vpack.c.b16 %v5734, %v5732
    %v5753 = vpack.c.b16 %v5735, %v5733
    %v5754 = vpack.c.b16 %v5738, %v5736
    %v5755 = vpack.c.b16 %v5739, %v5737
    %5772 = vmatprep.subr.bf16.mxu0 %v5741
    %5773 = vmatpush1.bf16.msra.mxu0 %v5740
    %5774 = vmatprep.subr.bf16.mxu0 %v5743
    %5775 = vmatpush1.bf16.msra.mxu0 %v5742
    %5776 = vmatprep.subr.bf16.mxu0 %v5745
    %5777 = vmatpush1.bf16.msra.mxu0 %v5744
    %5778 = vmatprep.subr.bf16.mxu0 %v5747
    %5779 = vmatpush1.bf16.msra.mxu0 %v5746
    %5780 = vmatprep.subr.bf16.mxu0 %v5749
    %5781 = vmatpush1.bf16.msra.mxu0 %v5748
    %5782 = vmatprep.subr.bf16.mxu0 %v5751
    %5783 = vmatpush1.bf16.msra.mxu0 %v5750
    %5784 = vmatprep.subr.bf16.mxu0 %v5753
    %5785 = vmatpush1.bf16.msra.mxu0 %v5752
    %5786 = vmatprep.subr.bf16.mxu0 %v5755
    %5787 = vmatpush1.bf16.msra.mxu0 %v5754
    %5788 = vmatprep.subr.bf16.mxu0 0
    %5789 = vmatpush1.bf16.msra.mxu0 0
    %5790 = vmatprep.subr.bf16.mxu0 0
    %5791 = vmatpush1.bf16.msra.mxu0 0
    %5792 = vmatprep.subr.bf16.mxu0 0
    %5793 = vmatpush1.bf16.msra.mxu0 0
    %5794 = vmatprep.subr.bf16.mxu0 0
    %5795 = vmatpush1.bf16.msra.mxu0 0
    %5796 = vmatprep.subr.bf16.mxu0 0
    %5797 = vmatpush1.bf16.msra.mxu0 0
    %5798 = vmatprep.subr.bf16.mxu0 0
    %5799 = vmatpush1.bf16.msra.mxu0 0
    %5800 = vmatprep.subr.bf16.mxu0 0
    %5801 = vmatpush1.bf16.msra.mxu0 0
    %5802 = vmatprep.subr.bf16.mxu0 0
    %5803 = vmatpush1.bf16.msra.mxu0 0
    %5804 = vmatprep.mubr.bf16.mxu0 0
    %5805 = vmatmul.mubr.bf16.gmra.mrb[0].mxu0 %v5674
    %v5806 = vpop.f32.mrb[0].mxu0
    %v5807 = vadd.f32 0.0, %v5806
    %v5808 = vpop.f32.mrb[0].mxu0
    %v5809 = vadd.f32 0.0, %v5808
    %v5810 = vpop.f32.mrb[0].mxu0
    %v5811 = vpop.f32.mrb[0].mxu0
    %5812 = vdwg.mxu0
    %v5813 = vadd.f32 %v5468, %v5807
    %v5814 = vadd.f32 %v5469, %v5809
    %v5815 = vld [vmem:[%s2708] sm:$0xf]
    %5816 = vrot.lane.b32.xlu0 %v5496, 64
    %v5817 = vpop.permute.xlu0 %5816
    %5818 = vrot.lane.b32.xlu0 %v5497, 64
    %v5819 = vpop.permute.xlu0 %5818
    %v5820 = vsel %vm124, %v5817, %v5819
    %v5825 = vunpack.c.l.s4 1983009808
    %v5826 = vunpack.c.0.s8 %v5825
    %v5827 = vlaneseq
    %v5828 = vshrl.u32 %v5827, 7
    %v5829 = vsub.s32 %v5826, %v5828
    %v5830 = vrot.slane %v5815, %v5829
    %v5831 = vcombine.high %v5830, %v5830
    %v5834 = vsel %vm124, %v4666, %v5817
    %v5835 = vpack.c.bf16 %v5834, %v5834
    %v5836 = vpack.c.bf16 %v5820, %v5820
    %v5837 = vpack.c.bf16 %v5830, %v5830
    %v5838 = vpack.c.bf16 %v5831, %v5831
    %v5840 = vsel %vm124, %v5838, 0
    %5842 = vmatprep.subr.bf16.mxu0 0
    %5843 = vmatpush1.bf16.msra.mxu0 %v5046
    %5844 = vmatprep.subr.bf16.mxu0 0
    %5845 = vmatpush1.bf16.msra.mxu0 %v5047
    %5846 = vmatprep.subr.bf16.mxu0 0
    %5847 = vmatpush1.bf16.msra.mxu0 %v5048
    %5848 = vmatprep.subr.bf16.mxu0 0
    %5849 = vmatpush1.bf16.msra.mxu0 %v5049
    %5850 = vmatprep.subr.bf16.mxu0 0
    %5851 = vmatpush1.bf16.msra.mxu0 %v5050
    %5852 = vmatprep.subr.bf16.mxu0 0
    %5853 = vmatpush1.bf16.msra.mxu0 %v5051
    %5854 = vmatprep.subr.bf16.mxu0 0
    %5855 = vmatpush1.bf16.msra.mxu0 %v5052
    %5856 = vmatprep.subr.bf16.mxu0 0
    %5857 = vmatpush1.bf16.msra.mxu0 %v5053
    %5858 = vmatprep.subr.bf16.mxu0 0
    %5859 = vmatpush1.bf16.msra.mxu0 %v5054
    %5860 = vmatprep.subr.bf16.mxu0 0
    %5861 = vmatpush1.bf16.msra.mxu0 %v5055
    %5862 = vmatprep.subr.bf16.mxu0 0
    %5863 = vmatpush1.bf16.msra.mxu0 %v5056
    %5864 = vmatprep.subr.bf16.mxu0 0
    %5865 = vmatpush1.bf16.msra.mxu0 %v5057
    %5866 = vmatprep.subr.bf16.mxu0 0
    %5867 = vmatpush1.bf16.msra.mxu0 %v5058
    %5868 = vmatprep.subr.bf16.mxu0 0
    %5869 = vmatpush1.bf16.msra.mxu0 %v5059
    %5870 = vmatprep.subr.bf16.mxu0 0
    %5871 = vmatpush1.bf16.msra.mxu0 %v5060
    %5872 = vmatprep.subr.bf16.mxu0 0
    %5873 = vmatpush1.bf16.msra.mxu0 %v5061
    %5874 = vmatprep.mubr.bf16.mxu0 %v4675
    %5875 = vmatmul.mubr.bf16.gmra.mrb[0].mxu0 %v4674
    %v5876 = vpop.f32.mrb[0].mxu0
    %v5877 = vadd.f32 %v4804, %v5876
    %v5878 = vpop.f32.mrb[0].mxu0
    %v5879 = vpop.f32.mrb[0].mxu0
    %v5880 = vpop.f32.mrb[0].mxu0
    %5881 = vdwg.mxu0
    %5882 = vmatprep.subr.bf16.mxu0 0
    %5883 = vmatpush1.bf16.msra.mxu0 %v5062
    %5884 = vmatprep.subr.bf16.mxu0 0
    %5885 = vmatpush1.bf16.msra.mxu0 %v5063
    %5886 = vmatprep.subr.bf16.mxu0 0
    %5887 = vmatpush1.bf16.msra.mxu0 %v5064
    %5888 = vmatprep.subr.bf16.mxu0 0
    %5889 = vmatpush1.bf16.msra.mxu0 %v5065
    %5890 = vmatprep.subr.bf16.mxu0 0
    %5891 = vmatpush1.bf16.msra.mxu0 %v5066
    %5892 = vmatprep.subr.bf16.mxu0 0
    %5893 = vmatpush1.bf16.msra.mxu0 %v5067
    %5894 = vmatprep.subr.bf16.mxu0 0
    %5895 = vmatpush1.bf16.msra.mxu0 %v5068
    %5896 = vmatprep.subr.bf16.mxu0 0
    %5897 = vmatpush1.bf16.msra.mxu0 %v5069
    %5898 = vmatprep.subr.bf16.mxu0 0
    %5899 = vmatpush1.bf16.msra.mxu0 %v5070
    %5900 = vmatprep.subr.bf16.mxu0 0
    %5901 = vmatpush1.bf16.msra.mxu0 %v5071
    %5902 = vmatprep.subr.bf16.mxu0 0
    %5903 = vmatpush1.bf16.msra.mxu0 %v5072
    %5904 = vmatprep.subr.bf16.mxu0 0
    %5905 = vmatpush1.bf16.msra.mxu0 %v5073
    %5906 = vmatprep.subr.bf16.mxu0 0
    %5907 = vmatpush1.bf16.msra.mxu0 %v5074
    %5908 = vmatprep.subr.bf16.mxu0 0
    %5909 = vmatpush1.bf16.msra.mxu0 %v5075
    %5910 = vmatprep.subr.bf16.mxu0 0
    %5911 = vmatpush1.bf16.msra.mxu0 %v5076
    %5912 = vmatprep.subr.bf16.mxu0 0
    %5913 = vmatpush1.bf16.msra.mxu0 %v5077
    %5914 = vmatprep.mubr.bf16.mxu0 %v4677
    %5915 = vmatmul.mubr.bf16.gmra.mrb[0].mxu0 %v4676
    %v5916 = vpop.f32.mrb[0].mxu0
    %v5917 = vadd.f32 %v5877, %v5916
    %v5918 = vpop.f32.mrb[0].mxu0
    %v5919 = vpop.f32.mrb[0].mxu0
    %v5920 = vpop.f32.mrb[0].mxu0
    %5921 = vdwg.mxu0
    %5922 = vmatprep.subr.bf16.mxu0 0
    %5923 = vmatpush1.bf16.msra.mxu0 %v5078
    %5924 = vmatprep.subr.bf16.mxu0 0
    %5925 = vmatpush1.bf16.msra.mxu0 %v5079
    %5926 = vmatprep.subr.bf16.mxu0 0
    %5927 = vmatpush1.bf16.msra.mxu0 %v5080
    %5928 = vmatprep.subr.bf16.mxu0 0
    %5929 = vmatpush1.bf16.msra.mxu0 %v5081
    %5930 = vmatprep.subr.bf16.mxu0 0
    %5931 = vmatpush1.bf16.msra.mxu0 %v5082
    %5932 = vmatprep.subr.bf16.mxu0 0
    %5933 = vmatpush1.bf16.msra.mxu0 %v5083
    %5934 = vmatprep.subr.bf16.mxu0 0
    %5935 = vmatpush1.bf16.msra.mxu0 %v5084
    %5936 = vmatprep.subr.bf16.mxu0 0
    %5937 = vmatpush1.bf16.msra.mxu0 %v5085
    %5938 = vmatprep.subr.bf16.mxu0 0
    %5939 = vmatpush1.bf16.msra.mxu0 %v5086
    %5940 = vmatprep.subr.bf16.mxu0 0
    %5941 = vmatpush1.bf16.msra.mxu0 %v5087
    %5942 = vmatprep.subr.bf16.mxu0 0
    %5943 = vmatpush1.bf16.msra.mxu0 %v5088
    %5944 = vmatprep.subr.bf16.mxu0 0
    %5945 = vmatpush1.bf16.msra.mxu0 %v5089
    %5946 = vmatprep.subr.bf16.mxu0 0
    %5947 = vmatpush1.bf16.msra.mxu0 %v5090
    %5948 = vmatprep.subr.bf16.mxu0 0
    %5949 = vmatpush1.bf16.msra.mxu0 %v5091
    %5950 = vmatprep.subr.bf16.mxu0 0
    %5951 = vmatpush1.bf16.msra.mxu0 %v5092
    %5952 = vmatprep.subr.bf16.mxu0 0
    %5953 = vmatpush1.bf16.msra.mxu0 %v5093
    %5954 = vmatprep.mubr.bf16.mxu0 %v5836
    %5955 = vmatmul.mubr.bf16.gmra.mrb[0].mxu0 %v5835
    %v5956 = vpop.f32.mrb[0].mxu0
    %v5957 = vadd.f32 %v5917, %v5956
    %v5958 = vpop.f32.mrb[0].mxu0
    %v5959 = vpop.f32.mrb[0].mxu0
    %v5960 = vpop.f32.mrb[0].mxu0
    %5961 = vdwg.mxu0
    %5962 = vmatprep.subr.bf16.mxu0 0
    %5963 = vmatpush1.bf16.msra.mxu0 %v5094
    %5964 = vmatprep.subr.bf16.mxu0 0
    %5965 = vmatpush1.bf16.msra.mxu0 %v5095
    %5966 = vmatprep.subr.bf16.mxu0 0
    %5967 = vmatpush1.bf16.msra.mxu0 %v5096
    %5968 = vmatprep.subr.bf16.mxu0 0
    %5969 = vmatpush1.bf16.msra.mxu0 %v5097
    %5970 = vmatprep.subr.bf16.mxu0 0
    %5971 = vmatpush1.bf16.msra.mxu0 %v5098
    %5972 = vmatprep.subr.bf16.mxu0 0
    %5973 = vmatpush1.bf16.msra.mxu0 %v5099
    %5974 = vmatprep.subr.bf16.mxu0 0
    %5975 = vmatpush1.bf16.msra.mxu0 %v5100
    %5976 = vmatprep.subr.bf16.mxu0 0
    %5977 = vmatpush1.bf16.msra.mxu0 %v5101
    %5978 = vmatprep.subr.bf16.mxu0 0
    %5979 = vmatpush1.bf16.msra.mxu0 %v5102
    %5980 = vmatprep.subr.bf16.mxu0 0
    %5981 = vmatpush1.bf16.msra.mxu0 %v5103
    %5982 = vmatprep.subr.bf16.mxu0 0
    %5983 = vmatpush1.bf16.msra.mxu0 %v5104
    %5984 = vmatprep.subr.bf16.mxu0 0
    %5985 = vmatpush1.bf16.msra.mxu0 %v5105
    %5986 = vmatprep.subr.bf16.mxu0 0
    %5987 = vmatpush1.bf16.msra.mxu0 0
    %5988 = vmatprep.subr.bf16.mxu0 0
    %5989 = vmatpush1.bf16.msra.mxu0 0
    %5990 = vmatprep.subr.bf16.mxu0 0
    %5991 = vmatpush1.bf16.msra.mxu0 0
    %5992 = vmatprep.subr.bf16.mxu0 0
    %5993 = vmatpush1.bf16.msra.mxu0 0
    %5994 = vmatprep.mubr.bf16.mxu0 %v5840
    %5995 = vmatmul.mubr.bf16.gmra.mrb[0].mxu0 %v5837
    %v5996 = vpop.f32.mrb[0].mxu0
    %v5997 = vadd.f32 %v5957, %v5996
    %v5998 = vpop.f32.mrb[0].mxu0
    %v5999 = vpop.f32.mrb[0].mxu0
    %v6000 = vpop.f32.mrb[0].mxu0
    %6001 = vdwg.mxu0
    %v6002 = vmax.f32 %v5997, 0.0
    %v6003 = vpack.c.bf16 %v6002, %v6002
    %s6004 = scalar_lea.vmem %s6, 256
    %v6005 = vld [vmem:[%s6004] sm:$0xff]
    %v6006 = vld [vmem:[%s6004 + $0x8] sm:$0xff]
    %v6007 = vld [vmem:[%s6004 + $0x10] sm:$0xff]
    %v6008 = vld [vmem:[%s6004 + $0x18] sm:$0xff]
    %v6009 = vld [vmem:[%s6004 + $0x20] sm:$0xff]
    %v6010 = vld [vmem:[%s6004 + $0x28] sm:$0xff]
    %v6011 = vld [vmem:[%s6004 + $0x30] sm:$0xff]
    %v6012 = vld [vmem:[%s6004 + $0x38] sm:$0xff]
    %v6013 = vld [vmem:[%s6004 + $0x40] sm:$0xff]
    %v6014 = vld [vmem:[%s6004 + $0x48] sm:$0xff]
    %v6015 = vld [vmem:[%s6004 + $0x50] sm:$0xff]
    %v6016 = vld [vmem:[%s6004 + $0x58] sm:$0xff]
    %v6017 = vld [vmem:[%s6004 + $0x60] sm:$0xff]
    %v6018 = vld [vmem:[%s6004 + $0x68] sm:$0xff]
    %v6019 = vld [vmem:[%s6004 + $0x70] sm:$0xff]
    %v6020 = vld [vmem:[%s6004 + $0x78] sm:$0xff]
    %v6037 = vunpack.c.l.b16 %v6005
    %v6038 = vunpack.c.h.b16 %v6005
    %v6039 = vunpack.c.l.b16 %v6006
    %v6040 = vunpack.c.h.b16 %v6006
    %v6041 = vunpack.c.l.b16 %v6007
    %v6042 = vunpack.c.h.b16 %v6007
    %v6043 = vunpack.c.l.b16 %v6008
    %v6044 = vunpack.c.h.b16 %v6008
    %v6045 = vunpack.c.l.b16 %v6009
    %v6046 = vunpack.c.h.b16 %v6009
    %v6047 = vunpack.c.l.b16 %v6010
    %v6048 = vunpack.c.h.b16 %v6010
    %v6049 = vunpack.c.l.b16 %v6011
    %v6050 = vunpack.c.h.b16 %v6011
    %v6051 = vunpack.c.l.b16 %v6012
    %v6052 = vunpack.c.h.b16 %v6012
    %v6053 = vunpack.c.l.b16 %v6013
    %v6054 = vunpack.c.h.b16 %v6013
    %v6055 = vunpack.c.l.b16 %v6014
    %v6056 = vunpack.c.h.b16 %v6014
    %v6057 = vunpack.c.l.b16 %v6015
    %v6058 = vunpack.c.h.b16 %v6015
    %v6059 = vunpack.c.l.b16 %v6016
    %v6060 = vunpack.c.h.b16 %v6016
    %v6061 = vunpack.c.l.b16 %v6017
    %v6062 = vunpack.c.h.b16 %v6017
    %v6063 = vunpack.c.l.b16 %v6018
    %v6064 = vunpack.c.h.b16 %v6018
    %v6065 = vunpack.c.l.b16 %v6019
    %v6066 = vunpack.c.h.b16 %v6019
    %v6067 = vunpack.c.l.b16 %v6020
    %v6068 = vunpack.c.h.b16 %v6020
    %v6069 = vpack.c.b16 %v6039, %v6037
    %v6070 = vpack.c.b16 %v6040, %v6038
    %v6071 = vpack.c.b16 %v6043, %v6041
    %v6072 = vpack.c.b16 %v6044, %v6042
    %v6073 = vpack.c.b16 %v6047, %v6045
    %v6074 = vpack.c.b16 %v6048, %v6046
    %v6075 = vpack.c.b16 %v6051, %v6049
    %v6076 = vpack.c.b16 %v6052, %v6050
    %v6077 = vpack.c.b16 %v6055, %v6053
    %v6078 = vpack.c.b16 %v6056, %v6054
    %v6079 = vpack.c.b16 %v6059, %v6057
    %v6080 = vpack.c.b16 %v6060, %v6058
    %v6081 = vpack.c.b16 %v6063, %v6061
    %v6082 = vpack.c.b16 %v6064, %v6062
    %v6083 = vpack.c.b16 %v6067, %v6065
    %v6084 = vpack.c.b16 %v6068, %v6066
    %6101 = vmatprep.subr.bf16.mxu0 %v6070
    %6102 = vmatpush1.bf16.msra.mxu0 %v6069
    %6103 = vmatprep.subr.bf16.mxu0 %v6072
    %6104 = vmatpush1.bf16.msra.mxu0 %v6071
    %6105 = vmatprep.subr.bf16.mxu0 %v6074
    %6106 = vmatpush1.bf16.msra.mxu0 %v6073
    %6107 = vmatprep.subr.bf16.mxu0 %v6076
    %6108 = vmatpush1.bf16.msra.mxu0 %v6075
    %6109 = vmatprep.subr.bf16.mxu0 %v6078
    %6110 = vmatpush1.bf16.msra.mxu0 %v6077
    %6111 = vmatprep.subr.bf16.mxu0 %v6080
    %6112 = vmatpush1.bf16.msra.mxu0 %v6079
    %6113 = vmatprep.subr.bf16.mxu0 %v6082
    %6114 = vmatpush1.bf16.msra.mxu0 %v6081
    %6115 = vmatprep.subr.bf16.mxu0 %v6084
    %6116 = vmatpush1.bf16.msra.mxu0 %v6083
    %6117 = vmatprep.subr.bf16.mxu0 0
    %6118 = vmatpush1.bf16.msra.mxu0 0
    %6119 = vmatprep.subr.bf16.mxu0 0
    %6120 = vmatpush1.bf16.msra.mxu0 0
    %6121 = vmatprep.subr.bf16.mxu0 0
    %6122 = vmatpush1.bf16.msra.mxu0 0
    %6123 = vmatprep.subr.bf16.mxu0 0
    %6124 = vmatpush1.bf16.msra.mxu0 0
    %6125 = vmatprep.subr.bf16.mxu0 0
    %6126 = vmatpush1.bf16.msra.mxu0 0
    %6127 = vmatprep.subr.bf16.mxu0 0
    %6128 = vmatpush1.bf16.msra.mxu0 0
    %6129 = vmatprep.subr.bf16.mxu0 0
    %6130 = vmatpush1.bf16.msra.mxu0 0
    %6131 = vmatprep.subr.bf16.mxu0 0
    %6132 = vmatpush1.bf16.msra.mxu0 0
    %6133 = vmatprep.mubr.bf16.mxu0 0
    %6134 = vmatmul.mubr.bf16.gmra.mrb[0].mxu0 %v6003
    %v6135 = vpop.f32.mrb[0].mxu0
    %v6136 = vadd.f32 0.0, %v6135
    %v6137 = vpop.f32.mrb[0].mxu0
    %v6138 = vadd.f32 0.0, %v6137
    %v6139 = vpop.f32.mrb[0].mxu0
    %v6140 = vpop.f32.mrb[0].mxu0
    %6141 = vdwg.mxu0
    %v6142 = vadd.f32 %v5813, %v6136
    %v6143 = vadd.f32 %v5814, %v6138
    %v6144 = vld [vmem:[%s3079] sm:$0xf]
    %6145 = vrot.lane.b32.xlu0 %v5830, 64
    %v6146 = vpop.permute.xlu0 %6145
    %6147 = vrot.lane.b32.xlu0 %v5831, 64
    %v6148 = vpop.permute.xlu0 %6147
    %v6149 = vsel %vm124, %v6146, %v6148
    %v6154 = vunpack.c.l.s4 1983009808
    %v6155 = vunpack.c.0.s8 %v6154
    %v6156 = vlaneseq
    %v6157 = vshrl.u32 %v6156, 7
    %v6158 = vsub.s32 %v6155, %v6157
    %v6159 = vrot.slane %v6144, %v6158
    %v6160 = vcombine.high %v6159, %v6159
    %v6163 = vsel %vm124, %v5497, %v6146
    %v6164 = vpack.c.bf16 %v6163, %v6163
    %v6165 = vpack.c.bf16 %v6149, %v6149
    %v6166 = vpack.c.bf16 %v6159, %v6159
    %v6167 = vpack.c.bf16 %v6160, %v6160
    %v6169 = vsel %vm124, %v6167, 0
    %6171 = vmatprep.subr.bf16.mxu0 0
    %6172 = vmatpush1.bf16.msra.mxu0 %v5046
    %6173 = vmatprep.subr.bf16.mxu0 0
    %6174 = vmatpush1.bf16.msra.mxu0 %v5047
    %6175 = vmatprep.subr.bf16.mxu0 0
    %6176 = vmatpush1.bf16.msra.mxu0 %v5048
    %6177 = vmatprep.subr.bf16.mxu0 0
    %6178 = vmatpush1.bf16.msra.mxu0 %v5049
    %6179 = vmatprep.subr.bf16.mxu0 0
    %6180 = vmatpush1.bf16.msra.mxu0 %v5050
    %6181 = vmatprep.subr.bf16.mxu0 0
    %6182 = vmatpush1.bf16.msra.mxu0 %v5051
    %6183 = vmatprep.subr.bf16.mxu0 0
    %6184 = vmatpush1.bf16.msra.mxu0 %v5052
    %6185 = vmatprep.subr.bf16.mxu0 0
    %6186 = vmatpush1.bf16.msra.mxu0 %v5053
    %6187 = vmatprep.subr.bf16.mxu0 0
    %6188 = vmatpush1.bf16.msra.mxu0 %v5054
    %6189 = vmatprep.subr.bf16.mxu0 0
    %6190 = vmatpush1.bf16.msra.mxu0 %v5055
    %6191 = vmatprep.subr.bf16.mxu0 0
    %6192 = vmatpush1.bf16.msra.mxu0 %v5056
    %6193 = vmatprep.subr.bf16.mxu0 0
    %6194 = vmatpush1.bf16.msra.mxu0 %v5057
    %6195 = vmatprep.subr.bf16.mxu0 0
    %6196 = vmatpush1.bf16.msra.mxu0 %v5058
    %6197 = vmatprep.subr.bf16.mxu0 0
    %6198 = vmatpush1.bf16.msra.mxu0 %v5059
    %6199 = vmatprep.subr.bf16.mxu0 0
    %6200 = vmatpush1.bf16.msra.mxu0 %v5060
    %6201 = vmatprep.subr.bf16.mxu0 0
    %6202 = vmatpush1.bf16.msra.mxu0 %v5061
    %6203 = vmatprep.mubr.bf16.mxu0 %v5506
    %6204 = vmatmul.mubr.bf16.gmra.mrb[0].mxu0 %v5505
    %v6205 = vpop.f32.mrb[0].mxu0
    %v6206 = vadd.f32 %v4804, %v6205
    %v6207 = vpop.f32.mrb[0].mxu0
    %v6208 = vpop.f32.mrb[0].mxu0
    %v6209 = vpop.f32.mrb[0].mxu0
    %6210 = vdwg.mxu0
    %6211 = vmatprep.subr.bf16.mxu0 0
    %6212 = vmatpush1.bf16.msra.mxu0 %v5062
    %6213 = vmatprep.subr.bf16.mxu0 0
    %6214 = vmatpush1.bf16.msra.mxu0 %v5063
    %6215 = vmatprep.subr.bf16.mxu0 0
    %6216 = vmatpush1.bf16.msra.mxu0 %v5064
    %6217 = vmatprep.subr.bf16.mxu0 0
    %6218 = vmatpush1.bf16.msra.mxu0 %v5065
    %6219 = vmatprep.subr.bf16.mxu0 0
    %6220 = vmatpush1.bf16.msra.mxu0 %v5066
    %6221 = vmatprep.subr.bf16.mxu0 0
    %6222 = vmatpush1.bf16.msra.mxu0 %v5067
    %6223 = vmatprep.subr.bf16.mxu0 0
    %6224 = vmatpush1.bf16.msra.mxu0 %v5068
    %6225 = vmatprep.subr.bf16.mxu0 0
    %6226 = vmatpush1.bf16.msra.mxu0 %v5069
    %6227 = vmatprep.subr.bf16.mxu0 0
    %6228 = vmatpush1.bf16.msra.mxu0 %v5070
    %6229 = vmatprep.subr.bf16.mxu0 0
    %6230 = vmatpush1.bf16.msra.mxu0 %v5071
    %6231 = vmatprep.subr.bf16.mxu0 0
    %6232 = vmatpush1.bf16.msra.mxu0 %v5072
    %6233 = vmatprep.subr.bf16.mxu0 0
    %6234 = vmatpush1.bf16.msra.mxu0 %v5073
    %6235 = vmatprep.subr.bf16.mxu0 0
    %6236 = vmatpush1.bf16.msra.mxu0 %v5074
    %6237 = vmatprep.subr.bf16.mxu0 0
    %6238 = vmatpush1.bf16.msra.mxu0 %v5075
    %6239 = vmatprep.subr.bf16.mxu0 0
    %6240 = vmatpush1.bf16.msra.mxu0 %v5076
    %6241 = vmatprep.subr.bf16.mxu0 0
    %6242 = vmatpush1.bf16.msra.mxu0 %v5077
    %6243 = vmatprep.mubr.bf16.mxu0 %v5508
    %6244 = vmatmul.mubr.bf16.gmra.mrb[0].mxu0 %v5507
    %v6245 = vpop.f32.mrb[0].mxu0
    %v6246 = vadd.f32 %v6206, %v6245
    %v6247 = vpop.f32.mrb[0].mxu0
    %v6248 = vpop.f32.mrb[0].mxu0
    %v6249 = vpop.f32.mrb[0].mxu0
    %6250 = vdwg.mxu0
    %6251 = vmatprep.subr.bf16.mxu0 0
    %6252 = vmatpush1.bf16.msra.mxu0 %v5078
    %6253 = vmatprep.subr.bf16.mxu0 0
    %6254 = vmatpush1.bf16.msra.mxu0 %v5079
    %6255 = vmatprep.subr.bf16.mxu0 0
    %6256 = vmatpush1.bf16.msra.mxu0 %v5080
    %6257 = vmatprep.subr.bf16.mxu0 0
    %6258 = vmatpush1.bf16.msra.mxu0 %v5081
    %6259 = vmatprep.subr.bf16.mxu0 0
    %6260 = vmatpush1.bf16.msra.mxu0 %v5082
    %6261 = vmatprep.subr.bf16.mxu0 0
    %6262 = vmatpush1.bf16.msra.mxu0 %v5083
    %6263 = vmatprep.subr.bf16.mxu0 0
    %6264 = vmatpush1.bf16.msra.mxu0 %v5084
    %6265 = vmatprep.subr.bf16.mxu0 0
    %6266 = vmatpush1.bf16.msra.mxu0 %v5085
    %6267 = vmatprep.subr.bf16.mxu0 0
    %6268 = vmatpush1.bf16.msra.mxu0 %v5086
    %6269 = vmatprep.subr.bf16.mxu0 0
    %6270 = vmatpush1.bf16.msra.mxu0 %v5087
    %6271 = vmatprep.subr.bf16.mxu0 0
    %6272 = vmatpush1.bf16.msra.mxu0 %v5088
    %6273 = vmatprep.subr.bf16.mxu0 0
    %6274 = vmatpush1.bf16.msra.mxu0 %v5089
    %6275 = vmatprep.subr.bf16.mxu0 0
    %6276 = vmatpush1.bf16.msra.mxu0 %v5090
    %6277 = vmatprep.subr.bf16.mxu0 0
    %6278 = vmatpush1.bf16.msra.mxu0 %v5091
    %6279 = vmatprep.subr.bf16.mxu0 0
    %6280 = vmatpush1.bf16.msra.mxu0 %v5092
    %6281 = vmatprep.subr.bf16.mxu0 0
    %6282 = vmatpush1.bf16.msra.mxu0 %v5093
    %6283 = vmatprep.mubr.bf16.mxu0 %v6165
    %6284 = vmatmul.mubr.bf16.gmra.mrb[0].mxu0 %v6164
    %v6285 = vpop.f32.mrb[0].mxu0
    %v6286 = vadd.f32 %v6246, %v6285
    %v6287 = vpop.f32.mrb[0].mxu0
    %v6288 = vpop.f32.mrb[0].mxu0
    %v6289 = vpop.f32.mrb[0].mxu0
    %6290 = vdwg.mxu0
    %6291 = vmatprep.subr.bf16.mxu0 0
    %6292 = vmatpush1.bf16.msra.mxu0 %v5094
    %6293 = vmatprep.subr.bf16.mxu0 0
    %6294 = vmatpush1.bf16.msra.mxu0 %v5095
    %6295 = vmatprep.subr.bf16.mxu0 0
    %6296 = vmatpush1.bf16.msra.mxu0 %v5096
    %6297 = vmatprep.subr.bf16.mxu0 0
    %6298 = vmatpush1.bf16.msra.mxu0 %v5097
    %6299 = vmatprep.subr.bf16.mxu0 0
    %6300 = vmatpush1.bf16.msra.mxu0 %v5098
    %6301 = vmatprep.subr.bf16.mxu0 0
    %6302 = vmatpush1.bf16.msra.mxu0 %v5099
    %6303 = vmatprep.subr.bf16.mxu0 0
    %6304 = vmatpush1.bf16.msra.mxu0 %v5100
    %6305 = vmatprep.subr.bf16.mxu0 0
    %6306 = vmatpush1.bf16.msra.mxu0 %v5101
    %6307 = vmatprep.subr.bf16.mxu0 0
    %6308 = vmatpush1.bf16.msra.mxu0 %v5102
    %6309 = vmatprep.subr.bf16.mxu0 0
    %6310 = vmatpush1.bf16.msra.mxu0 %v5103
    %6311 = vmatprep.subr.bf16.mxu0 0
    %6312 = vmatpush1.bf16.msra.mxu0 %v5104
    %6313 = vmatprep.subr.bf16.mxu0 0
    %6314 = vmatpush1.bf16.msra.mxu0 %v5105
    %6315 = vmatprep.subr.bf16.mxu0 0
    %6316 = vmatpush1.bf16.msra.mxu0 0
    %6317 = vmatprep.subr.bf16.mxu0 0
    %6318 = vmatpush1.bf16.msra.mxu0 0
    %6319 = vmatprep.subr.bf16.mxu0 0
    %6320 = vmatpush1.bf16.msra.mxu0 0
    %6321 = vmatprep.subr.bf16.mxu0 0
    %6322 = vmatpush1.bf16.msra.mxu0 0
    %6323 = vmatprep.mubr.bf16.mxu0 %v6169
    %6324 = vmatmul.mubr.bf16.gmra.mrb[0].mxu0 %v6166
    %v6325 = vpop.f32.mrb[0].mxu0
    %v6326 = vadd.f32 %v6286, %v6325
    %v6327 = vpop.f32.mrb[0].mxu0
    %v6328 = vpop.f32.mrb[0].mxu0
    %v6329 = vpop.f32.mrb[0].mxu0
    %6330 = vdwg.mxu0
    %v6331 = vmax.f32 %v6326, 0.0
    %v6332 = vpack.c.bf16 %v6331, %v6331
    %s6333 = scalar_lea.vmem %s6, 384
    %v6334 = vld [vmem:[%s6333] sm:$0xff]
    %v6335 = vld [vmem:[%s6333 + $0x8] sm:$0xff]
    %v6336 = vld [vmem:[%s6333 + $0x10] sm:$0xff]
    %v6337 = vld [vmem:[%s6333 + $0x18] sm:$0xff]
    %v6338 = vld [vmem:[%s6333 + $0x20] sm:$0xff]
    %v6339 = vld [vmem:[%s6333 + $0x28] sm:$0xff]
    %v6340 = vld [vmem:[%s6333 + $0x30] sm:$0xff]
    %v6341 = vld [vmem:[%s6333 + $0x38] sm:$0xff]
    %v6342 = vld [vmem:[%s6333 + $0x40] sm:$0xff]
    %v6343 = vld [vmem:[%s6333 + $0x48] sm:$0xff]
    %v6344 = vld [vmem:[%s6333 + $0x50] sm:$0xff]
    %v6345 = vld [vmem:[%s6333 + $0x58] sm:$0xff]
    %v6346 = vld [vmem:[%s6333 + $0x60] sm:$0xff]
    %v6347 = vld [vmem:[%s6333 + $0x68] sm:$0xff]
    %v6348 = vld [vmem:[%s6333 + $0x70] sm:$0xff]
    %v6349 = vld [vmem:[%s6333 + $0x78] sm:$0xff]
    %v6366 = vunpack.c.l.b16 %v6334
    %v6367 = vunpack.c.h.b16 %v6334
    %v6368 = vunpack.c.l.b16 %v6335
    %v6369 = vunpack.c.h.b16 %v6335
    %v6370 = vunpack.c.l.b16 %v6336
    %v6371 = vunpack.c.h.b16 %v6336
    %v6372 = vunpack.c.l.b16 %v6337
    %v6373 = vunpack.c.h.b16 %v6337
    %v6374 = vunpack.c.l.b16 %v6338
    %v6375 = vunpack.c.h.b16 %v6338
    %v6376 = vunpack.c.l.b16 %v6339
    %v6377 = vunpack.c.h.b16 %v6339
    %v6378 = vunpack.c.l.b16 %v6340
    %v6379 = vunpack.c.h.b16 %v6340
    %v6380 = vunpack.c.l.b16 %v6341
    %v6381 = vunpack.c.h.b16 %v6341
    %v6382 = vunpack.c.l.b16 %v6342
    %v6383 = vunpack.c.h.b16 %v6342
    %v6384 = vunpack.c.l.b16 %v6343
    %v6385 = vunpack.c.h.b16 %v6343
    %v6386 = vunpack.c.l.b16 %v6344
    %v6387 = vunpack.c.h.b16 %v6344
    %v6388 = vunpack.c.l.b16 %v6345
    %v6389 = vunpack.c.h.b16 %v6345
    %v6390 = vunpack.c.l.b16 %v6346
    %v6391 = vunpack.c.h.b16 %v6346
    %v6392 = vunpack.c.l.b16 %v6347
    %v6393 = vunpack.c.h.b16 %v6347
    %v6394 = vunpack.c.l.b16 %v6348
    %v6395 = vunpack.c.h.b16 %v6348
    %v6396 = vunpack.c.l.b16 %v6349
    %v6397 = vunpack.c.h.b16 %v6349
    %v6398 = vpack.c.b16 %v6368, %v6366
    %v6399 = vpack.c.b16 %v6369, %v6367
    %v6400 = vpack.c.b16 %v6372, %v6370
    %v6401 = vpack.c.b16 %v6373, %v6371
    %v6402 = vpack.c.b16 %v6376, %v6374
    %v6403 = vpack.c.b16 %v6377, %v6375
    %v6404 = vpack.c.b16 %v6380, %v6378
    %v6405 = vpack.c.b16 %v6381, %v6379
    %v6406 = vpack.c.b16 %v6384, %v6382
    %v6407 = vpack.c.b16 %v6385, %v6383
    %v6408 = vpack.c.b16 %v6388, %v6386
    %v6409 = vpack.c.b16 %v6389, %v6387
    %v6410 = vpack.c.b16 %v6392, %v6390
    %v6411 = vpack.c.b16 %v6393, %v6391
    %v6412 = vpack.c.b16 %v6396, %v6394
    %v6413 = vpack.c.b16 %v6397, %v6395
    %6430 = vmatprep.subr.bf16.mxu0 %v6399
    %6431 = vmatpush1.bf16.msra.mxu0 %v6398
    %6432 = vmatprep.subr.bf16.mxu0 %v6401
    %6433 = vmatpush1.bf16.msra.mxu0 %v6400
    %6434 = vmatprep.subr.bf16.mxu0 %v6403
    %6435 = vmatpush1.bf16.msra.mxu0 %v6402
    %6436 = vmatprep.subr.bf16.mxu0 %v6405
    %6437 = vmatpush1.bf16.msra.mxu0 %v6404
    %6438 = vmatprep.subr.bf16.mxu0 %v6407
    %6439 = vmatpush1.bf16.msra.mxu0 %v6406
    %6440 = vmatprep.subr.bf16.mxu0 %v6409
    %6441 = vmatpush1.bf16.msra.mxu0 %v6408
    %6442 = vmatprep.subr.bf16.mxu0 %v6411
    %6443 = vmatpush1.bf16.msra.mxu0 %v6410
    %6444 = vmatprep.subr.bf16.mxu0 %v6413
    %6445 = vmatpush1.bf16.msra.mxu0 %v6412
    %6446 = vmatprep.subr.bf16.mxu0 0
    %6447 = vmatpush1.bf16.msra.mxu0 0
    %6448 = vmatprep.subr.bf16.mxu0 0
    %6449 = vmatpush1.bf16.msra.mxu0 0
    %6450 = vmatprep.subr.bf16.mxu0 0
    %6451 = vmatpush1.bf16.msra.mxu0 0
    %6452 = vmatprep.subr.bf16.mxu0 0
    %6453 = vmatpush1.bf16.msra.mxu0 0
    %6454 = vmatprep.subr.bf16.mxu0 0
    %6455 = vmatpush1.bf16.msra.mxu0 0
    %6456 = vmatprep.subr.bf16.mxu0 0
    %6457 = vmatpush1.bf16.msra.mxu0 0
    %6458 = vmatprep.subr.bf16.mxu0 0
    %6459 = vmatpush1.bf16.msra.mxu0 0
    %6460 = vmatprep.subr.bf16.mxu0 0
    %6461 = vmatpush1.bf16.msra.mxu0 0
    %6462 = vmatprep.mubr.bf16.mxu0 0
    %6463 = vmatmul.mubr.bf16.gmra.mrb[0].mxu0 %v6332
    %v6464 = vpop.f32.mrb[0].mxu0
    %v6465 = vadd.f32 0.0, %v6464
    %v6466 = vpop.f32.mrb[0].mxu0
    %v6467 = vadd.f32 0.0, %v6466
    %v6468 = vpop.f32.mrb[0].mxu0
    %v6469 = vpop.f32.mrb[0].mxu0
    %6470 = vdwg.mxu0
    %v6471 = vadd.f32 %v6142, %v6465
    %v6472 = vadd.f32 %v6143, %v6467
    %v6473 = vld [vmem:[%s3450] sm:$0xf]
    %6474 = vrot.lane.b32.xlu0 %v6159, 64
    %v6475 = vpop.permute.xlu0 %6474
    %6476 = vrot.lane.b32.xlu0 %v6160, 64
    %v6477 = vpop.permute.xlu0 %6476
    %v6478 = vsel %vm124, %v6475, %v6477
    %v6483 = vunpack.c.l.s4 1983009808
    %v6484 = vunpack.c.0.s8 %v6483
    %v6485 = vlaneseq
    %v6486 = vshrl.u32 %v6485, 7
    %v6487 = vsub.s32 %v6484, %v6486
    %v6488 = vrot.slane %v6473, %v6487
    %v6489 = vcombine.high %v6488, %v6488
    %v6492 = vsel %vm124, %v5831, %v6475
    %v6493 = vpack.c.bf16 %v6492, %v6492
    %v6494 = vpack.c.bf16 %v6478, %v6478
    %v6495 = vpack.c.bf16 %v6488, %v6488
    %v6496 = vpack.c.bf16 %v6489, %v6489
    %v6498 = vsel %vm124, %v6496, 0
    %6500 = vmatprep.subr.bf16.mxu0 0
    %6501 = vmatpush1.bf16.msra.mxu0 %v5046
    %6502 = vmatprep.subr.bf16.mxu0 0
    %6503 = vmatpush1.bf16.msra.mxu0 %v5047
    %6504 = vmatprep.subr.bf16.mxu0 0
    %6505 = vmatpush1.bf16.msra.mxu0 %v5048
    %6506 = vmatprep.subr.bf16.mxu0 0
    %6507 = vmatpush1.bf16.msra.mxu0 %v5049
    %6508 = vmatprep.subr.bf16.mxu0 0
    %6509 = vmatpush1.bf16.msra.mxu0 %v5050
    %6510 = vmatprep.subr.bf16.mxu0 0
    %6511 = vmatpush1.bf16.msra.mxu0 %v5051
    %6512 = vmatprep.subr.bf16.mxu0 0
    %6513 = vmatpush1.bf16.msra.mxu0 %v5052
    %6514 = vmatprep.subr.bf16.mxu0 0
    %6515 = vmatpush1.bf16.msra.mxu0 %v5053
    %6516 = vmatprep.subr.bf16.mxu0 0
    %6517 = vmatpush1.bf16.msra.mxu0 %v5054
    %6518 = vmatprep.subr.bf16.mxu0 0
    %6519 = vmatpush1.bf16.msra.mxu0 %v5055
    %6520 = vmatprep.subr.bf16.mxu0 0
    %6521 = vmatpush1.bf16.msra.mxu0 %v5056
    %6522 = vmatprep.subr.bf16.mxu0 0
    %6523 = vmatpush1.bf16.msra.mxu0 %v5057
    %6524 = vmatprep.subr.bf16.mxu0 0
    %6525 = vmatpush1.bf16.msra.mxu0 %v5058
    %6526 = vmatprep.subr.bf16.mxu0 0
    %6527 = vmatpush1.bf16.msra.mxu0 %v5059
    %6528 = vmatprep.subr.bf16.mxu0 0
    %6529 = vmatpush1.bf16.msra.mxu0 %v5060
    %6530 = vmatprep.subr.bf16.mxu0 0
    %6531 = vmatpush1.bf16.msra.mxu0 %v5061
    %6532 = vmatprep.mubr.bf16.mxu0 %v5835
    %6533 = vmatmul.mubr.bf16.gmra.mrb[0].mxu0 %v4677
    %v6534 = vpop.f32.mrb[0].mxu0
    %v6535 = vadd.f32 %v4804, %v6534
    %v6536 = vpop.f32.mrb[0].mxu0
    %v6537 = vpop.f32.mrb[0].mxu0
    %v6538 = vpop.f32.mrb[0].mxu0
    %6539 = vdwg.mxu0
    %6540 = vmatprep.subr.bf16.mxu0 0
    %6541 = vmatpush1.bf16.msra.mxu0 %v5062
    %6542 = vmatprep.subr.bf16.mxu0 0
    %6543 = vmatpush1.bf16.msra.mxu0 %v5063
    %6544 = vmatprep.subr.bf16.mxu0 0
    %6545 = vmatpush1.bf16.msra.mxu0 %v5064
    %6546 = vmatprep.subr.bf16.mxu0 0
    %6547 = vmatpush1.bf16.msra.mxu0 %v5065
    %6548 = vmatprep.subr.bf16.mxu0 0
    %6549 = vmatpush1.bf16.msra.mxu0 %v5066
    %6550 = vmatprep.subr.bf16.mxu0 0
    %6551 = vmatpush1.bf16.msra.mxu0 %v5067
    %6552 = vmatprep.subr.bf16.mxu0 0
    %6553 = vmatpush1.bf16.msra.mxu0 %v5068
    %6554 = vmatprep.subr.bf16.mxu0 0
    %6555 = vmatpush1.bf16.msra.mxu0 %v5069
    %6556 = vmatprep.subr.bf16.mxu0 0
    %6557 = vmatpush1.bf16.msra.mxu0 %v5070
    %6558 = vmatprep.subr.bf16.mxu0 0
    %6559 = vmatpush1.bf16.msra.mxu0 %v5071
    %6560 = vmatprep.subr.bf16.mxu0 0
    %6561 = vmatpush1.bf16.msra.mxu0 %v5072
    %6562 = vmatprep.subr.bf16.mxu0 0
    %6563 = vmatpush1.bf16.msra.mxu0 %v5073
    %6564 = vmatprep.subr.bf16.mxu0 0
    %6565 = vmatpush1.bf16.msra.mxu0 %v5074
    %6566 = vmatprep.subr.bf16.mxu0 0
    %6567 = vmatpush1.bf16.msra.mxu0 %v5075
    %6568 = vmatprep.subr.bf16.mxu0 0
    %6569 = vmatpush1.bf16.msra.mxu0 %v5076
    %6570 = vmatprep.subr.bf16.mxu0 0
    %6571 = vmatpush1.bf16.msra.mxu0 %v5077
    %6572 = vmatprep.mubr.bf16.mxu0 %v5837
    %6573 = vmatmul.mubr.bf16.gmra.mrb[0].mxu0 %v5836
    %v6574 = vpop.f32.mrb[0].mxu0
    %v6575 = vadd.f32 %v6535, %v6574
    %v6576 = vpop.f32.mrb[0].mxu0
    %v6577 = vpop.f32.mrb[0].mxu0
    %v6578 = vpop.f32.mrb[0].mxu0
    %6579 = vdwg.mxu0
    %6580 = vmatprep.subr.bf16.mxu0 0
    %6581 = vmatpush1.bf16.msra.mxu0 %v5078
    %6582 = vmatprep.subr.bf16.mxu0 0
    %6583 = vmatpush1.bf16.msra.mxu0 %v5079
    %6584 = vmatprep.subr.bf16.mxu0 0
    %6585 = vmatpush1.bf16.msra.mxu0 %v5080
    %6586 = vmatprep.subr.bf16.mxu0 0
    %6587 = vmatpush1.bf16.msra.mxu0 %v5081
    %6588 = vmatprep.subr.bf16.mxu0 0
    %6589 = vmatpush1.bf16.msra.mxu0 %v5082
    %6590 = vmatprep.subr.bf16.mxu0 0
    %6591 = vmatpush1.bf16.msra.mxu0 %v5083
    %6592 = vmatprep.subr.bf16.mxu0 0
    %6593 = vmatpush1.bf16.msra.mxu0 %v5084
    %6594 = vmatprep.subr.bf16.mxu0 0
    %6595 = vmatpush1.bf16.msra.mxu0 %v5085
    %6596 = vmatprep.subr.bf16.mxu0 0
    %6597 = vmatpush1.bf16.msra.mxu0 %v5086
    %6598 = vmatprep.subr.bf16.mxu0 0
    %6599 = vmatpush1.bf16.msra.mxu0 %v5087
    %6600 = vmatprep.subr.bf16.mxu0 0
    %6601 = vmatpush1.bf16.msra.mxu0 %v5088
    %6602 = vmatprep.subr.bf16.mxu0 0
    %6603 = vmatpush1.bf16.msra.mxu0 %v5089
    %6604 = vmatprep.subr.bf16.mxu0 0
    %6605 = vmatpush1.bf16.msra.mxu0 %v5090
    %6606 = vmatprep.subr.bf16.mxu0 0
    %6607 = vmatpush1.bf16.msra.mxu0 %v5091
    %6608 = vmatprep.subr.bf16.mxu0 0
    %6609 = vmatpush1.bf16.msra.mxu0 %v5092
    %6610 = vmatprep.subr.bf16.mxu0 0
    %6611 = vmatpush1.bf16.msra.mxu0 %v5093
    %6612 = vmatprep.mubr.bf16.mxu0 %v6494
    %6613 = vmatmul.mubr.bf16.gmra.mrb[0].mxu0 %v6493
    %v6614 = vpop.f32.mrb[0].mxu0
    %v6615 = vadd.f32 %v6575, %v6614
    %v6616 = vpop.f32.mrb[0].mxu0
    %v6617 = vpop.f32.mrb[0].mxu0
    %v6618 = vpop.f32.mrb[0].mxu0
    %6619 = vdwg.mxu0
    %6620 = vmatprep.subr.bf16.mxu0 0
    %6621 = vmatpush1.bf16.msra.mxu0 %v5094
    %6622 = vmatprep.subr.bf16.mxu0 0
    %6623 = vmatpush1.bf16.msra.mxu0 %v5095
    %6624 = vmatprep.subr.bf16.mxu0 0
    %6625 = vmatpush1.bf16.msra.mxu0 %v5096
    %6626 = vmatprep.subr.bf16.mxu0 0
    %6627 = vmatpush1.bf16.msra.mxu0 %v5097
    %6628 = vmatprep.subr.bf16.mxu0 0
    %6629 = vmatpush1.bf16.msra.mxu0 %v5098
    %6630 = vmatprep.subr.bf16.mxu0 0
    %6631 = vmatpush1.bf16.msra.mxu0 %v5099
    %6632 = vmatprep.subr.bf16.mxu0 0
    %6633 = vmatpush1.bf16.msra.mxu0 %v5100
    %6634 = vmatprep.subr.bf16.mxu0 0
    %6635 = vmatpush1.bf16.msra.mxu0 %v5101
    %6636 = vmatprep.subr.bf16.mxu0 0
    %6637 = vmatpush1.bf16.msra.mxu0 %v5102
    %6638 = vmatprep.subr.bf16.mxu0 0
    %6639 = vmatpush1.bf16.msra.mxu0 %v5103
    %6640 = vmatprep.subr.bf16.mxu0 0
    %6641 = vmatpush1.bf16.msra.mxu0 %v5104
    %6642 = vmatprep.subr.bf16.mxu0 0
    %6643 = vmatpush1.bf16.msra.mxu0 %v5105
    %6644 = vmatprep.subr.bf16.mxu0 0
    %6645 = vmatpush1.bf16.msra.mxu0 0
    %6646 = vmatprep.subr.bf16.mxu0 0
    %6647 = vmatpush1.bf16.msra.mxu0 0
    %6648 = vmatprep.subr.bf16.mxu0 0
    %6649 = vmatpush1.bf16.msra.mxu0 0
    %6650 = vmatprep.subr.bf16.mxu0 0
    %6651 = vmatpush1.bf16.msra.mxu0 0
    %6652 = vmatprep.mubr.bf16.mxu0 %v6498
    %6653 = vmatmul.mubr.bf16.gmra.mrb[0].mxu0 %v6495
    %v6654 = vpop.f32.mrb[0].mxu0
    %v6655 = vadd.f32 %v6615, %v6654
    %v6656 = vpop.f32.mrb[0].mxu0
    %v6657 = vpop.f32.mrb[0].mxu0
    %v6658 = vpop.f32.mrb[0].mxu0
    %6659 = vdwg.mxu0
    %v6660 = vmax.f32 %v6655, 0.0
    %v6661 = vpack.c.bf16 %v6660, %v6660
    %s6662 = scalar_lea.vmem %s6, 512
    %v6663 = vld [vmem:[%s6662] sm:$0xff]
    %v6664 = vld [vmem:[%s6662 + $0x8] sm:$0xff]
    %v6665 = vld [vmem:[%s6662 + $0x10] sm:$0xff]
    %v6666 = vld [vmem:[%s6662 + $0x18] sm:$0xff]
    %v6667 = vld [vmem:[%s6662 + $0x20] sm:$0xff]
    %v6668 = vld [vmem:[%s6662 + $0x28] sm:$0xff]
    %v6669 = vld [vmem:[%s6662 + $0x30] sm:$0xff]
    %v6670 = vld [vmem:[%s6662 + $0x38] sm:$0xff]
    %v6671 = vld [vmem:[%s6662 + $0x40] sm:$0xff]
    %v6672 = vld [vmem:[%s6662 + $0x48] sm:$0xff]
    %v6673 = vld [vmem:[%s6662 + $0x50] sm:$0xff]
    %v6674 = vld [vmem:[%s6662 + $0x58] sm:$0xff]
    %v6675 = vld [vmem:[%s6662 + $0x60] sm:$0xff]
    %v6676 = vld [vmem:[%s6662 + $0x68] sm:$0xff]
    %v6677 = vld [vmem:[%s6662 + $0x70] sm:$0xff]
    %v6678 = vld [vmem:[%s6662 + $0x78] sm:$0xff]
    %v6695 = vunpack.c.l.b16 %v6663
    %v6696 = vunpack.c.h.b16 %v6663
    %v6697 = vunpack.c.l.b16 %v6664
    %v6698 = vunpack.c.h.b16 %v6664
    %v6699 = vunpack.c.l.b16 %v6665
    %v6700 = vunpack.c.h.b16 %v6665
    %v6701 = vunpack.c.l.b16 %v6666
    %v6702 = vunpack.c.h.b16 %v6666
    %v6703 = vunpack.c.l.b16 %v6667
    %v6704 = vunpack.c.h.b16 %v6667
    %v6705 = vunpack.c.l.b16 %v6668
    %v6706 = vunpack.c.h.b16 %v6668
    %v6707 = vunpack.c.l.b16 %v6669
    %v6708 = vunpack.c.h.b16 %v6669
    %v6709 = vunpack.c.l.b16 %v6670
    %v6710 = vunpack.c.h.b16 %v6670
    %v6711 = vunpack.c.l.b16 %v6671
    %v6712 = vunpack.c.h.b16 %v6671
    %v6713 = vunpack.c.l.b16 %v6672
    %v6714 = vunpack.c.h.b16 %v6672
    %v6715 = vunpack.c.l.b16 %v6673
    %v6716 = vunpack.c.h.b16 %v6673
    %v6717 = vunpack.c.l.b16 %v6674
    %v6718 = vunpack.c.h.b16 %v6674
    %v6719 = vunpack.c.l.b16 %v6675
    %v6720 = vunpack.c.h.b16 %v6675
    %v6721 = vunpack.c.l.b16 %v6676
    %v6722 = vunpack.c.h.b16 %v6676
    %v6723 = vunpack.c.l.b16 %v6677
    %v6724 = vunpack.c.h.b16 %v6677
    %v6725 = vunpack.c.l.b16 %v6678
    %v6726 = vunpack.c.h.b16 %v6678
    %v6727 = vpack.c.b16 %v6697, %v6695
    %v6728 = vpack.c.b16 %v6698, %v6696
    %v6729 = vpack.c.b16 %v6701, %v6699
    %v6730 = vpack.c.b16 %v6702, %v6700
    %v6731 = vpack.c.b16 %v6705, %v6703
    %v6732 = vpack.c.b16 %v6706, %v6704
    %v6733 = vpack.c.b16 %v6709, %v6707
    %v6734 = vpack.c.b16 %v6710, %v6708
    %v6735 = vpack.c.b16 %v6713, %v6711
    %v6736 = vpack.c.b16 %v6714, %v6712
    %v6737 = vpack.c.b16 %v6717, %v6715
    %v6738 = vpack.c.b16 %v6718, %v6716
    %v6739 = vpack.c.b16 %v6721, %v6719
    %v6740 = vpack.c.b16 %v6722, %v6720
    %v6741 = vpack.c.b16 %v6725, %v6723
    %v6742 = vpack.c.b16 %v6726, %v6724
    %6759 = vmatprep.subr.bf16.mxu0 %v6728
    %6760 = vmatpush1.bf16.msra.mxu0 %v6727
    %6761 = vmatprep.subr.bf16.mxu0 %v6730
    %6762 = vmatpush1.bf16.msra.mxu0 %v6729
    %6763 = vmatprep.subr.bf16.mxu0 %v6732
    %6764 = vmatpush1.bf16.msra.mxu0 %v6731
    %6765 = vmatprep.subr.bf16.mxu0 %v6734
    %6766 = vmatpush1.bf16.msra.mxu0 %v6733
    %6767 = vmatprep.subr.bf16.mxu0 %v6736
    %6768 = vmatpush1.bf16.msra.mxu0 %v6735
    %6769 = vmatprep.subr.bf16.mxu0 %v6738
    %6770 = vmatpush1.bf16.msra.mxu0 %v6737
    %6771 = vmatprep.subr.bf16.mxu0 %v6740
    %6772 = vmatpush1.bf16.msra.mxu0 %v6739
    %6773 = vmatprep.subr.bf16.mxu0 %v6742
    %6774 = vmatpush1.bf16.msra.mxu0 %v6741
    %6775 = vmatprep.subr.bf16.mxu0 0
    %6776 = vmatpush1.bf16.msra.mxu0 0
    %6777 = vmatprep.subr.bf16.mxu0 0
    %6778 = vmatpush1.bf16.msra.mxu0 0
    %6779 = vmatprep.subr.bf16.mxu0 0
    %6780 = vmatpush1.bf16.msra.mxu0 0
    %6781 = vmatprep.subr.bf16.mxu0 0
    %6782 = vmatpush1.bf16.msra.mxu0 0
    %6783 = vmatprep.subr.bf16.mxu0 0
    %6784 = vmatpush1.bf16.msra.mxu0 0
    %6785 = vmatprep.subr.bf16.mxu0 0
    %6786 = vmatpush1.bf16.msra.mxu0 0
    %6787 = vmatprep.subr.bf16.mxu0 0
    %6788 = vmatpush1.bf16.msra.mxu0 0
    %6789 = vmatprep.subr.bf16.mxu0 0
    %6790 = vmatpush1.bf16.msra.mxu0 0
    %6791 = vmatprep.mubr.bf16.mxu0 0
    %6792 = vmatmul.mubr.bf16.gmra.mrb[0].mxu0 %v6661
    %v6793 = vpop.f32.mrb[0].mxu0
    %v6794 = vadd.f32 0.0, %v6793
    %v6795 = vpop.f32.mrb[0].mxu0
    %v6796 = vadd.f32 0.0, %v6795
    %v6797 = vpop.f32.mrb[0].mxu0
    %v6798 = vpop.f32.mrb[0].mxu0
    %6799 = vdwg.mxu0
    %v6800 = vadd.f32 %v6471, %v6794
    %v6801 = vadd.f32 %v6472, %v6796
    %v6802 = vld [vmem:[%s3821] sm:$0xf]
    %6803 = vrot.lane.b32.xlu0 %v6488, 64
    %v6804 = vpop.permute.xlu0 %6803
    %6805 = vrot.lane.b32.xlu0 %v6489, 64
    %v6806 = vpop.permute.xlu0 %6805
    %v6807 = vsel %vm124, %v6804, %v6806
    %v6812 = vunpack.c.l.s4 1983009808
    %v6813 = vunpack.c.0.s8 %v6812
    %v6814 = vlaneseq
    %v6815 = vshrl.u32 %v6814, 7
    %v6816 = vsub.s32 %v6813, %v6815
    %v6817 = vrot.slane %v6802, %v6816
    %v6818 = vcombine.high %v6817, %v6817
    %v6821 = vsel %vm124, %v6160, %v6804
    %v6822 = vpack.c.bf16 %v6821, %v6821
    %v6823 = vpack.c.bf16 %v6807, %v6807
    %v6824 = vpack.c.bf16 %v6817, %v6817
    %v6825 = vpack.c.bf16 %v6818, %v6818
    %v6827 = vsel %vm124, %v6825, 0
    %6829 = vmatprep.subr.bf16.mxu0 0
    %6830 = vmatpush1.bf16.msra.mxu0 %v5046
    %6831 = vmatprep.subr.bf16.mxu0 0
    %6832 = vmatpush1.bf16.msra.mxu0 %v5047
    %6833 = vmatprep.subr.bf16.mxu0 0
    %6834 = vmatpush1.bf16.msra.mxu0 %v5048
    %6835 = vmatprep.subr.bf16.mxu0 0
    %6836 = vmatpush1.bf16.msra.mxu0 %v5049
    %6837 = vmatprep.subr.bf16.mxu0 0
    %6838 = vmatpush1.bf16.msra.mxu0 %v5050
    %6839 = vmatprep.subr.bf16.mxu0 0
    %6840 = vmatpush1.bf16.msra.mxu0 %v5051
    %6841 = vmatprep.subr.bf16.mxu0 0
    %6842 = vmatpush1.bf16.msra.mxu0 %v5052
    %6843 = vmatprep.subr.bf16.mxu0 0
    %6844 = vmatpush1.bf16.msra.mxu0 %v5053
    %6845 = vmatprep.subr.bf16.mxu0 0
    %6846 = vmatpush1.bf16.msra.mxu0 %v5054
    %6847 = vmatprep.subr.bf16.mxu0 0
    %6848 = vmatpush1.bf16.msra.mxu0 %v5055
    %6849 = vmatprep.subr.bf16.mxu0 0
    %6850 = vmatpush1.bf16.msra.mxu0 %v5056
    %6851 = vmatprep.subr.bf16.mxu0 0
    %6852 = vmatpush1.bf16.msra.mxu0 %v5057
    %6853 = vmatprep.subr.bf16.mxu0 0
    %6854 = vmatpush1.bf16.msra.mxu0 %v5058
    %6855 = vmatprep.subr.bf16.mxu0 0
    %6856 = vmatpush1.bf16.msra.mxu0 %v5059
    %6857 = vmatprep.subr.bf16.mxu0 0
    %6858 = vmatpush1.bf16.msra.mxu0 %v5060
    %6859 = vmatprep.subr.bf16.mxu0 0
    %6860 = vmatpush1.bf16.msra.mxu0 %v5061
    %6861 = vmatprep.mubr.bf16.mxu0 %v6164
    %6862 = vmatmul.mubr.bf16.gmra.mrb[0].mxu0 %v5508
    %v6863 = vpop.f32.mrb[0].mxu0
    %v6864 = vadd.f32 %v4804, %v6863
    %v6865 = vpop.f32.mrb[0].mxu0
    %v6866 = vpop.f32.mrb[0].mxu0
    %v6867 = vpop.f32.mrb[0].mxu0
    %6868 = vdwg.mxu0
    %6869 = vmatprep.subr.bf16.mxu0 0
    %6870 = vmatpush1.bf16.msra.mxu0 %v5062
    %6871 = vmatprep.subr.bf16.mxu0 0
    %6872 = vmatpush1.bf16.msra.mxu0 %v5063
    %6873 = vmatprep.subr.bf16.mxu0 0
    %6874 = vmatpush1.bf16.msra.mxu0 %v5064
    %6875 = vmatprep.subr.bf16.mxu0 0
    %6876 = vmatpush1.bf16.msra.mxu0 %v5065
    %6877 = vmatprep.subr.bf16.mxu0 0
    %6878 = vmatpush1.bf16.msra.mxu0 %v5066
    %6879 = vmatprep.subr.bf16.mxu0 0
    %6880 = vmatpush1.bf16.msra.mxu0 %v5067
    %6881 = vmatprep.subr.bf16.mxu0 0
    %6882 = vmatpush1.bf16.msra.mxu0 %v5068
    %6883 = vmatprep.subr.bf16.mxu0 0
    %6884 = vmatpush1.bf16.msra.mxu0 %v5069
    %6885 = vmatprep.subr.bf16.mxu0 0
    %6886 = vmatpush1.bf16.msra.mxu0 %v5070
    %6887 = vmatprep.subr.bf16.mxu0 0
    %6888 = vmatpush1.bf16.msra.mxu0 %v5071
    %6889 = vmatprep.subr.bf16.mxu0 0
    %6890 = vmatpush1.bf16.msra.mxu0 %v5072
    %6891 = vmatprep.subr.bf16.mxu0 0
    %6892 = vmatpush1.bf16.msra.mxu0 %v5073
    %6893 = vmatprep.subr.bf16.mxu0 0
    %6894 = vmatpush1.bf16.msra.mxu0 %v5074
    %6895 = vmatprep.subr.bf16.mxu0 0
    %6896 = vmatpush1.bf16.msra.mxu0 %v5075
    %6897 = vmatprep.subr.bf16.mxu0 0
    %6898 = vmatpush1.bf16.msra.mxu0 %v5076
    %6899 = vmatprep.subr.bf16.mxu0 0
    %6900 = vmatpush1.bf16.msra.mxu0 %v5077
    %6901 = vmatprep.mubr.bf16.mxu0 %v6166
    %6902 = vmatmul.mubr.bf16.gmra.mrb[0].mxu0 %v6165
    %v6903 = vpop.f32.mrb[0].mxu0
    %v6904 = vadd.f32 %v6864, %v6903
    %v6905 = vpop.f32.mrb[0].mxu0
    %v6906 = vpop.f32.mrb[0].mxu0
    %v6907 = vpop.f32.mrb[0].mxu0
    %6908 = vdwg.mxu0
    %6909 = vmatprep.subr.bf16.mxu0 0
    %6910 = vmatpush1.bf16.msra.mxu0 %v5078
    %6911 = vmatprep.subr.bf16.mxu0 0
    %6912 = vmatpush1.bf16.msra.mxu0 %v5079
    %6913 = vmatprep.subr.bf16.mxu0 0
    %6914 = vmatpush1.bf16.msra.mxu0 %v5080
    %6915 = vmatprep.subr.bf16.mxu0 0
    %6916 = vmatpush1.bf16.msra.mxu0 %v5081
    %6917 = vmatprep.subr.bf16.mxu0 0
    %6918 = vmatpush1.bf16.msra.mxu0 %v5082
    %6919 = vmatprep.subr.bf16.mxu0 0
    %6920 = vmatpush1.bf16.msra.mxu0 %v5083
    %6921 = vmatprep.subr.bf16.mxu0 0
    %6922 = vmatpush1.bf16.msra.mxu0 %v5084
    %6923 = vmatprep.subr.bf16.mxu0 0
    %6924 = vmatpush1.bf16.msra.mxu0 %v5085
    %6925 = vmatprep.subr.bf16.mxu0 0
    %6926 = vmatpush1.bf16.msra.mxu0 %v5086
    %6927 = vmatprep.subr.bf16.mxu0 0
    %6928 = vmatpush1.bf16.msra.mxu0 %v5087
    %6929 = vmatprep.subr.bf16.mxu0 0
    %6930 = vmatpush1.bf16.msra.mxu0 %v5088
    %6931 = vmatprep.subr.bf16.mxu0 0
    %6932 = vmatpush1.bf16.msra.mxu0 %v5089
    %6933 = vmatprep.subr.bf16.mxu0 0
    %6934 = vmatpush1.bf16.msra.mxu0 %v5090
    %6935 = vmatprep.subr.bf16.mxu0 0
    %6936 = vmatpush1.bf16.msra.mxu0 %v5091
    %6937 = vmatprep.subr.bf16.mxu0 0
    %6938 = vmatpush1.bf16.msra.mxu0 %v5092
    %6939 = vmatprep.subr.bf16.mxu0 0
    %6940 = vmatpush1.bf16.msra.mxu0 %v5093
    %6941 = vmatprep.mubr.bf16.mxu0 %v6823
    %6942 = vmatmul.mubr.bf16.gmra.mrb[0].mxu0 %v6822
    %v6943 = vpop.f32.mrb[0].mxu0
    %v6944 = vadd.f32 %v6904, %v6943
    %v6945 = vpop.f32.mrb[0].mxu0
    %v6946 = vpop.f32.mrb[0].mxu0
    %v6947 = vpop.f32.mrb[0].mxu0
    %6948 = vdwg.mxu0
    %6949 = vmatprep.subr.bf16.mxu0 0
    %6950 = vmatpush1.bf16.msra.mxu0 %v5094
    %6951 = vmatprep.subr.bf16.mxu0 0
    %6952 = vmatpush1.bf16.msra.mxu0 %v5095
    %6953 = vmatprep.subr.bf16.mxu0 0
    %6954 = vmatpush1.bf16.msra.mxu0 %v5096
    %6955 = vmatprep.subr.bf16.mxu0 0
    %6956 = vmatpush1.bf16.msra.mxu0 %v5097
    %6957 = vmatprep.subr.bf16.mxu0 0
    %6958 = vmatpush1.bf16.msra.mxu0 %v5098
    %6959 = vmatprep.subr.bf16.mxu0 0
    %6960 = vmatpush1.bf16.msra.mxu0 %v5099
    %6961 = vmatprep.subr.bf16.mxu0 0
    %6962 = vmatpush1.bf16.msra.mxu0 %v5100
    %6963 = vmatprep.subr.bf16.mxu0 0
    %6964 = vmatpush1.bf16.msra.mxu0 %v5101
    %6965 = vmatprep.subr.bf16.mxu0 0
    %6966 = vmatpush1.bf16.msra.mxu0 %v5102
    %6967 = vmatprep.subr.bf16.mxu0 0
    %6968 = vmatpush1.bf16.msra.mxu0 %v5103
    %6969 = vmatprep.subr.bf16.mxu0 0
    %6970 = vmatpush1.bf16.msra.mxu0 %v5104
    %6971 = vmatprep.subr.bf16.mxu0 0
    %6972 = vmatpush1.bf16.msra.mxu0 %v5105
    %6973 = vmatprep.subr.bf16.mxu0 0
    %6974 = vmatpush1.bf16.msra.mxu0 0
    %6975 = vmatprep.subr.bf16.mxu0 0
    %6976 = vmatpush1.bf16.msra.mxu0 0
    %6977 = vmatprep.subr.bf16.mxu0 0
    %6978 = vmatpush1.bf16.msra.mxu0 0
    %6979 = vmatprep.subr.bf16.mxu0 0
    %6980 = vmatpush1.bf16.msra.mxu0 0
    %6981 = vmatprep.mubr.bf16.mxu0 %v6827
    %6982 = vmatmul.mubr.bf16.gmra.mrb[0].mxu0 %v6824
    %v6983 = vpop.f32.mrb[0].mxu0
    %v6984 = vadd.f32 %v6944, %v6983
    %v6985 = vpop.f32.mrb[0].mxu0
    %v6986 = vpop.f32.mrb[0].mxu0
    %v6987 = vpop.f32.mrb[0].mxu0
    %6988 = vdwg.mxu0
    %v6989 = vmax.f32 %v6984, 0.0
    %v6990 = vpack.c.bf16 %v6989, %v6989
    %s6991 = scalar_lea.vmem %s6, 640
    %v6992 = vld [vmem:[%s6991] sm:$0xff]
    %v6993 = vld [vmem:[%s6991 + $0x8] sm:$0xff]
    %v6994 = vld [vmem:[%s6991 + $0x10] sm:$0xff]
    %v6995 = vld [vmem:[%s6991 + $0x18] sm:$0xff]
    %v6996 = vld [vmem:[%s6991 + $0x20] sm:$0xff]
    %v6997 = vld [vmem:[%s6991 + $0x28] sm:$0xff]
    %v6998 = vld [vmem:[%s6991 + $0x30] sm:$0xff]
    %v6999 = vld [vmem:[%s6991 + $0x38] sm:$0xff]
    %v7000 = vld [vmem:[%s6991 + $0x40] sm:$0xff]
    %v7001 = vld [vmem:[%s6991 + $0x48] sm:$0xff]
    %v7002 = vld [vmem:[%s6991 + $0x50] sm:$0xff]
    %v7003 = vld [vmem:[%s6991 + $0x58] sm:$0xff]
    %v7004 = vld [vmem:[%s6991 + $0x60] sm:$0xff]
    %v7005 = vld [vmem:[%s6991 + $0x68] sm:$0xff]
    %v7006 = vld [vmem:[%s6991 + $0x70] sm:$0xff]
    %v7007 = vld [vmem:[%s6991 + $0x78] sm:$0xff]
    %v7024 = vunpack.c.l.b16 %v6992
    %v7025 = vunpack.c.h.b16 %v6992
    %v7026 = vunpack.c.l.b16 %v6993
    %v7027 = vunpack.c.h.b16 %v6993
    %v7028 = vunpack.c.l.b16 %v6994
    %v7029 = vunpack.c.h.b16 %v6994
    %v7030 = vunpack.c.l.b16 %v6995
    %v7031 = vunpack.c.h.b16 %v6995
    %v7032 = vunpack.c.l.b16 %v6996
    %v7033 = vunpack.c.h.b16 %v6996
    %v7034 = vunpack.c.l.b16 %v6997
    %v7035 = vunpack.c.h.b16 %v6997
    %v7036 = vunpack.c.l.b16 %v6998
    %v7037 = vunpack.c.h.b16 %v6998
    %v7038 = vunpack.c.l.b16 %v6999
    %v7039 = vunpack.c.h.b16 %v6999
    %v7040 = vunpack.c.l.b16 %v7000
    %v7041 = vunpack.c.h.b16 %v7000
    %v7042 = vunpack.c.l.b16 %v7001
    %v7043 = vunpack.c.h.b16 %v7001
    %v7044 = vunpack.c.l.b16 %v7002
    %v7045 = vunpack.c.h.b16 %v7002
    %v7046 = vunpack.c.l.b16 %v7003
    %v7047 = vunpack.c.h.b16 %v7003
    %v7048 = vunpack.c.l.b16 %v7004
    %v7049 = vunpack.c.h.b16 %v7004
    %v7050 = vunpack.c.l.b16 %v7005
    %v7051 = vunpack.c.h.b16 %v7005
    %v7052 = vunpack.c.l.b16 %v7006
    %v7053 = vunpack.c.h.b16 %v7006
    %v7054 = vunpack.c.l.b16 %v7007
    %v7055 = vunpack.c.h.b16 %v7007
    %v7056 = vpack.c.b16 %v7026, %v7024
    %v7057 = vpack.c.b16 %v7027, %v7025
    %v7058 = vpack.c.b16 %v7030, %v7028
    %v7059 = vpack.c.b16 %v7031, %v7029
    %v7060 = vpack.c.b16 %v7034, %v7032
    %v7061 = vpack.c.b16 %v7035, %v7033
    %v7062 = vpack.c.b16 %v7038, %v7036
    %v7063 = vpack.c.b16 %v7039, %v7037
    %v7064 = vpack.c.b16 %v7042, %v7040
    %v7065 = vpack.c.b16 %v7043, %v7041
    %v7066 = vpack.c.b16 %v7046, %v7044
    %v7067 = vpack.c.b16 %v7047, %v7045
    %v7068 = vpack.c.b16 %v7050, %v7048
    %v7069 = vpack.c.b16 %v7051, %v7049
    %v7070 = vpack.c.b16 %v7054, %v7052
    %v7071 = vpack.c.b16 %v7055, %v7053
    %7088 = vmatprep.subr.bf16.mxu0 %v7057
    %7089 = vmatpush1.bf16.msra.mxu0 %v7056
    %7090 = vmatprep.subr.bf16.mxu0 %v7059
    %7091 = vmatpush1.bf16.msra.mxu0 %v7058
    %7092 = vmatprep.subr.bf16.mxu0 %v7061
    %7093 = vmatpush1.bf16.msra.mxu0 %v7060
    %7094 = vmatprep.subr.bf16.mxu0 %v7063
    %7095 = vmatpush1.bf16.msra.mxu0 %v7062
    %7096 = vmatprep.subr.bf16.mxu0 %v7065
    %7097 = vmatpush1.bf16.msra.mxu0 %v7064
    %7098 = vmatprep.subr.bf16.mxu0 %v7067
    %7099 = vmatpush1.bf16.msra.mxu0 %v7066
    %7100 = vmatprep.subr.bf16.mxu0 %v7069
    %7101 = vmatpush1.bf16.msra.mxu0 %v7068
    %7102 = vmatprep.subr.bf16.mxu0 %v7071
    %7103 = vmatpush1.bf16.msra.mxu0 %v7070
    %7104 = vmatprep.subr.bf16.mxu0 0
    %7105 = vmatpush1.bf16.msra.mxu0 0
    %7106 = vmatprep.subr.bf16.mxu0 0
    %7107 = vmatpush1.bf16.msra.mxu0 0
    %7108 = vmatprep.subr.bf16.mxu0 0
    %7109 = vmatpush1.bf16.msra.mxu0 0
    %7110 = vmatprep.subr.bf16.mxu0 0
    %7111 = vmatpush1.bf16.msra.mxu0 0
    %7112 = vmatprep.subr.bf16.mxu0 0
    %7113 = vmatpush1.bf16.msra.mxu0 0
    %7114 = vmatprep.subr.bf16.mxu0 0
    %7115 = vmatpush1.bf16.msra.mxu0 0
    %7116 = vmatprep.subr.bf16.mxu0 0
    %7117 = vmatpush1.bf16.msra.mxu0 0
    %7118 = vmatprep.subr.bf16.mxu0 0
    %7119 = vmatpush1.bf16.msra.mxu0 0
    %7120 = vmatprep.mubr.bf16.mxu0 0
    %7121 = vmatmul.mubr.bf16.gmra.mrb[0].mxu0 %v6990
    %v7122 = vpop.f32.mrb[0].mxu0
    %v7123 = vadd.f32 0.0, %v7122
    %v7124 = vpop.f32.mrb[0].mxu0
    %v7125 = vadd.f32 0.0, %v7124
    %v7126 = vpop.f32.mrb[0].mxu0
    %v7127 = vpop.f32.mrb[0].mxu0
    %7128 = vdwg.mxu0
    %v7129 = vadd.f32 %v6800, %v7123
    %v7130 = vadd.f32 %v6801, %v7125
    %v7131 = vld [vmem:[%s4192] sm:$0xf]
    %7132 = vrot.lane.b32.xlu0 %v6817, 64
    %v7133 = vpop.permute.xlu0 %7132
    %7134 = vrot.lane.b32.xlu0 %v6818, 64
    %v7135 = vpop.permute.xlu0 %7134
    %v7136 = vsel %vm124, %v7133, %v7135
    %v7141 = vunpack.c.l.s4 1983009808
    %v7142 = vunpack.c.0.s8 %v7141
    %v7143 = vlaneseq
    %v7144 = vshrl.u32 %v7143, 7
    %v7145 = vsub.s32 %v7142, %v7144
    %v7146 = vrot.slane %v7131, %v7145
    %v7147 = vcombine.high %v7146, %v7146
    %v7150 = vsel %vm124, %v6489, %v7133
    %v7151 = vpack.c.bf16 %v7150, %v7150
    %v7152 = vpack.c.bf16 %v7136, %v7136
    %v7153 = vpack.c.bf16 %v7146, %v7146
    %v7154 = vpack.c.bf16 %v7147, %v7147
    %v7156 = vsel %vm124, %v7154, 0
    %7158 = vmatprep.subr.bf16.mxu0 0
    %7159 = vmatpush1.bf16.msra.mxu0 %v5046
    %7160 = vmatprep.subr.bf16.mxu0 0
    %7161 = vmatpush1.bf16.msra.mxu0 %v5047
    %7162 = vmatprep.subr.bf16.mxu0 0
    %7163 = vmatpush1.bf16.msra.mxu0 %v5048
    %7164 = vmatprep.subr.bf16.mxu0 0
    %7165 = vmatpush1.bf16.msra.mxu0 %v5049
    %7166 = vmatprep.subr.bf16.mxu0 0
    %7167 = vmatpush1.bf16.msra.mxu0 %v5050
    %7168 = vmatprep.subr.bf16.mxu0 0
    %7169 = vmatpush1.bf16.msra.mxu0 %v5051
    %7170 = vmatprep.subr.bf16.mxu0 0
    %7171 = vmatpush1.bf16.msra.mxu0 %v5052
    %7172 = vmatprep.subr.bf16.mxu0 0
    %7173 = vmatpush1.bf16.msra.mxu0 %v5053
    %7174 = vmatprep.subr.bf16.mxu0 0
    %7175 = vmatpush1.bf16.msra.mxu0 %v5054
    %7176 = vmatprep.subr.bf16.mxu0 0
    %7177 = vmatpush1.bf16.msra.mxu0 %v5055
    %7178 = vmatprep.subr.bf16.mxu0 0
    %7179 = vmatpush1.bf16.msra.mxu0 %v5056
    %7180 = vmatprep.subr.bf16.mxu0 0
    %7181 = vmatpush1.bf16.msra.mxu0 %v5057
    %7182 = vmatprep.subr.bf16.mxu0 0
    %7183 = vmatpush1.bf16.msra.mxu0 %v5058
    %7184 = vmatprep.subr.bf16.mxu0 0
    %7185 = vmatpush1.bf16.msra.mxu0 %v5059
    %7186 = vmatprep.subr.bf16.mxu0 0
    %7187 = vmatpush1.bf16.msra.mxu0 %v5060
    %7188 = vmatprep.subr.bf16.mxu0 0
    %7189 = vmatpush1.bf16.msra.mxu0 %v5061
    %7190 = vmatprep.mubr.bf16.mxu0 %v6493
    %7191 = vmatmul.mubr.bf16.gmra.mrb[0].mxu0 %v5837
    %v7192 = vpop.f32.mrb[0].mxu0
    %v7193 = vadd.f32 %v4804, %v7192
    %v7194 = vpop.f32.mrb[0].mxu0
    %v7195 = vpop.f32.mrb[0].mxu0
    %v7196 = vpop.f32.mrb[0].mxu0
    %7197 = vdwg.mxu0
    %7198 = vmatprep.subr.bf16.mxu0 0
    %7199 = vmatpush1.bf16.msra.mxu0 %v5062
    %7200 = vmatprep.subr.bf16.mxu0 0
    %7201 = vmatpush1.bf16.msra.mxu0 %v5063
    %7202 = vmatprep.subr.bf16.mxu0 0
    %7203 = vmatpush1.bf16.msra.mxu0 %v5064
    %7204 = vmatprep.subr.bf16.mxu0 0
    %7205 = vmatpush1.bf16.msra.mxu0 %v5065
    %7206 = vmatprep.subr.bf16.mxu0 0
    %7207 = vmatpush1.bf16.msra.mxu0 %v5066
    %7208 = vmatprep.subr.bf16.mxu0 0
    %7209 = vmatpush1.bf16.msra.mxu0 %v5067
    %7210 = vmatprep.subr.bf16.mxu0 0
    %7211 = vmatpush1.bf16.msra.mxu0 %v5068
    %7212 = vmatprep.subr.bf16.mxu0 0
    %7213 = vmatpush1.bf16.msra.mxu0 %v5069
    %7214 = vmatprep.subr.bf16.mxu0 0
    %7215 = vmatpush1.bf16.msra.mxu0 %v5070
    %7216 = vmatprep.subr.bf16.mxu0 0
    %7217 = vmatpush1.bf16.msra.mxu0 %v5071
    %7218 = vmatprep.subr.bf16.mxu0 0
    %7219 = vmatpush1.bf16.msra.mxu0 %v5072
    %7220 = vmatprep.subr.bf16.mxu0 0
    %7221 = vmatpush1.bf16.msra.mxu0 %v5073
    %7222 = vmatprep.subr.bf16.mxu0 0
    %7223 = vmatpush1.bf16.msra.mxu0 %v5074
    %7224 = vmatprep.subr.bf16.mxu0 0
    %7225 = vmatpush1.bf16.msra.mxu0 %v5075
    %7226 = vmatprep.subr.bf16.mxu0 0
    %7227 = vmatpush1.bf16.msra.mxu0 %v5076
    %7228 = vmatprep.subr.bf16.mxu0 0
    %7229 = vmatpush1.bf16.msra.mxu0 %v5077
    %7230 = vmatprep.mubr.bf16.mxu0 %v6495
    %7231 = vmatmul.mubr.bf16.gmra.mrb[0].mxu0 %v6494
    %v7232 = vpop.f32.mrb[0].mxu0
    %v7233 = vadd.f32 %v7193, %v7232
    %v7234 = vpop.f32.mrb[0].mxu0
    %v7235 = vpop.f32.mrb[0].mxu0
    %v7236 = vpop.f32.mrb[0].mxu0
    %7237 = vdwg.mxu0
    %7238 = vmatprep.subr.bf16.mxu0 0
    %7239 = vmatpush1.bf16.msra.mxu0 %v5078
    %7240 = vmatprep.subr.bf16.mxu0 0
    %7241 = vmatpush1.bf16.msra.mxu0 %v5079
    %7242 = vmatprep.subr.bf16.mxu0 0
    %7243 = vmatpush1.bf16.msra.mxu0 %v5080
    %7244 = vmatprep.subr.bf16.mxu0 0
    %7245 = vmatpush1.bf16.msra.mxu0 %v5081
    %7246 = vmatprep.subr.bf16.mxu0 0
    %7247 = vmatpush1.bf16.msra.mxu0 %v5082
    %7248 = vmatprep.subr.bf16.mxu0 0
    %7249 = vmatpush1.bf16.msra.mxu0 %v5083
    %7250 = vmatprep.subr.bf16.mxu0 0
    %7251 = vmatpush1.bf16.msra.mxu0 %v5084
    %7252 = vmatprep.subr.bf16.mxu0 0
    %7253 = vmatpush1.bf16.msra.mxu0 %v5085
    %7254 = vmatprep.subr.bf16.mxu0 0
    %7255 = vmatpush1.bf16.msra.mxu0 %v5086
    %7256 = vmatprep.subr.bf16.mxu0 0
    %7257 = vmatpush1.bf16.msra.mxu0 %v5087
    %7258 = vmatprep.subr.bf16.mxu0 0
    %7259 = vmatpush1.bf16.msra.mxu0 %v5088
    %7260 = vmatprep.subr.bf16.mxu0 0
    %7261 = vmatpush1.bf16.msra.mxu0 %v5089
    %7262 = vmatprep.subr.bf16.mxu0 0
    %7263 = vmatpush1.bf16.msra.mxu0 %v5090
    %7264 = vmatprep.subr.bf16.mxu0 0
    %7265 = vmatpush1.bf16.msra.mxu0 %v5091
    %7266 = vmatprep.subr.bf16.mxu0 0
    %7267 = vmatpush1.bf16.msra.mxu0 %v5092
    %7268 = vmatprep.subr.bf16.mxu0 0
    %7269 = vmatpush1.bf16.msra.mxu0 %v5093
    %7270 = vmatprep.mubr.bf16.mxu0 %v7152
    %7271 = vmatmul.mubr.bf16.gmra.mrb[0].mxu0 %v7151
    %v7272 = vpop.f32.mrb[0].mxu0
    %v7273 = vadd.f32 %v7233, %v7272
    %v7274 = vpop.f32.mrb[0].mxu0
    %v7275 = vpop.f32.mrb[0].mxu0
    %v7276 = vpop.f32.mrb[0].mxu0
    %7277 = vdwg.mxu0
    %7278 = vmatprep.subr.bf16.mxu0 0
    %7279 = vmatpush1.bf16.msra.mxu0 %v5094
    %7280 = vmatprep.subr.bf16.mxu0 0
    %7281 = vmatpush1.bf16.msra.mxu0 %v5095
    %7282 = vmatprep.subr.bf16.mxu0 0
    %7283 = vmatpush1.bf16.msra.mxu0 %v5096
    %7284 = vmatprep.subr.bf16.mxu0 0
    %7285 = vmatpush1.bf16.msra.mxu0 %v5097
    %7286 = vmatprep.subr.bf16.mxu0 0
    %7287 = vmatpush1.bf16.msra.mxu0 %v5098
    %7288 = vmatprep.subr.bf16.mxu0 0
    %7289 = vmatpush1.bf16.msra.mxu0 %v5099
    %7290 = vmatprep.subr.bf16.mxu0 0
    %7291 = vmatpush1.bf16.msra.mxu0 %v5100
    %7292 = vmatprep.subr.bf16.mxu0 0
    %7293 = vmatpush1.bf16.msra.mxu0 %v5101
    %7294 = vmatprep.subr.bf16.mxu0 0
    %7295 = vmatpush1.bf16.msra.mxu0 %v5102
    %7296 = vmatprep.subr.bf16.mxu0 0
    %7297 = vmatpush1.bf16.msra.mxu0 %v5103
    %7298 = vmatprep.subr.bf16.mxu0 0
    %7299 = vmatpush1.bf16.msra.mxu0 %v5104
    %7300 = vmatprep.subr.bf16.mxu0 0
    %7301 = vmatpush1.bf16.msra.mxu0 %v5105
    %7302 = vmatprep.subr.bf16.mxu0 0
    %7303 = vmatpush1.bf16.msra.mxu0 0
    %7304 = vmatprep.subr.bf16.mxu0 0
    %7305 = vmatpush1.bf16.msra.mxu0 0
    %7306 = vmatprep.subr.bf16.mxu0 0
    %7307 = vmatpush1.bf16.msra.mxu0 0
    %7308 = vmatprep.subr.bf16.mxu0 0
    %7309 = vmatpush1.bf16.msra.mxu0 0
    %7310 = vmatprep.mubr.bf16.mxu0 %v7156
    %7311 = vmatmul.mubr.bf16.gmra.mrb[0].mxu0 %v7153
    %v7312 = vpop.f32.mrb[0].mxu0
    %v7313 = vadd.f32 %v7273, %v7312
    %v7314 = vpop.f32.mrb[0].mxu0
    %v7315 = vpop.f32.mrb[0].mxu0
    %v7316 = vpop.f32.mrb[0].mxu0
    %7317 = vdwg.mxu0
    %v7318 = vmax.f32 %v7313, 0.0
    %v7319 = vpack.c.bf16 %v7318, %v7318
    %s7320 = scalar_lea.vmem %s6, 768
    %v7321 = vld [vmem:[%s7320] sm:$0xff]
    %v7322 = vld [vmem:[%s7320 + $0x8] sm:$0xff]
    %v7323 = vld [vmem:[%s7320 + $0x10] sm:$0xff]
    %v7324 = vld [vmem:[%s7320 + $0x18] sm:$0xff]
    %v7325 = vld [vmem:[%s7320 + $0x20] sm:$0xff]
    %v7326 = vld [vmem:[%s7320 + $0x28] sm:$0xff]
    %v7327 = vld [vmem:[%s7320 + $0x30] sm:$0xff]
    %v7328 = vld [vmem:[%s7320 + $0x38] sm:$0xff]
    %v7329 = vld [vmem:[%s7320 + $0x40] sm:$0xff]
    %v7330 = vld [vmem:[%s7320 + $0x48] sm:$0xff]
    %v7331 = vld [vmem:[%s7320 + $0x50] sm:$0xff]
    %v7332 = vld [vmem:[%s7320 + $0x58] sm:$0xff]
    %v7333 = vld [vmem:[%s7320 + $0x60] sm:$0xff]
    %v7334 = vld [vmem:[%s7320 + $0x68] sm:$0xff]
    %v7335 = vld [vmem:[%s7320 + $0x70] sm:$0xff]
    %v7336 = vld [vmem:[%s7320 + $0x78] sm:$0xff]
    %v7353 = vunpack.c.l.b16 %v7321
    %v7354 = vunpack.c.h.b16 %v7321
    %v7355 = vunpack.c.l.b16 %v7322
    %v7356 = vunpack.c.h.b16 %v7322
    %v7357 = vunpack.c.l.b16 %v7323
    %v7358 = vunpack.c.h.b16 %v7323
    %v7359 = vunpack.c.l.b16 %v7324
    %v7360 = vunpack.c.h.b16 %v7324
    %v7361 = vunpack.c.l.b16 %v7325
    %v7362 = vunpack.c.h.b16 %v7325
    %v7363 = vunpack.c.l.b16 %v7326
    %v7364 = vunpack.c.h.b16 %v7326
    %v7365 = vunpack.c.l.b16 %v7327
    %v7366 = vunpack.c.h.b16 %v7327
    %v7367 = vunpack.c.l.b16 %v7328
    %v7368 = vunpack.c.h.b16 %v7328
    %v7369 = vunpack.c.l.b16 %v7329
    %v7370 = vunpack.c.h.b16 %v7329
    %v7371 = vunpack.c.l.b16 %v7330
    %v7372 = vunpack.c.h.b16 %v7330
    %v7373 = vunpack.c.l.b16 %v7331
    %v7374 = vunpack.c.h.b16 %v7331
    %v7375 = vunpack.c.l.b16 %v7332
    %v7376 = vunpack.c.h.b16 %v7332
    %v7377 = vunpack.c.l.b16 %v7333
    %v7378 = vunpack.c.h.b16 %v7333
    %v7379 = vunpack.c.l.b16 %v7334
    %v7380 = vunpack.c.h.b16 %v7334
    %v7381 = vunpack.c.l.b16 %v7335
    %v7382 = vunpack.c.h.b16 %v7335
    %v7383 = vunpack.c.l.b16 %v7336
    %v7384 = vunpack.c.h.b16 %v7336
    %v7385 = vpack.c.b16 %v7355, %v7353
    %v7386 = vpack.c.b16 %v7356, %v7354
    %v7387 = vpack.c.b16 %v7359, %v7357
    %v7388 = vpack.c.b16 %v7360, %v7358
    %v7389 = vpack.c.b16 %v7363, %v7361
    %v7390 = vpack.c.b16 %v7364, %v7362
    %v7391 = vpack.c.b16 %v7367, %v7365
    %v7392 = vpack.c.b16 %v7368, %v7366
    %v7393 = vpack.c.b16 %v7371, %v7369
    %v7394 = vpack.c.b16 %v7372, %v7370
    %v7395 = vpack.c.b16 %v7375, %v7373
    %v7396 = vpack.c.b16 %v7376, %v7374
    %v7397 = vpack.c.b16 %v7379, %v7377
    %v7398 = vpack.c.b16 %v7380, %v7378
    %v7399 = vpack.c.b16 %v7383, %v7381
    %v7400 = vpack.c.b16 %v7384, %v7382
    %7417 = vmatprep.subr.bf16.mxu0 %v7386
    %7418 = vmatpush1.bf16.msra.mxu0 %v7385
    %7419 = vmatprep.subr.bf16.mxu0 %v7388
    %7420 = vmatpush1.bf16.msra.mxu0 %v7387
    %7421 = vmatprep.subr.bf16.mxu0 %v7390
    %7422 = vmatpush1.bf16.msra.mxu0 %v7389
    %7423 = vmatprep.subr.bf16.mxu0 %v7392
    %7424 = vmatpush1.bf16.msra.mxu0 %v7391
    %7425 = vmatprep.subr.bf16.mxu0 %v7394
    %7426 = vmatpush1.bf16.msra.mxu0 %v7393
    %7427 = vmatprep.subr.bf16.mxu0 %v7396
    %7428 = vmatpush1.bf16.msra.mxu0 %v7395
    %7429 = vmatprep.subr.bf16.mxu0 %v7398
    %7430 = vmatpush1.bf16.msra.mxu0 %v7397
    %7431 = vmatprep.subr.bf16.mxu0 %v7400
    %7432 = vmatpush1.bf16.msra.mxu0 %v7399
    %7433 = vmatprep.subr.bf16.mxu0 0
    %7434 = vmatpush1.bf16.msra.mxu0 0
    %7435 = vmatprep.subr.bf16.mxu0 0
    %7436 = vmatpush1.bf16.msra.mxu0 0
    %7437 = vmatprep.subr.bf16.mxu0 0
    %7438 = vmatpush1.bf16.msra.mxu0 0
    %7439 = vmatprep.subr.bf16.mxu0 0
    %7440 = vmatpush1.bf16.msra.mxu0 0
    %7441 = vmatprep.subr.bf16.mxu0 0
    %7442 = vmatpush1.bf16.msra.mxu0 0
    %7443 = vmatprep.subr.bf16.mxu0 0
    %7444 = vmatpush1.bf16.msra.mxu0 0
    %7445 = vmatprep.subr.bf16.mxu0 0
    %7446 = vmatpush1.bf16.msra.mxu0 0
    %7447 = vmatprep.subr.bf16.mxu0 0
    %7448 = vmatpush1.bf16.msra.mxu0 0
    %7449 = vmatprep.mubr.bf16.mxu0 0
    %7450 = vmatmul.mubr.bf16.gmra.mrb[0].mxu0 %v7319
    %v7451 = vpop.f32.mrb[0].mxu0
    %v7452 = vadd.f32 0.0, %v7451
    %v7453 = vpop.f32.mrb[0].mxu0
    %v7454 = vadd.f32 0.0, %v7453
    %v7455 = vpop.f32.mrb[0].mxu0
    %v7456 = vpop.f32.mrb[0].mxu0
    %7457 = vdwg.mxu0
    %v7458 = vadd.f32 %v7129, %v7452
    %v7459 = vadd.f32 %v7130, %v7454
    %v7460 = vld [vmem:[%s4563] sm:$0xf]
    %7461 = vrot.lane.b32.xlu0 %v7146, 64
    %v7462 = vpop.permute.xlu0 %7461
    %7463 = vrot.lane.b32.xlu0 %v7147, 64
    %v7464 = vpop.permute.xlu0 %7463
    %v7465 = vsel %vm124, %v7462, %v7464
    %v7470 = vunpack.c.l.s4 1983009808
    %v7471 = vunpack.c.0.s8 %v7470
    %v7472 = vlaneseq
    %v7473 = vshrl.u32 %v7472, 7
    %v7474 = vsub.s32 %v7471, %v7473
    %v7475 = vrot.slane %v7460, %v7474
    %v7476 = vcombine.high %v7475, %v7475
    %v7479 = vsel %vm124, %v6818, %v7462
    %v7480 = vpack.c.bf16 %v7479, %v7479
    %v7481 = vpack.c.bf16 %v7465, %v7465
    %v7482 = vpack.c.bf16 %v7475, %v7475
    %v7483 = vpack.c.bf16 %v7476, %v7476
    %v7485 = vsel %vm124, %v7483, 0
    %7487 = vmatprep.subr.bf16.mxu0 0
    %7488 = vmatpush1.bf16.msra.mxu0 %v5046
    %7489 = vmatprep.subr.bf16.mxu0 0
    %7490 = vmatpush1.bf16.msra.mxu0 %v5047
    %7491 = vmatprep.subr.bf16.mxu0 0
    %7492 = vmatpush1.bf16.msra.mxu0 %v5048
    %7493 = vmatprep.subr.bf16.mxu0 0
    %7494 = vmatpush1.bf16.msra.mxu0 %v5049
    %7495 = vmatprep.subr.bf16.mxu0 0
    %7496 = vmatpush1.bf16.msra.mxu0 %v5050
    %7497 = vmatprep.subr.bf16.mxu0 0
    %7498 = vmatpush1.bf16.msra.mxu0 %v5051
    %7499 = vmatprep.subr.bf16.mxu0 0
    %7500 = vmatpush1.bf16.msra.mxu0 %v5052
    %7501 = vmatprep.subr.bf16.mxu0 0
    %7502 = vmatpush1.bf16.msra.mxu0 %v5053
    %7503 = vmatprep.subr.bf16.mxu0 0
    %7504 = vmatpush1.bf16.msra.mxu0 %v5054
    %7505 = vmatprep.subr.bf16.mxu0 0
    %7506 = vmatpush1.bf16.msra.mxu0 %v5055
    %7507 = vmatprep.subr.bf16.mxu0 0
    %7508 = vmatpush1.bf16.msra.mxu0 %v5056
    %7509 = vmatprep.subr.bf16.mxu0 0
    %7510 = vmatpush1.bf16.msra.mxu0 %v5057
    %7511 = vmatprep.subr.bf16.mxu0 0
    %7512 = vmatpush1.bf16.msra.mxu0 %v5058
    %7513 = vmatprep.subr.bf16.mxu0 0
    %7514 = vmatpush1.bf16.msra.mxu0 %v5059
    %7515 = vmatprep.subr.bf16.mxu0 0
    %7516 = vmatpush1.bf16.msra.mxu0 %v5060
    %7517 = vmatprep.subr.bf16.mxu0 0
    %7518 = vmatpush1.bf16.msra.mxu0 %v5061
    %7519 = vmatprep.mubr.bf16.mxu0 %v6822
    %7520 = vmatmul.mubr.bf16.gmra.mrb[0].mxu0 %v6166
    %v7521 = vpop.f32.mrb[0].mxu0
    %v7522 = vadd.f32 %v4804, %v7521
    %v7523 = vpop.f32.mrb[0].mxu0
    %v7524 = vpop.f32.mrb[0].mxu0
    %v7525 = vpop.f32.mrb[0].mxu0
    %7526 = vdwg.mxu0
    %7527 = vmatprep.subr.bf16.mxu0 0
    %7528 = vmatpush1.bf16.msra.mxu0 %v5062
    %7529 = vmatprep.subr.bf16.mxu0 0
    %7530 = vmatpush1.bf16.msra.mxu0 %v5063
    %7531 = vmatprep.subr.bf16.mxu0 0
    %7532 = vmatpush1.bf16.msra.mxu0 %v5064
    %7533 = vmatprep.subr.bf16.mxu0 0
    %7534 = vmatpush1.bf16.msra.mxu0 %v5065
    %7535 = vmatprep.subr.bf16.mxu0 0
    %7536 = vmatpush1.bf16.msra.mxu0 %v5066
    %7537 = vmatprep.subr.bf16.mxu0 0
    %7538 = vmatpush1.bf16.msra.mxu0 %v5067
    %7539 = vmatprep.subr.bf16.mxu0 0
    %7540 = vmatpush1.bf16.msra.mxu0 %v5068
    %7541 = vmatprep.subr.bf16.mxu0 0
    %7542 = vmatpush1.bf16.msra.mxu0 %v5069
    %7543 = vmatprep.subr.bf16.mxu0 0
    %7544 = vmatpush1.bf16.msra.mxu0 %v5070
    %7545 = vmatprep.subr.bf16.mxu0 0
    %7546 = vmatpush1.bf16.msra.mxu0 %v5071
    %7547 = vmatprep.subr.bf16.mxu0 0
    %7548 = vmatpush1.bf16.msra.mxu0 %v5072
    %7549 = vmatprep.subr.bf16.mxu0 0
    %7550 = vmatpush1.bf16.msra.mxu0 %v5073
    %7551 = vmatprep.subr.bf16.mxu0 0
    %7552 = vmatpush1.bf16.msra.mxu0 %v5074
    %7553 = vmatprep.subr.bf16.mxu0 0
    %7554 = vmatpush1.bf16.msra.mxu0 %v5075
    %7555 = vmatprep.subr.bf16.mxu0 0
    %7556 = vmatpush1.bf16.msra.mxu0 %v5076
    %7557 = vmatprep.subr.bf16.mxu0 0
    %7558 = vmatpush1.bf16.msra.mxu0 %v5077
    %7559 = vmatprep.mubr.bf16.mxu0 %v6824
    %7560 = vmatmul.mubr.bf16.gmra.mrb[0].mxu0 %v6823
    %v7561 = vpop.f32.mrb[0].mxu0
    %v7562 = vadd.f32 %v7522, %v7561
    %v7563 = vpop.f32.mrb[0].mxu0
    %v7564 = vpop.f32.mrb[0].mxu0
    %v7565 = vpop.f32.mrb[0].mxu0
    %7566 = vdwg.mxu0
    %7567 = vmatprep.subr.bf16.mxu0 0
    %7568 = vmatpush1.bf16.msra.mxu0 %v5078
    %7569 = vmatprep.subr.bf16.mxu0 0
    %7570 = vmatpush1.bf16.msra.mxu0 %v5079
    %7571 = vmatprep.subr.bf16.mxu0 0
    %7572 = vmatpush1.bf16.msra.mxu0 %v5080
    %7573 = vmatprep.subr.bf16.mxu0 0
    %7574 = vmatpush1.bf16.msra.mxu0 %v5081
    %7575 = vmatprep.subr.bf16.mxu0 0
    %7576 = vmatpush1.bf16.msra.mxu0 %v5082
    %7577 = vmatprep.subr.bf16.mxu0 0
    %7578 = vmatpush1.bf16.msra.mxu0 %v5083
    %7579 = vmatprep.subr.bf16.mxu0 0
    %7580 = vmatpush1.bf16.msra.mxu0 %v5084
    %7581 = vmatprep.subr.bf16.mxu0 0
    %7582 = vmatpush1.bf16.msra.mxu0 %v5085
    %7583 = vmatprep.subr.bf16.mxu0 0
    %7584 = vmatpush1.bf16.msra.mxu0 %v5086
    %7585 = vmatprep.subr.bf16.mxu0 0
    %7586 = vmatpush1.bf16.msra.mxu0 %v5087
    %7587 = vmatprep.subr.bf16.mxu0 0
    %7588 = vmatpush1.bf16.msra.mxu0 %v5088
    %7589 = vmatprep.subr.bf16.mxu0 0
    %7590 = vmatpush1.bf16.msra.mxu0 %v5089
    %7591 = vmatprep.subr.bf16.mxu0 0
    %7592 = vmatpush1.bf16.msra.mxu0 %v5090
    %7593 = vmatprep.subr.bf16.mxu0 0
    %7594 = vmatpush1.bf16.msra.mxu0 %v5091
    %7595 = vmatprep.subr.bf16.mxu0 0
    %7596 = vmatpush1.bf16.msra.mxu0 %v5092
    %7597 = vmatprep.subr.bf16.mxu0 0
    %7598 = vmatpush1.bf16.msra.mxu0 %v5093
    %7599 = vmatprep.mubr.bf16.mxu0 %v7481
    %7600 = vmatmul.mubr.bf16.gmra.mrb[0].mxu0 %v7480
    %v7601 = vpop.f32.mrb[0].mxu0
    %v7602 = vadd.f32 %v7562, %v7601
    %v7603 = vpop.f32.mrb[0].mxu0
    %v7604 = vpop.f32.mrb[0].mxu0
    %v7605 = vpop.f32.mrb[0].mxu0
    %7606 = vdwg.mxu0
    %7607 = vmatprep.subr.bf16.mxu0 0
    %7608 = vmatpush1.bf16.msra.mxu0 %v5094
    %7609 = vmatprep.subr.bf16.mxu0 0
    %7610 = vmatpush1.bf16.msra.mxu0 %v5095
    %7611 = vmatprep.subr.bf16.mxu0 0
    %7612 = vmatpush1.bf16.msra.mxu0 %v5096
    %7613 = vmatprep.subr.bf16.mxu0 0
    %7614 = vmatpush1.bf16.msra.mxu0 %v5097
    %7615 = vmatprep.subr.bf16.mxu0 0
    %7616 = vmatpush1.bf16.msra.mxu0 %v5098
    %7617 = vmatprep.subr.bf16.mxu0 0
    %7618 = vmatpush1.bf16.msra.mxu0 %v5099
    %7619 = vmatprep.subr.bf16.mxu0 0
    %7620 = vmatpush1.bf16.msra.mxu0 %v5100
    %7621 = vmatprep.subr.bf16.mxu0 0
    %7622 = vmatpush1.bf16.msra.mxu0 %v5101
    %7623 = vmatprep.subr.bf16.mxu0 0
    %7624 = vmatpush1.bf16.msra.mxu0 %v5102
    %7625 = vmatprep.subr.bf16.mxu0 0
    %7626 = vmatpush1.bf16.msra.mxu0 %v5103
    %7627 = vmatprep.subr.bf16.mxu0 0
    %7628 = vmatpush1.bf16.msra.mxu0 %v5104
    %7629 = vmatprep.subr.bf16.mxu0 0
    %7630 = vmatpush1.bf16.msra.mxu0 %v5105
    %7631 = vmatprep.subr.bf16.mxu0 0
    %7632 = vmatpush1.bf16.msra.mxu0 0
    %7633 = vmatprep.subr.bf16.mxu0 0
    %7634 = vmatpush1.bf16.msra.mxu0 0
    %7635 = vmatprep.subr.bf16.mxu0 0
    %7636 = vmatpush1.bf16.msra.mxu0 0
    %7637 = vmatprep.subr.bf16.mxu0 0
    %7638 = vmatpush1.bf16.msra.mxu0 0
    %7639 = vmatprep.mubr.bf16.mxu0 %v7485
    %7640 = vmatmul.mubr.bf16.gmra.mrb[0].mxu0 %v7482
    %v7641 = vpop.f32.mrb[0].mxu0
    %v7642 = vadd.f32 %v7602, %v7641
    %v7643 = vpop.f32.mrb[0].mxu0
    %v7644 = vpop.f32.mrb[0].mxu0
    %v7645 = vpop.f32.mrb[0].mxu0
    %7646 = vdwg.mxu0
    %v7647 = vmax.f32 %v7642, 0.0
    %v7648 = vpack.c.bf16 %v7647, %v7647
    %s7649 = scalar_lea.vmem %s6, 896
    %v7650 = vld [vmem:[%s7649] sm:$0xff]
    %v7651 = vld [vmem:[%s7649 + $0x8] sm:$0xff]
    %v7652 = vld [vmem:[%s7649 + $0x10] sm:$0xff]
    %v7653 = vld [vmem:[%s7649 + $0x18] sm:$0xff]
    %v7654 = vld [vmem:[%s7649 + $0x20] sm:$0xff]
    %v7655 = vld [vmem:[%s7649 + $0x28] sm:$0xff]
    %v7656 = vld [vmem:[%s7649 + $0x30] sm:$0xff]
    %v7657 = vld [vmem:[%s7649 + $0x38] sm:$0xff]
    %v7658 = vld [vmem:[%s7649 + $0x40] sm:$0xff]
    %v7659 = vld [vmem:[%s7649 + $0x48] sm:$0xff]
    %v7660 = vld [vmem:[%s7649 + $0x50] sm:$0xff]
    %v7661 = vld [vmem:[%s7649 + $0x58] sm:$0xff]
    %v7662 = vld [vmem:[%s7649 + $0x60] sm:$0xff]
    %v7663 = vld [vmem:[%s7649 + $0x68] sm:$0xff]
    %v7664 = vld [vmem:[%s7649 + $0x70] sm:$0xff]
    %v7665 = vld [vmem:[%s7649 + $0x78] sm:$0xff]
    %v7682 = vunpack.c.l.b16 %v7650
    %v7683 = vunpack.c.h.b16 %v7650
    %v7684 = vunpack.c.l.b16 %v7651
    %v7685 = vunpack.c.h.b16 %v7651
    %v7686 = vunpack.c.l.b16 %v7652
    %v7687 = vunpack.c.h.b16 %v7652
    %v7688 = vunpack.c.l.b16 %v7653
    %v7689 = vunpack.c.h.b16 %v7653
    %v7690 = vunpack.c.l.b16 %v7654
    %v7691 = vunpack.c.h.b16 %v7654
    %v7692 = vunpack.c.l.b16 %v7655
    %v7693 = vunpack.c.h.b16 %v7655
    %v7694 = vunpack.c.l.b16 %v7656
    %v7695 = vunpack.c.h.b16 %v7656
    %v7696 = vunpack.c.l.b16 %v7657
    %v7697 = vunpack.c.h.b16 %v7657
    %v7698 = vunpack.c.l.b16 %v7658
    %v7699 = vunpack.c.h.b16 %v7658
    %v7700 = vunpack.c.l.b16 %v7659
    %v7701 = vunpack.c.h.b16 %v7659
    %v7702 = vunpack.c.l.b16 %v7660
    %v7703 = vunpack.c.h.b16 %v7660
    %v7704 = vunpack.c.l.b16 %v7661
    %v7705 = vunpack.c.h.b16 %v7661
    %v7706 = vunpack.c.l.b16 %v7662
    %v7707 = vunpack.c.h.b16 %v7662
    %v7708 = vunpack.c.l.b16 %v7663
    %v7709 = vunpack.c.h.b16 %v7663
    %v7710 = vunpack.c.l.b16 %v7664
    %v7711 = vunpack.c.h.b16 %v7664
    %v7712 = vunpack.c.l.b16 %v7665
    %v7713 = vunpack.c.h.b16 %v7665
    %v7714 = vpack.c.b16 %v7684, %v7682
    %v7715 = vpack.c.b16 %v7685, %v7683
    %v7716 = vpack.c.b16 %v7688, %v7686
    %v7717 = vpack.c.b16 %v7689, %v7687
    %v7718 = vpack.c.b16 %v7692, %v7690
    %v7719 = vpack.c.b16 %v7693, %v7691
    %v7720 = vpack.c.b16 %v7696, %v7694
    %v7721 = vpack.c.b16 %v7697, %v7695
    %v7722 = vpack.c.b16 %v7700, %v7698
    %v7723 = vpack.c.b16 %v7701, %v7699
    %v7724 = vpack.c.b16 %v7704, %v7702
    %v7725 = vpack.c.b16 %v7705, %v7703
    %v7726 = vpack.c.b16 %v7708, %v7706
    %v7727 = vpack.c.b16 %v7709, %v7707
    %v7728 = vpack.c.b16 %v7712, %v7710
    %v7729 = vpack.c.b16 %v7713, %v7711
    %7746 = vmatprep.subr.bf16.mxu0 %v7715
    %7747 = vmatpush1.bf16.msra.mxu0 %v7714
    %7748 = vmatprep.subr.bf16.mxu0 %v7717
    %7749 = vmatpush1.bf16.msra.mxu0 %v7716
    %7750 = vmatprep.subr.bf16.mxu0 %v7719
    %7751 = vmatpush1.bf16.msra.mxu0 %v7718
    %7752 = vmatprep.subr.bf16.mxu0 %v7721
    %7753 = vmatpush1.bf16.msra.mxu0 %v7720
    %7754 = vmatprep.subr.bf16.mxu0 %v7723
    %7755 = vmatpush1.bf16.msra.mxu0 %v7722
    %7756 = vmatprep.subr.bf16.mxu0 %v7725
    %7757 = vmatpush1.bf16.msra.mxu0 %v7724
    %7758 = vmatprep.subr.bf16.mxu0 %v7727
    %7759 = vmatpush1.bf16.msra.mxu0 %v7726
    %7760 = vmatprep.subr.bf16.mxu0 %v7729
    %7761 = vmatpush1.bf16.msra.mxu0 %v7728
    %7762 = vmatprep.subr.bf16.mxu0 0
    %7763 = vmatpush1.bf16.msra.mxu0 0
    %7764 = vmatprep.subr.bf16.mxu0 0
    %7765 = vmatpush1.bf16.msra.mxu0 0
    %7766 = vmatprep.subr.bf16.mxu0 0
    %7767 = vmatpush1.bf16.msra.mxu0 0
    %7768 = vmatprep.subr.bf16.mxu0 0
    %7769 = vmatpush1.bf16.msra.mxu0 0
    %7770 = vmatprep.subr.bf16.mxu0 0
    %7771 = vmatpush1.bf16.msra.mxu0 0
    %7772 = vmatprep.subr.bf16.mxu0 0
    %7773 = vmatpush1.bf16.msra.mxu0 0
    %7774 = vmatprep.subr.bf16.mxu0 0
    %7775 = vmatpush1.bf16.msra.mxu0 0
    %7776 = vmatprep.subr.bf16.mxu0 0
    %7777 = vmatpush1.bf16.msra.mxu0 0
    %7778 = vmatprep.mubr.bf16.mxu0 0
    %7779 = vmatmul.mubr.bf16.gmra.mrb[0].mxu0 %v7648
    %v7780 = vpop.f32.mrb[0].mxu0
    %v7781 = vadd.f32 0.0, %v7780
    %v7782 = vpop.f32.mrb[0].mxu0
    %v7783 = vadd.f32 0.0, %v7782
    %v7784 = vpop.f32.mrb[0].mxu0
    %v7785 = vpop.f32.mrb[0].mxu0
    %7786 = vdwg.mxu0
    %v7787 = vadd.f32 %v7458, %v7781
    %v7788 = vadd.f32 %v7459, %v7783
    %v7789 = vmax.f32 %v7787, 0.0
    %v7790 = vmax.f32 %v7788, 0.0
    %v7791 = vpack.c.bf16 %v7789, %v7789
    %v7792 = vpack.c.bf16 %v7790, %v7790
    %v7793 = vld [vmem:[#allocation6] sm:$0xff]
    %v7794 = vld [vmem:[#allocation6 + $0x8] sm:$0xff]
    %v7795 = vld [vmem:[#allocation6 + $0x10] sm:$0xff]
    %v7796 = vld [vmem:[#allocation6 + $0x18] sm:$0xff]
    %v7797 = vld [vmem:[#allocation6 + $0x20] sm:$0xff]
    %v7798 = vld [vmem:[#allocation6 + $0x28] sm:$0xff]
    %v7799 = vld [vmem:[#allocation6 + $0x30] sm:$0xff]
    %v7800 = vld [vmem:[#allocation6 + $0x38] sm:$0xff]
    %v7801 = vld [vmem:[#allocation6 + $0x40] sm:$0xff]
    %v7802 = vld [vmem:[#allocation6 + $0x48] sm:$0xff]
    %v7803 = vld [vmem:[#allocation6 + $0x50] sm:$0xff]
    %v7804 = vld [vmem:[#allocation6 + $0x58] sm:$0xff]
    %v7805 = vld [vmem:[#allocation6 + $0x60] sm:$0xff]
    %v7806 = vld [vmem:[#allocation6 + $0x68] sm:$0xff]
    %v7807 = vld [vmem:[#allocation6 + $0x70] sm:$0xff]
    %v7808 = vld [vmem:[#allocation6 + $0x78] sm:$0xff]
    %v7809 = vld [vmem:[#allocation6 + $0x80] sm:$0xff]
    %v7810 = vld [vmem:[#allocation6 + $0x88] sm:$0xff]
    %v7811 = vld [vmem:[#allocation6 + $0x90] sm:$0xff]
    %v7812 = vld [vmem:[#allocation6 + $0x98] sm:$0xff]
    %v7813 = vld [vmem:[#allocation6 + $0xa0] sm:$0xff]
    %v7814 = vld [vmem:[#allocation6 + $0xa8] sm:$0xff]
    %v7815 = vld [vmem:[#allocation6 + $0xb0] sm:$0xff]
    %v7816 = vld [vmem:[#allocation6 + $0xb8] sm:$0xff]
    %v7817 = vld [vmem:[#allocation6 + $0xc0] sm:$0xff]
    %v7818 = vld [vmem:[#allocation6 + $0xc8] sm:$0xff]
    %v7819 = vld [vmem:[#allocation6 + $0xd0] sm:$0xff]
    %v7820 = vld [vmem:[#allocation6 + $0xd8] sm:$0xff]
    %v7821 = vld [vmem:[#allocation6 + $0xe0] sm:$0xff]
    %v7822 = vld [vmem:[#allocation6 + $0xe8] sm:$0xff]
    %v7823 = vld [vmem:[#allocation6 + $0xf0] sm:$0xff]
    %v7824 = vld [vmem:[#allocation6 + $0xf8] sm:$0xff]
    %v7825 = vld [vmem:[%s10] sm:$0x3]
    %v7827 = vlaneseq
    %v7828 = vshrl.u32 %v7827, 7
    %v7829 = vsub.s32 0, %v7828
    %v7830 = vrot.slane %v7825, %v7829
    %v7831 = vlaneseq
    %v7832 = vshrl.u32 %v7831, 7
    %v7833 = vsub.s32 1, %v7832
    %v7834 = vrot.slane %v7825, %v7833
    %v7869 = vunpack.c.l.b16 %v7793
    %v7870 = vunpack.c.h.b16 %v7793
    %v7871 = vunpack.c.l.b16 %v7794
    %v7872 = vunpack.c.h.b16 %v7794
    %v7873 = vunpack.c.l.b16 %v7795
    %v7874 = vunpack.c.h.b16 %v7795
    %v7875 = vunpack.c.l.b16 %v7796
    %v7876 = vunpack.c.h.b16 %v7796
    %v7877 = vunpack.c.l.b16 %v7797
    %v7878 = vunpack.c.h.b16 %v7797
    %v7879 = vunpack.c.l.b16 %v7798
    %v7880 = vunpack.c.h.b16 %v7798
    %v7881 = vunpack.c.l.b16 %v7799
    %v7882 = vunpack.c.h.b16 %v7799
    %v7883 = vunpack.c.l.b16 %v7800
    %v7884 = vunpack.c.h.b16 %v7800
    %v7885 = vunpack.c.l.b16 %v7801
    %v7886 = vunpack.c.h.b16 %v7801
    %v7887 = vunpack.c.l.b16 %v7802
    %v7888 = vunpack.c.h.b16 %v7802
    %v7889 = vunpack.c.l.b16 %v7803
    %v7890 = vunpack.c.h.b16 %v7803
    %v7891 = vunpack.c.l.b16 %v7804
    %v7892 = vunpack.c.h.b16 %v7804
    %v7893 = vunpack.c.l.b16 %v7805
    %v7894 = vunpack.c.h.b16 %v7805
    %v7895 = vunpack.c.l.b16 %v7806
    %v7896 = vunpack.c.h.b16 %v7806
    %v7897 = vunpack.c.l.b16 %v7807
    %v7898 = vunpack.c.h.b16 %v7807
    %v7899 = vunpack.c.l.b16 %v7808
    %v7900 = vunpack.c.h.b16 %v7808
    %v7901 = vunpack.c.l.b16 %v7809
    %v7902 = vunpack.c.h.b16 %v7809
    %v7903 = vunpack.c.l.b16 %v7810
    %v7904 = vunpack.c.h.b16 %v7810
    %v7905 = vunpack.c.l.b16 %v7811
    %v7906 = vunpack.c.h.b16 %v7811
    %v7907 = vunpack.c.l.b16 %v7812
    %v7908 = vunpack.c.h.b16 %v7812
    %v7909 = vunpack.c.l.b16 %v7813
    %v7910 = vunpack.c.h.b16 %v7813
    %v7911 = vunpack.c.l.b16 %v7814
    %v7912 = vunpack.c.h.b16 %v7814
    %v7913 = vunpack.c.l.b16 %v7815
    %v7914 = vunpack.c.h.b16 %v7815
    %v7915 = vunpack.c.l.b16 %v7816
    %v7916 = vunpack.c.h.b16 %v7816
    %v7917 = vunpack.c.l.b16 %v7817
    %v7918 = vunpack.c.h.b16 %v7817
    %v7919 = vunpack.c.l.b16 %v7818
    %v7920 = vunpack.c.h.b16 %v7818
    %v7921 = vunpack.c.l.b16 %v7819
    %v7922 = vunpack.c.h.b16 %v7819
    %v7923 = vunpack.c.l.b16 %v7820
    %v7924 = vunpack.c.h.b16 %v7820
    %v7925 = vunpack.c.l.b16 %v7821
    %v7926 = vunpack.c.h.b16 %v7821
    %v7927 = vunpack.c.l.b16 %v7822
    %v7928 = vunpack.c.h.b16 %v7822
    %v7929 = vunpack.c.l.b16 %v7823
    %v7930 = vunpack.c.h.b16 %v7823
    %v7931 = vunpack.c.l.b16 %v7824
    %v7932 = vunpack.c.h.b16 %v7824
    %v7933 = vpack.c.b16 %v7871, %v7869
    %v7934 = vpack.c.b16 %v7872, %v7870
    %v7935 = vpack.c.b16 %v7875, %v7873
    %v7936 = vpack.c.b16 %v7876, %v7874
    %v7937 = vpack.c.b16 %v7879, %v7877
    %v7938 = vpack.c.b16 %v7880, %v7878
    %v7939 = vpack.c.b16 %v7883, %v7881
    %v7940 = vpack.c.b16 %v7884, %v7882
    %v7941 = vpack.c.b16 %v7887, %v7885
    %v7942 = vpack.c.b16 %v7888, %v7886
    %v7943 = vpack.c.b16 %v7891, %v7889
    %v7944 = vpack.c.b16 %v7892, %v7890
    %v7945 = vpack.c.b16 %v7895, %v7893
    %v7946 = vpack.c.b16 %v7896, %v7894
    %v7947 = vpack.c.b16 %v7899, %v7897
    %v7948 = vpack.c.b16 %v7900, %v7898
    %v7949 = vpack.c.b16 %v7903, %v7901
    %v7950 = vpack.c.b16 %v7904, %v7902
    %v7951 = vpack.c.b16 %v7907, %v7905
    %v7952 = vpack.c.b16 %v7908, %v7906
    %v7953 = vpack.c.b16 %v7911, %v7909
    %v7954 = vpack.c.b16 %v7912, %v7910
    %v7955 = vpack.c.b16 %v7915, %v7913
    %v7956 = vpack.c.b16 %v7916, %v7914
    %v7957 = vpack.c.b16 %v7919, %v7917
    %v7958 = vpack.c.b16 %v7920, %v7918
    %v7959 = vpack.c.b16 %v7923, %v7921
    %v7960 = vpack.c.b16 %v7924, %v7922
    %v7961 = vpack.c.b16 %v7927, %v7925
    %v7962 = vpack.c.b16 %v7928, %v7926
    %v7963 = vpack.c.b16 %v7931, %v7929
    %v7964 = vpack.c.b16 %v7932, %v7930
    %7997 = vmatprep.subr.bf16.mxu0 %v7934
    %7998 = vmatpush1.bf16.msra.mxu0 %v7933
    %7999 = vmatprep.subr.bf16.mxu0 %v7936
    %8000 = vmatpush1.bf16.msra.mxu0 %v7935
    %8001 = vmatprep.subr.bf16.mxu0 %v7938
    %8002 = vmatpush1.bf16.msra.mxu0 %v7937
    %8003 = vmatprep.subr.bf16.mxu0 %v7940
    %8004 = vmatpush1.bf16.msra.mxu0 %v7939
    %8005 = vmatprep.subr.bf16.mxu0 %v7942
    %8006 = vmatpush1.bf16.msra.mxu0 %v7941
    %8007 = vmatprep.subr.bf16.mxu0 %v7944
    %8008 = vmatpush1.bf16.msra.mxu0 %v7943
    %8009 = vmatprep.subr.bf16.mxu0 %v7946
    %8010 = vmatpush1.bf16.msra.mxu0 %v7945
    %8011 = vmatprep.subr.bf16.mxu0 %v7948
    %8012 = vmatpush1.bf16.msra.mxu0 %v7947
    %8013 = vmatprep.subr.bf16.mxu0 %v7950
    %8014 = vmatpush1.bf16.msra.mxu0 %v7949
    %8015 = vmatprep.subr.bf16.mxu0 %v7952
    %8016 = vmatpush1.bf16.msra.mxu0 %v7951
    %8017 = vmatprep.subr.bf16.mxu0 %v7954
    %8018 = vmatpush1.bf16.msra.mxu0 %v7953
    %8019 = vmatprep.subr.bf16.mxu0 %v7956
    %8020 = vmatpush1.bf16.msra.mxu0 %v7955
    %8021 = vmatprep.subr.bf16.mxu0 %v7958
    %8022 = vmatpush1.bf16.msra.mxu0 %v7957
    %8023 = vmatprep.subr.bf16.mxu0 %v7960
    %8024 = vmatpush1.bf16.msra.mxu0 %v7959
    %8025 = vmatprep.subr.bf16.mxu0 %v7962
    %8026 = vmatpush1.bf16.msra.mxu0 %v7961
    %8027 = vmatprep.subr.bf16.mxu0 %v7964
    %8028 = vmatpush1.bf16.msra.mxu0 %v7963
    %8029 = vmatprep.mubr.bf16.mxu0 %v7792
    %8030 = vmatmul.mubr.bf16.gmra.mrb[0].mxu0 %v7791
    %v8031 = vpop.f32.mrb[0].mxu0
    %v8032 = vadd.f32 %v7830, %v8031
    %v8033 = vpop.f32.mrb[0].mxu0
    %v8034 = vadd.f32 %v7834, %v8033
    %v8035 = vpop.f32.mrb[0].mxu0
    %v8036 = vpop.f32.mrb[0].mxu0
    %8037 = vdwg.mxu0
    %v8038 = vmax.f32 %v8032, 0.0
    %v8039 = vmax.f32 %v8034, 0.0
    %v8040 = vpack.c.bf16 %v8038, %v8038
    %v8041 = vpack.c.bf16 %v8039, %v8039
    %v8042 = vld [vmem:[#allocation8] sm:$0xff]
    %v8043 = vld [vmem:[#allocation8 + $0x8] sm:$0xff]
    %v8044 = vld [vmem:[#allocation8 + $0x10] sm:$0xff]
    %v8045 = vld [vmem:[#allocation8 + $0x18] sm:$0xff]
    %v8046 = vld [vmem:[#allocation8 + $0x20] sm:$0xff]
    %v8047 = vld [vmem:[#allocation8 + $0x28] sm:$0xff]
    %v8048 = vld [vmem:[#allocation8 + $0x30] sm:$0xff]
    %v8049 = vld [vmem:[#allocation8 + $0x38] sm:$0xff]
    %v8050 = vld [vmem:[#allocation8 + $0x40] sm:$0xff]
    %v8051 = vld [vmem:[#allocation8 + $0x48] sm:$0xff]
    %v8052 = vld [vmem:[#allocation8 + $0x50] sm:$0xff]
    %v8053 = vld [vmem:[#allocation8 + $0x58] sm:$0xff]
    %v8054 = vld [vmem:[#allocation8 + $0x60] sm:$0xff]
    %v8055 = vld [vmem:[#allocation8 + $0x68] sm:$0xff]
    %v8056 = vld [vmem:[#allocation8 + $0x70] sm:$0xff]
    %v8057 = vld [vmem:[#allocation8 + $0x78] sm:$0xff]
    %v8058 = vld [vmem:[#allocation8 + $0x80] sm:$0xff]
    %v8059 = vld [vmem:[#allocation8 + $0x88] sm:$0xff]
    %v8060 = vld [vmem:[#allocation8 + $0x90] sm:$0xff]
    %v8061 = vld [vmem:[#allocation8 + $0x98] sm:$0xff]
    %v8062 = vld [vmem:[#allocation8 + $0xa0] sm:$0xff]
    %v8063 = vld [vmem:[#allocation8 + $0xa8] sm:$0xff]
    %v8064 = vld [vmem:[#allocation8 + $0xb0] sm:$0xff]
    %v8065 = vld [vmem:[#allocation8 + $0xb8] sm:$0xff]
    %v8066 = vld [vmem:[#allocation8 + $0xc0] sm:$0xff]
    %v8067 = vld [vmem:[#allocation8 + $0xc8] sm:$0xff]
    %v8068 = vld [vmem:[#allocation8 + $0xd0] sm:$0xff]
    %v8069 = vld [vmem:[#allocation8 + $0xd8] sm:$0xff]
    %v8070 = vld [vmem:[#allocation8 + $0xe0] sm:$0xff]
    %v8071 = vld [vmem:[#allocation8 + $0xe8] sm:$0xff]
    %v8072 = vld [vmem:[#allocation8 + $0xf0] sm:$0xff]
    %v8073 = vld [vmem:[#allocation8 + $0xf8] sm:$0xff]
    %v8074 = vld [vmem:[%s12] sm:$0x3]
    %v8076 = vlaneseq
    %v8077 = vshrl.u32 %v8076, 7
    %v8078 = vsub.s32 0, %v8077
    %v8079 = vrot.slane %v8074, %v8078
    %v8080 = vlaneseq
    %v8081 = vshrl.u32 %v8080, 7
    %v8082 = vsub.s32 1, %v8081
    %v8083 = vrot.slane %v8074, %v8082
    %v8118 = vunpack.c.l.b16 %v8042
    %v8119 = vunpack.c.h.b16 %v8042
    %v8120 = vunpack.c.l.b16 %v8043
    %v8121 = vunpack.c.h.b16 %v8043
    %v8122 = vunpack.c.l.b16 %v8044
    %v8123 = vunpack.c.h.b16 %v8044
    %v8124 = vunpack.c.l.b16 %v8045
    %v8125 = vunpack.c.h.b16 %v8045
    %v8126 = vunpack.c.l.b16 %v8046
    %v8127 = vunpack.c.h.b16 %v8046
    %v8128 = vunpack.c.l.b16 %v8047
    %v8129 = vunpack.c.h.b16 %v8047
    %v8130 = vunpack.c.l.b16 %v8048
    %v8131 = vunpack.c.h.b16 %v8048
    %v8132 = vunpack.c.l.b16 %v8049
    %v8133 = vunpack.c.h.b16 %v8049
    %v8134 = vunpack.c.l.b16 %v8050
    %v8135 = vunpack.c.h.b16 %v8050
    %v8136 = vunpack.c.l.b16 %v8051
    %v8137 = vunpack.c.h.b16 %v8051
    %v8138 = vunpack.c.l.b16 %v8052
    %v8139 = vunpack.c.h.b16 %v8052
    %v8140 = vunpack.c.l.b16 %v8053
    %v8141 = vunpack.c.h.b16 %v8053
    %v8142 = vunpack.c.l.b16 %v8054
    %v8143 = vunpack.c.h.b16 %v8054
    %v8144 = vunpack.c.l.b16 %v8055
    %v8145 = vunpack.c.h.b16 %v8055
    %v8146 = vunpack.c.l.b16 %v8056
    %v8147 = vunpack.c.h.b16 %v8056
    %v8148 = vunpack.c.l.b16 %v8057
    %v8149 = vunpack.c.h.b16 %v8057
    %v8150 = vunpack.c.l.b16 %v8058
    %v8151 = vunpack.c.h.b16 %v8058
    %v8152 = vunpack.c.l.b16 %v8059
    %v8153 = vunpack.c.h.b16 %v8059
    %v8154 = vunpack.c.l.b16 %v8060
    %v8155 = vunpack.c.h.b16 %v8060
    %v8156 = vunpack.c.l.b16 %v8061
    %v8157 = vunpack.c.h.b16 %v8061
    %v8158 = vunpack.c.l.b16 %v8062
    %v8159 = vunpack.c.h.b16 %v8062
    %v8160 = vunpack.c.l.b16 %v8063
    %v8161 = vunpack.c.h.b16 %v8063
    %v8162 = vunpack.c.l.b16 %v8064
    %v8163 = vunpack.c.h.b16 %v8064
    %v8164 = vunpack.c.l.b16 %v8065
    %v8165 = vunpack.c.h.b16 %v8065
    %v8166 = vunpack.c.l.b16 %v8066
    %v8167 = vunpack.c.h.b16 %v8066
    %v8168 = vunpack.c.l.b16 %v8067
    %v8169 = vunpack.c.h.b16 %v8067
    %v8170 = vunpack.c.l.b16 %v8068
    %v8171 = vunpack.c.h.b16 %v8068
    %v8172 = vunpack.c.l.b16 %v8069
    %v8173 = vunpack.c.h.b16 %v8069
    %v8174 = vunpack.c.l.b16 %v8070
    %v8175 = vunpack.c.h.b16 %v8070
    %v8176 = vunpack.c.l.b16 %v8071
    %v8177 = vunpack.c.h.b16 %v8071
    %v8178 = vunpack.c.l.b16 %v8072
    %v8179 = vunpack.c.h.b16 %v8072
    %v8180 = vunpack.c.l.b16 %v8073
    %v8181 = vunpack.c.h.b16 %v8073
    %v8182 = vpack.c.b16 %v8120, %v8118
    %v8183 = vpack.c.b16 %v8121, %v8119
    %v8184 = vpack.c.b16 %v8124, %v8122
    %v8185 = vpack.c.b16 %v8125, %v8123
    %v8186 = vpack.c.b16 %v8128, %v8126
    %v8187 = vpack.c.b16 %v8129, %v8127
    %v8188 = vpack.c.b16 %v8132, %v8130
    %v8189 = vpack.c.b16 %v8133, %v8131
    %v8190 = vpack.c.b16 %v8136, %v8134
    %v8191 = vpack.c.b16 %v8137, %v8135
    %v8192 = vpack.c.b16 %v8140, %v8138
    %v8193 = vpack.c.b16 %v8141, %v8139
    %v8194 = vpack.c.b16 %v8144, %v8142
    %v8195 = vpack.c.b16 %v8145, %v8143
    %v8196 = vpack.c.b16 %v8148, %v8146
    %v8197 = vpack.c.b16 %v8149, %v8147
    %v8198 = vpack.c.b16 %v8152, %v8150
    %v8199 = vpack.c.b16 %v8153, %v8151
    %v8200 = vpack.c.b16 %v8156, %v8154
    %v8201 = vpack.c.b16 %v8157, %v8155
    %v8202 = vpack.c.b16 %v8160, %v8158
    %v8203 = vpack.c.b16 %v8161, %v8159
    %v8204 = vpack.c.b16 %v8164, %v8162
    %v8205 = vpack.c.b16 %v8165, %v8163
    %v8206 = vpack.c.b16 %v8168, %v8166
    %v8207 = vpack.c.b16 %v8169, %v8167
    %v8208 = vpack.c.b16 %v8172, %v8170
    %v8209 = vpack.c.b16 %v8173, %v8171
    %v8210 = vpack.c.b16 %v8176, %v8174
    %v8211 = vpack.c.b16 %v8177, %v8175
    %v8212 = vpack.c.b16 %v8180, %v8178
    %v8213 = vpack.c.b16 %v8181, %v8179
    %8246 = vmatprep.subr.bf16.mxu0 %v8183
    %8247 = vmatpush1.bf16.msra.mxu0 %v8182
    %8248 = vmatprep.subr.bf16.mxu0 %v8185
    %8249 = vmatpush1.bf16.msra.mxu0 %v8184
    %8250 = vmatprep.subr.bf16.mxu0 %v8187
    %8251 = vmatpush1.bf16.msra.mxu0 %v8186
    %8252 = vmatprep.subr.bf16.mxu0 %v8189
    %8253 = vmatpush1.bf16.msra.mxu0 %v8188
    %8254 = vmatprep.subr.bf16.mxu0 %v8191
    %8255 = vmatpush1.bf16.msra.mxu0 %v8190
    %8256 = vmatprep.subr.bf16.mxu0 %v8193
    %8257 = vmatpush1.bf16.msra.mxu0 %v8192
    %8258 = vmatprep.subr.bf16.mxu0 %v8195
    %8259 = vmatpush1.bf16.msra.mxu0 %v8194
    %8260 = vmatprep.subr.bf16.mxu0 %v8197
    %8261 = vmatpush1.bf16.msra.mxu0 %v8196
    %8262 = vmatprep.subr.bf16.mxu0 %v8199
    %8263 = vmatpush1.bf16.msra.mxu0 %v8198
    %8264 = vmatprep.subr.bf16.mxu0 %v8201
    %8265 = vmatpush1.bf16.msra.mxu0 %v8200
    %8266 = vmatprep.subr.bf16.mxu0 %v8203
    %8267 = vmatpush1.bf16.msra.mxu0 %v8202
    %8268 = vmatprep.subr.bf16.mxu0 %v8205
    %8269 = vmatpush1.bf16.msra.mxu0 %v8204
    %8270 = vmatprep.subr.bf16.mxu0 %v8207
    %8271 = vmatpush1.bf16.msra.mxu0 %v8206
    %8272 = vmatprep.subr.bf16.mxu0 %v8209
    %8273 = vmatpush1.bf16.msra.mxu0 %v8208
    %8274 = vmatprep.subr.bf16.mxu0 %v8211
    %8275 = vmatpush1.bf16.msra.mxu0 %v8210
    %8276 = vmatprep.subr.bf16.mxu0 %v8213
    %8277 = vmatpush1.bf16.msra.mxu0 %v8212
    %8278 = vmatprep.mubr.bf16.mxu0 %v8041
    %8279 = vmatmul.mubr.bf16.gmra.mrb[0].mxu0 %v8040
    %v8280 = vpop.f32.mrb[0].mxu0
    %v8281 = vadd.f32 %v8079, %v8280
    %v8282 = vpop.f32.mrb[0].mxu0
    %v8283 = vadd.f32 %v8083, %v8282
    %v8284 = vpop.f32.mrb[0].mxu0
    %v8285 = vpop.f32.mrb[0].mxu0
    %8286 = vdwg.mxu0
    %v8287 = vmax.f32 %v8281, 0.0
    %v8288 = vmax.f32 %v8283, 0.0
    %v8289 = vld [vmem:[#allocation9] sm:$0xff]
    %v8290 = vld [vmem:[#allocation9 + $0x8] sm:$0xff]
    %v8291 = vld [vmem:[#allocation9 + $0x10] sm:$0xff]
    %v8292 = vld [vmem:[#allocation9 + $0x18] sm:$0xff]
    %v8293 = vld [vmem:[#allocation9 + $0x20] sm:$0xff]
    %v8294 = vld [vmem:[#allocation9 + $0x28] sm:$0xff]
    %v8295 = vld [vmem:[#allocation9 + $0x30] sm:$0xff]
    %v8296 = vld [vmem:[#allocation9 + $0x38] sm:$0xff]
    %v8297 = vld [vmem:[#allocation9 + $0x40] sm:$0xff]
    %v8298 = vld [vmem:[#allocation9 + $0x48] sm:$0xff]
    %v8299 = vld [vmem:[#allocation9 + $0x50] sm:$0xff]
    %v8300 = vld [vmem:[#allocation9 + $0x58] sm:$0xff]
    %v8301 = vld [vmem:[#allocation9 + $0x60] sm:$0xff]
    %v8302 = vld [vmem:[#allocation9 + $0x68] sm:$0xff]
    %v8303 = vld [vmem:[#allocation9 + $0x70] sm:$0xff]
    %v8304 = vld [vmem:[#allocation9 + $0x78] sm:$0xff]
    %v8305 = vld [vmem:[#allocation9 + $0x80] sm:$0xff]
    %v8306 = vld [vmem:[#allocation9 + $0x88] sm:$0xff]
    %v8307 = vld [vmem:[#allocation9 + $0x90] sm:$0xff]
    %v8308 = vld [vmem:[#allocation9 + $0x98] sm:$0xff]
    %v8309 = vld [vmem:[#allocation9 + $0xa0] sm:$0xff]
    %v8310 = vld [vmem:[#allocation9 + $0xa8] sm:$0xff]
    %v8311 = vld [vmem:[#allocation9 + $0xb0] sm:$0xff]
    %v8312 = vld [vmem:[#allocation9 + $0xb8] sm:$0xff]
    %v8313 = vld [vmem:[#allocation9 + $0xc0] sm:$0xff]
    %v8314 = vld [vmem:[#allocation9 + $0xc8] sm:$0xff]
    %v8315 = vld [vmem:[#allocation9 + $0xd0] sm:$0xff]
    %v8316 = vld [vmem:[#allocation9 + $0xd8] sm:$0xff]
    %v8317 = vld [vmem:[#allocation9 + $0xe0] sm:$0xff]
    %v8318 = vld [vmem:[#allocation9 + $0xe8] sm:$0xff]
    %v8319 = vld [vmem:[#allocation9 + $0xf0] sm:$0xff]
    %v8320 = vld [vmem:[#allocation9 + $0xf8] sm:$0xff]
    %v8321 = vld [vmem:[%s14] sm:$0x1]
    %v8323 = vlaneseq
    %v8324 = vshrl.u32 %v8323, 7
    %v8325 = vsub.s32 0, %v8324
    %v8326 = vrot.slane %v8321, %v8325
    %8328 = vmatprep.subr.mxu0 0.0
    %8329 = vmatpush1.msra.mxu0 %v8289
    %8330 = vmatprep.subr.mxu0 0.0
    %8331 = vmatpush1.msra.mxu0 %v8290
    %8332 = vmatprep.subr.mxu0 0.0
    %8333 = vmatpush1.msra.mxu0 %v8291
    %8334 = vmatprep.subr.mxu0 0.0
    %8335 = vmatpush1.msra.mxu0 %v8292
    %8336 = vmatprep.subr.mxu0 0.0
    %8337 = vmatpush1.msra.mxu0 %v8293
    %8338 = vmatprep.subr.mxu0 0.0
    %8339 = vmatpush1.msra.mxu0 %v8294
    %8340 = vmatprep.subr.mxu0 0.0
    %8341 = vmatpush1.msra.mxu0 %v8295
    %8342 = vmatprep.subr.mxu0 0.0
    %8343 = vmatpush1.msra.mxu0 %v8296
    %8344 = vmatprep.subr.mxu0 0.0
    %8345 = vmatpush1.msra.mxu0 %v8297
    %8346 = vmatprep.subr.mxu0 0.0
    %8347 = vmatpush1.msra.mxu0 %v8298
    %8348 = vmatprep.subr.mxu0 0.0
    %8349 = vmatpush1.msra.mxu0 %v8299
    %8350 = vmatprep.subr.mxu0 0.0
    %8351 = vmatpush1.msra.mxu0 %v8300
    %8352 = vmatprep.subr.mxu0 0.0
    %8353 = vmatpush1.msra.mxu0 %v8301
    %8354 = vmatprep.subr.mxu0 0.0
    %8355 = vmatpush1.msra.mxu0 %v8302
    %8356 = vmatprep.subr.mxu0 0.0
    %8357 = vmatpush1.msra.mxu0 %v8303
    %8358 = vmatprep.subr.mxu0 0.0
    %8359 = vmatpush1.msra.mxu0 %v8304
    %8360 = vmatprep.subr.mxu0 0.0
    %8361 = vmatpush1.msra.mxu0 %v8305
    %8362 = vmatprep.subr.mxu0 0.0
    %8363 = vmatpush1.msra.mxu0 %v8306
    %8364 = vmatprep.subr.mxu0 0.0
    %8365 = vmatpush1.msra.mxu0 %v8307
    %8366 = vmatprep.subr.mxu0 0.0
    %8367 = vmatpush1.msra.mxu0 %v8308
    %8368 = vmatprep.subr.mxu0 0.0
    %8369 = vmatpush1.msra.mxu0 %v8309
    %8370 = vmatprep.subr.mxu0 0.0
    %8371 = vmatpush1.msra.mxu0 %v8310
    %8372 = vmatprep.subr.mxu0 0.0
    %8373 = vmatpush1.msra.mxu0 %v8311
    %8374 = vmatprep.subr.mxu0 0.0
    %8375 = vmatpush1.msra.mxu0 %v8312
    %8376 = vmatprep.subr.mxu0 0.0
    %8377 = vmatpush1.msra.mxu0 %v8313
    %8378 = vmatprep.subr.mxu0 0.0
    %8379 = vmatpush1.msra.mxu0 %v8314
    %8380 = vmatprep.subr.mxu0 0.0
    %8381 = vmatpush1.msra.mxu0 %v8315
    %8382 = vmatprep.subr.mxu0 0.0
    %8383 = vmatpush1.msra.mxu0 %v8316
    %8384 = vmatprep.subr.mxu0 0.0
    %8385 = vmatpush1.msra.mxu0 %v8317
    %8386 = vmatprep.subr.mxu0 0.0
    %8387 = vmatpush1.msra.mxu0 %v8318
    %8388 = vmatprep.subr.mxu0 0.0
    %8389 = vmatpush1.msra.mxu0 %v8319
    %8390 = vmatprep.subr.mxu0 0.0
    %8391 = vmatpush1.msra.mxu0 %v8320
    %8392 = vmatprep.mubr.f32.mxu0 %v8288
    %8393 = vmatmul.mubr.f32.gmra.mrb[0].mxu0 %v8287
    %v8394 = vpop.f32.mrb[0].mxu0
    %v8395 = vadd.f32 %v8326, %v8394
    %v8396 = vpop.f32.mrb[0].mxu0
    %8397 = vdwg.mxu0
    %8398 = vst [vmem:[#allocation11] sm:$0x3] %v8395
    // Predicated region
    $region78: #{model_forward.1} parent=1 // pred_check
      _
    $region79: #{model_forward.1} parent=1 // pred_check_branch
      %8400 = sbr.rel (0) target = $region81
    $region80: #{model_forward.1} parent=1 // pred_region
      %s8402 = ssub.s32 32, 32
      %8403 = vsyncadd [#allocation5], %s8402
      %s8405 = sshll.u32 [#allocation11], 4
      %s8406 = int_to_ptr.vmem [resolvable:$true] %s8405
      %8408 = dma.vmem_to_hbm [thread:$0]  %s8406, 32, %s15, [#allocation5]
    $region81: #{model_forward.1} parent=1 // pred_fallthru
      _
    // Predicated region
    $region82: #{model_forward.1} parent=1 // pred_check
      _
    $region83: #{model_forward.1} parent=1 // pred_check_branch
      %8410 = sbr.rel (0) target = $region85
    $region84: #{model_forward.1} parent=1 // pred_region
      %8411 = dma.done [#allocation5], 32
    $region85: #{model_forward.1} parent=1 // pred_fallthru
      _
    %8412 = vsyncpa [#allocation4], 1
    %8413 = vsyncpa [#allocation7], 1
    %8414 = vsyncpa [#allocation10], 1
    %8415 = vsyncpa [#allocation5], 1

</llo_original>
